<compile_context>
chip_gen: v6e
topology: v6e:2x2x1
jax: 0.10.0
libtpu: 0.0.40
codegen_flags: <defaults>
</compile_context>

<pallas_src>
import functools

import jax
import jax.numpy as jnp
from jax.experimental import pallas as pl
from jax.experimental.pallas import tpu as pltpu

NEG_SLOPE = 0.01   # torch.nn.LeakyReLU default negative_slope
EPS = 1e-12        # torch.nn.functional.normalize default eps


def _round_up(x, m):
    return ((x + m - 1) // m) * m


def _leaky(x):
    return jnp.where(x >= 0, x, NEG_SLOPE * x)


def _mot_cnn_kernel(x_ref, mask_ref, w1_ref, b1_ref, w2_ref, b2_ref,
                    wl_ref, bl_ref, out_ref, xs_ref, hs_ref, hc_ref,
                    *, block_b, lp):
    f32, bf16 = jnp.float32, jnp.bfloat16
    M, D = x_ref.shape                        # M = block_b * lp
    valid = mask_ref[...] > 0.5               # (M, 1): valid conv output rows

    # ---- stage x with an 8-row zero halo so the +1/+2 time taps stay in-bounds
    xs_ref[0:M, :] = x_ref[...]
    xs_ref[M:M + 8, :] = jnp.zeros((8, D), x_ref.dtype)
    x_t0 = x_ref[...]                          # x[t]
    x_t1 = xs_ref[1:M + 1, :]                  # x[t+1]
    x_t2 = xs_ref[2:M + 2, :]                  # x[t+2]

    # ---- conv1 (1/2/3-gram): three tap-packed matmuls, f32 accumulation ------
    h = (jnp.dot(x_t0, w1_ref[0], preferred_element_type=f32)
         + jnp.dot(x_t1, w1_ref[1], preferred_element_type=f32)
         + jnp.dot(x_t2, w1_ref[2], preferred_element_type=f32)
         + b1_ref[...])
    h = _leaky(h)                              # (M, 384) f32
    # Zero rows past each example's valid conv length so the shifted conv2
    # taps (also across example boundaries) see exactly the torch zero padding.
    h = jnp.where(valid, h, 0.0)

    # ---- stage h with 8-row zero halos on both sides for the +-1 time taps ---
    hs_ref[0:8, :] = jnp.zeros((8, 384), f32)
    hs_ref[8:M + 8, :] = h
    hs_ref[M + 8:M + 16, :] = jnp.zeros((8, 384), f32)

    # ---- conv2: one fused (M, 768) x (768, 768) bf16 matmul ------------------
    # hc column blocks: [h1[t], h2[t], h2[t+1], h3[t-1], h3[t], h3[t+1]]
    hc_ref[:, 0:256] = h[:, 0:256].astype(bf16)                  # h1[t] | h2[t]
    hc_ref[:, 256:384] = hs_ref[9:M + 9, 128:256].astype(bf16)   # h2[t+1]
    hc_ref[:, 384:512] = hs_ref[7:M + 7, 256:384].astype(bf16)   # h3[t-1]
    hc_ref[:, 512:640] = h[:, 256:384].astype(bf16)              # h3[t]
    hc_ref[:, 640:768] = hs_ref[9:M + 9, 256:384].astype(bf16)   # h3[t+1]

    g = jnp.dot(hc_ref[...], w2_ref[...],
                preferred_element_type=f32) + b2_ref[...]
    g = _leaky(g)                              # (M, 768) f32

    # ---- max-over-time, per example -------------------------------------------
    g = jnp.where(valid, g, -1e30)             # drop padded rows
    feat = jnp.max(g.reshape(block_b, lp, 768), axis=1)          # (block_b, 768)

    # ---- linear + LeakyReLU + L2 normalize (lane-dense Sp output) -------------
    y = jnp.dot(feat.astype(bf16), wl_ref[...],
                preferred_element_type=f32) + bl_ref[...]
    y = _leaky(y)                              # (block_b, Sp)
    # Padded output columns are exactly zero (zero-padded wl/bl), so the norm
    # over Sp lanes equals the norm over the real S features.
    ss = jnp.sum(y * y, axis=1, keepdims=True)
    out_ref[...] = y * jax.lax.rsqrt(jnp.maximum(ss, EPS * EPS))


def max_over_time_cnn(token_ids, params, *, block_b=None):
    """Forward pass.  token_ids: int (B, T), already padded with id 0."""
    f32, bf16 = jnp.float32, jnp.bfloat16
    emb_tbl = params["embedding"]
    B, T = token_ids.shape
    D = emb_tbl.shape[1]
    S = params["bl"].shape[-1]

    L = T + 2                                  # conv output rows per example
    Lp = _round_up(T + 4, 8)                   # padded per-example time length
    Sp = _round_up(max(S, 128), 128)           # lane-dense output width

    if block_b is None:
        block_b = 8 * max(1, pl.cdiv(256, 8 * Lp))   # aim for M >= 256 rows
        block_b = min(block_b, _round_up(B, 8))
    Bp = _round_up(B, block_b)
    Mblk = block_b * Lp

    # --- glue kept in plain JAX: embedding gather + one zero time-pad ---------
    emb = emb_tbl[token_ids].astype(bf16)                          # (B, T, D)
    ep = jnp.pad(emb, ((0, Bp - B), (2, Lp - (T + 2)), (0, 0)))    # (Bp, Lp, D)
    x2d = ep.reshape(Bp * Lp, D)

    valid_t = (jnp.arange(Lp) < L).astype(f32)                     # (Lp,)
    mask = jnp.broadcast_to(valid_t[None, :], (Bp, Lp)).reshape(Bp * Lp, 1)

    # --- pack conv1 into three per-tap (D, 384) weights ------------------------
    # tap 0 -> x[t], tap 1 -> x[t+1], tap 2 -> x[t+2]
    W1 = jnp.zeros((3, D, 384), f32)
    W1 = W1.at[1, :, 0:128].set(params["w11"][0])
    W1 = W1.at[1, :, 128:256].set(params["w12"][0])
    W1 = W1.at[2, :, 128:256].set(params["w12"][1])
    W1 = W1.at[0, :, 256:384].set(params["w13"][0])
    W1 = W1.at[1, :, 256:384].set(params["w13"][1])
    W1 = W1.at[2, :, 256:384].set(params["w13"][2])
    W1 = W1.astype(bf16)
    B1 = jnp.concatenate([params["b11"], params["b12"], params["b13"]],
                         axis=1).astype(f32)                       # (1, 384)

    # --- pack conv2 taps into one (768, 768) weight -----------------------------
    # row blocks: [h1[t], h2[t], h2[t+1], h3[t-1], h3[t], h3[t+1]]
    W2 = jnp.zeros((768, 768), f32)
    W2 = W2.at[0:128, 0:256].set(params["w21"][0])
    W2 = W2.at[128:256, 256:512].set(params["w22"][0])
    W2 = W2.at[256:384, 256:512].set(params["w22"][1])
    W2 = W2.at[384:512, 512:768].set(params["w23"][0])
    W2 = W2.at[512:640, 512:768].set(params["w23"][1])
    W2 = W2.at[640:768, 512:768].set(params["w23"][2])
    W2 = W2.astype(bf16)
    B2 = jnp.concatenate([params["b21"], params["b22"], params["b23"]],
                         axis=1).astype(f32)                       # (1, 768)

    # --- lane-dense final linear (S padded to Sp with zeros) --------------------
    WL = jnp.zeros((768, Sp), f32).at[:, :S].set(params["wl"]).astype(bf16)
    BL = jnp.zeros((1, Sp), f32).at[:, :S].set(params["bl"])

    kern = functools.partial(_mot_cnn_kernel, block_b=block_b, lp=Lp)
    grid = (Bp // block_b,)

    out = pl.pallas_call(
        kern,
        grid=grid,
        in_specs=[
            pl.BlockSpec((Mblk, D), lambda i: (i, 0)),        # x (bf16)
            pl.BlockSpec((Mblk, 1), lambda i: (i, 0)),        # row-valid mask
            pl.BlockSpec((3, D, 384), lambda i: (0, 0, 0)),   # per-tap W1
            pl.BlockSpec((1, 384), lambda i: (0, 0)),         # packed B1
            pl.BlockSpec((768, 768), lambda i: (0, 0)),       # packed W2
            pl.BlockSpec((1, 768), lambda i: (0, 0)),         # packed B2
            pl.BlockSpec((768, Sp), lambda i: (0, 0)),        # WL (padded)
            pl.BlockSpec((1, Sp), lambda i: (0, 0)),          # BL (padded)
        ],
        out_specs=pl.BlockSpec((block_b, Sp), lambda i: (i, 0)),
        out_shape=jax.ShapeDtypeStruct((Bp, Sp), f32),
        scratch_shapes=[
            pltpu.VMEM((Mblk + 8, D), bf16),      # x staging + zero halo
            pltpu.VMEM((Mblk + 16, 384), f32),    # h staging + zero halos
            pltpu.VMEM((Mblk, 768), bf16),        # conv2 fused operand
        ],
        compiler_params=pltpu.CompilerParams(
            dimension_semantics=("parallel",)),
    )(x2d, mask, W1, B1, W2, B2, WL, BL)

    return out[:B, :S]                                             # (B, S)


# --------------------------- plain-JAX reference ---------------------------
def reference(token_ids, params):
    HI = jax.lax.Precision.HIGHEST
    emb = params["embedding"][token_ids]
    B, T, D = emb.shape
    L = T + 2

    def conv(xp, w, b):
        acc = 0.0
        for n in range(w.shape[0]):
            acc = acc + jnp.einsum("bld,dc->blc", xp[:, n:n + L], w[n],
                                   precision=HI)
        return _leaky(acc + b[None, :, :])

    x1p = jnp.pad(emb, ((0, 0), (1, 1), (0, 0)))
    x2p = jnp.pad(emb, ((0, 0), (1, 2), (0, 0)))
    x3p = jnp.pad(emb, ((0, 0), (2, 2), (0, 0)))
    h1 = conv(x1p, params["w11"], params["b11"])
    h2 = conv(x2p, params["w12"], params["b12"])
    h3 = conv(x3p, params["w13"], params["b13"])
    h2p = jnp.pad(h2, ((0, 0), (0, 1), (0, 0)))
    h3p = jnp.pad(h3, ((0, 0), (1, 1), (0, 0)))
    g1 = conv(h1, params["w21"], params["b21"])
    g2 = conv(h2p, params["w22"], params["b22"])
    g3 = conv(h3p, params["w23"], params["b23"])
    feat = jnp.concatenate(
        [g1.max(axis=1), g2.max(axis=1), g3.max(axis=1)], axis=1)   # (B, 768)
    y = _leaky(jnp.dot(feat, params["wl"], precision=HI) + params["bl"])
    nrm = jnp.sqrt(jnp.sum(y * y, axis=1, keepdims=True))
    return y / jnp.maximum(nrm, EPS)


# --------------------------- deterministic params ---------------------------
def init_params(key, vocab_len, wordvec_dim, sentvec_dim):
    ks = jax.random.split(key, 15)

    def nrm(k, shape, scale=0.1):
        return scale * jax.random.normal(k, shape, dtype=jnp.float32)

    emb = nrm(ks[0], (vocab_len, wordvec_dim))
    emb = emb.at[0].set(0.0)   # Embedding(padding_idx=0)
    return dict(
        embedding=emb,
        w11=nrm(ks[1], (1, wordvec_dim, 128)), b11=nrm(ks[2], (1, 128)),
        w12=nrm(ks[3], (2, wordvec_dim, 128)), b12=nrm(ks[4], (1, 128)),
        w13=nrm(ks[5], (3, wordvec_dim, 128)), b13=nrm(ks[6], (1, 128)),
        w21=nrm(ks[7], (1, 128, 256)), b21=nrm(ks[8], (1, 256)),
        w22=nrm(ks[9], (2, 128, 256)), b22=nrm(ks[10], (1, 256)),
        w23=nrm(ks[11], (3, 128, 256)), b23=nrm(ks[12], (1, 256)),
        wl=nrm(ks[13], (768, sentvec_dim)), bl=nrm(ks[14], (1, sentvec_dim)),
    )


if __name__ == "__main__":
    VOCAB_LEN, WORDVEC_DIM, SENTVEC_DIM = 50, 32, 16
    B, T = 2, 8

    key = jax.random.PRNGKey(0)
    pkey, dkey = jax.random.split(key)
    params = init_params(pkey, VOCAB_LEN, WORDVEC_DIM, SENTVEC_DIM)

    # Simulated output of pad_sequence(batch_first=True, padding_value=0)
    token_ids = jax.random.randint(dkey, (B, T), 0, VOCAB_LEN)
    token_ids = token_ids.at[1, 6:].set(0)     # second sequence is shorter

    out = max_over_time_cnn(token_ids, params)
    jax.block_until_ready(out)

    ref = reference(token_ids, params)
    assert out.shape == (B, SENTVEC_DIM)
    max_err = float(jnp.max(jnp.abs(out - ref)))
    assert jnp.allclose(out, ref, atol=2e-2, rtol=2e-2), max_err

    print("KERNEL_OK")
</pallas_src>

<mosaic_0001>
module attributes {stable_mosaic.version = 11 : i64} {
  func.func @_mot_cnn_kernel(%arg0: i32, %arg1: memref<128x32xbf16, #tpu.memory_space<vmem>>, %arg2: memref<128x1xf32, #tpu.memory_space<vmem>>, %arg3: memref<3x32x384xbf16, #tpu.memory_space<vmem>>, %arg4: memref<1x384xf32, #tpu.memory_space<vmem>>, %arg5: memref<768x768xbf16, #tpu.memory_space<vmem>>, %arg6: memref<1x768xf32, #tpu.memory_space<vmem>>, %arg7: memref<768x128xbf16, #tpu.memory_space<vmem>>, %arg8: memref<1x128xf32, #tpu.memory_space<vmem>>, %arg9: memref<8x128xf32, #tpu.memory_space<vmem>>, %arg10: memref<136x32xbf16, #tpu.memory_space<vmem>>, %arg11: memref<144x384xf32, #tpu.memory_space<vmem>>, %arg12: memref<128x768xbf16, #tpu.memory_space<vmem>>) attributes {dimension_semantics = [#tpu.dimension_semantics<parallel>], iteration_bounds = array<i64: 1>, scalar_prefetch = 0 : i64, scratch_operands = 3 : i64, tpu.core_type = #tpu.core_type<tc>, window_params = [{transform_indices = @transform_0, window_bounds = array<i64: 128, 32>}, {transform_indices = @transform_1, window_bounds = array<i64: 128, 1>}, {pipeline_mode = #tpu.pipeline_mode<synchronous>, transform_indices = @transform_2, window_bounds = array<i64: 3, 32, 384>}, {pipeline_mode = #tpu.pipeline_mode<synchronous>, transform_indices = @transform_3, window_bounds = array<i64: 1, 384>}, {pipeline_mode = #tpu.pipeline_mode<synchronous>, transform_indices = @transform_4, window_bounds = array<i64: 768, 768>}, {pipeline_mode = #tpu.pipeline_mode<synchronous>, transform_indices = @transform_5, window_bounds = array<i64: 1, 768>}, {pipeline_mode = #tpu.pipeline_mode<synchronous>, transform_indices = @transform_6, window_bounds = array<i64: 768, 128>}, {pipeline_mode = #tpu.pipeline_mode<synchronous>, transform_indices = @transform_7, window_bounds = array<i64: 1, 128>}, {transform_indices = @transform_8, window_bounds = array<i64: 8, 128>}]} {
    %c0 = arith.constant 0 : index
    %c0_0 = arith.constant 0 : index
    %0 = vector.load %arg2[%c0, %c0_0] : memref<128x1xf32, #tpu.memory_space<vmem>>, vector<128x1xf32>
    %cst = arith.constant 5.000000e-01 : f32
    %1 = vector.broadcast %cst : f32 to vector<128x1xf32>
    %2 = arith.cmpf ogt, %0, %1 : vector<128x1xf32>
    %c0_1 = arith.constant 0 : index
    %c0_2 = arith.constant 0 : index
    %3 = vector.load %arg1[%c0_1, %c0_2] : memref<128x32xbf16, #tpu.memory_space<vmem>>, vector<128x32xbf16>
    %c0_3 = arith.constant 0 : index
    %c0_4 = arith.constant 0 : index
    %4 = vector.load %arg10[%c0_3, %c0_4] : memref<136x32xbf16, #tpu.memory_space<vmem>>, vector<128x32xbf16>
    tpu.vector_store %arg10[%c0_3, %c0_4], %3 {strides = array<i32>} : memref<136x32xbf16, #tpu.memory_space<vmem>>, vector<128x32xbf16>,
    %cst_5 = arith.constant 0.000000e+00 : bf16
    %5 = vector.broadcast %cst_5 : bf16 to vector<8x32xbf16>
    %c128 = arith.constant 128 : index
    %c0_6 = arith.constant 0 : index
    %6 = vector.load %arg10[%c128, %c0_6] : memref<136x32xbf16, #tpu.memory_space<vmem>>, vector<8x32xbf16>
    tpu.vector_store %arg10[%c128, %c0_6], %5 {strides = array<i32>} : memref<136x32xbf16, #tpu.memory_space<vmem>>, vector<8x32xbf16>,
    %c0_7 = arith.constant 0 : index
    %c0_8 = arith.constant 0 : index
    %7 = vector.load %arg1[%c0_7, %c0_8] : memref<128x32xbf16, #tpu.memory_space<vmem>>, vector<128x32xbf16>
    %c1 = arith.constant 1 : index
    %c0_9 = arith.constant 0 : index
    %8 = vector.load %arg10[%c1, %c0_9] : memref<136x32xbf16, #tpu.memory_space<vmem>>, vector<128x32xbf16>
    %c2 = arith.constant 2 : index
    %c0_10 = arith.constant 0 : index
    %9 = vector.load %arg10[%c2, %c0_10] : memref<136x32xbf16, #tpu.memory_space<vmem>>, vector<128x32xbf16>
    %c0_11 = arith.constant 0 : index
    %c0_12 = arith.constant 0 : index
    %c0_13 = arith.constant 0 : index
    %10 = vector.load %arg3[%c0_11, %c0_12, %c0_13] : memref<3x32x384xbf16, #tpu.memory_space<vmem>>, vector<1x32x384xbf16>
    %11 = vector.shape_cast %10 : vector<1x32x384xbf16> to vector<32x384xbf16>
    %cst_14 = arith.constant dense<0.000000e+00> : vector<128x384xf32>
    %12 = tpu.matmul %7, %11, %cst_14 {dimension_numbers = #tpu.dot_dimension_numbers<[1], [0], [0], [1], [0, 0, 1, 1], [], []>} : vector<128x32xbf16>, vector<32x384xbf16>, vector<128x384xf32> -> vector<128x384xf32>
    %c1_15 = arith.constant 1 : index
    %c0_16 = arith.constant 0 : index
    %c0_17 = arith.constant 0 : index
    %13 = vector.load %arg3[%c1_15, %c0_16, %c0_17] : memref<3x32x384xbf16, #tpu.memory_space<vmem>>, vector<1x32x384xbf16>
    %14 = vector.shape_cast %13 : vector<1x32x384xbf16> to vector<32x384xbf16>
    %cst_18 = arith.constant dense<0.000000e+00> : vector<128x384xf32>
    %15 = tpu.matmul %8, %14, %cst_18 {dimension_numbers = #tpu.dot_dimension_numbers<[1], [0], [0], [1], [0, 0, 1, 1], [], []>} : vector<128x32xbf16>, vector<32x384xbf16>, vector<128x384xf32> -> vector<128x384xf32>
    %16 = arith.addf %12, %15 : vector<128x384xf32>
    %c2_19 = arith.constant 2 : index
    %c0_20 = arith.constant 0 : index
    %c0_21 = arith.constant 0 : index
    %17 = vector.load %arg3[%c2_19, %c0_20, %c0_21] : memref<3x32x384xbf16, #tpu.memory_space<vmem>>, vector<1x32x384xbf16>
    %18 = vector.shape_cast %17 : vector<1x32x384xbf16> to vector<32x384xbf16>
    %cst_22 = arith.constant dense<0.000000e+00> : vector<128x384xf32>
    %19 = tpu.matmul %9, %18, %cst_22 {dimension_numbers = #tpu.dot_dimension_numbers<[1], [0], [0], [1], [0, 0, 1, 1], [], []>} : vector<128x32xbf16>, vector<32x384xbf16>, vector<128x384xf32> -> vector<128x384xf32>
    %20 = arith.addf %16, %19 : vector<128x384xf32>
    %c0_23 = arith.constant 0 : index
    %c0_24 = arith.constant 0 : index
    %21 = vector.load %arg4[%c0_23, %c0_24] : memref<1x384xf32, #tpu.memory_space<vmem>>, vector<1x384xf32>
    %22 = vector.broadcast %21 : vector<1x384xf32> to vector<128x384xf32>
    %23 = arith.addf %20, %22 : vector<128x384xf32>
    %cst_25 = arith.constant 0.000000e+00 : f32
    %24 = vector.broadcast %cst_25 : f32 to vector<128x384xf32>
    %25 = arith.cmpf oge, %23, %24 : vector<128x384xf32>
    %cst_26 = arith.constant 0.00999999977 : f32
    %26 = vector.broadcast %cst_26 : f32 to vector<128x384xf32>
    %27 = arith.mulf %26, %23 : vector<128x384xf32>
    %28 = arith.select %25, %23, %27 : vector<128x384xi1>, vector<128x384xf32>
    %cst_27 = arith.constant 0.000000e+00 : f32
    %29 = vector.shape_cast %2 : vector<128x1xi1> to vector<128x1xi1>
    %30 = vector.broadcast %29 : vector<128x1xi1> to vector<128x384xi1>
    %31 = vector.broadcast %cst_27 : f32 to vector<128x384xf32>
    %32 = arith.select %30, %28, %31 : vector<128x384xi1>, vector<128x384xf32>
    %cst_28 = arith.constant 0.000000e+00 : f32
    %33 = vector.broadcast %cst_28 : f32 to vector<8x384xf32>
    %c0_29 = arith.constant 0 : index
    %c0_30 = arith.constant 0 : index
    %34 = vector.load %arg11[%c0_29, %c0_30] : memref<144x384xf32, #tpu.memory_space<vmem>>, vector<8x384xf32>
    tpu.vector_store %arg11[%c0_29, %c0_30], %33 {strides = array<i32>} : memref<144x384xf32, #tpu.memory_space<vmem>>, vector<8x384xf32>,
    %c8 = arith.constant 8 : index
    %c0_31 = arith.constant 0 : index
    %35 = vector.load %arg11[%c8, %c0_31] : memref<144x384xf32, #tpu.memory_space<vmem>>, vector<128x384xf32>
    tpu.vector_store %arg11[%c8, %c0_31], %32 {strides = array<i32>} : memref<144x384xf32, #tpu.memory_space<vmem>>, vector<128x384xf32>,
    %cst_32 = arith.constant 0.000000e+00 : f32
    %36 = vector.broadcast %cst_32 : f32 to vector<8x384xf32>
    %c136 = arith.constant 136 : index
    %c0_33 = arith.constant 0 : index
    %37 = vector.load %arg11[%c136, %c0_33] : memref<144x384xf32, #tpu.memory_space<vmem>>, vector<8x384xf32>
    tpu.vector_store %arg11[%c136, %c0_33], %36 {strides = array<i32>} : memref<144x384xf32, #tpu.memory_space<vmem>>, vector<8x384xf32>,
    %38 = vector.extract_strided_slice %32 {offsets = [0, 0], sizes = [128, 256], strides = [1, 1]} : vector<128x384xf32> to vector<128x256xf32>
    %39 = arith.truncf %38 : vector<128x256xf32> to vector<128x256xbf16>
    %c0_34 = arith.constant 0 : index
    %c0_35 = arith.constant 0 : index
    %40 = vector.load %arg12[%c0_34, %c0_35] : memref<128x768xbf16, #tpu.memory_space<vmem>>, vector<128x256xbf16>
    tpu.vector_store %arg12[%c0_34, %c0_35], %39 {strides = array<i32>} : memref<128x768xbf16, #tpu.memory_space<vmem>>, vector<128x256xbf16>,
    %c9 = arith.constant 9 : index
    %c128_36 = arith.constant 128 : index
    %41 = vector.load %arg11[%c9, %c128_36] : memref<144x384xf32, #tpu.memory_space<vmem>>, vector<128x128xf32>
    %42 = arith.truncf %41 : vector<128x128xf32> to vector<128x128xbf16>
    %c0_37 = arith.constant 0 : index
    %c256 = arith.constant 256 : index
    %43 = vector.load %arg12[%c0_37, %c256] : memref<128x768xbf16, #tpu.memory_space<vmem>>, vector<128x128xbf16>
    tpu.vector_store %arg12[%c0_37, %c256], %42 {strides = array<i32>} : memref<128x768xbf16, #tpu.memory_space<vmem>>, vector<128x128xbf16>,
    %c7 = arith.constant 7 : index
    %c256_38 = arith.constant 256 : index
    %44 = vector.load %arg11[%c7, %c256_38] : memref<144x384xf32, #tpu.memory_space<vmem>>, vector<128x128xf32>
    %45 = arith.truncf %44 : vector<128x128xf32> to vector<128x128xbf16>
    %c0_39 = arith.constant 0 : index
    %c384 = arith.constant 384 : index
    %46 = vector.load %arg12[%c0_39, %c384] : memref<128x768xbf16, #tpu.memory_space<vmem>>, vector<128x128xbf16>
    tpu.vector_store %arg12[%c0_39, %c384], %45 {strides = array<i32>} : memref<128x768xbf16, #tpu.memory_space<vmem>>, vector<128x128xbf16>,
    %47 = vector.extract_strided_slice %32 {offsets = [0, 256], sizes = [128, 128], strides = [1, 1]} : vector<128x384xf32> to vector<128x128xf32>
    %48 = arith.truncf %47 : vector<128x128xf32> to vector<128x128xbf16>
    %c0_40 = arith.constant 0 : index
    %c512 = arith.constant 512 : index
    %49 = vector.load %arg12[%c0_40, %c512] : memref<128x768xbf16, #tpu.memory_space<vmem>>, vector<128x128xbf16>
    tpu.vector_store %arg12[%c0_40, %c512], %48 {strides = array<i32>} : memref<128x768xbf16, #tpu.memory_space<vmem>>, vector<128x128xbf16>,
    %c9_41 = arith.constant 9 : index
    %c256_42 = arith.constant 256 : index
    %50 = vector.load %arg11[%c9_41, %c256_42] : memref<144x384xf32, #tpu.memory_space<vmem>>, vector<128x128xf32>
    %51 = arith.truncf %50 : vector<128x128xf32> to vector<128x128xbf16>
    %c0_43 = arith.constant 0 : index
    %c640 = arith.constant 640 : index
    %52 = vector.load %arg12[%c0_43, %c640] : memref<128x768xbf16, #tpu.memory_space<vmem>>, vector<128x128xbf16>
    tpu.vector_store %arg12[%c0_43, %c640], %51 {strides = array<i32>} : memref<128x768xbf16, #tpu.memory_space<vmem>>, vector<128x128xbf16>,
    %c0_44 = arith.constant 0 : index
    %c0_45 = arith.constant 0 : index
    %53 = vector.load %arg12[%c0_44, %c0_45] : memref<128x768xbf16, #tpu.memory_space<vmem>>, vector<128x768xbf16>
    %c0_46 = arith.constant 0 : index
    %c0_47 = arith.constant 0 : index
    %54 = vector.load %arg5[%c0_46, %c0_47] : memref<768x768xbf16, #tpu.memory_space<vmem>>, vector<768x768xbf16>
    %cst_48 = arith.constant dense<0.000000e+00> : vector<128x768xf32>
    %55 = tpu.matmul %53, %54, %cst_48 {dimension_numbers = #tpu.dot_dimension_numbers<[1], [0], [0], [1], [0, 0, 1, 1], [], []>} : vector<128x768xbf16>, vector<768x768xbf16>, vector<128x768xf32> -> vector<128x768xf32>
    %c0_49 = arith.constant 0 : index
    %c0_50 = arith.constant 0 : index
    %56 = vector.load %arg6[%c0_49, %c0_50] : memref<1x768xf32, #tpu.memory_space<vmem>>, vector<1x768xf32>
    %57 = vector.broadcast %56 : vector<1x768xf32> to vector<128x768xf32>
    %58 = arith.addf %55, %57 : vector<128x768xf32>
    %cst_51 = arith.constant 0.000000e+00 : f32
    %59 = vector.broadcast %cst_51 : f32 to vector<128x768xf32>
    %60 = arith.cmpf oge, %58, %59 : vector<128x768xf32>
    %cst_52 = arith.constant 0.00999999977 : f32
    %61 = vector.broadcast %cst_52 : f32 to vector<128x768xf32>
    %62 = arith.mulf %61, %58 : vector<128x768xf32>
    %63 = arith.select %60, %58, %62 : vector<128x768xi1>, vector<128x768xf32>
    %cst_53 = arith.constant -1.000000e+30 : f32
    %64 = vector.shape_cast %2 : vector<128x1xi1> to vector<128x1xi1>
    %65 = vector.broadcast %64 : vector<128x1xi1> to vector<128x768xi1>
    %66 = vector.broadcast %cst_53 : f32 to vector<128x768xf32>
    %67 = arith.select %65, %63, %66 : vector<128x768xi1>, vector<128x768xf32>
    %68 = vector.shape_cast %67 : vector<128x768xf32> to vector<8x16x768xf32>
    %cst_54 = arith.constant dense<0xFF800000> : vector<8x768xf32>
    %69 = vector.multi_reduction <maximumf>, %68, %cst_54 [1] : vector<8x16x768xf32> to vector<8x768xf32>
    %70 = arith.truncf %69 : vector<8x768xf32> to vector<8x768xbf16>
    %c0_55 = arith.constant 0 : index
    %c0_56 = arith.constant 0 : index
    %71 = vector.load %arg7[%c0_55, %c0_56] : memref<768x128xbf16, #tpu.memory_space<vmem>>, vector<768x128xbf16>
    %cst_57 = arith.constant dense<0.000000e+00> : vector<8x128xf32>
    %72 = tpu.matmul %70, %71, %cst_57 {dimension_numbers = #tpu.dot_dimension_numbers<[1], [0], [0], [1], [0, 0, 1, 1], [], []>} : vector<8x768xbf16>, vector<768x128xbf16>, vector<8x128xf32> -> vector<8x128xf32>
    %c0_58 = arith.constant 0 : index
    %c0_59 = arith.constant 0 : index
    %73 = vector.load %arg8[%c0_58, %c0_59] : memref<1x128xf32, #tpu.memory_space<vmem>>, vector<1x128xf32>
    %74 = vector.broadcast %73 : vector<1x128xf32> to vector<8x128xf32>
    %75 = arith.addf %72, %74 : vector<8x128xf32>
    %cst_60 = arith.constant 0.000000e+00 : f32
    %76 = vector.broadcast %cst_60 : f32 to vector<8x128xf32>
    %77 = arith.cmpf oge, %75, %76 : vector<8x128xf32>
    %cst_61 = arith.constant 0.00999999977 : f32
    %78 = vector.broadcast %cst_61 : f32 to vector<8x128xf32>
    %79 = arith.mulf %78, %75 : vector<8x128xf32>
    %80 = arith.select %77, %75, %79 : vector<8x128xi1>, vector<8x128xf32>
    %81 = arith.mulf %80, %80 : vector<8x128xf32>
    %cst_62 = arith.constant dense<0.000000e+00> : vector<8xf32>
    %82 = vector.multi_reduction <add>, %81, %cst_62 [1] : vector<8x128xf32> to vector<8xf32>
    %83 = vector.shape_cast %82 : vector<8xf32> to vector<8x1xf32>
    %cst_63 = arith.constant 1.000000e-24 : f32
    %84 = vector.broadcast %cst_63 : f32 to vector<8x1xf32>
    %85 = arith.maximumf %83, %84 : vector<8x1xf32>
    %86 = math.rsqrt %85 : vector<8x1xf32>
    %87 = vector.broadcast %86 : vector<8x1xf32> to vector<8x128xf32>
    %88 = arith.mulf %80, %87 : vector<8x128xf32>
    %c0_64 = arith.constant 0 : index
    %c0_65 = arith.constant 0 : index
    %89 = vector.load %arg9[%c0_64, %c0_65] : memref<8x128xf32, #tpu.memory_space<vmem>>, vector<8x128xf32>
    tpu.vector_store %arg9[%c0_64, %c0_65], %88 {strides = array<i32>} : memref<8x128xf32, #tpu.memory_space<vmem>>, vector<8x128xf32>,
    return
  }
  func.func @transform_0(%arg0: i32) -> (i32, i32) {
    %c0_i32 = arith.constant 0 : i32
    %c0_i32_0 = arith.constant 0 : i32
    return %arg0, %c0_i32 : i32, i32
  }
  func.func @transform_1(%arg0: i32) -> (i32, i32) {
    %c0_i32 = arith.constant 0 : i32
    %c0_i32_0 = arith.constant 0 : i32
    return %arg0, %c0_i32 : i32, i32
  }
  func.func @transform_2(%arg0: i32) -> (i32, i32, i32) {
    %c0_i32 = arith.constant 0 : i32
    %c0_i32_0 = arith.constant 0 : i32
    %c0_i32_1 = arith.constant 0 : i32
    %c0_i32_2 = arith.constant 0 : i32
    return %c0_i32, %c0_i32_0, %c0_i32_1 : i32, i32, i32
  }
  func.func @transform_3(%arg0: i32) -> (i32, i32) {
    %c0_i32 = arith.constant 0 : i32
    %c0_i32_0 = arith.constant 0 : i32
    %c0_i32_1 = arith.constant 0 : i32
    return %c0_i32, %c0_i32_0 : i32, i32
  }
  func.func @transform_4(%arg0: i32) -> (i32, i32) {
    %c0_i32 = arith.constant 0 : i32
    %c0_i32_0 = arith.constant 0 : i32
    %c0_i32_1 = arith.constant 0 : i32
    return %c0_i32, %c0_i32_0 : i32, i32
  }
  func.func @transform_5(%arg0: i32) -> (i32, i32) {
    %c0_i32 = arith.constant 0 : i32
    %c0_i32_0 = arith.constant 0 : i32
    %c0_i32_1 = arith.constant 0 : i32
    return %c0_i32, %c0_i32_0 : i32, i32
  }
  func.func @transform_6(%arg0: i32) -> (i32, i32) {
    %c0_i32 = arith.constant 0 : i32
    %c0_i32_0 = arith.constant 0 : i32
    %c0_i32_1 = arith.constant 0 : i32
    return %c0_i32, %c0_i32_0 : i32, i32
  }
  func.func @transform_7(%arg0: i32) -> (i32, i32) {
    %c0_i32 = arith.constant 0 : i32
    %c0_i32_0 = arith.constant 0 : i32
    %c0_i32_1 = arith.constant 0 : i32
    return %c0_i32, %c0_i32_0 : i32, i32
  }
  func.func @transform_8(%arg0: i32) -> (i32, i32) {
    %c0_i32 = arith.constant 0 : i32
    %c0_i32_0 = arith.constant 0 : i32
    return %arg0, %c0_i32 : i32, i32
  }
}

</mosaic_0001>

<llo_original>
// kernel: tpu_custom_call.1
$region0: #{tpu_custom_call.1}
  #allocation0 [shape = 'u32[]', space=smem, size = 0x4, offset = 0x4, fixed_abs, tag = 'smem constant byte address 0x4 - core index']
  #allocation1 [shape = 'u32[144,128]{1,0:T(1,128)}', space=vmem, size = 0x12000, scoped, tag = 'internal scratch']
  #allocation2 [shape = 'bf16[136,32]{1,0:T(8,128)(2,1)}', space=vmem, size = 0x8800, scoped, tag = 'scratch operand']
  #allocation3 [shape = 'f32[144,384]{1,0:T(8,128)}', space=vmem, size = 0x36000, scoped, tag = 'scratch operand']
  #allocation4 [shape = 'bf16[128,768]{1,0:T(8,128)(2,1)}', space=vmem, size = 0x30000, scoped, tag = 'scratch operand']
  %s0 = inlined_call_operand.vmem [shape: bf16[128,32], index: 0, kind: input, shape index: {}]
  %s1 = inlined_call_operand.vmem [shape: f32[128,1], index: 1, kind: input, shape index: {}]
  %s2 = inlined_call_operand.hbm [shape: bf16[3,32,384], index: 2, kind: input, shape index: {}]
  %s3 = inlined_call_operand.hbm [shape: f32[1,384], index: 3, kind: input, shape index: {}]
  %s4 = inlined_call_operand.hbm [shape: bf16[768,768], index: 4, kind: input, shape index: {}]
  %s5 = inlined_call_operand.hbm [shape: f32[1,768], index: 5, kind: input, shape index: {}]
  %s6 = inlined_call_operand.hbm [shape: bf16[768,128], index: 6, kind: input, shape index: {}]
  %s7 = inlined_call_operand.hbm [shape: f32[1,128], index: 7, kind: input, shape index: {}]
  %s8 = inlined_call_operand.hbm [shape: f32[8,128], index: 8, kind: output, shape index: {}]
  %s9 = sld [smem:[#allocation0]]
  $region66: #{tpu_custom_call.1} parent=0
    _
  %s11 = ssub.s32 1, %s9
  %s12 = scalar_select 0, %s11, %s9
  $region1: #{tpu_custom_call.1} parent=0
    #allocation5 [shape = 'u8[73728]{0}', space=vmem, size = 0x12000, scoped, tag = 'input window, operand 2, single buffered']
    #allocation6 [shape = 's32[1]{0}', space=sflag, size = 0x4, scoped, tag = 'scoped memory for tpu_custom_call.1']
    #allocation7 [shape = 's32[1]{0}', space=sflag, size = 0x4, scoped, tag = 'scoped memory for tpu_custom_call.1']
    #allocation8 [shape = 'u8[1536]{0}', space=vmem, size = 0x800, scoped, tag = 'input window, operand 3, single buffered']
    #allocation9 [shape = 's32[1]{0}', space=sflag, size = 0x4, scoped, tag = 'scoped memory for tpu_custom_call.1']
    #allocation10 [shape = 'u8[1179648]{0}', space=vmem, size = 0x120000, scoped, tag = 'input window, operand 4, single buffered']
    #allocation11 [shape = 'u8[3072]{0}', space=vmem, size = 0xc00, scoped, tag = 'input window, operand 5, single buffered']
    #allocation12 [shape = 's32[1]{0}', space=sflag, size = 0x4, scoped, tag = 'scoped memory for tpu_custom_call.1']
    #allocation13 [shape = 'u8[196608]{0}', space=vmem, size = 0x30000, scoped, tag = 'input window, operand 6, single buffered']
    #allocation14 [shape = 'u8[512]{0}', space=vmem, size = 0x400, scoped, tag = 'input window, operand 7, single buffered']
    #allocation15 [shape = 's32[1]{0}', space=sflag, size = 0x4, scoped, tag = 'scoped memory for tpu_custom_call.1']
    #allocation16 [shape = 'u8[4096]{0}', space=vmem, size = 0x1000, scoped, tag = 'output window, operand 0, single buffered']
    %13 = vsyncpa [#allocation6], 0
    %14 = vsyncpa [#allocation9], 0
    %15 = vsyncpa [#allocation12], 0
    %16 = vsyncpa [#allocation15], 0
    %17 = vsyncpa [#allocation7], 0
    // Predicated region
    $region2: #{tpu_custom_call.1} parent=1 // pred_check
      _
    $region3: #{tpu_custom_call.1} parent=1 // pred_check_branch
      %19 = sbr.rel (0) target = $region5
    $region4: #{tpu_custom_call.1} parent=1 // pred_region
      _
    $region5: #{tpu_custom_call.1} parent=1 // pred_fallthru
      _
    // Predicated region
    $region6: #{tpu_custom_call.1} parent=1 // pred_check
      _
    $region7: #{tpu_custom_call.1} parent=1 // pred_check_branch
      %21 = sbr.rel (0) target = $region9
    $region8: #{tpu_custom_call.1} parent=1 // pred_region
      _
    $region9: #{tpu_custom_call.1} parent=1 // pred_fallthru
      _
    // Predicated region
    $region10: #{tpu_custom_call.1} parent=1 // pred_check
      _
    $region11: #{tpu_custom_call.1} parent=1 // pred_check_branch
      %23 = sbr.rel (0) target = $region13
    $region12: #{tpu_custom_call.1} parent=1 // pred_region
      %s25 = ssub.s32 2304, 2304
      %26 = vsyncadd [#allocation6], %s25
      %s27 = sshll.u32 [#allocation5], 4
      %s28 = int_to_ptr.vmem [resolvable:$true] %s27
      %33 = dma.hbm_to_vmem [thread:$0]  %s2, 2304, %s28, [#allocation6], 192, 192, 12
    $region13: #{tpu_custom_call.1} parent=1 // pred_fallthru
      _
    // Predicated region
    $region14: #{tpu_custom_call.1} parent=1 // pred_check
      _
    $region15: #{tpu_custom_call.1} parent=1 // pred_check_branch
      %35 = sbr.rel (0) target = $region17
    $region16: #{tpu_custom_call.1} parent=1 // pred_region
      %s37 = ssub.s32 48, 48
      %38 = vsyncadd [#allocation9], %s37
      %s40 = sshll.u32 [#allocation8], 4
      %s41 = int_to_ptr.vmem [resolvable:$true] %s40
      %43 = dma.hbm_to_vmem [thread:$0]  %s3, 48, %s41, [#allocation9]
    $region17: #{tpu_custom_call.1} parent=1 // pred_fallthru
      _
    // Predicated region
    $region18: #{tpu_custom_call.1} parent=1 // pred_check
      _
    $region19: #{tpu_custom_call.1} parent=1 // pred_check_branch
      %45 = sbr.rel (0) target = $region21
    $region20: #{tpu_custom_call.1} parent=1 // pred_region
      %s47 = ssub.s32 36864, 36864
      %48 = vsyncadd [#allocation9], %s47
      %s49 = sshll.u32 [#allocation10], 4
      %s50 = int_to_ptr.vmem [resolvable:$true] %s49
      %55 = dma.hbm_to_vmem [thread:$0]  %s4, 36864, %s50, [#allocation9], 384, 384, 24
    $region21: #{tpu_custom_call.1} parent=1 // pred_fallthru
      _
    // Predicated region
    $region22: #{tpu_custom_call.1} parent=1 // pred_check
      _
    $region23: #{tpu_custom_call.1} parent=1 // pred_check_branch
      %57 = sbr.rel (0) target = $region25
    $region24: #{tpu_custom_call.1} parent=1 // pred_region
      %s59 = ssub.s32 96, 96
      %60 = vsyncadd [#allocation12], %s59
      %s62 = sshll.u32 [#allocation11], 4
      %s63 = int_to_ptr.vmem [resolvable:$true] %s62
      %65 = dma.hbm_to_vmem [thread:$0]  %s5, 96, %s63, [#allocation12]
    $region25: #{tpu_custom_call.1} parent=1 // pred_fallthru
      _
    // Predicated region
    $region26: #{tpu_custom_call.1} parent=1 // pred_check
      _
    $region27: #{tpu_custom_call.1} parent=1 // pred_check_branch
      %67 = sbr.rel (0) target = $region29
    $region28: #{tpu_custom_call.1} parent=1 // pred_region
      %s69 = ssub.s32 6144, 6144
      %70 = vsyncadd [#allocation12], %s69
      %s71 = sshll.u32 [#allocation13], 4
      %s72 = int_to_ptr.vmem [resolvable:$true] %s71
      %77 = dma.hbm_to_vmem [thread:$0]  %s6, 6144, %s72, [#allocation12], 64, 64, 4
    $region29: #{tpu_custom_call.1} parent=1 // pred_fallthru
      _
    // Predicated region
    $region30: #{tpu_custom_call.1} parent=1 // pred_check
      _
    $region31: #{tpu_custom_call.1} parent=1 // pred_check_branch
      %79 = sbr.rel (0) target = $region33
    $region32: #{tpu_custom_call.1} parent=1 // pred_region
      %s81 = ssub.s32 16, 16
      %82 = vsyncadd [#allocation15], %s81
      %s84 = sshll.u32 [#allocation14], 4
      %s85 = int_to_ptr.vmem [resolvable:$true] %s84
      %87 = dma.hbm_to_vmem [thread:$0]  %s7, 16, %s85, [#allocation15]
    $region33: #{tpu_custom_call.1} parent=1 // pred_fallthru
      _
    // Predicated region
    $region34: #{tpu_custom_call.1} parent=1 // pred_check
      _
    $region35: #{tpu_custom_call.1} parent=1 // pred_check_branch
      %89 = sbr.rel (0) target = $region37
    $region36: #{tpu_custom_call.1} parent=1 // pred_region
      %90 = dma.done [#allocation6], 2304
    $region37: #{tpu_custom_call.1} parent=1 // pred_fallthru
      _
    // Predicated region
    $region38: #{tpu_custom_call.1} parent=1 // pred_check
      _
    $region39: #{tpu_custom_call.1} parent=1 // pred_check_branch
      %92 = sbr.rel (0) target = $region41
    $region40: #{tpu_custom_call.1} parent=1 // pred_region
      %93 = dma.done [#allocation9], 48
    $region41: #{tpu_custom_call.1} parent=1 // pred_fallthru
      _
    // Predicated region
    $region42: #{tpu_custom_call.1} parent=1 // pred_check
      _
    $region43: #{tpu_custom_call.1} parent=1 // pred_check_branch
      %95 = sbr.rel (0) target = $region45
    $region44: #{tpu_custom_call.1} parent=1 // pred_region
      %96 = dma.done [#allocation9], 36864
    $region45: #{tpu_custom_call.1} parent=1 // pred_fallthru
      _
    // Predicated region
    $region46: #{tpu_custom_call.1} parent=1 // pred_check
      _
    $region47: #{tpu_custom_call.1} parent=1 // pred_check_branch
      %98 = sbr.rel (0) target = $region49
    $region48: #{tpu_custom_call.1} parent=1 // pred_region
      %99 = dma.done [#allocation12], 96
    $region49: #{tpu_custom_call.1} parent=1 // pred_fallthru
      _
    // Predicated region
    $region50: #{tpu_custom_call.1} parent=1 // pred_check
      _
    $region51: #{tpu_custom_call.1} parent=1 // pred_check_branch
      %101 = sbr.rel (0) target = $region53
    $region52: #{tpu_custom_call.1} parent=1 // pred_region
      %102 = dma.done [#allocation12], 6144
    $region53: #{tpu_custom_call.1} parent=1 // pred_fallthru
      _
    // Predicated region
    $region54: #{tpu_custom_call.1} parent=1 // pred_check
      _
    $region55: #{tpu_custom_call.1} parent=1 // pred_check_branch
      %104 = sbr.rel (0) target = $region57
    $region56: #{tpu_custom_call.1} parent=1 // pred_region
      %105 = dma.done [#allocation15], 16
    $region57: #{tpu_custom_call.1} parent=1 // pred_fallthru
      _
    %v107 = vld [vmem:[%s1] sm:$0xff]
    %v108 = vld [vmem:[%s1 + $0x8] sm:$0xff]
    %v109 = vld [vmem:[%s1 + $0x10] sm:$0xff]
    %v110 = vld [vmem:[%s1 + $0x18] sm:$0xff]
    %v111 = vld [vmem:[%s1 + $0x20] sm:$0xff]
    %v112 = vld [vmem:[%s1 + $0x28] sm:$0xff]
    %v113 = vld [vmem:[%s1 + $0x30] sm:$0xff]
    %v114 = vld [vmem:[%s1 + $0x38] sm:$0xff]
    %v115 = vld [vmem:[%s1 + $0x40] sm:$0xff]
    %v116 = vld [vmem:[%s1 + $0x48] sm:$0xff]
    %v117 = vld [vmem:[%s1 + $0x50] sm:$0xff]
    %v118 = vld [vmem:[%s1 + $0x58] sm:$0xff]
    %v119 = vld [vmem:[%s1 + $0x60] sm:$0xff]
    %v120 = vld [vmem:[%s1 + $0x68] sm:$0xff]
    %v121 = vld [vmem:[%s1 + $0x70] sm:$0xff]
    %v122 = vld [vmem:[%s1 + $0x78] sm:$0xff]
    %vm123 = vcmp.gt.f32.partialorder %v107, 0.5
    %vm124 = vcmp.gt.f32.partialorder %v108, 0.5
    %vm125 = vcmp.gt.f32.partialorder %v109, 0.5
    %vm126 = vcmp.gt.f32.partialorder %v110, 0.5
    %vm127 = vcmp.gt.f32.partialorder %v111, 0.5
    %vm128 = vcmp.gt.f32.partialorder %v112, 0.5
    %vm129 = vcmp.gt.f32.partialorder %v113, 0.5
    %vm130 = vcmp.gt.f32.partialorder %v114, 0.5
    %vm131 = vcmp.gt.f32.partialorder %v115, 0.5
    %vm132 = vcmp.gt.f32.partialorder %v116, 0.5
    %vm133 = vcmp.gt.f32.partialorder %v117, 0.5
    %vm134 = vcmp.gt.f32.partialorder %v118, 0.5
    %vm135 = vcmp.gt.f32.partialorder %v119, 0.5
    %vm136 = vcmp.gt.f32.partialorder %v120, 0.5
    %vm137 = vcmp.gt.f32.partialorder %v121, 0.5
    %vm138 = vcmp.gt.f32.partialorder %v122, 0.5
    %v139 = vld [vmem:[%s0] sm:$0xf]
    %v140 = vld [vmem:[%s0 + $0x4] sm:$0xf]
    %v141 = vld [vmem:[%s0 + $0x8] sm:$0xf]
    %v142 = vld [vmem:[%s0 + $0xc] sm:$0xf]
    %v143 = vld [vmem:[%s0 + $0x10] sm:$0xf]
    %v144 = vld [vmem:[%s0 + $0x14] sm:$0xf]
    %v145 = vld [vmem:[%s0 + $0x18] sm:$0xf]
    %v146 = vld [vmem:[%s0 + $0x1c] sm:$0xf]
    %v147 = vld [vmem:[%s0 + $0x20] sm:$0xf]
    %v148 = vld [vmem:[%s0 + $0x24] sm:$0xf]
    %v149 = vld [vmem:[%s0 + $0x28] sm:$0xf]
    %v150 = vld [vmem:[%s0 + $0x2c] sm:$0xf]
    %v151 = vld [vmem:[%s0 + $0x30] sm:$0xf]
    %v152 = vld [vmem:[%s0 + $0x34] sm:$0xf]
    %v153 = vld [vmem:[%s0 + $0x38] sm:$0xf]
    %v154 = vld [vmem:[%s0 + $0x3c] sm:$0xf]
    %vm155 = vcmask 257024
    %156 = vst.msk [vmem:[#allocation2] sm:$0xf] %vm155, %v139
    %157 = vst.msk [vmem:[#allocation2 + $0x4] sm:$0xf] %vm155, %v140
    %158 = vst.msk [vmem:[#allocation2 + $0x8] sm:$0xf] %vm155, %v141
    %159 = vst.msk [vmem:[#allocation2 + $0xc] sm:$0xf] %vm155, %v142
    %160 = vst.msk [vmem:[#allocation2 + $0x10] sm:$0xf] %vm155, %v143
    %161 = vst.msk [vmem:[#allocation2 + $0x14] sm:$0xf] %vm155, %v144
    %162 = vst.msk [vmem:[#allocation2 + $0x18] sm:$0xf] %vm155, %v145
    %163 = vst.msk [vmem:[#allocation2 + $0x1c] sm:$0xf] %vm155, %v146
    %164 = vst.msk [vmem:[#allocation2 + $0x20] sm:$0xf] %vm155, %v147
    %165 = vst.msk [vmem:[#allocation2 + $0x24] sm:$0xf] %vm155, %v148
    %166 = vst.msk [vmem:[#allocation2 + $0x28] sm:$0xf] %vm155, %v149
    %167 = vst.msk [vmem:[#allocation2 + $0x2c] sm:$0xf] %vm155, %v150
    %168 = vst.msk [vmem:[#allocation2 + $0x30] sm:$0xf] %vm155, %v151
    %169 = vst.msk [vmem:[#allocation2 + $0x34] sm:$0xf] %vm155, %v152
    %170 = vst.msk [vmem:[#allocation2 + $0x38] sm:$0xf] %vm155, %v153
    %171 = vst.msk [vmem:[#allocation2 + $0x3c] sm:$0xf] %vm155, %v154
    %172 = vst.msk [vmem:[#allocation2 + $0x40] sm:$0xf] %vm155, 0
    %v173 = vld [vmem:[%s0] sm:$0xf]
    %v174 = vld [vmem:[%s0 + $0x4] sm:$0xf]
    %v175 = vld [vmem:[%s0 + $0x8] sm:$0xf]
    %v176 = vld [vmem:[%s0 + $0xc] sm:$0xf]
    %v177 = vld [vmem:[%s0 + $0x10] sm:$0xf]
    %v178 = vld [vmem:[%s0 + $0x14] sm:$0xf]
    %v179 = vld [vmem:[%s0 + $0x18] sm:$0xf]
    %v180 = vld [vmem:[%s0 + $0x1c] sm:$0xf]
    %v181 = vld [vmem:[%s0 + $0x20] sm:$0xf]
    %v182 = vld [vmem:[%s0 + $0x24] sm:$0xf]
    %v183 = vld [vmem:[%s0 + $0x28] sm:$0xf]
    %v184 = vld [vmem:[%s0 + $0x2c] sm:$0xf]
    %v185 = vld [vmem:[%s0 + $0x30] sm:$0xf]
    %v186 = vld [vmem:[%s0 + $0x34] sm:$0xf]
    %v187 = vld [vmem:[%s0 + $0x38] sm:$0xf]
    %v188 = vld [vmem:[%s0 + $0x3c] sm:$0xf]
    %v189 = vld [vmem:[#allocation2] sm:$0xf]
    %v190 = vld [vmem:[#allocation2 + $0x4] sm:$0xf]
    %v191 = vld [vmem:[#allocation2 + $0x8] sm:$0xf]
    %v192 = vld [vmem:[#allocation2 + $0xc] sm:$0xf]
    %v193 = vld [vmem:[#allocation2 + $0x10] sm:$0xf]
    %v194 = vld [vmem:[#allocation2 + $0x14] sm:$0xf]
    %v195 = vld [vmem:[#allocation2 + $0x18] sm:$0xf]
    %v196 = vld [vmem:[#allocation2 + $0x1c] sm:$0xf]
    %v197 = vld [vmem:[#allocation2 + $0x20] sm:$0xf]
    %v198 = vld [vmem:[#allocation2 + $0x24] sm:$0xf]
    %v199 = vld [vmem:[#allocation2 + $0x28] sm:$0xf]
    %v200 = vld [vmem:[#allocation2 + $0x2c] sm:$0xf]
    %v201 = vld [vmem:[#allocation2 + $0x30] sm:$0xf]
    %v202 = vld [vmem:[#allocation2 + $0x34] sm:$0xf]
    %v203 = vld [vmem:[#allocation2 + $0x38] sm:$0xf]
    %v204 = vld [vmem:[#allocation2 + $0x3c] sm:$0xf]
    %v205 = vld [vmem:[#allocation2 + $0x40] sm:$0x1]
    %v206 = vld [vmem:[#allocation2] sm:$0xe]
    %v207 = vld [vmem:[#allocation5] sm:$0xff]
    %v208 = vld [vmem:[#allocation5 + $0x8] sm:$0xf]
    %v209 = vld [vmem:[#allocation5 + $0xc] sm:$0xff]
    %v210 = vld [vmem:[#allocation5 + $0x14] sm:$0xf]
    %v211 = vld [vmem:[#allocation5 + $0x18] sm:$0xff]
    %v212 = vld [vmem:[#allocation5 + $0x20] sm:$0xf]
    %v213 = vld [vmem:[#allocation5 + $0x24] sm:$0xff]
    %v214 = vld [vmem:[#allocation5 + $0x2c] sm:$0xf]
    %s215 = scalar_lea.vmem [#allocation5], 48
    %v216 = vld [vmem:[%s215] sm:$0xff]
    %v217 = vld [vmem:[%s215 + $0x8] sm:$0xf]
    %v218 = vld [vmem:[%s215 + $0xc] sm:$0xff]
    %v219 = vld [vmem:[%s215 + $0x14] sm:$0xf]
    %v220 = vld [vmem:[%s215 + $0x18] sm:$0xff]
    %v221 = vld [vmem:[%s215 + $0x20] sm:$0xf]
    %v222 = vld [vmem:[%s215 + $0x24] sm:$0xff]
    %v223 = vld [vmem:[%s215 + $0x2c] sm:$0xf]
    %v241 = vunpack.c.l.b16 %v189
    %v242 = vunpack.c.l.b16 %v190
    %v243 = vunpack.c.l.b16 %v191
    %v244 = vunpack.c.l.b16 %v192
    %v245 = vunpack.c.l.b16 %v193
    %v246 = vunpack.c.l.b16 %v194
    %v247 = vunpack.c.l.b16 %v195
    %v248 = vunpack.c.l.b16 %v196
    %v249 = vunpack.c.l.b16 %v197
    %v250 = vunpack.c.l.b16 %v198
    %v251 = vunpack.c.l.b16 %v199
    %v252 = vunpack.c.l.b16 %v200
    %v253 = vunpack.c.l.b16 %v201
    %v254 = vunpack.c.l.b16 %v202
    %v255 = vunpack.c.l.b16 %v203
    %v256 = vunpack.c.l.b16 %v204
    %v257 = vunpack.c.l.b16 %v205
    %v258 = vpack.c.b16 %v242, %v241
    %v259 = vpack.c.b16 %v244, %v243
    %v260 = vpack.c.b16 %v246, %v245
    %v261 = vpack.c.b16 %v248, %v247
    %v262 = vpack.c.b16 %v250, %v249
    %v263 = vpack.c.b16 %v252, %v251
    %v264 = vpack.c.b16 %v254, %v253
    %v265 = vpack.c.b16 %v256, %v255
    %v266 = vpack.c.b16 %v257, %v257
    %vm267 = vsmask.f32 7424
    %v269 = vshrl.u32 %v258, 16
    %v271 = vshll.u32 %v258, 16
    %v273 = vrot.slane %v271, 1
    %v274 = vor.u32 %v269, %v273
    %v276 = vshll.u32 %v259, 16
    %v278 = vrot.slane %v276, 1
    %v279 = vsel %vm267, %v274, %v278
    %v280 = vshrl.u32 %v259, 16
    %v282 = vor.u32 %v280, %v278
    %v284 = vshll.u32 %v260, 16
    %v286 = vrot.slane %v284, 1
    %v287 = vsel %vm267, %v282, %v286
    %v288 = vshrl.u32 %v260, 16
    %v290 = vor.u32 %v288, %v286
    %v292 = vshll.u32 %v261, 16
    %v294 = vrot.slane %v292, 1
    %v295 = vsel %vm267, %v290, %v294
    %v296 = vshrl.u32 %v261, 16
    %v298 = vor.u32 %v296, %v294
    %v300 = vshll.u32 %v262, 16
    %v302 = vrot.slane %v300, 1
    %v303 = vsel %vm267, %v298, %v302
    %v304 = vshrl.u32 %v262, 16
    %v306 = vor.u32 %v304, %v302
    %v308 = vshll.u32 %v263, 16
    %v310 = vrot.slane %v308, 1
    %v311 = vsel %vm267, %v306, %v310
    %v312 = vshrl.u32 %v263, 16
    %v314 = vor.u32 %v312, %v310
    %v316 = vshll.u32 %v264, 16
    %v318 = vrot.slane %v316, 1
    %v319 = vsel %vm267, %v314, %v318
    %v320 = vshrl.u32 %v264, 16
    %v322 = vor.u32 %v320, %v318
    %v324 = vshll.u32 %v265, 16
    %v326 = vrot.slane %v324, 1
    %v327 = vsel %vm267, %v322, %v326
    %v328 = vshrl.u32 %v265, 16
    %v330 = vor.u32 %v328, %v326
    %v332 = vshll.u32 %v266, 16
    %v334 = vrot.slane %v332, 1
    %v335 = vsel %vm267, %v330, %v334
    %v344 = vunpack.c.l.b16 %v216
    %v345 = vunpack.c.h.b16 %v216
    %v346 = vunpack.c.l.b16 %v217
    %v347 = vunpack.c.l.b16 %v218
    %v348 = vunpack.c.h.b16 %v218
    %v349 = vunpack.c.l.b16 %v219
    %v350 = vunpack.c.l.b16 %v220
    %v351 = vunpack.c.h.b16 %v220
    %v352 = vunpack.c.l.b16 %v221
    %v353 = vunpack.c.l.b16 %v222
    %v354 = vunpack.c.h.b16 %v222
    %v355 = vunpack.c.l.b16 %v223
    %v356 = vpack.c.b16 %v347, %v344
    %v357 = vpack.c.b16 %v348, %v345
    %v358 = vpack.c.b16 %v349, %v346
    %v359 = vpack.c.b16 %v353, %v350
    %v360 = vpack.c.b16 %v354, %v351
    %v361 = vpack.c.b16 %v355, %v352
    %vm368 = vcmask 261120
    %v370 = vsel %vm368, %v279, 0
    %v373 = vsel %vm368, %v287, 0
    %v376 = vsel %vm368, %v295, 0
    %v379 = vsel %vm368, %v303, 0
    %v382 = vsel %vm368, %v311, 0
    %v385 = vsel %vm368, %v319, 0
    %v388 = vsel %vm368, %v327, 0
    %v391 = vsel %vm368, %v335, 0
    %393 = vmatprep.subr.bf16.mxu0 0
    %394 = vmatpush1.bf16.msra.mxu0 0
    %395 = vmatprep.subr.bf16.mxu0 0
    %396 = vmatpush1.bf16.msra.mxu0 0
    %397 = vmatprep.subr.bf16.mxu0 0
    %398 = vmatpush1.bf16.msra.mxu0 0
    %399 = vmatprep.subr.bf16.mxu0 0
    %400 = vmatpush1.bf16.msra.mxu0 0
    %401 = vmatprep.subr.bf16.mxu0 0
    %402 = vmatpush1.bf16.msra.mxu0 0
    %403 = vmatprep.subr.bf16.mxu0 0
    %404 = vmatpush1.bf16.msra.mxu0 0
    %405 = vmatprep.subr.bf16.mxu0 %v360
    %406 = vmatpush1.bf16.msra.mxu0 %v359
    %407 = vmatprep.subr.bf16.mxu0 %v357
    %408 = vmatpush1.bf16.msra.mxu0 %v356
    %409 = vmatprep.subr.bf16.mxu0 0
    %410 = vmatpush2.bf16.msra.mxu0 0
    %411 = vmatprep.subr.bf16.mxu0 0
    %412 = vmatpush2.bf16.msra.mxu0 0
    %413 = vmatprep.subr.bf16.mxu0 0
    %414 = vmatpush2.bf16.msra.mxu0 0
    %415 = vmatprep.subr.bf16.mxu0 0
    %416 = vmatpush2.bf16.msra.mxu0 0
    %417 = vmatprep.subr.bf16.mxu0 0
    %418 = vmatpush2.bf16.msra.mxu0 0
    %419 = vmatprep.subr.bf16.mxu0 0
    %420 = vmatpush2.bf16.msra.mxu0 0
    %421 = vmatprep.subr.bf16.mxu0 0
    %422 = vmatpush2.bf16.msra.mxu0 0
    %423 = vmatprep.subr.bf16.mxu0 0
    %424 = vmatpush2.bf16.msra.mxu0 0
    %425 = vmatprep.mubr.bf16.mxu0 0
    %426 = vmatmul.mubr.bf16.gmra.mxu0 %v370
    %v427 = vpop.f32.mrf.mxu0
    %v428 = vadd.f32 0.0, %v427
    %v429 = vpop.f32.mrf.mxu0
    %v430 = vadd.f32 0.0, %v429
    %v431 = vpop.f32.mrf.mxu0
    %v432 = vadd.f32 0.0, %v431
    %v433 = vpop.f32.mrf.mxu0
    %v434 = vadd.f32 0.0, %v433
    %435 = vmatprep.mubr.bf16.mxu0 0
    %436 = vmatmul.mubr.bf16.gmra.mxu0 %v373
    %v437 = vpop.f32.mrf.mxu0
    %v438 = vadd.f32 0.0, %v437
    %v439 = vpop.f32.mrf.mxu0
    %v440 = vadd.f32 0.0, %v439
    %v441 = vpop.f32.mrf.mxu0
    %v442 = vadd.f32 0.0, %v441
    %v443 = vpop.f32.mrf.mxu0
    %v444 = vadd.f32 0.0, %v443
    %445 = vmatprep.mubr.bf16.mxu0 0
    %446 = vmatmul.mubr.bf16.gmra.mxu0 %v376
    %v447 = vpop.f32.mrf.mxu0
    %v448 = vadd.f32 0.0, %v447
    %v449 = vpop.f32.mrf.mxu0
    %v450 = vadd.f32 0.0, %v449
    %v451 = vpop.f32.mrf.mxu0
    %v452 = vadd.f32 0.0, %v451
    %v453 = vpop.f32.mrf.mxu0
    %v454 = vadd.f32 0.0, %v453
    %455 = vmatprep.mubr.bf16.mxu0 0
    %456 = vmatmul.mubr.bf16.gmra.mxu0 %v379
    %v457 = vpop.f32.mrf.mxu0
    %v458 = vadd.f32 0.0, %v457
    %v459 = vpop.f32.mrf.mxu0
    %v460 = vadd.f32 0.0, %v459
    %v461 = vpop.f32.mrf.mxu0
    %v462 = vadd.f32 0.0, %v461
    %v463 = vpop.f32.mrf.mxu0
    %v464 = vadd.f32 0.0, %v463
    %465 = vmatprep.mubr.bf16.mxu0 0
    %466 = vmatmul.mubr.bf16.gmra.mxu0 %v382
    %v467 = vpop.f32.mrf.mxu0
    %v468 = vadd.f32 0.0, %v467
    %v469 = vpop.f32.mrf.mxu0
    %v470 = vadd.f32 0.0, %v469
    %v471 = vpop.f32.mrf.mxu0
    %v472 = vadd.f32 0.0, %v471
    %v473 = vpop.f32.mrf.mxu0
    %v474 = vadd.f32 0.0, %v473
    %475 = vmatprep.mubr.bf16.mxu0 0
    %476 = vmatmul.mubr.bf16.gmra.mxu0 %v385
    %v477 = vpop.f32.mrf.mxu0
    %v478 = vadd.f32 0.0, %v477
    %v479 = vpop.f32.mrf.mxu0
    %v480 = vadd.f32 0.0, %v479
    %v481 = vpop.f32.mrf.mxu0
    %v482 = vadd.f32 0.0, %v481
    %v483 = vpop.f32.mrf.mxu0
    %v484 = vadd.f32 0.0, %v483
    %485 = vmatprep.mubr.bf16.mxu0 0
    %486 = vmatmul.mubr.bf16.gmra.mxu0 %v388
    %v487 = vpop.f32.mrf.mxu0
    %v488 = vadd.f32 0.0, %v487
    %v489 = vpop.f32.mrf.mxu0
    %v490 = vadd.f32 0.0, %v489
    %v491 = vpop.f32.mrf.mxu0
    %v492 = vadd.f32 0.0, %v491
    %v493 = vpop.f32.mrf.mxu0
    %v494 = vadd.f32 0.0, %v493
    %495 = vmatprep.mubr.bf16.mxu0 0
    %496 = vmatmul.mubr.bf16.gmra.mxu0 %v391
    %v497 = vpop.f32.mrf.mxu0
    %v498 = vadd.f32 0.0, %v497
    %v499 = vpop.f32.mrf.mxu0
    %v500 = vadd.f32 0.0, %v499
    %v501 = vpop.f32.mrf.mxu0
    %v502 = vadd.f32 0.0, %v501
    %v503 = vpop.f32.mrf.mxu0
    %v504 = vadd.f32 0.0, %v503
    %505 = vdwg.mxu0
    %506 = vmatprep.subr.bf16.mxu0 0
    %507 = vmatpush1.bf16.msra.mxu0 0
    %508 = vmatprep.subr.bf16.mxu0 0
    %509 = vmatpush1.bf16.msra.mxu0 0
    %510 = vmatprep.subr.bf16.mxu0 0
    %511 = vmatpush1.bf16.msra.mxu0 0
    %512 = vmatprep.subr.bf16.mxu0 0
    %513 = vmatpush1.bf16.msra.mxu0 0
    %514 = vmatprep.subr.bf16.mxu0 0
    %515 = vmatpush1.bf16.msra.mxu0 0
    %516 = vmatprep.subr.bf16.mxu0 0
    %517 = vmatpush1.bf16.msra.mxu0 0
    %518 = vmatprep.subr.bf16.mxu0 0
    %519 = vmatpush1.bf16.msra.mxu0 %v361
    %520 = vmatprep.subr.bf16.mxu0 0
    %521 = vmatpush1.bf16.msra.mxu0 %v358
    %522 = vmatprep.subr.bf16.mxu0 0
    %523 = vmatpush2.bf16.msra.mxu0 0
    %524 = vmatprep.subr.bf16.mxu0 0
    %525 = vmatpush2.bf16.msra.mxu0 0
    %526 = vmatprep.subr.bf16.mxu0 0
    %527 = vmatpush2.bf16.msra.mxu0 0
    %528 = vmatprep.subr.bf16.mxu0 0
    %529 = vmatpush2.bf16.msra.mxu0 0
    %530 = vmatprep.subr.bf16.mxu0 0
    %531 = vmatpush2.bf16.msra.mxu0 0
    %532 = vmatprep.subr.bf16.mxu0 0
    %533 = vmatpush2.bf16.msra.mxu0 0
    %534 = vmatprep.subr.bf16.mxu0 0
    %535 = vmatpush2.bf16.msra.mxu0 0
    %536 = vmatprep.subr.bf16.mxu0 0
    %537 = vmatpush2.bf16.msra.mxu0 0
    %538 = vmatprep.mubr.bf16.mxu0 0
    %539 = vmatmul.mubr.bf16.gmra.mxu0 %v370
    %v540 = vpop.f32.mrf.mxu0
    %v541 = vadd.f32 0.0, %v540
    %v542 = vpop.f32.mrf.mxu0
    %v543 = vpop.f32.mrf.mxu0
    %v544 = vadd.f32 0.0, %v543
    %v545 = vpop.f32.mrf.mxu0
    %546 = vmatprep.mubr.bf16.mxu0 0
    %547 = vmatmul.mubr.bf16.gmra.mxu0 %v373
    %v548 = vpop.f32.mrf.mxu0
    %v549 = vadd.f32 0.0, %v548
    %v550 = vpop.f32.mrf.mxu0
    %v551 = vpop.f32.mrf.mxu0
    %v552 = vadd.f32 0.0, %v551
    %v553 = vpop.f32.mrf.mxu0
    %554 = vmatprep.mubr.bf16.mxu0 0
    %555 = vmatmul.mubr.bf16.gmra.mxu0 %v376
    %v556 = vpop.f32.mrf.mxu0
    %v557 = vadd.f32 0.0, %v556
    %v558 = vpop.f32.mrf.mxu0
    %v559 = vpop.f32.mrf.mxu0
    %v560 = vadd.f32 0.0, %v559
    %v561 = vpop.f32.mrf.mxu0
    %562 = vmatprep.mubr.bf16.mxu0 0
    %563 = vmatmul.mubr.bf16.gmra.mxu0 %v379
    %v564 = vpop.f32.mrf.mxu0
    %v565 = vadd.f32 0.0, %v564
    %v566 = vpop.f32.mrf.mxu0
    %v567 = vpop.f32.mrf.mxu0
    %v568 = vadd.f32 0.0, %v567
    %v569 = vpop.f32.mrf.mxu0
    %570 = vmatprep.mubr.bf16.mxu0 0
    %571 = vmatmul.mubr.bf16.gmra.mxu0 %v382
    %v572 = vpop.f32.mrf.mxu0
    %v573 = vadd.f32 0.0, %v572
    %v574 = vpop.f32.mrf.mxu0
    %v575 = vpop.f32.mrf.mxu0
    %v576 = vadd.f32 0.0, %v575
    %v577 = vpop.f32.mrf.mxu0
    %578 = vmatprep.mubr.bf16.mxu0 0
    %579 = vmatmul.mubr.bf16.gmra.mxu0 %v385
    %v580 = vpop.f32.mrf.mxu0
    %v581 = vadd.f32 0.0, %v580
    %v582 = vpop.f32.mrf.mxu0
    %v583 = vpop.f32.mrf.mxu0
    %v584 = vadd.f32 0.0, %v583
    %v585 = vpop.f32.mrf.mxu0
    %586 = vmatprep.mubr.bf16.mxu0 0
    %587 = vmatmul.mubr.bf16.gmra.mxu0 %v388
    %v588 = vpop.f32.mrf.mxu0
    %v589 = vadd.f32 0.0, %v588
    %v590 = vpop.f32.mrf.mxu0
    %v591 = vpop.f32.mrf.mxu0
    %v592 = vadd.f32 0.0, %v591
    %v593 = vpop.f32.mrf.mxu0
    %594 = vmatprep.mubr.bf16.mxu0 0
    %595 = vmatmul.mubr.bf16.gmra.mxu0 %v391
    %v596 = vpop.f32.mrf.mxu0
    %v597 = vadd.f32 0.0, %v596
    %v598 = vpop.f32.mrf.mxu0
    %v599 = vpop.f32.mrf.mxu0
    %v600 = vadd.f32 0.0, %v599
    %v601 = vpop.f32.mrf.mxu0
    %602 = vdwg.mxu0
    %v619 = vunpack.c.l.b16 %v173
    %v620 = vunpack.c.l.b16 %v174
    %v621 = vunpack.c.l.b16 %v175
    %v622 = vunpack.c.l.b16 %v176
    %v623 = vunpack.c.l.b16 %v177
    %v624 = vunpack.c.l.b16 %v178
    %v625 = vunpack.c.l.b16 %v179
    %v626 = vunpack.c.l.b16 %v180
    %v627 = vunpack.c.l.b16 %v181
    %v628 = vunpack.c.l.b16 %v182
    %v629 = vunpack.c.l.b16 %v183
    %v630 = vunpack.c.l.b16 %v184
    %v631 = vunpack.c.l.b16 %v185
    %v632 = vunpack.c.l.b16 %v186
    %v633 = vunpack.c.l.b16 %v187
    %v634 = vunpack.c.l.b16 %v188
    %v635 = vpack.c.b16 %v620, %v619
    %v636 = vpack.c.b16 %v622, %v621
    %v637 = vpack.c.b16 %v624, %v623
    %v638 = vpack.c.b16 %v626, %v625
    %v639 = vpack.c.b16 %v628, %v627
    %v640 = vpack.c.b16 %v630, %v629
    %v641 = vpack.c.b16 %v632, %v631
    %v642 = vpack.c.b16 %v634, %v633
    %v651 = vunpack.c.l.b16 %v207
    %v652 = vunpack.c.h.b16 %v207
    %v653 = vunpack.c.l.b16 %v208
    %v654 = vunpack.c.l.b16 %v209
    %v655 = vunpack.c.h.b16 %v209
    %v656 = vunpack.c.l.b16 %v210
    %v657 = vunpack.c.l.b16 %v211
    %v658 = vunpack.c.h.b16 %v211
    %v659 = vunpack.c.l.b16 %v212
    %v660 = vunpack.c.l.b16 %v213
    %v661 = vunpack.c.h.b16 %v213
    %v662 = vunpack.c.l.b16 %v214
    %v663 = vpack.c.b16 %v654, %v651
    %v664 = vpack.c.b16 %v655, %v652
    %v665 = vpack.c.b16 %v656, %v653
    %v666 = vpack.c.b16 %v660, %v657
    %v667 = vpack.c.b16 %v661, %v658
    %v668 = vpack.c.b16 %v662, %v659
    %v676 = vsel %vm368, %v635, 0
    %v679 = vsel %vm368, %v636, 0
    %v682 = vsel %vm368, %v637, 0
    %v685 = vsel %vm368, %v638, 0
    %v688 = vsel %vm368, %v639, 0
    %v691 = vsel %vm368, %v640, 0
    %v694 = vsel %vm368, %v641, 0
    %v697 = vsel %vm368, %v642, 0
    %699 = vmatprep.subr.bf16.mxu0 0
    %700 = vmatpush1.bf16.msra.mxu0 0
    %701 = vmatprep.subr.bf16.mxu0 0
    %702 = vmatpush1.bf16.msra.mxu0 0
    %703 = vmatprep.subr.bf16.mxu0 0
    %704 = vmatpush1.bf16.msra.mxu0 0
    %705 = vmatprep.subr.bf16.mxu0 0
    %706 = vmatpush1.bf16.msra.mxu0 0
    %707 = vmatprep.subr.bf16.mxu0 0
    %708 = vmatpush1.bf16.msra.mxu0 0
    %709 = vmatprep.subr.bf16.mxu0 0
    %710 = vmatpush1.bf16.msra.mxu0 0
    %711 = vmatprep.subr.bf16.mxu0 %v667
    %712 = vmatpush1.bf16.msra.mxu0 %v666
    %713 = vmatprep.subr.bf16.mxu0 %v664
    %714 = vmatpush1.bf16.msra.mxu0 %v663
    %715 = vmatprep.subr.bf16.mxu0 0
    %716 = vmatpush2.bf16.msra.mxu0 0
    %717 = vmatprep.subr.bf16.mxu0 0
    %718 = vmatpush2.bf16.msra.mxu0 0
    %719 = vmatprep.subr.bf16.mxu0 0
    %720 = vmatpush2.bf16.msra.mxu0 0
    %721 = vmatprep.subr.bf16.mxu0 0
    %722 = vmatpush2.bf16.msra.mxu0 0
    %723 = vmatprep.subr.bf16.mxu0 0
    %724 = vmatpush2.bf16.msra.mxu0 0
    %725 = vmatprep.subr.bf16.mxu0 0
    %726 = vmatpush2.bf16.msra.mxu0 0
    %727 = vmatprep.subr.bf16.mxu0 0
    %728 = vmatpush2.bf16.msra.mxu0 0
    %729 = vmatprep.subr.bf16.mxu0 0
    %730 = vmatpush2.bf16.msra.mxu0 0
    %731 = vmatprep.mubr.bf16.mxu0 0
    %732 = vmatmul.mubr.bf16.gmra.mxu0 %v676
    %v733 = vpop.f32.mrf.mxu0
    %v734 = vadd.f32 %v428, %v733
    %v735 = vpop.f32.mrf.mxu0
    %v736 = vadd.f32 %v430, %v735
    %v737 = vpop.f32.mrf.mxu0
    %v738 = vadd.f32 %v432, %v737
    %v739 = vpop.f32.mrf.mxu0
    %v740 = vadd.f32 %v434, %v739
    %741 = vmatprep.mubr.bf16.mxu0 0
    %742 = vmatmul.mubr.bf16.gmra.mxu0 %v679
    %v743 = vpop.f32.mrf.mxu0
    %v744 = vadd.f32 %v438, %v743
    %v745 = vpop.f32.mrf.mxu0
    %v746 = vadd.f32 %v440, %v745
    %v747 = vpop.f32.mrf.mxu0
    %v748 = vadd.f32 %v442, %v747
    %v749 = vpop.f32.mrf.mxu0
    %v750 = vadd.f32 %v444, %v749
    %751 = vmatprep.mubr.bf16.mxu0 0
    %752 = vmatmul.mubr.bf16.gmra.mxu0 %v682
    %v753 = vpop.f32.mrf.mxu0
    %v754 = vadd.f32 %v448, %v753
    %v755 = vpop.f32.mrf.mxu0
    %v756 = vadd.f32 %v450, %v755
    %v757 = vpop.f32.mrf.mxu0
    %v758 = vadd.f32 %v452, %v757
    %v759 = vpop.f32.mrf.mxu0
    %v760 = vadd.f32 %v454, %v759
    %761 = vmatprep.mubr.bf16.mxu0 0
    %762 = vmatmul.mubr.bf16.gmra.mxu0 %v685
    %v763 = vpop.f32.mrf.mxu0
    %v764 = vadd.f32 %v458, %v763
    %v765 = vpop.f32.mrf.mxu0
    %v766 = vadd.f32 %v460, %v765
    %v767 = vpop.f32.mrf.mxu0
    %v768 = vadd.f32 %v462, %v767
    %v769 = vpop.f32.mrf.mxu0
    %v770 = vadd.f32 %v464, %v769
    %771 = vmatprep.mubr.bf16.mxu0 0
    %772 = vmatmul.mubr.bf16.gmra.mxu0 %v688
    %v773 = vpop.f32.mrf.mxu0
    %v774 = vadd.f32 %v468, %v773
    %v775 = vpop.f32.mrf.mxu0
    %v776 = vadd.f32 %v470, %v775
    %v777 = vpop.f32.mrf.mxu0
    %v778 = vadd.f32 %v472, %v777
    %v779 = vpop.f32.mrf.mxu0
    %v780 = vadd.f32 %v474, %v779
    %781 = vmatprep.mubr.bf16.mxu0 0
    %782 = vmatmul.mubr.bf16.gmra.mxu0 %v691
    %v783 = vpop.f32.mrf.mxu0
    %v784 = vadd.f32 %v478, %v783
    %v785 = vpop.f32.mrf.mxu0
    %v786 = vadd.f32 %v480, %v785
    %v787 = vpop.f32.mrf.mxu0
    %v788 = vadd.f32 %v482, %v787
    %v789 = vpop.f32.mrf.mxu0
    %v790 = vadd.f32 %v484, %v789
    %791 = vmatprep.mubr.bf16.mxu0 0
    %792 = vmatmul.mubr.bf16.gmra.mxu0 %v694
    %v793 = vpop.f32.mrf.mxu0
    %v794 = vadd.f32 %v488, %v793
    %v795 = vpop.f32.mrf.mxu0
    %v796 = vadd.f32 %v490, %v795
    %v797 = vpop.f32.mrf.mxu0
    %v798 = vadd.f32 %v492, %v797
    %v799 = vpop.f32.mrf.mxu0
    %v800 = vadd.f32 %v494, %v799
    %801 = vmatprep.mubr.bf16.mxu0 0
    %802 = vmatmul.mubr.bf16.gmra.mxu0 %v697
    %v803 = vpop.f32.mrf.mxu0
    %v804 = vadd.f32 %v498, %v803
    %v805 = vpop.f32.mrf.mxu0
    %v806 = vadd.f32 %v500, %v805
    %v807 = vpop.f32.mrf.mxu0
    %v808 = vadd.f32 %v502, %v807
    %v809 = vpop.f32.mrf.mxu0
    %v810 = vadd.f32 %v504, %v809
    %811 = vdwg.mxu0
    %812 = vmatprep.subr.bf16.mxu0 0
    %813 = vmatpush1.bf16.msra.mxu0 0
    %814 = vmatprep.subr.bf16.mxu0 0
    %815 = vmatpush1.bf16.msra.mxu0 0
    %816 = vmatprep.subr.bf16.mxu0 0
    %817 = vmatpush1.bf16.msra.mxu0 0
    %818 = vmatprep.subr.bf16.mxu0 0
    %819 = vmatpush1.bf16.msra.mxu0 0
    %820 = vmatprep.subr.bf16.mxu0 0
    %821 = vmatpush1.bf16.msra.mxu0 0
    %822 = vmatprep.subr.bf16.mxu0 0
    %823 = vmatpush1.bf16.msra.mxu0 0
    %824 = vmatprep.subr.bf16.mxu0 0
    %825 = vmatpush1.bf16.msra.mxu0 %v668
    %826 = vmatprep.subr.bf16.mxu0 0
    %827 = vmatpush1.bf16.msra.mxu0 %v665
    %828 = vmatprep.subr.bf16.mxu0 0
    %829 = vmatpush2.bf16.msra.mxu0 0
    %830 = vmatprep.subr.bf16.mxu0 0
    %831 = vmatpush2.bf16.msra.mxu0 0
    %832 = vmatprep.subr.bf16.mxu0 0
    %833 = vmatpush2.bf16.msra.mxu0 0
    %834 = vmatprep.subr.bf16.mxu0 0
    %835 = vmatpush2.bf16.msra.mxu0 0
    %836 = vmatprep.subr.bf16.mxu0 0
    %837 = vmatpush2.bf16.msra.mxu0 0
    %838 = vmatprep.subr.bf16.mxu0 0
    %839 = vmatpush2.bf16.msra.mxu0 0
    %840 = vmatprep.subr.bf16.mxu0 0
    %841 = vmatpush2.bf16.msra.mxu0 0
    %842 = vmatprep.subr.bf16.mxu0 0
    %843 = vmatpush2.bf16.msra.mxu0 0
    %844 = vmatprep.mubr.bf16.mxu0 0
    %845 = vmatmul.mubr.bf16.gmra.mxu0 %v676
    %v846 = vpop.f32.mrf.mxu0
    %v847 = vadd.f32 %v541, %v846
    %v848 = vpop.f32.mrf.mxu0
    %v849 = vpop.f32.mrf.mxu0
    %v850 = vadd.f32 %v544, %v849
    %v851 = vpop.f32.mrf.mxu0
    %852 = vmatprep.mubr.bf16.mxu0 0
    %853 = vmatmul.mubr.bf16.gmra.mxu0 %v679
    %v854 = vpop.f32.mrf.mxu0
    %v855 = vadd.f32 %v549, %v854
    %v856 = vpop.f32.mrf.mxu0
    %v857 = vpop.f32.mrf.mxu0
    %v858 = vadd.f32 %v552, %v857
    %v859 = vpop.f32.mrf.mxu0
    %860 = vmatprep.mubr.bf16.mxu0 0
    %861 = vmatmul.mubr.bf16.gmra.mxu0 %v682
    %v862 = vpop.f32.mrf.mxu0
    %v863 = vadd.f32 %v557, %v862
    %v864 = vpop.f32.mrf.mxu0
    %v865 = vpop.f32.mrf.mxu0
    %v866 = vadd.f32 %v560, %v865
    %v867 = vpop.f32.mrf.mxu0
    %868 = vmatprep.mubr.bf16.mxu0 0
    %869 = vmatmul.mubr.bf16.gmra.mxu0 %v685
    %v870 = vpop.f32.mrf.mxu0
    %v871 = vadd.f32 %v565, %v870
    %v872 = vpop.f32.mrf.mxu0
    %v873 = vpop.f32.mrf.mxu0
    %v874 = vadd.f32 %v568, %v873
    %v875 = vpop.f32.mrf.mxu0
    %876 = vmatprep.mubr.bf16.mxu0 0
    %877 = vmatmul.mubr.bf16.gmra.mxu0 %v688
    %v878 = vpop.f32.mrf.mxu0
    %v879 = vadd.f32 %v573, %v878
    %v880 = vpop.f32.mrf.mxu0
    %v881 = vpop.f32.mrf.mxu0
    %v882 = vadd.f32 %v576, %v881
    %v883 = vpop.f32.mrf.mxu0
    %884 = vmatprep.mubr.bf16.mxu0 0
    %885 = vmatmul.mubr.bf16.gmra.mxu0 %v691
    %v886 = vpop.f32.mrf.mxu0
    %v887 = vadd.f32 %v581, %v886
    %v888 = vpop.f32.mrf.mxu0
    %v889 = vpop.f32.mrf.mxu0
    %v890 = vadd.f32 %v584, %v889
    %v891 = vpop.f32.mrf.mxu0
    %892 = vmatprep.mubr.bf16.mxu0 0
    %893 = vmatmul.mubr.bf16.gmra.mxu0 %v694
    %v894 = vpop.f32.mrf.mxu0
    %v895 = vadd.f32 %v589, %v894
    %v896 = vpop.f32.mrf.mxu0
    %v897 = vpop.f32.mrf.mxu0
    %v898 = vadd.f32 %v592, %v897
    %v899 = vpop.f32.mrf.mxu0
    %900 = vmatprep.mubr.bf16.mxu0 0
    %901 = vmatmul.mubr.bf16.gmra.mxu0 %v697
    %v902 = vpop.f32.mrf.mxu0
    %v903 = vadd.f32 %v597, %v902
    %v904 = vpop.f32.mrf.mxu0
    %v905 = vpop.f32.mrf.mxu0
    %v906 = vadd.f32 %v600, %v905
    %v907 = vpop.f32.mrf.mxu0
    %908 = vdwg.mxu0
    %s909 = scalar_lea.vmem [#allocation5], 96
    %v910 = vld [vmem:[%s909] sm:$0xff]
    %v911 = vld [vmem:[%s909 + $0x8] sm:$0xf]
    %v912 = vld [vmem:[%s909 + $0xc] sm:$0xff]
    %v913 = vld [vmem:[%s909 + $0x14] sm:$0xf]
    %v914 = vld [vmem:[%s909 + $0x18] sm:$0xff]
    %v915 = vld [vmem:[%s909 + $0x20] sm:$0xf]
    %v916 = vld [vmem:[%s909 + $0x24] sm:$0xff]
    %v917 = vld [vmem:[%s909 + $0x2c] sm:$0xf]
    %v919 = vunpack.c.l.b16 %v206
    %v920 = vpack.c.b16 %v242, %v919
    %vm921 = vcmask 1046528
    %v922 = vrot.slane %v920, 1
    %v923 = vrot.slane %v259, 1
    %v924 = vsel %vm921, %v922, %v923
    %v925 = vrot.slane %v260, 1
    %v926 = vsel %vm921, %v923, %v925
    %v927 = vrot.slane %v261, 1
    %v928 = vsel %vm921, %v925, %v927
    %v929 = vrot.slane %v262, 1
    %v930 = vsel %vm921, %v927, %v929
    %v931 = vrot.slane %v263, 1
    %v932 = vsel %vm921, %v929, %v931
    %v933 = vrot.slane %v264, 1
    %v934 = vsel %vm921, %v931, %v933
    %v935 = vrot.slane %v265, 1
    %v936 = vsel %vm921, %v933, %v935
    %v937 = vrot.slane %v266, 1
    %v938 = vsel %vm921, %v935, %v937
    %v947 = vunpack.c.l.b16 %v910
    %v948 = vunpack.c.h.b16 %v910
    %v949 = vunpack.c.l.b16 %v911
    %v950 = vunpack.c.l.b16 %v912
    %v951 = vunpack.c.h.b16 %v912
    %v952 = vunpack.c.l.b16 %v913
    %v953 = vunpack.c.l.b16 %v914
    %v954 = vunpack.c.h.b16 %v914
    %v955 = vunpack.c.l.b16 %v915
    %v956 = vunpack.c.l.b16 %v916
    %v957 = vunpack.c.h.b16 %v916
    %v958 = vunpack.c.l.b16 %v917
    %v959 = vpack.c.b16 %v950, %v947
    %v960 = vpack.c.b16 %v951, %v948
    %v961 = vpack.c.b16 %v952, %v949
    %v962 = vpack.c.b16 %v956, %v953
    %v963 = vpack.c.b16 %v957, %v954
    %v964 = vpack.c.b16 %v958, %v955
    %v972 = vsel %vm368, %v924, 0
    %v975 = vsel %vm368, %v926, 0
    %v978 = vsel %vm368, %v928, 0
    %v981 = vsel %vm368, %v930, 0
    %v984 = vsel %vm368, %v932, 0
    %v987 = vsel %vm368, %v934, 0
    %v990 = vsel %vm368, %v936, 0
    %v993 = vsel %vm368, %v938, 0
    %995 = vmatprep.subr.bf16.mxu0 0
    %996 = vmatpush1.bf16.msra.mxu0 0
    %997 = vmatprep.subr.bf16.mxu0 0
    %998 = vmatpush1.bf16.msra.mxu0 0
    %999 = vmatprep.subr.bf16.mxu0 0
    %1000 = vmatpush1.bf16.msra.mxu0 0
    %1001 = vmatprep.subr.bf16.mxu0 0
    %1002 = vmatpush1.bf16.msra.mxu0 0
    %1003 = vmatprep.subr.bf16.mxu0 0
    %1004 = vmatpush1.bf16.msra.mxu0 0
    %1005 = vmatprep.subr.bf16.mxu0 0
    %1006 = vmatpush1.bf16.msra.mxu0 0
    %1007 = vmatprep.subr.bf16.mxu0 %v963
    %1008 = vmatpush1.bf16.msra.mxu0 %v962
    %1009 = vmatprep.subr.bf16.mxu0 %v960
    %1010 = vmatpush1.bf16.msra.mxu0 %v959
    %1011 = vmatprep.subr.bf16.mxu0 0
    %1012 = vmatpush2.bf16.msra.mxu0 0
    %1013 = vmatprep.subr.bf16.mxu0 0
    %1014 = vmatpush2.bf16.msra.mxu0 0
    %1015 = vmatprep.subr.bf16.mxu0 0
    %1016 = vmatpush2.bf16.msra.mxu0 0
    %1017 = vmatprep.subr.bf16.mxu0 0
    %1018 = vmatpush2.bf16.msra.mxu0 0
    %1019 = vmatprep.subr.bf16.mxu0 0
    %1020 = vmatpush2.bf16.msra.mxu0 0
    %1021 = vmatprep.subr.bf16.mxu0 0
    %1022 = vmatpush2.bf16.msra.mxu0 0
    %1023 = vmatprep.subr.bf16.mxu0 0
    %1024 = vmatpush2.bf16.msra.mxu0 0
    %1025 = vmatprep.subr.bf16.mxu0 0
    %1026 = vmatpush2.bf16.msra.mxu0 0
    %1027 = vmatprep.mubr.bf16.mxu0 0
    %1028 = vmatmul.mubr.bf16.gmra.mxu0 %v972
    %v1029 = vpop.f32.mrf.mxu0
    %v1030 = vadd.f32 0.0, %v1029
    %v1031 = vpop.f32.mrf.mxu0
    %v1032 = vadd.f32 0.0, %v1031
    %v1033 = vpop.f32.mrf.mxu0
    %v1034 = vadd.f32 0.0, %v1033
    %v1035 = vpop.f32.mrf.mxu0
    %v1036 = vadd.f32 0.0, %v1035
    %1037 = vmatprep.mubr.bf16.mxu0 0
    %1038 = vmatmul.mubr.bf16.gmra.mxu0 %v975
    %v1039 = vpop.f32.mrf.mxu0
    %v1040 = vadd.f32 0.0, %v1039
    %v1041 = vpop.f32.mrf.mxu0
    %v1042 = vadd.f32 0.0, %v1041
    %v1043 = vpop.f32.mrf.mxu0
    %v1044 = vadd.f32 0.0, %v1043
    %v1045 = vpop.f32.mrf.mxu0
    %v1046 = vadd.f32 0.0, %v1045
    %1047 = vmatprep.mubr.bf16.mxu0 0
    %1048 = vmatmul.mubr.bf16.gmra.mxu0 %v978
    %v1049 = vpop.f32.mrf.mxu0
    %v1050 = vadd.f32 0.0, %v1049
    %v1051 = vpop.f32.mrf.mxu0
    %v1052 = vadd.f32 0.0, %v1051
    %v1053 = vpop.f32.mrf.mxu0
    %v1054 = vadd.f32 0.0, %v1053
    %v1055 = vpop.f32.mrf.mxu0
    %v1056 = vadd.f32 0.0, %v1055
    %1057 = vmatprep.mubr.bf16.mxu0 0
    %1058 = vmatmul.mubr.bf16.gmra.mxu0 %v981
    %v1059 = vpop.f32.mrf.mxu0
    %v1060 = vadd.f32 0.0, %v1059
    %v1061 = vpop.f32.mrf.mxu0
    %v1062 = vadd.f32 0.0, %v1061
    %v1063 = vpop.f32.mrf.mxu0
    %v1064 = vadd.f32 0.0, %v1063
    %v1065 = vpop.f32.mrf.mxu0
    %v1066 = vadd.f32 0.0, %v1065
    %1067 = vmatprep.mubr.bf16.mxu0 0
    %1068 = vmatmul.mubr.bf16.gmra.mxu0 %v984
    %v1069 = vpop.f32.mrf.mxu0
    %v1070 = vadd.f32 0.0, %v1069
    %v1071 = vpop.f32.mrf.mxu0
    %v1072 = vadd.f32 0.0, %v1071
    %v1073 = vpop.f32.mrf.mxu0
    %v1074 = vadd.f32 0.0, %v1073
    %v1075 = vpop.f32.mrf.mxu0
    %v1076 = vadd.f32 0.0, %v1075
    %1077 = vmatprep.mubr.bf16.mxu0 0
    %1078 = vmatmul.mubr.bf16.gmra.mxu0 %v987
    %v1079 = vpop.f32.mrf.mxu0
    %v1080 = vadd.f32 0.0, %v1079
    %v1081 = vpop.f32.mrf.mxu0
    %v1082 = vadd.f32 0.0, %v1081
    %v1083 = vpop.f32.mrf.mxu0
    %v1084 = vadd.f32 0.0, %v1083
    %v1085 = vpop.f32.mrf.mxu0
    %v1086 = vadd.f32 0.0, %v1085
    %1087 = vmatprep.mubr.bf16.mxu0 0
    %1088 = vmatmul.mubr.bf16.gmra.mxu0 %v990
    %v1089 = vpop.f32.mrf.mxu0
    %v1090 = vadd.f32 0.0, %v1089
    %v1091 = vpop.f32.mrf.mxu0
    %v1092 = vadd.f32 0.0, %v1091
    %v1093 = vpop.f32.mrf.mxu0
    %v1094 = vadd.f32 0.0, %v1093
    %v1095 = vpop.f32.mrf.mxu0
    %v1096 = vadd.f32 0.0, %v1095
    %1097 = vmatprep.mubr.bf16.mxu0 0
    %1098 = vmatmul.mubr.bf16.gmra.mxu0 %v993
    %v1099 = vpop.f32.mrf.mxu0
    %v1100 = vadd.f32 0.0, %v1099
    %v1101 = vpop.f32.mrf.mxu0
    %v1102 = vadd.f32 0.0, %v1101
    %v1103 = vpop.f32.mrf.mxu0
    %v1104 = vadd.f32 0.0, %v1103
    %v1105 = vpop.f32.mrf.mxu0
    %v1106 = vadd.f32 0.0, %v1105
    %1107 = vdwg.mxu0
    %1108 = vmatprep.subr.bf16.mxu0 0
    %1109 = vmatpush1.bf16.msra.mxu0 0
    %1110 = vmatprep.subr.bf16.mxu0 0
    %1111 = vmatpush1.bf16.msra.mxu0 0
    %1112 = vmatprep.subr.bf16.mxu0 0
    %1113 = vmatpush1.bf16.msra.mxu0 0
    %1114 = vmatprep.subr.bf16.mxu0 0
    %1115 = vmatpush1.bf16.msra.mxu0 0
    %1116 = vmatprep.subr.bf16.mxu0 0
    %1117 = vmatpush1.bf16.msra.mxu0 0
    %1118 = vmatprep.subr.bf16.mxu0 0
    %1119 = vmatpush1.bf16.msra.mxu0 0
    %1120 = vmatprep.subr.bf16.mxu0 0
    %1121 = vmatpush1.bf16.msra.mxu0 %v964
    %1122 = vmatprep.subr.bf16.mxu0 0
    %1123 = vmatpush1.bf16.msra.mxu0 %v961
    %1124 = vmatprep.subr.bf16.mxu0 0
    %1125 = vmatpush2.bf16.msra.mxu0 0
    %1126 = vmatprep.subr.bf16.mxu0 0
    %1127 = vmatpush2.bf16.msra.mxu0 0
    %1128 = vmatprep.subr.bf16.mxu0 0
    %1129 = vmatpush2.bf16.msra.mxu0 0
    %1130 = vmatprep.subr.bf16.mxu0 0
    %1131 = vmatpush2.bf16.msra.mxu0 0
    %1132 = vmatprep.subr.bf16.mxu0 0
    %1133 = vmatpush2.bf16.msra.mxu0 0
    %1134 = vmatprep.subr.bf16.mxu0 0
    %1135 = vmatpush2.bf16.msra.mxu0 0
    %1136 = vmatprep.subr.bf16.mxu0 0
    %1137 = vmatpush2.bf16.msra.mxu0 0
    %1138 = vmatprep.subr.bf16.mxu0 0
    %1139 = vmatpush2.bf16.msra.mxu0 0
    %1140 = vmatprep.mubr.bf16.mxu0 0
    %1141 = vmatmul.mubr.bf16.gmra.mxu0 %v972
    %v1142 = vpop.f32.mrf.mxu0
    %v1143 = vadd.f32 0.0, %v1142
    %v1144 = vpop.f32.mrf.mxu0
    %v1145 = vpop.f32.mrf.mxu0
    %v1146 = vadd.f32 0.0, %v1145
    %v1147 = vpop.f32.mrf.mxu0
    %1148 = vmatprep.mubr.bf16.mxu0 0
    %1149 = vmatmul.mubr.bf16.gmra.mxu0 %v975
    %v1150 = vpop.f32.mrf.mxu0
    %v1151 = vadd.f32 0.0, %v1150
    %v1152 = vpop.f32.mrf.mxu0
    %v1153 = vpop.f32.mrf.mxu0
    %v1154 = vadd.f32 0.0, %v1153
    %v1155 = vpop.f32.mrf.mxu0
    %1156 = vmatprep.mubr.bf16.mxu0 0
    %1157 = vmatmul.mubr.bf16.gmra.mxu0 %v978
    %v1158 = vpop.f32.mrf.mxu0
    %v1159 = vadd.f32 0.0, %v1158
    %v1160 = vpop.f32.mrf.mxu0
    %v1161 = vpop.f32.mrf.mxu0
    %v1162 = vadd.f32 0.0, %v1161
    %v1163 = vpop.f32.mrf.mxu0
    %1164 = vmatprep.mubr.bf16.mxu0 0
    %1165 = vmatmul.mubr.bf16.gmra.mxu0 %v981
    %v1166 = vpop.f32.mrf.mxu0
    %v1167 = vadd.f32 0.0, %v1166
    %v1168 = vpop.f32.mrf.mxu0
    %v1169 = vpop.f32.mrf.mxu0
    %v1170 = vadd.f32 0.0, %v1169
    %v1171 = vpop.f32.mrf.mxu0
    %1172 = vmatprep.mubr.bf16.mxu0 0
    %1173 = vmatmul.mubr.bf16.gmra.mxu0 %v984
    %v1174 = vpop.f32.mrf.mxu0
    %v1175 = vadd.f32 0.0, %v1174
    %v1176 = vpop.f32.mrf.mxu0
    %v1177 = vpop.f32.mrf.mxu0
    %v1178 = vadd.f32 0.0, %v1177
    %v1179 = vpop.f32.mrf.mxu0
    %1180 = vmatprep.mubr.bf16.mxu0 0
    %1181 = vmatmul.mubr.bf16.gmra.mxu0 %v987
    %v1182 = vpop.f32.mrf.mxu0
    %v1183 = vadd.f32 0.0, %v1182
    %v1184 = vpop.f32.mrf.mxu0
    %v1185 = vpop.f32.mrf.mxu0
    %v1186 = vadd.f32 0.0, %v1185
    %v1187 = vpop.f32.mrf.mxu0
    %1188 = vmatprep.mubr.bf16.mxu0 0
    %1189 = vmatmul.mubr.bf16.gmra.mxu0 %v990
    %v1190 = vpop.f32.mrf.mxu0
    %v1191 = vadd.f32 0.0, %v1190
    %v1192 = vpop.f32.mrf.mxu0
    %v1193 = vpop.f32.mrf.mxu0
    %v1194 = vadd.f32 0.0, %v1193
    %v1195 = vpop.f32.mrf.mxu0
    %1196 = vmatprep.mubr.bf16.mxu0 0
    %1197 = vmatmul.mubr.bf16.gmra.mxu0 %v993
    %v1198 = vpop.f32.mrf.mxu0
    %v1199 = vadd.f32 0.0, %v1198
    %v1200 = vpop.f32.mrf.mxu0
    %v1201 = vpop.f32.mrf.mxu0
    %v1202 = vadd.f32 0.0, %v1201
    %v1203 = vpop.f32.mrf.mxu0
    %1204 = vdwg.mxu0
    %v1205 = vadd.f32 %v734, %v1030
    %v1206 = vadd.f32 %v736, %v1032
    %v1207 = vadd.f32 %v847, %v1143
    %v1208 = vadd.f32 %v738, %v1034
    %v1209 = vadd.f32 %v740, %v1036
    %v1210 = vadd.f32 %v850, %v1146
    %v1211 = vadd.f32 %v744, %v1040
    %v1212 = vadd.f32 %v746, %v1042
    %v1213 = vadd.f32 %v855, %v1151
    %v1214 = vadd.f32 %v748, %v1044
    %v1215 = vadd.f32 %v750, %v1046
    %v1216 = vadd.f32 %v858, %v1154
    %v1217 = vadd.f32 %v754, %v1050
    %v1218 = vadd.f32 %v756, %v1052
    %v1219 = vadd.f32 %v863, %v1159
    %v1220 = vadd.f32 %v758, %v1054
    %v1221 = vadd.f32 %v760, %v1056
    %v1222 = vadd.f32 %v866, %v1162
    %v1223 = vadd.f32 %v764, %v1060
    %v1224 = vadd.f32 %v766, %v1062
    %v1225 = vadd.f32 %v871, %v1167
    %v1226 = vadd.f32 %v768, %v1064
    %v1227 = vadd.f32 %v770, %v1066
    %v1228 = vadd.f32 %v874, %v1170
    %v1229 = vadd.f32 %v774, %v1070
    %v1230 = vadd.f32 %v776, %v1072
    %v1231 = vadd.f32 %v879, %v1175
    %v1232 = vadd.f32 %v778, %v1074
    %v1233 = vadd.f32 %v780, %v1076
    %v1234 = vadd.f32 %v882, %v1178
    %v1235 = vadd.f32 %v784, %v1080
    %v1236 = vadd.f32 %v786, %v1082
    %v1237 = vadd.f32 %v887, %v1183
    %v1238 = vadd.f32 %v788, %v1084
    %v1239 = vadd.f32 %v790, %v1086
    %v1240 = vadd.f32 %v890, %v1186
    %v1241 = vadd.f32 %v794, %v1090
    %v1242 = vadd.f32 %v796, %v1092
    %v1243 = vadd.f32 %v895, %v1191
    %v1244 = vadd.f32 %v798, %v1094
    %v1245 = vadd.f32 %v800, %v1096
    %v1246 = vadd.f32 %v898, %v1194
    %v1247 = vadd.f32 %v804, %v1100
    %v1248 = vadd.f32 %v806, %v1102
    %v1249 = vadd.f32 %v903, %v1199
    %v1250 = vadd.f32 %v808, %v1104
    %v1251 = vadd.f32 %v810, %v1106
    %v1252 = vadd.f32 %v906, %v1202
    %v1253 = vld [vmem:[#allocation8] sm:$0x7]
    %v1255 = vlaneseq
    %v1256 = vshrl.u32 %v1255, 7
    %v1257 = vsub.s32 0, %v1256
    %v1258 = vrot.slane %v1253, %v1257
    %v1259 = vlaneseq
    %v1260 = vshrl.u32 %v1259, 7
    %v1261 = vsub.s32 1, %v1260
    %v1262 = vrot.slane %v1253, %v1261
    %v1263 = vlaneseq
    %v1264 = vshrl.u32 %v1263, 7
    %v1265 = vsub.s32 2, %v1264
    %v1266 = vrot.slane %v1253, %v1265
    %v1270 = vadd.f32 %v1205, %v1258
    %v1271 = vadd.f32 %v1206, %v1262
    %v1272 = vadd.f32 %v1207, %v1266
    %v1273 = vadd.f32 %v1208, %v1258
    %v1274 = vadd.f32 %v1209, %v1262
    %v1275 = vadd.f32 %v1210, %v1266
    %v1276 = vadd.f32 %v1211, %v1258
    %v1277 = vadd.f32 %v1212, %v1262
    %v1278 = vadd.f32 %v1213, %v1266
    %v1279 = vadd.f32 %v1214, %v1258
    %v1280 = vadd.f32 %v1215, %v1262
    %v1281 = vadd.f32 %v1216, %v1266
    %v1282 = vadd.f32 %v1217, %v1258
    %v1283 = vadd.f32 %v1218, %v1262
    %v1284 = vadd.f32 %v1219, %v1266
    %v1285 = vadd.f32 %v1220, %v1258
    %v1286 = vadd.f32 %v1221, %v1262
    %v1287 = vadd.f32 %v1222, %v1266
    %v1288 = vadd.f32 %v1223, %v1258
    %v1289 = vadd.f32 %v1224, %v1262
    %v1290 = vadd.f32 %v1225, %v1266
    %v1291 = vadd.f32 %v1226, %v1258
    %v1292 = vadd.f32 %v1227, %v1262
    %v1293 = vadd.f32 %v1228, %v1266
    %v1294 = vadd.f32 %v1229, %v1258
    %v1295 = vadd.f32 %v1230, %v1262
    %v1296 = vadd.f32 %v1231, %v1266
    %v1297 = vadd.f32 %v1232, %v1258
    %v1298 = vadd.f32 %v1233, %v1262
    %v1299 = vadd.f32 %v1234, %v1266
    %v1300 = vadd.f32 %v1235, %v1258
    %v1301 = vadd.f32 %v1236, %v1262
    %v1302 = vadd.f32 %v1237, %v1266
    %v1303 = vadd.f32 %v1238, %v1258
    %v1304 = vadd.f32 %v1239, %v1262
    %v1305 = vadd.f32 %v1240, %v1266
    %v1306 = vadd.f32 %v1241, %v1258
    %v1307 = vadd.f32 %v1242, %v1262
    %v1308 = vadd.f32 %v1243, %v1266
    %v1309 = vadd.f32 %v1244, %v1258
    %v1310 = vadd.f32 %v1245, %v1262
    %v1311 = vadd.f32 %v1246, %v1266
    %v1312 = vadd.f32 %v1247, %v1258
    %v1313 = vadd.f32 %v1248, %v1262
    %v1314 = vadd.f32 %v1249, %v1266
    %v1315 = vadd.f32 %v1250, %v1258
    %v1316 = vadd.f32 %v1251, %v1262
    %v1317 = vadd.f32 %v1252, %v1266
    %vm1318 = vcmp.ge.f32.partialorder %v1270, 0.0
    %vm1319 = vcmp.ge.f32.partialorder %v1271, 0.0
    %vm1320 = vcmp.ge.f32.partialorder %v1272, 0.0
    %vm1321 = vcmp.ge.f32.partialorder %v1273, 0.0
    %vm1322 = vcmp.ge.f32.partialorder %v1274, 0.0
    %vm1323 = vcmp.ge.f32.partialorder %v1275, 0.0
    %vm1324 = vcmp.ge.f32.partialorder %v1276, 0.0
    %vm1325 = vcmp.ge.f32.partialorder %v1277, 0.0
    %vm1326 = vcmp.ge.f32.partialorder %v1278, 0.0
    %vm1327 = vcmp.ge.f32.partialorder %v1279, 0.0
    %vm1328 = vcmp.ge.f32.partialorder %v1280, 0.0
    %vm1329 = vcmp.ge.f32.partialorder %v1281, 0.0
    %vm1330 = vcmp.ge.f32.partialorder %v1282, 0.0
    %vm1331 = vcmp.ge.f32.partialorder %v1283, 0.0
    %vm1332 = vcmp.ge.f32.partialorder %v1284, 0.0
    %vm1333 = vcmp.ge.f32.partialorder %v1285, 0.0
    %vm1334 = vcmp.ge.f32.partialorder %v1286, 0.0
    %vm1335 = vcmp.ge.f32.partialorder %v1287, 0.0
    %vm1336 = vcmp.ge.f32.partialorder %v1288, 0.0
    %vm1337 = vcmp.ge.f32.partialorder %v1289, 0.0
    %vm1338 = vcmp.ge.f32.partialorder %v1290, 0.0
    %vm1339 = vcmp.ge.f32.partialorder %v1291, 0.0
    %vm1340 = vcmp.ge.f32.partialorder %v1292, 0.0
    %vm1341 = vcmp.ge.f32.partialorder %v1293, 0.0
    %vm1342 = vcmp.ge.f32.partialorder %v1294, 0.0
    %vm1343 = vcmp.ge.f32.partialorder %v1295, 0.0
    %vm1344 = vcmp.ge.f32.partialorder %v1296, 0.0
    %vm1345 = vcmp.ge.f32.partialorder %v1297, 0.0
    %vm1346 = vcmp.ge.f32.partialorder %v1298, 0.0
    %vm1347 = vcmp.ge.f32.partialorder %v1299, 0.0
    %vm1348 = vcmp.ge.f32.partialorder %v1300, 0.0
    %vm1349 = vcmp.ge.f32.partialorder %v1301, 0.0
    %vm1350 = vcmp.ge.f32.partialorder %v1302, 0.0
    %vm1351 = vcmp.ge.f32.partialorder %v1303, 0.0
    %vm1352 = vcmp.ge.f32.partialorder %v1304, 0.0
    %vm1353 = vcmp.ge.f32.partialorder %v1305, 0.0
    %vm1354 = vcmp.ge.f32.partialorder %v1306, 0.0
    %vm1355 = vcmp.ge.f32.partialorder %v1307, 0.0
    %vm1356 = vcmp.ge.f32.partialorder %v1308, 0.0
    %vm1357 = vcmp.ge.f32.partialorder %v1309, 0.0
    %vm1358 = vcmp.ge.f32.partialorder %v1310, 0.0
    %vm1359 = vcmp.ge.f32.partialorder %v1311, 0.0
    %vm1360 = vcmp.ge.f32.partialorder %v1312, 0.0
    %vm1361 = vcmp.ge.f32.partialorder %v1313, 0.0
    %vm1362 = vcmp.ge.f32.partialorder %v1314, 0.0
    %vm1363 = vcmp.ge.f32.partialorder %v1315, 0.0
    %vm1364 = vcmp.ge.f32.partialorder %v1316, 0.0
    %vm1365 = vcmp.ge.f32.partialorder %v1317, 0.0
    %v1366 = vmul.f32 %v1270, 0.01
    %v1367 = vmul.f32 %v1271, 0.01
    %v1368 = vmul.f32 %v1272, 0.01
    %v1369 = vmul.f32 %v1273, 0.01
    %v1370 = vmul.f32 %v1274, 0.01
    %v1371 = vmul.f32 %v1275, 0.01
    %v1372 = vmul.f32 %v1276, 0.01
    %v1373 = vmul.f32 %v1277, 0.01
    %v1374 = vmul.f32 %v1278, 0.01
    %v1375 = vmul.f32 %v1279, 0.01
    %v1376 = vmul.f32 %v1280, 0.01
    %v1377 = vmul.f32 %v1281, 0.01
    %v1378 = vmul.f32 %v1282, 0.01
    %v1379 = vmul.f32 %v1283, 0.01
    %v1380 = vmul.f32 %v1284, 0.01
    %v1381 = vmul.f32 %v1285, 0.01
    %v1382 = vmul.f32 %v1286, 0.01
    %v1383 = vmul.f32 %v1287, 0.01
    %v1384 = vmul.f32 %v1288, 0.01
    %v1385 = vmul.f32 %v1289, 0.01
    %v1386 = vmul.f32 %v1290, 0.01
    %v1387 = vmul.f32 %v1291, 0.01
    %v1388 = vmul.f32 %v1292, 0.01
    %v1389 = vmul.f32 %v1293, 0.01
    %v1390 = vmul.f32 %v1294, 0.01
    %v1391 = vmul.f32 %v1295, 0.01
    %v1392 = vmul.f32 %v1296, 0.01
    %v1393 = vmul.f32 %v1297, 0.01
    %v1394 = vmul.f32 %v1298, 0.01
    %v1395 = vmul.f32 %v1299, 0.01
    %v1396 = vmul.f32 %v1300, 0.01
    %v1397 = vmul.f32 %v1301, 0.01
    %v1398 = vmul.f32 %v1302, 0.01
    %v1399 = vmul.f32 %v1303, 0.01
    %v1400 = vmul.f32 %v1304, 0.01
    %v1401 = vmul.f32 %v1305, 0.01
    %v1402 = vmul.f32 %v1306, 0.01
    %v1403 = vmul.f32 %v1307, 0.01
    %v1404 = vmul.f32 %v1308, 0.01
    %v1405 = vmul.f32 %v1309, 0.01
    %v1406 = vmul.f32 %v1310, 0.01
    %v1407 = vmul.f32 %v1311, 0.01
    %v1408 = vmul.f32 %v1312, 0.01
    %v1409 = vmul.f32 %v1313, 0.01
    %v1410 = vmul.f32 %v1314, 0.01
    %v1411 = vmul.f32 %v1315, 0.01
    %v1412 = vmul.f32 %v1316, 0.01
    %v1413 = vmul.f32 %v1317, 0.01
    %v1414 = vsel %vm1318, %v1270, %v1366
    %v1415 = vsel %vm1319, %v1271, %v1367
    %v1416 = vsel %vm1320, %v1272, %v1368
    %v1417 = vsel %vm1321, %v1273, %v1369
    %v1418 = vsel %vm1322, %v1274, %v1370
    %v1419 = vsel %vm1323, %v1275, %v1371
    %v1420 = vsel %vm1324, %v1276, %v1372
    %v1421 = vsel %vm1325, %v1277, %v1373
    %v1422 = vsel %vm1326, %v1278, %v1374
    %v1423 = vsel %vm1327, %v1279, %v1375
    %v1424 = vsel %vm1328, %v1280, %v1376
    %v1425 = vsel %vm1329, %v1281, %v1377
    %v1426 = vsel %vm1330, %v1282, %v1378
    %v1427 = vsel %vm1331, %v1283, %v1379
    %v1428 = vsel %vm1332, %v1284, %v1380
    %v1429 = vsel %vm1333, %v1285, %v1381
    %v1430 = vsel %vm1334, %v1286, %v1382
    %v1431 = vsel %vm1335, %v1287, %v1383
    %v1432 = vsel %vm1336, %v1288, %v1384
    %v1433 = vsel %vm1337, %v1289, %v1385
    %v1434 = vsel %vm1338, %v1290, %v1386
    %v1435 = vsel %vm1339, %v1291, %v1387
    %v1436 = vsel %vm1340, %v1292, %v1388
    %v1437 = vsel %vm1341, %v1293, %v1389
    %v1438 = vsel %vm1342, %v1294, %v1390
    %v1439 = vsel %vm1343, %v1295, %v1391
    %v1440 = vsel %vm1344, %v1296, %v1392
    %v1441 = vsel %vm1345, %v1297, %v1393
    %v1442 = vsel %vm1346, %v1298, %v1394
    %v1443 = vsel %vm1347, %v1299, %v1395
    %v1444 = vsel %vm1348, %v1300, %v1396
    %v1445 = vsel %vm1349, %v1301, %v1397
    %v1446 = vsel %vm1350, %v1302, %v1398
    %v1447 = vsel %vm1351, %v1303, %v1399
    %v1448 = vsel %vm1352, %v1304, %v1400
    %v1449 = vsel %vm1353, %v1305, %v1401
    %v1450 = vsel %vm1354, %v1306, %v1402
    %v1451 = vsel %vm1355, %v1307, %v1403
    %v1452 = vsel %vm1356, %v1308, %v1404
    %v1453 = vsel %vm1357, %v1309, %v1405
    %v1454 = vsel %vm1358, %v1310, %v1406
    %v1455 = vsel %vm1359, %v1311, %v1407
    %v1456 = vsel %vm1360, %v1312, %v1408
    %v1457 = vsel %vm1361, %v1313, %v1409
    %v1458 = vsel %vm1362, %v1314, %v1410
    %v1459 = vsel %vm1363, %v1315, %v1411
    %v1460 = vsel %vm1364, %v1316, %v1412
    %v1461 = vsel %vm1365, %v1317, %v1413
    %v1462 = vsel %vm123, 1, 0
    %v1463 = vsel %vm124, 1, 0
    %v1464 = vsel %vm125, 1, 0
    %v1465 = vsel %vm126, 1, 0
    %v1466 = vsel %vm127, 1, 0
    %v1467 = vsel %vm128, 1, 0
    %v1468 = vsel %vm129, 1, 0
    %v1469 = vsel %vm130, 1, 0
    %v1470 = vsel %vm131, 1, 0
    %v1471 = vsel %vm132, 1, 0
    %v1472 = vsel %vm133, 1, 0
    %v1473 = vsel %vm134, 1, 0
    %v1474 = vsel %vm135, 1, 0
    %v1475 = vsel %vm136, 1, 0
    %v1476 = vsel %vm137, 1, 0
    %v1477 = vsel %vm138, 1, 0
    %1478 = vset.pattern.permute.xlu0 0
    %1479 = vperm.xlu0 %1478, %v1462
    %v1480 = vpop.permute.xlu0 %1479
    %1481 = vset.pattern.permute.xlu0 0
    %1482 = vperm.xlu0 %1481, %v1463
    %v1483 = vpop.permute.xlu0 %1482
    %1484 = vset.pattern.permute.xlu0 0
    %1485 = vperm.xlu0 %1484, %v1464
    %v1486 = vpop.permute.xlu0 %1485
    %1487 = vset.pattern.permute.xlu0 0
    %1488 = vperm.xlu0 %1487, %v1465
    %v1489 = vpop.permute.xlu0 %1488
    %1490 = vset.pattern.permute.xlu0 0
    %1491 = vperm.xlu0 %1490, %v1466
    %v1492 = vpop.permute.xlu0 %1491
    %1493 = vset.pattern.permute.xlu0 0
    %1494 = vperm.xlu0 %1493, %v1467
    %v1495 = vpop.permute.xlu0 %1494
    %1496 = vset.pattern.permute.xlu0 0
    %1497 = vperm.xlu0 %1496, %v1468
    %v1498 = vpop.permute.xlu0 %1497
    %1499 = vset.pattern.permute.xlu0 0
    %1500 = vperm.xlu0 %1499, %v1469
    %v1501 = vpop.permute.xlu0 %1500
    %1502 = vset.pattern.permute.xlu0 0
    %1503 = vperm.xlu0 %1502, %v1470
    %v1504 = vpop.permute.xlu0 %1503
    %1505 = vset.pattern.permute.xlu0 0
    %1506 = vperm.xlu0 %1505, %v1471
    %v1507 = vpop.permute.xlu0 %1506
    %1508 = vset.pattern.permute.xlu0 0
    %1509 = vperm.xlu0 %1508, %v1472
    %v1510 = vpop.permute.xlu0 %1509
    %1511 = vset.pattern.permute.xlu0 0
    %1512 = vperm.xlu0 %1511, %v1473
    %v1513 = vpop.permute.xlu0 %1512
    %1514 = vset.pattern.permute.xlu0 0
    %1515 = vperm.xlu0 %1514, %v1474
    %v1516 = vpop.permute.xlu0 %1515
    %1517 = vset.pattern.permute.xlu0 0
    %1518 = vperm.xlu0 %1517, %v1475
    %v1519 = vpop.permute.xlu0 %1518
    %1520 = vset.pattern.permute.xlu0 0
    %1521 = vperm.xlu0 %1520, %v1476
    %v1522 = vpop.permute.xlu0 %1521
    %1523 = vset.pattern.permute.xlu0 0
    %1524 = vperm.xlu0 %1523, %v1477
    %v1525 = vpop.permute.xlu0 %1524
    %vm1526 = vcmp.eq.s32.totalorder %v1480, 1
    %vm1527 = vcmp.eq.s32.totalorder %v1483, 1
    %vm1528 = vcmp.eq.s32.totalorder %v1486, 1
    %vm1529 = vcmp.eq.s32.totalorder %v1489, 1
    %vm1530 = vcmp.eq.s32.totalorder %v1492, 1
    %vm1531 = vcmp.eq.s32.totalorder %v1495, 1
    %vm1532 = vcmp.eq.s32.totalorder %v1498, 1
    %vm1533 = vcmp.eq.s32.totalorder %v1501, 1
    %vm1534 = vcmp.eq.s32.totalorder %v1504, 1
    %vm1535 = vcmp.eq.s32.totalorder %v1507, 1
    %vm1536 = vcmp.eq.s32.totalorder %v1510, 1
    %vm1537 = vcmp.eq.s32.totalorder %v1513, 1
    %vm1538 = vcmp.eq.s32.totalorder %v1516, 1
    %vm1539 = vcmp.eq.s32.totalorder %v1519, 1
    %vm1540 = vcmp.eq.s32.totalorder %v1522, 1
    %vm1541 = vcmp.eq.s32.totalorder %v1525, 1
    %v1542 = vsel %vm1526, %v1414, 0.0
    %v1543 = vsel %vm1526, %v1415, 0.0
    %v1544 = vsel %vm1526, %v1416, 0.0
    %v1545 = vsel %vm1527, %v1417, 0.0
    %v1546 = vsel %vm1527, %v1418, 0.0
    %v1547 = vsel %vm1527, %v1419, 0.0
    %v1548 = vsel %vm1528, %v1420, 0.0
    %v1549 = vsel %vm1528, %v1421, 0.0
    %v1550 = vsel %vm1528, %v1422, 0.0
    %v1551 = vsel %vm1529, %v1423, 0.0
    %v1552 = vsel %vm1529, %v1424, 0.0
    %v1553 = vsel %vm1529, %v1425, 0.0
    %v1554 = vsel %vm1530, %v1426, 0.0
    %v1555 = vsel %vm1530, %v1427, 0.0
    %v1556 = vsel %vm1530, %v1428, 0.0
    %v1557 = vsel %vm1531, %v1429, 0.0
    %v1558 = vsel %vm1531, %v1430, 0.0
    %v1559 = vsel %vm1531, %v1431, 0.0
    %v1560 = vsel %vm1532, %v1432, 0.0
    %v1561 = vsel %vm1532, %v1433, 0.0
    %v1562 = vsel %vm1532, %v1434, 0.0
    %v1563 = vsel %vm1533, %v1435, 0.0
    %v1564 = vsel %vm1533, %v1436, 0.0
    %v1565 = vsel %vm1533, %v1437, 0.0
    %v1566 = vsel %vm1534, %v1438, 0.0
    %v1567 = vsel %vm1534, %v1439, 0.0
    %v1568 = vsel %vm1534, %v1440, 0.0
    %v1569 = vsel %vm1535, %v1441, 0.0
    %v1570 = vsel %vm1535, %v1442, 0.0
    %v1571 = vsel %vm1535, %v1443, 0.0
    %v1572 = vsel %vm1536, %v1444, 0.0
    %v1573 = vsel %vm1536, %v1445, 0.0
    %v1574 = vsel %vm1536, %v1446, 0.0
    %v1575 = vsel %vm1537, %v1447, 0.0
    %v1576 = vsel %vm1537, %v1448, 0.0
    %v1577 = vsel %vm1537, %v1449, 0.0
    %v1578 = vsel %vm1538, %v1450, 0.0
    %v1579 = vsel %vm1538, %v1451, 0.0
    %v1580 = vsel %vm1538, %v1452, 0.0
    %v1581 = vsel %vm1539, %v1453, 0.0
    %v1582 = vsel %vm1539, %v1454, 0.0
    %v1583 = vsel %vm1539, %v1455, 0.0
    %v1584 = vsel %vm1540, %v1456, 0.0
    %v1585 = vsel %vm1540, %v1457, 0.0
    %v1586 = vsel %vm1540, %v1458, 0.0
    %v1587 = vsel %vm1541, %v1459, 0.0
    %v1588 = vsel %vm1541, %v1460, 0.0
    %v1589 = vsel %vm1541, %v1461, 0.0
    %1590 = vst [vmem:[#allocation3] sm:$0xff] 0.0
    %1591 = vst [vmem:[#allocation3 + $0x8] sm:$0xff] 0.0
    %1592 = vst [vmem:[#allocation3 + $0x10] sm:$0xff] 0.0
    %1593 = vst [vmem:[#allocation3 + $0x18] sm:$0xff] %v1542
    %1594 = vst [vmem:[#allocation3 + $0x20] sm:$0xff] %v1543
    %1595 = vst [vmem:[#allocation3 + $0x28] sm:$0xff] %v1544
    %1596 = vst [vmem:[#allocation3 + $0x30] sm:$0xff] %v1545
    %1597 = vst [vmem:[#allocation3 + $0x38] sm:$0xff] %v1546
    %1598 = vst [vmem:[#allocation3 + $0x40] sm:$0xff] %v1547
    %1599 = vst [vmem:[#allocation3 + $0x48] sm:$0xff] %v1548
    %1600 = vst [vmem:[#allocation3 + $0x50] sm:$0xff] %v1549
    %1601 = vst [vmem:[#allocation3 + $0x58] sm:$0xff] %v1550
    %1602 = vst [vmem:[#allocation3 + $0x60] sm:$0xff] %v1551
    %1603 = vst [vmem:[#allocation3 + $0x68] sm:$0xff] %v1552
    %1604 = vst [vmem:[#allocation3 + $0x70] sm:$0xff] %v1553
    %1605 = vst [vmem:[#allocation3 + $0x78] sm:$0xff] %v1554
    %1606 = vst [vmem:[#allocation3 + $0x80] sm:$0xff] %v1555
    %1607 = vst [vmem:[#allocation3 + $0x88] sm:$0xff] %v1556
    %1608 = vst [vmem:[#allocation3 + $0x90] sm:$0xff] %v1557
    %1609 = vst [vmem:[#allocation3 + $0x98] sm:$0xff] %v1558
    %1610 = vst [vmem:[#allocation3 + $0xa0] sm:$0xff] %v1559
    %1611 = vst [vmem:[#allocation3 + $0xa8] sm:$0xff] %v1560
    %1612 = vst [vmem:[#allocation3 + $0xb0] sm:$0xff] %v1561
    %1613 = vst [vmem:[#allocation3 + $0xb8] sm:$0xff] %v1562
    %1614 = vst [vmem:[#allocation3 + $0xc0] sm:$0xff] %v1563
    %1615 = vst [vmem:[#allocation3 + $0xc8] sm:$0xff] %v1564
    %1616 = vst [vmem:[#allocation3 + $0xd0] sm:$0xff] %v1565
    %1617 = vst [vmem:[#allocation3 + $0xd8] sm:$0xff] %v1566
    %1618 = vst [vmem:[#allocation3 + $0xe0] sm:$0xff] %v1567
    %1619 = vst [vmem:[#allocation3 + $0xe8] sm:$0xff] %v1568
    %1620 = vst [vmem:[#allocation3 + $0xf0] sm:$0xff] %v1569
    %1621 = vst [vmem:[#allocation3 + $0xf8] sm:$0xff] %v1570
    %1622 = vst [vmem:[#allocation3 + $0x100] sm:$0xff] %v1571
    %1623 = vst [vmem:[#allocation3 + $0x108] sm:$0xff] %v1572
    %1624 = vst [vmem:[#allocation3 + $0x110] sm:$0xff] %v1573
    %1625 = vst [vmem:[#allocation3 + $0x118] sm:$0xff] %v1574
    %1626 = vst [vmem:[#allocation3 + $0x120] sm:$0xff] %v1575
    %1627 = vst [vmem:[#allocation3 + $0x128] sm:$0xff] %v1576
    %1628 = vst [vmem:[#allocation3 + $0x130] sm:$0xff] %v1577
    %1629 = vst [vmem:[#allocation3 + $0x138] sm:$0xff] %v1578
    %1630 = vst [vmem:[#allocation3 + $0x140] sm:$0xff] %v1579
    %1631 = vst [vmem:[#allocation3 + $0x148] sm:$0xff] %v1580
    %1632 = vst [vmem:[#allocation3 + $0x150] sm:$0xff] %v1581
    %1633 = vst [vmem:[#allocation3 + $0x158] sm:$0xff] %v1582
    %1634 = vst [vmem:[#allocation3 + $0x160] sm:$0xff] %v1583
    %1635 = vst [vmem:[#allocation3 + $0x168] sm:$0xff] %v1584
    %1636 = vst [vmem:[#allocation3 + $0x170] sm:$0xff] %v1585
    %1637 = vst [vmem:[#allocation3 + $0x178] sm:$0xff] %v1586
    %1638 = vst [vmem:[#allocation3 + $0x180] sm:$0xff] %v1587
    %1639 = vst [vmem:[#allocation3 + $0x188] sm:$0xff] %v1588
    %1640 = vst [vmem:[#allocation3 + $0x190] sm:$0xff] %v1589
    %1641 = vst [vmem:[#allocation3 + $0x198] sm:$0xff] 0.0
    %1642 = vst [vmem:[#allocation3 + $0x1a0] sm:$0xff] 0.0
    %1643 = vst [vmem:[#allocation3 + $0x1a8] sm:$0xff] 0.0
    %v1644 = vpack.c.bf16 %v1545, %v1542
    %v1645 = vpack.c.bf16 %v1546, %v1543
    %v1646 = vpack.c.bf16 %v1551, %v1548
    %v1647 = vpack.c.bf16 %v1552, %v1549
    %v1648 = vpack.c.bf16 %v1557, %v1554
    %v1649 = vpack.c.bf16 %v1558, %v1555
    %v1650 = vpack.c.bf16 %v1563, %v1560
    %v1651 = vpack.c.bf16 %v1564, %v1561
    %v1652 = vpack.c.bf16 %v1569, %v1566
    %v1653 = vpack.c.bf16 %v1570, %v1567
    %v1654 = vpack.c.bf16 %v1575, %v1572
    %v1655 = vpack.c.bf16 %v1576, %v1573
    %v1656 = vpack.c.bf16 %v1581, %v1578
    %v1657 = vpack.c.bf16 %v1582, %v1579
    %v1658 = vpack.c.bf16 %v1587, %v1584
    %v1659 = vpack.c.bf16 %v1588, %v1585
    %v1676 = vunpack.c.l.b16 %v1644
    %v1677 = vunpack.c.l.b16 %v1645
    %v1678 = vunpack.c.h.b16 %v1644
    %v1679 = vunpack.c.h.b16 %v1645
    %v1680 = vunpack.c.l.b16 %v1646
    %v1681 = vunpack.c.l.b16 %v1647
    %v1682 = vunpack.c.h.b16 %v1646
    %v1683 = vunpack.c.h.b16 %v1647
    %v1684 = vunpack.c.l.b16 %v1648
    %v1685 = vunpack.c.l.b16 %v1649
    %v1686 = vunpack.c.h.b16 %v1648
    %v1687 = vunpack.c.h.b16 %v1649
    %v1688 = vunpack.c.l.b16 %v1650
    %v1689 = vunpack.c.l.b16 %v1651
    %v1690 = vunpack.c.h.b16 %v1650
    %v1691 = vunpack.c.h.b16 %v1651
    %v1692 = vunpack.c.l.b16 %v1652
    %v1693 = vunpack.c.l.b16 %v1653
    %v1694 = vunpack.c.h.b16 %v1652
    %v1695 = vunpack.c.h.b16 %v1653
    %v1696 = vunpack.c.l.b16 %v1654
    %v1697 = vunpack.c.l.b16 %v1655
    %v1698 = vunpack.c.h.b16 %v1654
    %v1699 = vunpack.c.h.b16 %v1655
    %v1700 = vunpack.c.l.b16 %v1656
    %v1701 = vunpack.c.l.b16 %v1657
    %v1702 = vunpack.c.h.b16 %v1656
    %v1703 = vunpack.c.h.b16 %v1657
    %v1704 = vunpack.c.l.b16 %v1658
    %v1705 = vunpack.c.l.b16 %v1659
    %v1706 = vunpack.c.h.b16 %v1658
    %v1707 = vunpack.c.h.b16 %v1659
    %v1708 = vpack.c.b16 %v1677, %v1676
    %v1709 = vpack.c.b16 %v1679, %v1678
    %v1710 = vpack.c.b16 %v1681, %v1680
    %v1711 = vpack.c.b16 %v1683, %v1682
    %v1712 = vpack.c.b16 %v1685, %v1684
    %v1713 = vpack.c.b16 %v1687, %v1686
    %v1714 = vpack.c.b16 %v1689, %v1688
    %v1715 = vpack.c.b16 %v1691, %v1690
    %v1716 = vpack.c.b16 %v1693, %v1692
    %v1717 = vpack.c.b16 %v1695, %v1694
    %v1718 = vpack.c.b16 %v1697, %v1696
    %v1719 = vpack.c.b16 %v1699, %v1698
    %v1720 = vpack.c.b16 %v1701, %v1700
    %v1721 = vpack.c.b16 %v1703, %v1702
    %v1722 = vpack.c.b16 %v1705, %v1704
    %v1723 = vpack.c.b16 %v1707, %v1706
    %1740 = vst [vmem:[#allocation4] sm:$0xff] %v1708
    %1741 = vst [vmem:[#allocation4 + $0x18] sm:$0xff] %v1709
    %1742 = vst [vmem:[#allocation4 + $0x30] sm:$0xff] %v1710
    %1743 = vst [vmem:[#allocation4 + $0x48] sm:$0xff] %v1711
    %1744 = vst [vmem:[#allocation4 + $0x60] sm:$0xff] %v1712
    %1745 = vst [vmem:[#allocation4 + $0x78] sm:$0xff] %v1713
    %1746 = vst [vmem:[#allocation4 + $0x90] sm:$0xff] %v1714
    %1747 = vst [vmem:[#allocation4 + $0xa8] sm:$0xff] %v1715
    %1748 = vst [vmem:[#allocation4 + $0xc0] sm:$0xff] %v1716
    %1749 = vst [vmem:[#allocation4 + $0xd8] sm:$0xff] %v1717
    %1750 = vst [vmem:[#allocation4 + $0xf0] sm:$0xff] %v1718
    %1751 = vst [vmem:[#allocation4 + $0x108] sm:$0xff] %v1719
    %1752 = vst [vmem:[#allocation4 + $0x120] sm:$0xff] %v1720
    %1753 = vst [vmem:[#allocation4 + $0x138] sm:$0xff] %v1721
    %1754 = vst [vmem:[#allocation4 + $0x150] sm:$0xff] %v1722
    %1755 = vst [vmem:[#allocation4 + $0x168] sm:$0xff] %v1723
    %v1756 = vld [vmem:[#allocation3 + $0x20] sm:$0xfe]
    %v1757 = vld [vmem:[#allocation3 + $0x38] sm:$0xff]
    %v1758 = vld [vmem:[#allocation3 + $0x50] sm:$0xff]
    %v1759 = vld [vmem:[#allocation3 + $0x68] sm:$0xff]
    %v1760 = vld [vmem:[#allocation3 + $0x80] sm:$0xff]
    %v1761 = vld [vmem:[#allocation3 + $0x98] sm:$0xff]
    %v1762 = vld [vmem:[#allocation3 + $0xb0] sm:$0xff]
    %v1763 = vld [vmem:[#allocation3 + $0xc8] sm:$0xff]
    %v1764 = vld [vmem:[#allocation3 + $0xe0] sm:$0xff]
    %v1765 = vld [vmem:[#allocation3 + $0xf8] sm:$0xff]
    %v1766 = vld [vmem:[#allocation3 + $0x110] sm:$0xff]
    %v1767 = vld [vmem:[#allocation3 + $0x128] sm:$0xff]
    %v1768 = vld [vmem:[#allocation3 + $0x140] sm:$0xff]
    %v1769 = vld [vmem:[#allocation3 + $0x158] sm:$0xff]
    %v1770 = vld [vmem:[#allocation3 + $0x170] sm:$0xff]
    %v1771 = vld [vmem:[#allocation3 + $0x188] sm:$0xff]
    %v1772 = vld [vmem:[#allocation3 + $0x1a0] sm:$0x1]
    %v1773 = vpack.c.bf16 %v1757, %v1756
    %v1774 = vpack.c.bf16 %v1759, %v1758
    %v1775 = vpack.c.bf16 %v1761, %v1760
    %v1776 = vpack.c.bf16 %v1763, %v1762
    %v1777 = vpack.c.bf16 %v1765, %v1764
    %v1778 = vpack.c.bf16 %v1767, %v1766
    %v1779 = vpack.c.bf16 %v1769, %v1768
    %v1780 = vpack.c.bf16 %v1771, %v1770
    %v1781 = vpack.c.bf16 %v1772, %v1772
    %v1791 = vunpack.c.l.b16 %v1773
    %v1792 = vunpack.c.h.b16 %v1773
    %v1793 = vunpack.c.l.b16 %v1774
    %v1794 = vunpack.c.h.b16 %v1774
    %v1795 = vunpack.c.l.b16 %v1775
    %v1796 = vunpack.c.h.b16 %v1775
    %v1797 = vunpack.c.l.b16 %v1776
    %v1798 = vunpack.c.h.b16 %v1776
    %v1799 = vunpack.c.l.b16 %v1777
    %v1800 = vunpack.c.h.b16 %v1777
    %v1801 = vunpack.c.l.b16 %v1778
    %v1802 = vunpack.c.h.b16 %v1778
    %v1803 = vunpack.c.l.b16 %v1779
    %v1804 = vunpack.c.h.b16 %v1779
    %v1805 = vunpack.c.l.b16 %v1780
    %v1806 = vunpack.c.h.b16 %v1780
    %v1807 = vunpack.c.l.b16 %v1781
    %v1808 = vpack.c.b16 %v1791, %v1791
    %v1809 = vpack.c.b16 %v1792, %v1792
    %v1810 = vpack.c.b16 %v1793, %v1793
    %v1811 = vpack.c.b16 %v1794, %v1794
    %v1812 = vpack.c.b16 %v1795, %v1795
    %v1813 = vpack.c.b16 %v1796, %v1796
    %v1814 = vpack.c.b16 %v1797, %v1797
    %v1815 = vpack.c.b16 %v1798, %v1798
    %v1816 = vpack.c.b16 %v1799, %v1799
    %v1817 = vpack.c.b16 %v1800, %v1800
    %v1818 = vpack.c.b16 %v1801, %v1801
    %v1819 = vpack.c.b16 %v1802, %v1802
    %v1820 = vpack.c.b16 %v1803, %v1803
    %v1821 = vpack.c.b16 %v1804, %v1804
    %v1822 = vpack.c.b16 %v1805, %v1805
    %v1823 = vpack.c.b16 %v1806, %v1806
    %v1824 = vpack.c.b16 %v1807, %v1807
    %vm1825 = vsmask.f32 3328
    %vm1826 = vsmask.f32 7440
    %vm1827 = vmor %vm1825, %vm1826
    %v1829 = vshrl.u32 %v1808, 16
    %v1831 = vrot.slane %v1829, 4
    %v1832 = vshll.u32 %v1808, 16
    %v1834 = vrot.slane %v1832, 5
    %v1835 = vor.u32 %v1831, %v1834
    %v1836 = vrot.slane %v1835, 4
    %v1838 = vshll.u32 %v1809, 16
    %v1840 = vrot.slane %v1838, 5
    %v1841 = vsel %vm1827, %v1836, %v1840
    %v1842 = vshrl.u32 %v1809, 16
    %v1844 = vrot.slane %v1842, 4
    %v1845 = vor.u32 %v1844, %v1840
    %v1846 = vrot.slane %v1845, 4
    %v1848 = vshll.u32 %v1810, 16
    %v1850 = vrot.slane %v1848, 5
    %v1851 = vsel %vm1827, %v1846, %v1850
    %v1852 = vshrl.u32 %v1810, 16
    %v1854 = vrot.slane %v1852, 4
    %v1855 = vor.u32 %v1854, %v1850
    %v1856 = vrot.slane %v1855, 4
    %v1858 = vshll.u32 %v1811, 16
    %v1860 = vrot.slane %v1858, 5
    %v1861 = vsel %vm1827, %v1856, %v1860
    %v1862 = vshrl.u32 %v1811, 16
    %v1864 = vrot.slane %v1862, 4
    %v1865 = vor.u32 %v1864, %v1860
    %v1866 = vrot.slane %v1865, 4
    %v1868 = vshll.u32 %v1812, 16
    %v1870 = vrot.slane %v1868, 5
    %v1871 = vsel %vm1827, %v1866, %v1870
    %v1872 = vshrl.u32 %v1812, 16
    %v1874 = vrot.slane %v1872, 4
    %v1875 = vor.u32 %v1874, %v1870
    %v1876 = vrot.slane %v1875, 4
    %v1878 = vshll.u32 %v1813, 16
    %v1880 = vrot.slane %v1878, 5
    %v1881 = vsel %vm1827, %v1876, %v1880
    %v1882 = vshrl.u32 %v1813, 16
    %v1884 = vrot.slane %v1882, 4
    %v1885 = vor.u32 %v1884, %v1880
    %v1886 = vrot.slane %v1885, 4
    %v1888 = vshll.u32 %v1814, 16
    %v1890 = vrot.slane %v1888, 5
    %v1891 = vsel %vm1827, %v1886, %v1890
    %v1892 = vshrl.u32 %v1814, 16
    %v1894 = vrot.slane %v1892, 4
    %v1895 = vor.u32 %v1894, %v1890
    %v1896 = vrot.slane %v1895, 4
    %v1898 = vshll.u32 %v1815, 16
    %v1900 = vrot.slane %v1898, 5
    %v1901 = vsel %vm1827, %v1896, %v1900
    %v1902 = vshrl.u32 %v1815, 16
    %v1904 = vrot.slane %v1902, 4
    %v1905 = vor.u32 %v1904, %v1900
    %v1906 = vrot.slane %v1905, 4
    %v1908 = vshll.u32 %v1816, 16
    %v1910 = vrot.slane %v1908, 5
    %v1911 = vsel %vm1827, %v1906, %v1910
    %v1912 = vshrl.u32 %v1816, 16
    %v1914 = vrot.slane %v1912, 4
    %v1915 = vor.u32 %v1914, %v1910
    %v1916 = vrot.slane %v1915, 4
    %v1918 = vshll.u32 %v1817, 16
    %v1920 = vrot.slane %v1918, 5
    %v1921 = vsel %vm1827, %v1916, %v1920
    %v1922 = vshrl.u32 %v1817, 16
    %v1924 = vrot.slane %v1922, 4
    %v1925 = vor.u32 %v1924, %v1920
    %v1926 = vrot.slane %v1925, 4
    %v1928 = vshll.u32 %v1818, 16
    %v1930 = vrot.slane %v1928, 5
    %v1931 = vsel %vm1827, %v1926, %v1930
    %v1932 = vshrl.u32 %v1818, 16
    %v1934 = vrot.slane %v1932, 4
    %v1935 = vor.u32 %v1934, %v1930
    %v1936 = vrot.slane %v1935, 4
    %v1938 = vshll.u32 %v1819, 16
    %v1940 = vrot.slane %v1938, 5
    %v1941 = vsel %vm1827, %v1936, %v1940
    %v1942 = vshrl.u32 %v1819, 16
    %v1944 = vrot.slane %v1942, 4
    %v1945 = vor.u32 %v1944, %v1940
    %v1946 = vrot.slane %v1945, 4
    %v1948 = vshll.u32 %v1820, 16
    %v1950 = vrot.slane %v1948, 5
    %v1951 = vsel %vm1827, %v1946, %v1950
    %v1952 = vshrl.u32 %v1820, 16
    %v1954 = vrot.slane %v1952, 4
    %v1955 = vor.u32 %v1954, %v1950
    %v1956 = vrot.slane %v1955, 4
    %v1958 = vshll.u32 %v1821, 16
    %v1960 = vrot.slane %v1958, 5
    %v1961 = vsel %vm1827, %v1956, %v1960
    %v1962 = vshrl.u32 %v1821, 16
    %v1964 = vrot.slane %v1962, 4
    %v1965 = vor.u32 %v1964, %v1960
    %v1966 = vrot.slane %v1965, 4
    %v1968 = vshll.u32 %v1822, 16
    %v1970 = vrot.slane %v1968, 5
    %v1971 = vsel %vm1827, %v1966, %v1970
    %v1972 = vshrl.u32 %v1822, 16
    %v1974 = vrot.slane %v1972, 4
    %v1975 = vor.u32 %v1974, %v1970
    %v1976 = vrot.slane %v1975, 4
    %v1978 = vshll.u32 %v1823, 16
    %v1980 = vrot.slane %v1978, 5
    %v1981 = vsel %vm1827, %v1976, %v1980
    %v1982 = vshrl.u32 %v1823, 16
    %v1984 = vrot.slane %v1982, 4
    %v1985 = vor.u32 %v1984, %v1980
    %v1986 = vrot.slane %v1985, 4
    %v1988 = vshll.u32 %v1824, 16
    %v1990 = vrot.slane %v1988, 5
    %v1991 = vsel %vm1827, %v1986, %v1990
    %2008 = vst [vmem:[#allocation4 + $0x8] sm:$0xf] %v1841
    %2009 = vst [vmem:[#allocation4 + $0x20] sm:$0xf] %v1851
    %2010 = vst [vmem:[#allocation4 + $0x38] sm:$0xf] %v1861
    %2011 = vst [vmem:[#allocation4 + $0x50] sm:$0xf] %v1871
    %2012 = vst [vmem:[#allocation4 + $0x68] sm:$0xf] %v1881
    %2013 = vst [vmem:[#allocation4 + $0x80] sm:$0xf] %v1891
    %2014 = vst [vmem:[#allocation4 + $0x98] sm:$0xf] %v1901
    %2015 = vst [vmem:[#allocation4 + $0xb0] sm:$0xf] %v1911
    %2016 = vst [vmem:[#allocation4 + $0xc8] sm:$0xf] %v1921
    %2017 = vst [vmem:[#allocation4 + $0xe0] sm:$0xf] %v1931
    %2018 = vst [vmem:[#allocation4 + $0xf8] sm:$0xf] %v1941
    %2019 = vst [vmem:[#allocation4 + $0x110] sm:$0xf] %v1951
    %2020 = vst [vmem:[#allocation4 + $0x128] sm:$0xf] %v1961
    %2021 = vst [vmem:[#allocation4 + $0x140] sm:$0xf] %v1971
    %2022 = vst [vmem:[#allocation4 + $0x158] sm:$0xf] %v1981
    %2023 = vst [vmem:[#allocation4 + $0x170] sm:$0xf] %v1991
    %v2024 = vld [vmem:[#allocation3 + $0x10] sm:$0x80]
    %v2025 = vld [vmem:[#allocation3 + $0x28] sm:$0xff]
    %v2026 = vld [vmem:[#allocation3 + $0x40] sm:$0xff]
    %v2027 = vld [vmem:[#allocation3 + $0x58] sm:$0xff]
    %v2028 = vld [vmem:[#allocation3 + $0x70] sm:$0xff]
    %v2029 = vld [vmem:[#allocation3 + $0x88] sm:$0xff]
    %v2030 = vld [vmem:[#allocation3 + $0xa0] sm:$0xff]
    %v2031 = vld [vmem:[#allocation3 + $0xb8] sm:$0xff]
    %v2032 = vld [vmem:[#allocation3 + $0xd0] sm:$0xff]
    %v2033 = vld [vmem:[#allocation3 + $0xe8] sm:$0xff]
    %v2034 = vld [vmem:[#allocation3 + $0x100] sm:$0xff]
    %v2035 = vld [vmem:[#allocation3 + $0x118] sm:$0xff]
    %v2036 = vld [vmem:[#allocation3 + $0x130] sm:$0xff]
    %v2037 = vld [vmem:[#allocation3 + $0x148] sm:$0xff]
    %v2038 = vld [vmem:[#allocation3 + $0x160] sm:$0xff]
    %v2039 = vld [vmem:[#allocation3 + $0x178] sm:$0xff]
    %v2040 = vld [vmem:[#allocation3 + $0x190] sm:$0x7f]
    %v2041 = vpack.c.bf16 %v2025, %v2024
    %v2042 = vpack.c.bf16 %v2027, %v2026
    %v2043 = vpack.c.bf16 %v2029, %v2028
    %v2044 = vpack.c.bf16 %v2031, %v2030
    %v2045 = vpack.c.bf16 %v2033, %v2032
    %v2046 = vpack.c.bf16 %v2035, %v2034
    %v2047 = vpack.c.bf16 %v2037, %v2036
    %v2048 = vpack.c.bf16 %v2039, %v2038
    %v2049 = vpack.c.bf16 %v2040, %v2040
    %v2059 = vunpack.c.l.b16 %v2041
    %v2060 = vunpack.c.h.b16 %v2041
    %v2061 = vunpack.c.l.b16 %v2042
    %v2062 = vunpack.c.h.b16 %v2042
    %v2063 = vunpack.c.l.b16 %v2043
    %v2064 = vunpack.c.h.b16 %v2043
    %v2065 = vunpack.c.l.b16 %v2044
    %v2066 = vunpack.c.h.b16 %v2044
    %v2067 = vunpack.c.l.b16 %v2045
    %v2068 = vunpack.c.h.b16 %v2045
    %v2069 = vunpack.c.l.b16 %v2046
    %v2070 = vunpack.c.h.b16 %v2046
    %v2071 = vunpack.c.l.b16 %v2047
    %v2072 = vunpack.c.h.b16 %v2047
    %v2073 = vunpack.c.l.b16 %v2048
    %v2074 = vunpack.c.h.b16 %v2048
    %v2075 = vunpack.c.l.b16 %v2049
    %v2076 = vpack.c.b16 %v2059, %v2059
    %v2077 = vpack.c.b16 %v2060, %v2060
    %v2078 = vpack.c.b16 %v2061, %v2061
    %v2079 = vpack.c.b16 %v2062, %v2062
    %v2080 = vpack.c.b16 %v2063, %v2063
    %v2081 = vpack.c.b16 %v2064, %v2064
    %v2082 = vpack.c.b16 %v2065, %v2065
    %v2083 = vpack.c.b16 %v2066, %v2066
    %v2084 = vpack.c.b16 %v2067, %v2067
    %v2085 = vpack.c.b16 %v2068, %v2068
    %v2086 = vpack.c.b16 %v2069, %v2069
    %v2087 = vpack.c.b16 %v2070, %v2070
    %v2088 = vpack.c.b16 %v2071, %v2071
    %v2089 = vpack.c.b16 %v2072, %v2072
    %v2090 = vpack.c.b16 %v2073, %v2073
    %v2091 = vpack.c.b16 %v2074, %v2074
    %v2092 = vpack.c.b16 %v2075, %v2075
    %vm2093 = vsmask.f32 256
    %vm2094 = vsmask.f32 4368
    %vm2095 = vmor %vm2093, %vm2094
    %v2097 = vshrl.u32 %v2076, 16
    %v2099 = vrot.slane %v2097, 7
    %v2100 = vrot.slane %v2099, 4
    %v2102 = vshrl.u32 %v2077, 16
    %v2104 = vrot.slane %v2102, 7
    %v2105 = vshll.u32 %v2077, 16
    %v2107 = vor.u32 %v2104, %v2105
    %v2108 = vsel %vm2095, %v2100, %v2107
    %v2109 = vrot.slane %v2104, 4
    %v2111 = vshrl.u32 %v2078, 16
    %v2113 = vrot.slane %v2111, 7
    %v2114 = vshll.u32 %v2078, 16
    %v2116 = vor.u32 %v2113, %v2114
    %v2117 = vsel %vm2095, %v2109, %v2116
    %v2118 = vrot.slane %v2113, 4
    %v2120 = vshrl.u32 %v2079, 16
    %v2122 = vrot.slane %v2120, 7
    %v2123 = vshll.u32 %v2079, 16
    %v2125 = vor.u32 %v2122, %v2123
    %v2126 = vsel %vm2095, %v2118, %v2125
    %v2127 = vrot.slane %v2122, 4
    %v2129 = vshrl.u32 %v2080, 16
    %v2131 = vrot.slane %v2129, 7
    %v2132 = vshll.u32 %v2080, 16
    %v2134 = vor.u32 %v2131, %v2132
    %v2135 = vsel %vm2095, %v2127, %v2134
    %v2136 = vrot.slane %v2131, 4
    %v2138 = vshrl.u32 %v2081, 16
    %v2140 = vrot.slane %v2138, 7
    %v2141 = vshll.u32 %v2081, 16
    %v2143 = vor.u32 %v2140, %v2141
    %v2144 = vsel %vm2095, %v2136, %v2143
    %v2145 = vrot.slane %v2140, 4
    %v2147 = vshrl.u32 %v2082, 16
    %v2149 = vrot.slane %v2147, 7
    %v2150 = vshll.u32 %v2082, 16
    %v2152 = vor.u32 %v2149, %v2150
    %v2153 = vsel %vm2095, %v2145, %v2152
    %v2154 = vrot.slane %v2149, 4
    %v2156 = vshrl.u32 %v2083, 16
    %v2158 = vrot.slane %v2156, 7
    %v2159 = vshll.u32 %v2083, 16
    %v2161 = vor.u32 %v2158, %v2159
    %v2162 = vsel %vm2095, %v2154, %v2161
    %v2163 = vrot.slane %v2158, 4
    %v2165 = vshrl.u32 %v2084, 16
    %v2167 = vrot.slane %v2165, 7
    %v2168 = vshll.u32 %v2084, 16
    %v2170 = vor.u32 %v2167, %v2168
    %v2171 = vsel %vm2095, %v2163, %v2170
    %v2172 = vrot.slane %v2167, 4
    %v2174 = vshrl.u32 %v2085, 16
    %v2176 = vrot.slane %v2174, 7
    %v2177 = vshll.u32 %v2085, 16
    %v2179 = vor.u32 %v2176, %v2177
    %v2180 = vsel %vm2095, %v2172, %v2179
    %v2181 = vrot.slane %v2176, 4
    %v2183 = vshrl.u32 %v2086, 16
    %v2185 = vrot.slane %v2183, 7
    %v2186 = vshll.u32 %v2086, 16
    %v2188 = vor.u32 %v2185, %v2186
    %v2189 = vsel %vm2095, %v2181, %v2188
    %v2190 = vrot.slane %v2185, 4
    %v2192 = vshrl.u32 %v2087, 16
    %v2194 = vrot.slane %v2192, 7
    %v2195 = vshll.u32 %v2087, 16
    %v2197 = vor.u32 %v2194, %v2195
    %v2198 = vsel %vm2095, %v2190, %v2197
    %v2199 = vrot.slane %v2194, 4
    %v2201 = vshrl.u32 %v2088, 16
    %v2203 = vrot.slane %v2201, 7
    %v2204 = vshll.u32 %v2088, 16
    %v2206 = vor.u32 %v2203, %v2204
    %v2207 = vsel %vm2095, %v2199, %v2206
    %v2208 = vrot.slane %v2203, 4
    %v2210 = vshrl.u32 %v2089, 16
    %v2212 = vrot.slane %v2210, 7
    %v2213 = vshll.u32 %v2089, 16
    %v2215 = vor.u32 %v2212, %v2213
    %v2216 = vsel %vm2095, %v2208, %v2215
    %v2217 = vrot.slane %v2212, 4
    %v2219 = vshrl.u32 %v2090, 16
    %v2221 = vrot.slane %v2219, 7
    %v2222 = vshll.u32 %v2090, 16
    %v2224 = vor.u32 %v2221, %v2222
    %v2225 = vsel %vm2095, %v2217, %v2224
    %v2226 = vrot.slane %v2221, 4
    %v2228 = vshrl.u32 %v2091, 16
    %v2230 = vrot.slane %v2228, 7
    %v2231 = vshll.u32 %v2091, 16
    %v2233 = vor.u32 %v2230, %v2231
    %v2234 = vsel %vm2095, %v2226, %v2233
    %v2235 = vrot.slane %v2230, 4
    %v2237 = vshrl.u32 %v2092, 16
    %v2239 = vrot.slane %v2237, 7
    %v2240 = vshll.u32 %v2092, 16
    %v2242 = vor.u32 %v2239, %v2240
    %v2243 = vsel %vm2095, %v2235, %v2242
    %2260 = vst [vmem:[#allocation4 + $0xc] sm:$0xf] %v2108
    %2261 = vst [vmem:[#allocation4 + $0x24] sm:$0xf] %v2117
    %2262 = vst [vmem:[#allocation4 + $0x3c] sm:$0xf] %v2126
    %2263 = vst [vmem:[#allocation4 + $0x54] sm:$0xf] %v2135
    %2264 = vst [vmem:[#allocation4 + $0x6c] sm:$0xf] %v2144
    %2265 = vst [vmem:[#allocation4 + $0x84] sm:$0xf] %v2153
    %2266 = vst [vmem:[#allocation4 + $0x9c] sm:$0xf] %v2162
    %2267 = vst [vmem:[#allocation4 + $0xb4] sm:$0xf] %v2171
    %2268 = vst [vmem:[#allocation4 + $0xcc] sm:$0xf] %v2180
    %2269 = vst [vmem:[#allocation4 + $0xe4] sm:$0xf] %v2189
    %2270 = vst [vmem:[#allocation4 + $0xfc] sm:$0xf] %v2198
    %2271 = vst [vmem:[#allocation4 + $0x114] sm:$0xf] %v2207
    %2272 = vst [vmem:[#allocation4 + $0x12c] sm:$0xf] %v2216
    %2273 = vst [vmem:[#allocation4 + $0x144] sm:$0xf] %v2225
    %2274 = vst [vmem:[#allocation4 + $0x15c] sm:$0xf] %v2234
    %2275 = vst [vmem:[#allocation4 + $0x174] sm:$0xf] %v2243
    %v2276 = vpack.c.bf16 %v1547, %v1544
    %v2277 = vpack.c.bf16 %v1553, %v1550
    %v2278 = vpack.c.bf16 %v1559, %v1556
    %v2279 = vpack.c.bf16 %v1565, %v1562
    %v2280 = vpack.c.bf16 %v1571, %v1568
    %v2281 = vpack.c.bf16 %v1577, %v1574
    %v2282 = vpack.c.bf16 %v1583, %v1580
    %v2283 = vpack.c.bf16 %v1589, %v1586
    %v2292 = vunpack.c.l.b16 %v2276
    %v2293 = vunpack.c.h.b16 %v2276
    %v2294 = vunpack.c.l.b16 %v2277
    %v2295 = vunpack.c.h.b16 %v2277
    %v2296 = vunpack.c.l.b16 %v2278
    %v2297 = vunpack.c.h.b16 %v2278
    %v2298 = vunpack.c.l.b16 %v2279
    %v2299 = vunpack.c.h.b16 %v2279
    %v2300 = vunpack.c.l.b16 %v2280
    %v2301 = vunpack.c.h.b16 %v2280
    %v2302 = vunpack.c.l.b16 %v2281
    %v2303 = vunpack.c.h.b16 %v2281
    %v2304 = vunpack.c.l.b16 %v2282
    %v2305 = vunpack.c.h.b16 %v2282
    %v2306 = vunpack.c.l.b16 %v2283
    %v2307 = vunpack.c.h.b16 %v2283
    %v2308 = vpack.c.b16 %v2292, %v2292
    %v2309 = vpack.c.b16 %v2293, %v2293
    %v2310 = vpack.c.b16 %v2294, %v2294
    %v2311 = vpack.c.b16 %v2295, %v2295
    %v2312 = vpack.c.b16 %v2296, %v2296
    %v2313 = vpack.c.b16 %v2297, %v2297
    %v2314 = vpack.c.b16 %v2298, %v2298
    %v2315 = vpack.c.b16 %v2299, %v2299
    %v2316 = vpack.c.b16 %v2300, %v2300
    %v2317 = vpack.c.b16 %v2301, %v2301
    %v2318 = vpack.c.b16 %v2302, %v2302
    %v2319 = vpack.c.b16 %v2303, %v2303
    %v2320 = vpack.c.b16 %v2304, %v2304
    %v2321 = vpack.c.b16 %v2305, %v2305
    %v2322 = vpack.c.b16 %v2306, %v2306
    %v2323 = vpack.c.b16 %v2307, %v2307
    %2340 = vst [vmem:[#allocation4 + $0x10] sm:$0xf] %v2308
    %2341 = vst [vmem:[#allocation4 + $0x28] sm:$0xf] %v2309
    %2342 = vst [vmem:[#allocation4 + $0x40] sm:$0xf] %v2310
    %2343 = vst [vmem:[#allocation4 + $0x58] sm:$0xf] %v2311
    %2344 = vst [vmem:[#allocation4 + $0x70] sm:$0xf] %v2312
    %2345 = vst [vmem:[#allocation4 + $0x88] sm:$0xf] %v2313
    %2346 = vst [vmem:[#allocation4 + $0xa0] sm:$0xf] %v2314
    %2347 = vst [vmem:[#allocation4 + $0xb8] sm:$0xf] %v2315
    %2348 = vst [vmem:[#allocation4 + $0xd0] sm:$0xf] %v2316
    %2349 = vst [vmem:[#allocation4 + $0xe8] sm:$0xf] %v2317
    %2350 = vst [vmem:[#allocation4 + $0x100] sm:$0xf] %v2318
    %2351 = vst [vmem:[#allocation4 + $0x118] sm:$0xf] %v2319
    %2352 = vst [vmem:[#allocation4 + $0x130] sm:$0xf] %v2320
    %2353 = vst [vmem:[#allocation4 + $0x148] sm:$0xf] %v2321
    %2354 = vst [vmem:[#allocation4 + $0x160] sm:$0xf] %v2322
    %2355 = vst [vmem:[#allocation4 + $0x178] sm:$0xf] %v2323
    %v2356 = vld [vmem:[#allocation3 + $0x28] sm:$0xfe]
    %v2357 = vld [vmem:[#allocation3 + $0x40] sm:$0xff]
    %v2358 = vld [vmem:[#allocation3 + $0x58] sm:$0xff]
    %v2359 = vld [vmem:[#allocation3 + $0x70] sm:$0xff]
    %v2360 = vld [vmem:[#allocation3 + $0x88] sm:$0xff]
    %v2361 = vld [vmem:[#allocation3 + $0xa0] sm:$0xff]
    %v2362 = vld [vmem:[#allocation3 + $0xb8] sm:$0xff]
    %v2363 = vld [vmem:[#allocation3 + $0xd0] sm:$0xff]
    %v2364 = vld [vmem:[#allocation3 + $0xe8] sm:$0xff]
    %v2365 = vld [vmem:[#allocation3 + $0x100] sm:$0xff]
    %v2366 = vld [vmem:[#allocation3 + $0x118] sm:$0xff]
    %v2367 = vld [vmem:[#allocation3 + $0x130] sm:$0xff]
    %v2368 = vld [vmem:[#allocation3 + $0x148] sm:$0xff]
    %v2369 = vld [vmem:[#allocation3 + $0x160] sm:$0xff]
    %v2370 = vld [vmem:[#allocation3 + $0x178] sm:$0xff]
    %v2371 = vld [vmem:[#allocation3 + $0x190] sm:$0xff]
    %v2372 = vld [vmem:[#allocation3 + $0x1a8] sm:$0x1]
    %v2373 = vpack.c.bf16 %v2357, %v2356
    %v2374 = vpack.c.bf16 %v2359, %v2358
    %v2375 = vpack.c.bf16 %v2361, %v2360
    %v2376 = vpack.c.bf16 %v2363, %v2362
    %v2377 = vpack.c.bf16 %v2365, %v2364
    %v2378 = vpack.c.bf16 %v2367, %v2366
    %v2379 = vpack.c.bf16 %v2369, %v2368
    %v2380 = vpack.c.bf16 %v2371, %v2370
    %v2381 = vpack.c.bf16 %v2372, %v2372
    %v2391 = vunpack.c.l.b16 %v2373
    %v2392 = vunpack.c.h.b16 %v2373
    %v2393 = vunpack.c.l.b16 %v2374
    %v2394 = vunpack.c.h.b16 %v2374
    %v2395 = vunpack.c.l.b16 %v2375
    %v2396 = vunpack.c.h.b16 %v2375
    %v2397 = vunpack.c.l.b16 %v2376
    %v2398 = vunpack.c.h.b16 %v2376
    %v2399 = vunpack.c.l.b16 %v2377
    %v2400 = vunpack.c.h.b16 %v2377
    %v2401 = vunpack.c.l.b16 %v2378
    %v2402 = vunpack.c.h.b16 %v2378
    %v2403 = vunpack.c.l.b16 %v2379
    %v2404 = vunpack.c.h.b16 %v2379
    %v2405 = vunpack.c.l.b16 %v2380
    %v2406 = vunpack.c.h.b16 %v2380
    %v2407 = vunpack.c.l.b16 %v2381
    %v2408 = vpack.c.b16 %v2391, %v2391
    %v2409 = vpack.c.b16 %v2392, %v2392
    %v2410 = vpack.c.b16 %v2393, %v2393
    %v2411 = vpack.c.b16 %v2394, %v2394
    %v2412 = vpack.c.b16 %v2395, %v2395
    %v2413 = vpack.c.b16 %v2396, %v2396
    %v2414 = vpack.c.b16 %v2397, %v2397
    %v2415 = vpack.c.b16 %v2398, %v2398
    %v2416 = vpack.c.b16 %v2399, %v2399
    %v2417 = vpack.c.b16 %v2400, %v2400
    %v2418 = vpack.c.b16 %v2401, %v2401
    %v2419 = vpack.c.b16 %v2402, %v2402
    %v2420 = vpack.c.b16 %v2403, %v2403
    %v2421 = vpack.c.b16 %v2404, %v2404
    %v2422 = vpack.c.b16 %v2405, %v2405
    %v2423 = vpack.c.b16 %v2406, %v2406
    %v2424 = vpack.c.b16 %v2407, %v2407
    %v2426 = vshrl.u32 %v2408, 16
    %v2428 = vrot.slane %v2426, 4
    %v2429 = vshll.u32 %v2408, 16
    %v2431 = vrot.slane %v2429, 5
    %v2432 = vor.u32 %v2428, %v2431
    %v2433 = vrot.slane %v2432, 4
    %v2435 = vshll.u32 %v2409, 16
    %v2437 = vrot.slane %v2435, 5
    %v2438 = vsel %vm1827, %v2433, %v2437
    %v2439 = vshrl.u32 %v2409, 16
    %v2441 = vrot.slane %v2439, 4
    %v2442 = vor.u32 %v2441, %v2437
    %v2443 = vrot.slane %v2442, 4
    %v2445 = vshll.u32 %v2410, 16
    %v2447 = vrot.slane %v2445, 5
    %v2448 = vsel %vm1827, %v2443, %v2447
    %v2449 = vshrl.u32 %v2410, 16
    %v2451 = vrot.slane %v2449, 4
    %v2452 = vor.u32 %v2451, %v2447
    %v2453 = vrot.slane %v2452, 4
    %v2455 = vshll.u32 %v2411, 16
    %v2457 = vrot.slane %v2455, 5
    %v2458 = vsel %vm1827, %v2453, %v2457
    %v2459 = vshrl.u32 %v2411, 16
    %v2461 = vrot.slane %v2459, 4
    %v2462 = vor.u32 %v2461, %v2457
    %v2463 = vrot.slane %v2462, 4
    %v2465 = vshll.u32 %v2412, 16
    %v2467 = vrot.slane %v2465, 5
    %v2468 = vsel %vm1827, %v2463, %v2467
    %v2469 = vshrl.u32 %v2412, 16
    %v2471 = vrot.slane %v2469, 4
    %v2472 = vor.u32 %v2471, %v2467
    %v2473 = vrot.slane %v2472, 4
    %v2475 = vshll.u32 %v2413, 16
    %v2477 = vrot.slane %v2475, 5
    %v2478 = vsel %vm1827, %v2473, %v2477
    %v2479 = vshrl.u32 %v2413, 16
    %v2481 = vrot.slane %v2479, 4
    %v2482 = vor.u32 %v2481, %v2477
    %v2483 = vrot.slane %v2482, 4
    %v2485 = vshll.u32 %v2414, 16
    %v2487 = vrot.slane %v2485, 5
    %v2488 = vsel %vm1827, %v2483, %v2487
    %v2489 = vshrl.u32 %v2414, 16
    %v2491 = vrot.slane %v2489, 4
    %v2492 = vor.u32 %v2491, %v2487
    %v2493 = vrot.slane %v2492, 4
    %v2495 = vshll.u32 %v2415, 16
    %v2497 = vrot.slane %v2495, 5
    %v2498 = vsel %vm1827, %v2493, %v2497
    %v2499 = vshrl.u32 %v2415, 16
    %v2501 = vrot.slane %v2499, 4
    %v2502 = vor.u32 %v2501, %v2497
    %v2503 = vrot.slane %v2502, 4
    %v2505 = vshll.u32 %v2416, 16
    %v2507 = vrot.slane %v2505, 5
    %v2508 = vsel %vm1827, %v2503, %v2507
    %v2509 = vshrl.u32 %v2416, 16
    %v2511 = vrot.slane %v2509, 4
    %v2512 = vor.u32 %v2511, %v2507
    %v2513 = vrot.slane %v2512, 4
    %v2515 = vshll.u32 %v2417, 16
    %v2517 = vrot.slane %v2515, 5
    %v2518 = vsel %vm1827, %v2513, %v2517
    %v2519 = vshrl.u32 %v2417, 16
    %v2521 = vrot.slane %v2519, 4
    %v2522 = vor.u32 %v2521, %v2517
    %v2523 = vrot.slane %v2522, 4
    %v2525 = vshll.u32 %v2418, 16
    %v2527 = vrot.slane %v2525, 5
    %v2528 = vsel %vm1827, %v2523, %v2527
    %v2529 = vshrl.u32 %v2418, 16
    %v2531 = vrot.slane %v2529, 4
    %v2532 = vor.u32 %v2531, %v2527
    %v2533 = vrot.slane %v2532, 4
    %v2535 = vshll.u32 %v2419, 16
    %v2537 = vrot.slane %v2535, 5
    %v2538 = vsel %vm1827, %v2533, %v2537
    %v2539 = vshrl.u32 %v2419, 16
    %v2541 = vrot.slane %v2539, 4
    %v2542 = vor.u32 %v2541, %v2537
    %v2543 = vrot.slane %v2542, 4
    %v2545 = vshll.u32 %v2420, 16
    %v2547 = vrot.slane %v2545, 5
    %v2548 = vsel %vm1827, %v2543, %v2547
    %v2549 = vshrl.u32 %v2420, 16
    %v2551 = vrot.slane %v2549, 4
    %v2552 = vor.u32 %v2551, %v2547
    %v2553 = vrot.slane %v2552, 4
    %v2555 = vshll.u32 %v2421, 16
    %v2557 = vrot.slane %v2555, 5
    %v2558 = vsel %vm1827, %v2553, %v2557
    %v2559 = vshrl.u32 %v2421, 16
    %v2561 = vrot.slane %v2559, 4
    %v2562 = vor.u32 %v2561, %v2557
    %v2563 = vrot.slane %v2562, 4
    %v2565 = vshll.u32 %v2422, 16
    %v2567 = vrot.slane %v2565, 5
    %v2568 = vsel %vm1827, %v2563, %v2567
    %v2569 = vshrl.u32 %v2422, 16
    %v2571 = vrot.slane %v2569, 4
    %v2572 = vor.u32 %v2571, %v2567
    %v2573 = vrot.slane %v2572, 4
    %v2575 = vshll.u32 %v2423, 16
    %v2577 = vrot.slane %v2575, 5
    %v2578 = vsel %vm1827, %v2573, %v2577
    %v2579 = vshrl.u32 %v2423, 16
    %v2581 = vrot.slane %v2579, 4
    %v2582 = vor.u32 %v2581, %v2577
    %v2583 = vrot.slane %v2582, 4
    %v2585 = vshll.u32 %v2424, 16
    %v2587 = vrot.slane %v2585, 5
    %v2588 = vsel %vm1827, %v2583, %v2587
    %2605 = vst [vmem:[#allocation4 + $0x14] sm:$0xf] %v2438
    %2606 = vst [vmem:[#allocation4 + $0x2c] sm:$0xf] %v2448
    %2607 = vst [vmem:[#allocation4 + $0x44] sm:$0xf] %v2458
    %2608 = vst [vmem:[#allocation4 + $0x5c] sm:$0xf] %v2468
    %2609 = vst [vmem:[#allocation4 + $0x74] sm:$0xf] %v2478
    %2610 = vst [vmem:[#allocation4 + $0x8c] sm:$0xf] %v2488
    %2611 = vst [vmem:[#allocation4 + $0xa4] sm:$0xf] %v2498
    %2612 = vst [vmem:[#allocation4 + $0xbc] sm:$0xf] %v2508
    %2613 = vst [vmem:[#allocation4 + $0xd4] sm:$0xf] %v2518
    %2614 = vst [vmem:[#allocation4 + $0xec] sm:$0xf] %v2528
    %2615 = vst [vmem:[#allocation4 + $0x104] sm:$0xf] %v2538
    %2616 = vst [vmem:[#allocation4 + $0x11c] sm:$0xf] %v2548
    %2617 = vst [vmem:[#allocation4 + $0x134] sm:$0xf] %v2558
    %2618 = vst [vmem:[#allocation4 + $0x14c] sm:$0xf] %v2568
    %2619 = vst [vmem:[#allocation4 + $0x164] sm:$0xf] %v2578
    %2620 = vst [vmem:[#allocation4 + $0x17c] sm:$0xf] %v2588
    %v2621 = vld [vmem:[#allocation4] sm:$0xff]
    %v2622 = vld [vmem:[#allocation4 + $0x8] sm:$0xff]
    %v2623 = vld [vmem:[#allocation4 + $0x10] sm:$0xff]
    %v2624 = vld [vmem:[#allocation4 + $0x18] sm:$0xff]
    %v2625 = vld [vmem:[#allocation4 + $0x20] sm:$0xff]
    %v2626 = vld [vmem:[#allocation4 + $0x28] sm:$0xff]
    %v2627 = vld [vmem:[#allocation4 + $0x30] sm:$0xff]
    %v2628 = vld [vmem:[#allocation4 + $0x38] sm:$0xff]
    %v2629 = vld [vmem:[#allocation4 + $0x40] sm:$0xff]
    %v2630 = vld [vmem:[#allocation4 + $0x48] sm:$0xff]
    %v2631 = vld [vmem:[#allocation4 + $0x50] sm:$0xff]
    %v2632 = vld [vmem:[#allocation4 + $0x58] sm:$0xff]
    %v2633 = vld [vmem:[#allocation4 + $0x60] sm:$0xff]
    %v2634 = vld [vmem:[#allocation4 + $0x68] sm:$0xff]
    %v2635 = vld [vmem:[#allocation4 + $0x70] sm:$0xff]
    %v2636 = vld [vmem:[#allocation4 + $0x78] sm:$0xff]
    %v2637 = vld [vmem:[#allocation4 + $0x80] sm:$0xff]
    %v2638 = vld [vmem:[#allocation4 + $0x88] sm:$0xff]
    %v2639 = vld [vmem:[#allocation4 + $0x90] sm:$0xff]
    %v2640 = vld [vmem:[#allocation4 + $0x98] sm:$0xff]
    %v2641 = vld [vmem:[#allocation4 + $0xa0] sm:$0xff]
    %v2642 = vld [vmem:[#allocation4 + $0xa8] sm:$0xff]
    %v2643 = vld [vmem:[#allocation4 + $0xb0] sm:$0xff]
    %v2644 = vld [vmem:[#allocation4 + $0xb8] sm:$0xff]
    %v2645 = vld [vmem:[#allocation4 + $0xc0] sm:$0xff]
    %v2646 = vld [vmem:[#allocation4 + $0xc8] sm:$0xff]
    %v2647 = vld [vmem:[#allocation4 + $0xd0] sm:$0xff]
    %v2648 = vld [vmem:[#allocation4 + $0xd8] sm:$0xff]
    %v2649 = vld [vmem:[#allocation4 + $0xe0] sm:$0xff]
    %v2650 = vld [vmem:[#allocation4 + $0xe8] sm:$0xff]
    %v2651 = vld [vmem:[#allocation4 + $0xf0] sm:$0xff]
    %v2652 = vld [vmem:[#allocation4 + $0xf8] sm:$0xff]
    %v2653 = vld [vmem:[#allocation4 + $0x100] sm:$0xff]
    %v2654 = vld [vmem:[#allocation4 + $0x108] sm:$0xff]
    %v2655 = vld [vmem:[#allocation4 + $0x110] sm:$0xff]
    %v2656 = vld [vmem:[#allocation4 + $0x118] sm:$0xff]
    %v2657 = vld [vmem:[#allocation4 + $0x120] sm:$0xff]
    %v2658 = vld [vmem:[#allocation4 + $0x128] sm:$0xff]
    %v2659 = vld [vmem:[#allocation4 + $0x130] sm:$0xff]
    %v2660 = vld [vmem:[#allocation4 + $0x138] sm:$0xff]
    %v2661 = vld [vmem:[#allocation4 + $0x140] sm:$0xff]
    %v2662 = vld [vmem:[#allocation4 + $0x148] sm:$0xff]
    %v2663 = vld [vmem:[#allocation4 + $0x150] sm:$0xff]
    %v2664 = vld [vmem:[#allocation4 + $0x158] sm:$0xff]
    %v2665 = vld [vmem:[#allocation4 + $0x160] sm:$0xff]
    %v2666 = vld [vmem:[#allocation4 + $0x168] sm:$0xff]
    %v2667 = vld [vmem:[#allocation4 + $0x170] sm:$0xff]
    %v2668 = vld [vmem:[#allocation4 + $0x178] sm:$0xff]
    %v2669 = vld [vmem:[#allocation10] sm:$0xff]
    %v2670 = vld [vmem:[#allocation10 + $0x8] sm:$0xff]
    %v2671 = vld [vmem:[#allocation10 + $0x10] sm:$0xff]
    %v2672 = vld [vmem:[#allocation10 + $0x18] sm:$0xff]
    %v2673 = vld [vmem:[#allocation10 + $0x20] sm:$0xff]
    %v2674 = vld [vmem:[#allocation10 + $0x28] sm:$0xff]
    %v2675 = vld [vmem:[#allocation10 + $0x30] sm:$0xff]
    %v2676 = vld [vmem:[#allocation10 + $0x38] sm:$0xff]
    %v2677 = vld [vmem:[#allocation10 + $0x40] sm:$0xff]
    %v2678 = vld [vmem:[#allocation10 + $0x48] sm:$0xff]
    %v2679 = vld [vmem:[#allocation10 + $0x50] sm:$0xff]
    %v2680 = vld [vmem:[#allocation10 + $0x58] sm:$0xff]
    %v2681 = vld [vmem:[#allocation10 + $0x60] sm:$0xff]
    %v2682 = vld [vmem:[#allocation10 + $0x68] sm:$0xff]
    %v2683 = vld [vmem:[#allocation10 + $0x70] sm:$0xff]
    %v2684 = vld [vmem:[#allocation10 + $0x78] sm:$0xff]
    %v2685 = vld [vmem:[#allocation10 + $0x80] sm:$0xff]
    %v2686 = vld [vmem:[#allocation10 + $0x88] sm:$0xff]
    %v2687 = vld [vmem:[#allocation10 + $0x90] sm:$0xff]
    %v2688 = vld [vmem:[#allocation10 + $0x98] sm:$0xff]
    %v2689 = vld [vmem:[#allocation10 + $0xa0] sm:$0xff]
    %v2690 = vld [vmem:[#allocation10 + $0xa8] sm:$0xff]
    %v2691 = vld [vmem:[#allocation10 + $0xb0] sm:$0xff]
    %v2692 = vld [vmem:[#allocation10 + $0xb8] sm:$0xff]
    %v2693 = vld [vmem:[#allocation10 + $0xc0] sm:$0xff]
    %v2694 = vld [vmem:[#allocation10 + $0xc8] sm:$0xff]
    %v2695 = vld [vmem:[#allocation10 + $0xd0] sm:$0xff]
    %v2696 = vld [vmem:[#allocation10 + $0xd8] sm:$0xff]
    %v2697 = vld [vmem:[#allocation10 + $0xe0] sm:$0xff]
    %v2698 = vld [vmem:[#allocation10 + $0xe8] sm:$0xff]
    %v2699 = vld [vmem:[#allocation10 + $0xf0] sm:$0xff]
    %v2700 = vld [vmem:[#allocation10 + $0xf8] sm:$0xff]
    %v2701 = vld [vmem:[#allocation10 + $0x100] sm:$0xff]
    %v2702 = vld [vmem:[#allocation10 + $0x108] sm:$0xff]
    %v2703 = vld [vmem:[#allocation10 + $0x110] sm:$0xff]
    %v2704 = vld [vmem:[#allocation10 + $0x118] sm:$0xff]
    %v2705 = vld [vmem:[#allocation10 + $0x120] sm:$0xff]
    %v2706 = vld [vmem:[#allocation10 + $0x128] sm:$0xff]
    %v2707 = vld [vmem:[#allocation10 + $0x130] sm:$0xff]
    %v2708 = vld [vmem:[#allocation10 + $0x138] sm:$0xff]
    %v2709 = vld [vmem:[#allocation10 + $0x140] sm:$0xff]
    %v2710 = vld [vmem:[#allocation10 + $0x148] sm:$0xff]
    %v2711 = vld [vmem:[#allocation10 + $0x150] sm:$0xff]
    %v2712 = vld [vmem:[#allocation10 + $0x158] sm:$0xff]
    %v2713 = vld [vmem:[#allocation10 + $0x160] sm:$0xff]
    %v2714 = vld [vmem:[#allocation10 + $0x168] sm:$0xff]
    %v2715 = vld [vmem:[#allocation10 + $0x170] sm:$0xff]
    %v2716 = vld [vmem:[#allocation10 + $0x178] sm:$0xff]
    %v2717 = vld [vmem:[#allocation10 + $0x180] sm:$0xff]
    %v2718 = vld [vmem:[#allocation10 + $0x188] sm:$0xff]
    %v2719 = vld [vmem:[#allocation10 + $0x190] sm:$0xff]
    %v2720 = vld [vmem:[#allocation10 + $0x198] sm:$0xff]
    %v2721 = vld [vmem:[#allocation10 + $0x1a0] sm:$0xff]
    %v2722 = vld [vmem:[#allocation10 + $0x1a8] sm:$0xff]
    %v2723 = vld [vmem:[#allocation10 + $0x1b0] sm:$0xff]
    %v2724 = vld [vmem:[#allocation10 + $0x1b8] sm:$0xff]
    %v2725 = vld [vmem:[#allocation10 + $0x1c0] sm:$0xff]
    %v2726 = vld [vmem:[#allocation10 + $0x1c8] sm:$0xff]
    %v2727 = vld [vmem:[#allocation10 + $0x1d0] sm:$0xff]
    %v2728 = vld [vmem:[#allocation10 + $0x1d8] sm:$0xff]
    %v2729 = vld [vmem:[#allocation10 + $0x1e0] sm:$0xff]
    %v2730 = vld [vmem:[#allocation10 + $0x1e8] sm:$0xff]
    %v2731 = vld [vmem:[#allocation10 + $0x1f0] sm:$0xff]
    %v2732 = vld [vmem:[#allocation10 + $0x1f8] sm:$0xff]
    %v2733 = vld [vmem:[#allocation10 + $0x200] sm:$0xff]
    %v2734 = vld [vmem:[#allocation10 + $0x208] sm:$0xff]
    %v2735 = vld [vmem:[#allocation10 + $0x210] sm:$0xff]
    %v2736 = vld [vmem:[#allocation10 + $0x218] sm:$0xff]
    %v2737 = vld [vmem:[#allocation10 + $0x220] sm:$0xff]
    %v2738 = vld [vmem:[#allocation10 + $0x228] sm:$0xff]
    %v2739 = vld [vmem:[#allocation10 + $0x230] sm:$0xff]
    %v2740 = vld [vmem:[#allocation10 + $0x238] sm:$0xff]
    %v2741 = vld [vmem:[#allocation10 + $0x240] sm:$0xff]
    %v2742 = vld [vmem:[#allocation10 + $0x248] sm:$0xff]
    %v2743 = vld [vmem:[#allocation10 + $0x250] sm:$0xff]
    %v2744 = vld [vmem:[#allocation10 + $0x258] sm:$0xff]
    %v2745 = vld [vmem:[#allocation10 + $0x260] sm:$0xff]
    %v2746 = vld [vmem:[#allocation10 + $0x268] sm:$0xff]
    %v2747 = vld [vmem:[#allocation10 + $0x270] sm:$0xff]
    %v2748 = vld [vmem:[#allocation10 + $0x278] sm:$0xff]
    %v2749 = vld [vmem:[#allocation10 + $0x280] sm:$0xff]
    %v2750 = vld [vmem:[#allocation10 + $0x288] sm:$0xff]
    %v2751 = vld [vmem:[#allocation10 + $0x290] sm:$0xff]
    %v2752 = vld [vmem:[#allocation10 + $0x298] sm:$0xff]
    %v2753 = vld [vmem:[#allocation10 + $0x2a0] sm:$0xff]
    %v2754 = vld [vmem:[#allocation10 + $0x2a8] sm:$0xff]
    %v2755 = vld [vmem:[#allocation10 + $0x2b0] sm:$0xff]
    %v2756 = vld [vmem:[#allocation10 + $0x2b8] sm:$0xff]
    %v2757 = vld [vmem:[#allocation10 + $0x2c0] sm:$0xff]
    %v2758 = vld [vmem:[#allocation10 + $0x2c8] sm:$0xff]
    %v2759 = vld [vmem:[#allocation10 + $0x2d0] sm:$0xff]
    %v2760 = vld [vmem:[#allocation10 + $0x2d8] sm:$0xff]
    %v2761 = vld [vmem:[#allocation10 + $0x2e0] sm:$0xff]
    %v2762 = vld [vmem:[#allocation10 + $0x2e8] sm:$0xff]
    %v2763 = vld [vmem:[#allocation10 + $0x2f0] sm:$0xff]
    %v2764 = vld [vmem:[#allocation10 + $0x2f8] sm:$0xff]
    %v2765 = vld [vmem:[#allocation10 + $0x300] sm:$0xff]
    %v2766 = vld [vmem:[#allocation10 + $0x308] sm:$0xff]
    %v2767 = vld [vmem:[#allocation10 + $0x310] sm:$0xff]
    %v2768 = vld [vmem:[#allocation10 + $0x318] sm:$0xff]
    %v2769 = vld [vmem:[#allocation10 + $0x320] sm:$0xff]
    %v2770 = vld [vmem:[#allocation10 + $0x328] sm:$0xff]
    %v2771 = vld [vmem:[#allocation10 + $0x330] sm:$0xff]
    %v2772 = vld [vmem:[#allocation10 + $0x338] sm:$0xff]
    %v2773 = vld [vmem:[#allocation10 + $0x340] sm:$0xff]
    %v2774 = vld [vmem:[#allocation10 + $0x348] sm:$0xff]
    %v2775 = vld [vmem:[#allocation10 + $0x350] sm:$0xff]
    %v2776 = vld [vmem:[#allocation10 + $0x358] sm:$0xff]
    %v2777 = vld [vmem:[#allocation10 + $0x360] sm:$0xff]
    %v2778 = vld [vmem:[#allocation10 + $0x368] sm:$0xff]
    %v2779 = vld [vmem:[#allocation10 + $0x370] sm:$0xff]
    %v2780 = vld [vmem:[#allocation10 + $0x378] sm:$0xff]
    %v2781 = vld [vmem:[#allocation10 + $0x380] sm:$0xff]
    %v2782 = vld [vmem:[#allocation10 + $0x388] sm:$0xff]
    %v2783 = vld [vmem:[#allocation10 + $0x390] sm:$0xff]
    %v2784 = vld [vmem:[#allocation10 + $0x398] sm:$0xff]
    %v2785 = vld [vmem:[#allocation10 + $0x3a0] sm:$0xff]
    %v2786 = vld [vmem:[#allocation10 + $0x3a8] sm:$0xff]
    %v2787 = vld [vmem:[#allocation10 + $0x3b0] sm:$0xff]
    %v2788 = vld [vmem:[#allocation10 + $0x3b8] sm:$0xff]
    %v2789 = vld [vmem:[#allocation10 + $0x3c0] sm:$0xff]
    %v2790 = vld [vmem:[#allocation10 + $0x3c8] sm:$0xff]
    %v2791 = vld [vmem:[#allocation10 + $0x3d0] sm:$0xff]
    %v2792 = vld [vmem:[#allocation10 + $0x3d8] sm:$0xff]
    %v2793 = vld [vmem:[#allocation10 + $0x3e0] sm:$0xff]
    %v2794 = vld [vmem:[#allocation10 + $0x3e8] sm:$0xff]
    %v2795 = vld [vmem:[#allocation10 + $0x3f0] sm:$0xff]
    %v2796 = vld [vmem:[#allocation10 + $0x3f8] sm:$0xff]
    %v2797 = vld [vmem:[#allocation10 + $0x400] sm:$0xff]
    %v2798 = vld [vmem:[#allocation10 + $0x408] sm:$0xff]
    %v2799 = vld [vmem:[#allocation10 + $0x410] sm:$0xff]
    %v2800 = vld [vmem:[#allocation10 + $0x418] sm:$0xff]
    %v2801 = vld [vmem:[#allocation10 + $0x420] sm:$0xff]
    %v2802 = vld [vmem:[#allocation10 + $0x428] sm:$0xff]
    %v2803 = vld [vmem:[#allocation10 + $0x430] sm:$0xff]
    %v2804 = vld [vmem:[#allocation10 + $0x438] sm:$0xff]
    %v2805 = vld [vmem:[#allocation10 + $0x440] sm:$0xff]
    %v2806 = vld [vmem:[#allocation10 + $0x448] sm:$0xff]
    %v2807 = vld [vmem:[#allocation10 + $0x450] sm:$0xff]
    %v2808 = vld [vmem:[#allocation10 + $0x458] sm:$0xff]
    %v2809 = vld [vmem:[#allocation10 + $0x460] sm:$0xff]
    %v2810 = vld [vmem:[#allocation10 + $0x468] sm:$0xff]
    %v2811 = vld [vmem:[#allocation10 + $0x470] sm:$0xff]
    %v2812 = vld [vmem:[#allocation10 + $0x478] sm:$0xff]
    %v2813 = vld [vmem:[#allocation10 + $0x480] sm:$0xff]
    %v2814 = vld [vmem:[#allocation10 + $0x488] sm:$0xff]
    %v2815 = vld [vmem:[#allocation10 + $0x490] sm:$0xff]
    %v2816 = vld [vmem:[#allocation10 + $0x498] sm:$0xff]
    %v2817 = vld [vmem:[#allocation10 + $0x4a0] sm:$0xff]
    %v2818 = vld [vmem:[#allocation10 + $0x4a8] sm:$0xff]
    %v2819 = vld [vmem:[#allocation10 + $0x4b0] sm:$0xff]
    %v2820 = vld [vmem:[#allocation10 + $0x4b8] sm:$0xff]
    %v2821 = vld [vmem:[#allocation10 + $0x4c0] sm:$0xff]
    %v2822 = vld [vmem:[#allocation10 + $0x4c8] sm:$0xff]
    %v2823 = vld [vmem:[#allocation10 + $0x4d0] sm:$0xff]
    %v2824 = vld [vmem:[#allocation10 + $0x4d8] sm:$0xff]
    %v2825 = vld [vmem:[#allocation10 + $0x4e0] sm:$0xff]
    %v2826 = vld [vmem:[#allocation10 + $0x4e8] sm:$0xff]
    %v2827 = vld [vmem:[#allocation10 + $0x4f0] sm:$0xff]
    %v2828 = vld [vmem:[#allocation10 + $0x4f8] sm:$0xff]
    %v2829 = vld [vmem:[#allocation10 + $0x500] sm:$0xff]
    %v2830 = vld [vmem:[#allocation10 + $0x508] sm:$0xff]
    %v2831 = vld [vmem:[#allocation10 + $0x510] sm:$0xff]
    %v2832 = vld [vmem:[#allocation10 + $0x518] sm:$0xff]
    %v2833 = vld [vmem:[#allocation10 + $0x520] sm:$0xff]
    %v2834 = vld [vmem:[#allocation10 + $0x528] sm:$0xff]
    %v2835 = vld [vmem:[#allocation10 + $0x530] sm:$0xff]
    %v2836 = vld [vmem:[#allocation10 + $0x538] sm:$0xff]
    %v2837 = vld [vmem:[#allocation10 + $0x540] sm:$0xff]
    %v2838 = vld [vmem:[#allocation10 + $0x548] sm:$0xff]
    %v2839 = vld [vmem:[#allocation10 + $0x550] sm:$0xff]
    %v2840 = vld [vmem:[#allocation10 + $0x558] sm:$0xff]
    %v2841 = vld [vmem:[#allocation10 + $0x560] sm:$0xff]
    %v2842 = vld [vmem:[#allocation10 + $0x568] sm:$0xff]
    %v2843 = vld [vmem:[#allocation10 + $0x570] sm:$0xff]
    %v2844 = vld [vmem:[#allocation10 + $0x578] sm:$0xff]
    %v2845 = vld [vmem:[#allocation10 + $0x580] sm:$0xff]
    %v2846 = vld [vmem:[#allocation10 + $0x588] sm:$0xff]
    %v2847 = vld [vmem:[#allocation10 + $0x590] sm:$0xff]
    %v2848 = vld [vmem:[#allocation10 + $0x598] sm:$0xff]
    %v2849 = vld [vmem:[#allocation10 + $0x5a0] sm:$0xff]
    %v2850 = vld [vmem:[#allocation10 + $0x5a8] sm:$0xff]
    %v2851 = vld [vmem:[#allocation10 + $0x5b0] sm:$0xff]
    %v2852 = vld [vmem:[#allocation10 + $0x5b8] sm:$0xff]
    %v2853 = vld [vmem:[#allocation10 + $0x5c0] sm:$0xff]
    %v2854 = vld [vmem:[#allocation10 + $0x5c8] sm:$0xff]
    %v2855 = vld [vmem:[#allocation10 + $0x5d0] sm:$0xff]
    %v2856 = vld [vmem:[#allocation10 + $0x5d8] sm:$0xff]
    %v2857 = vld [vmem:[#allocation10 + $0x5e0] sm:$0xff]
    %v2858 = vld [vmem:[#allocation10 + $0x5e8] sm:$0xff]
    %v2859 = vld [vmem:[#allocation10 + $0x5f0] sm:$0xff]
    %v2860 = vld [vmem:[#allocation10 + $0x5f8] sm:$0xff]
    %v2861 = vld [vmem:[#allocation10 + $0x600] sm:$0xff]
    %v2862 = vld [vmem:[#allocation10 + $0x608] sm:$0xff]
    %v2863 = vld [vmem:[#allocation10 + $0x610] sm:$0xff]
    %v2864 = vld [vmem:[#allocation10 + $0x618] sm:$0xff]
    %v2865 = vld [vmem:[#allocation10 + $0x620] sm:$0xff]
    %v2866 = vld [vmem:[#allocation10 + $0x628] sm:$0xff]
    %v2867 = vld [vmem:[#allocation10 + $0x630] sm:$0xff]
    %v2868 = vld [vmem:[#allocation10 + $0x638] sm:$0xff]
    %v2869 = vld [vmem:[#allocation10 + $0x640] sm:$0xff]
    %v2870 = vld [vmem:[#allocation10 + $0x648] sm:$0xff]
    %v2871 = vld [vmem:[#allocation10 + $0x650] sm:$0xff]
    %v2872 = vld [vmem:[#allocation10 + $0x658] sm:$0xff]
    %v2873 = vld [vmem:[#allocation10 + $0x660] sm:$0xff]
    %v2874 = vld [vmem:[#allocation10 + $0x668] sm:$0xff]
    %v2875 = vld [vmem:[#allocation10 + $0x670] sm:$0xff]
    %v2876 = vld [vmem:[#allocation10 + $0x678] sm:$0xff]
    %v2877 = vld [vmem:[#allocation10 + $0x680] sm:$0xff]
    %v2878 = vld [vmem:[#allocation10 + $0x688] sm:$0xff]
    %v2879 = vld [vmem:[#allocation10 + $0x690] sm:$0xff]
    %v2880 = vld [vmem:[#allocation10 + $0x698] sm:$0xff]
    %v2881 = vld [vmem:[#allocation10 + $0x6a0] sm:$0xff]
    %v2882 = vld [vmem:[#allocation10 + $0x6a8] sm:$0xff]
    %v2883 = vld [vmem:[#allocation10 + $0x6b0] sm:$0xff]
    %v2884 = vld [vmem:[#allocation10 + $0x6b8] sm:$0xff]
    %v2885 = vld [vmem:[#allocation10 + $0x6c0] sm:$0xff]
    %v2886 = vld [vmem:[#allocation10 + $0x6c8] sm:$0xff]
    %v2887 = vld [vmem:[#allocation10 + $0x6d0] sm:$0xff]
    %v2888 = vld [vmem:[#allocation10 + $0x6d8] sm:$0xff]
    %v2889 = vld [vmem:[#allocation10 + $0x6e0] sm:$0xff]
    %v2890 = vld [vmem:[#allocation10 + $0x6e8] sm:$0xff]
    %v2891 = vld [vmem:[#allocation10 + $0x6f0] sm:$0xff]
    %v2892 = vld [vmem:[#allocation10 + $0x6f8] sm:$0xff]
    %v2893 = vld [vmem:[#allocation10 + $0x700] sm:$0xff]
    %v2894 = vld [vmem:[#allocation10 + $0x708] sm:$0xff]
    %v2895 = vld [vmem:[#allocation10 + $0x710] sm:$0xff]
    %v2896 = vld [vmem:[#allocation10 + $0x718] sm:$0xff]
    %v2897 = vld [vmem:[#allocation10 + $0x720] sm:$0xff]
    %v2898 = vld [vmem:[#allocation10 + $0x728] sm:$0xff]
    %v2899 = vld [vmem:[#allocation10 + $0x730] sm:$0xff]
    %v2900 = vld [vmem:[#allocation10 + $0x738] sm:$0xff]
    %v2901 = vld [vmem:[#allocation10 + $0x740] sm:$0xff]
    %v2902 = vld [vmem:[#allocation10 + $0x748] sm:$0xff]
    %v2903 = vld [vmem:[#allocation10 + $0x750] sm:$0xff]
    %v2904 = vld [vmem:[#allocation10 + $0x758] sm:$0xff]
    %v2905 = vld [vmem:[#allocation10 + $0x760] sm:$0xff]
    %v2906 = vld [vmem:[#allocation10 + $0x768] sm:$0xff]
    %v2907 = vld [vmem:[#allocation10 + $0x770] sm:$0xff]
    %v2908 = vld [vmem:[#allocation10 + $0x778] sm:$0xff]
    %v2909 = vld [vmem:[#allocation10 + $0x780] sm:$0xff]
    %v2910 = vld [vmem:[#allocation10 + $0x788] sm:$0xff]
    %v2911 = vld [vmem:[#allocation10 + $0x790] sm:$0xff]
    %v2912 = vld [vmem:[#allocation10 + $0x798] sm:$0xff]
    %v2913 = vld [vmem:[#allocation10 + $0x7a0] sm:$0xff]
    %v2914 = vld [vmem:[#allocation10 + $0x7a8] sm:$0xff]
    %v2915 = vld [vmem:[#allocation10 + $0x7b0] sm:$0xff]
    %v2916 = vld [vmem:[#allocation10 + $0x7b8] sm:$0xff]
    %v2917 = vld [vmem:[#allocation10 + $0x7c0] sm:$0xff]
    %v2918 = vld [vmem:[#allocation10 + $0x7c8] sm:$0xff]
    %v2919 = vld [vmem:[#allocation10 + $0x7d0] sm:$0xff]
    %v2920 = vld [vmem:[#allocation10 + $0x7d8] sm:$0xff]
    %v2921 = vld [vmem:[#allocation10 + $0x7e0] sm:$0xff]
    %v2922 = vld [vmem:[#allocation10 + $0x7e8] sm:$0xff]
    %v2923 = vld [vmem:[#allocation10 + $0x7f0] sm:$0xff]
    %v2924 = vld [vmem:[#allocation10 + $0x7f8] sm:$0xff]
    %v2925 = vld [vmem:[#allocation10 + $0x800] sm:$0xff]
    %v2926 = vld [vmem:[#allocation10 + $0x808] sm:$0xff]
    %v2927 = vld [vmem:[#allocation10 + $0x810] sm:$0xff]
    %v2928 = vld [vmem:[#allocation10 + $0x818] sm:$0xff]
    %v2929 = vld [vmem:[#allocation10 + $0x820] sm:$0xff]
    %v2930 = vld [vmem:[#allocation10 + $0x828] sm:$0xff]
    %v2931 = vld [vmem:[#allocation10 + $0x830] sm:$0xff]
    %v2932 = vld [vmem:[#allocation10 + $0x838] sm:$0xff]
    %v2933 = vld [vmem:[#allocation10 + $0x840] sm:$0xff]
    %v2934 = vld [vmem:[#allocation10 + $0x848] sm:$0xff]
    %v2935 = vld [vmem:[#allocation10 + $0x850] sm:$0xff]
    %v2936 = vld [vmem:[#allocation10 + $0x858] sm:$0xff]
    %v2937 = vld [vmem:[#allocation10 + $0x860] sm:$0xff]
    %v2938 = vld [vmem:[#allocation10 + $0x868] sm:$0xff]
    %v2939 = vld [vmem:[#allocation10 + $0x870] sm:$0xff]
    %v2940 = vld [vmem:[#allocation10 + $0x878] sm:$0xff]
    %v2941 = vld [vmem:[#allocation10 + $0x880] sm:$0xff]
    %v2942 = vld [vmem:[#allocation10 + $0x888] sm:$0xff]
    %v2943 = vld [vmem:[#allocation10 + $0x890] sm:$0xff]
    %v2944 = vld [vmem:[#allocation10 + $0x898] sm:$0xff]
    %v2945 = vld [vmem:[#allocation10 + $0x8a0] sm:$0xff]
    %v2946 = vld [vmem:[#allocation10 + $0x8a8] sm:$0xff]
    %v2947 = vld [vmem:[#allocation10 + $0x8b0] sm:$0xff]
    %v2948 = vld [vmem:[#allocation10 + $0x8b8] sm:$0xff]
    %v2949 = vld [vmem:[#allocation10 + $0x8c0] sm:$0xff]
    %v2950 = vld [vmem:[#allocation10 + $0x8c8] sm:$0xff]
    %v2951 = vld [vmem:[#allocation10 + $0x8d0] sm:$0xff]
    %v2952 = vld [vmem:[#allocation10 + $0x8d8] sm:$0xff]
    %v2953 = vld [vmem:[#allocation10 + $0x8e0] sm:$0xff]
    %v2954 = vld [vmem:[#allocation10 + $0x8e8] sm:$0xff]
    %v2955 = vld [vmem:[#allocation10 + $0x8f0] sm:$0xff]
    %v2956 = vld [vmem:[#allocation10 + $0x8f8] sm:$0xff]
    %v2957 = vld [vmem:[#allocation11] sm:$0x3f]
    %v2959 = vlaneseq
    %v2960 = vshrl.u32 %v2959, 7
    %v2961 = vsub.s32 0, %v2960
    %v2962 = vrot.slane %v2957, %v2961
    %v2963 = vlaneseq
    %v2964 = vshrl.u32 %v2963, 7
    %v2965 = vsub.s32 1, %v2964
    %v2966 = vrot.slane %v2957, %v2965
    %v2967 = vlaneseq
    %v2968 = vshrl.u32 %v2967, 7
    %v2969 = vsub.s32 2, %v2968
    %v2970 = vrot.slane %v2957, %v2969
    %v2971 = vlaneseq
    %v2972 = vshrl.u32 %v2971, 7
    %v2973 = vsub.s32 3, %v2972
    %v2974 = vrot.slane %v2957, %v2973
    %v2975 = vlaneseq
    %v2976 = vshrl.u32 %v2975, 7
    %v2977 = vsub.s32 4, %v2976
    %v2978 = vrot.slane %v2957, %v2977
    %v2979 = vlaneseq
    %v2980 = vshrl.u32 %v2979, 7
    %v2981 = vsub.s32 5, %v2980
    %v2982 = vrot.slane %v2957, %v2981
    %v3037 = vunpack.c.l.b16 %v2621
    %v3038 = vunpack.c.h.b16 %v2621
    %v3039 = vunpack.c.l.b16 %v2622
    %v3040 = vunpack.c.h.b16 %v2622
    %v3041 = vunpack.c.l.b16 %v2623
    %v3042 = vunpack.c.h.b16 %v2623
    %v3043 = vunpack.c.l.b16 %v2624
    %v3044 = vunpack.c.h.b16 %v2624
    %v3045 = vunpack.c.l.b16 %v2625
    %v3046 = vunpack.c.h.b16 %v2625
    %v3047 = vunpack.c.l.b16 %v2626
    %v3048 = vunpack.c.h.b16 %v2626
    %v3049 = vunpack.c.l.b16 %v2627
    %v3050 = vunpack.c.h.b16 %v2627
    %v3051 = vunpack.c.l.b16 %v2628
    %v3052 = vunpack.c.h.b16 %v2628
    %v3053 = vunpack.c.l.b16 %v2629
    %v3054 = vunpack.c.h.b16 %v2629
    %v3055 = vunpack.c.l.b16 %v2630
    %v3056 = vunpack.c.h.b16 %v2630
    %v3057 = vunpack.c.l.b16 %v2631
    %v3058 = vunpack.c.h.b16 %v2631
    %v3059 = vunpack.c.l.b16 %v2632
    %v3060 = vunpack.c.h.b16 %v2632
    %v3061 = vunpack.c.l.b16 %v2633
    %v3062 = vunpack.c.h.b16 %v2633
    %v3063 = vunpack.c.l.b16 %v2634
    %v3064 = vunpack.c.h.b16 %v2634
    %v3065 = vunpack.c.l.b16 %v2635
    %v3066 = vunpack.c.h.b16 %v2635
    %v3067 = vunpack.c.l.b16 %v2636
    %v3068 = vunpack.c.h.b16 %v2636
    %v3069 = vunpack.c.l.b16 %v2637
    %v3070 = vunpack.c.h.b16 %v2637
    %v3071 = vunpack.c.l.b16 %v2638
    %v3072 = vunpack.c.h.b16 %v2638
    %v3073 = vunpack.c.l.b16 %v2639
    %v3074 = vunpack.c.h.b16 %v2639
    %v3075 = vunpack.c.l.b16 %v2640
    %v3076 = vunpack.c.h.b16 %v2640
    %v3077 = vunpack.c.l.b16 %v2641
    %v3078 = vunpack.c.h.b16 %v2641
    %v3079 = vunpack.c.l.b16 %v2642
    %v3080 = vunpack.c.h.b16 %v2642
    %v3081 = vunpack.c.l.b16 %v2643
    %v3082 = vunpack.c.h.b16 %v2643
    %v3083 = vunpack.c.l.b16 %v2644
    %v3084 = vunpack.c.h.b16 %v2644
    %v3085 = vunpack.c.l.b16 %v2645
    %v3086 = vunpack.c.h.b16 %v2645
    %v3087 = vunpack.c.l.b16 %v2646
    %v3088 = vunpack.c.h.b16 %v2646
    %v3089 = vunpack.c.l.b16 %v2647
    %v3090 = vunpack.c.h.b16 %v2647
    %v3091 = vunpack.c.l.b16 %v2648
    %v3092 = vunpack.c.h.b16 %v2648
    %v3093 = vunpack.c.l.b16 %v2649
    %v3094 = vunpack.c.h.b16 %v2649
    %v3095 = vunpack.c.l.b16 %v2650
    %v3096 = vunpack.c.h.b16 %v2650
    %v3097 = vunpack.c.l.b16 %v2651
    %v3098 = vunpack.c.h.b16 %v2651
    %v3099 = vunpack.c.l.b16 %v2652
    %v3100 = vunpack.c.h.b16 %v2652
    %v3101 = vunpack.c.l.b16 %v2653
    %v3102 = vunpack.c.h.b16 %v2653
    %v3103 = vunpack.c.l.b16 %v2654
    %v3104 = vunpack.c.h.b16 %v2654
    %v3105 = vunpack.c.l.b16 %v2655
    %v3106 = vunpack.c.h.b16 %v2655
    %v3107 = vunpack.c.l.b16 %v2656
    %v3108 = vunpack.c.h.b16 %v2656
    %v3109 = vunpack.c.l.b16 %v2657
    %v3110 = vunpack.c.h.b16 %v2657
    %v3111 = vunpack.c.l.b16 %v2658
    %v3112 = vunpack.c.h.b16 %v2658
    %v3113 = vunpack.c.l.b16 %v2659
    %v3114 = vunpack.c.h.b16 %v2659
    %v3115 = vunpack.c.l.b16 %v2660
    %v3116 = vunpack.c.h.b16 %v2660
    %v3117 = vunpack.c.l.b16 %v2661
    %v3118 = vunpack.c.h.b16 %v2661
    %v3119 = vunpack.c.l.b16 %v2662
    %v3120 = vunpack.c.h.b16 %v2662
    %v3121 = vunpack.c.l.b16 %v2663
    %v3122 = vunpack.c.h.b16 %v2663
    %v3123 = vunpack.c.l.b16 %v2664
    %v3124 = vunpack.c.h.b16 %v2664
    %v3125 = vunpack.c.l.b16 %v2665
    %v3126 = vunpack.c.h.b16 %v2665
    %v3127 = vunpack.c.l.b16 %v2666
    %v3128 = vunpack.c.h.b16 %v2666
    %v3129 = vunpack.c.l.b16 %v2667
    %v3130 = vunpack.c.h.b16 %v2667
    %v3131 = vunpack.c.l.b16 %v2668
    %v3132 = vunpack.c.h.b16 %v2668
    %v3133 = vpack.c.b16 %v3043, %v3037
    %v3134 = vpack.c.b16 %v3044, %v3038
    %v3135 = vpack.c.b16 %v3045, %v3039
    %v3136 = vpack.c.b16 %v3046, %v3040
    %v3137 = vpack.c.b16 %v3047, %v3041
    %v3138 = vpack.c.b16 %v3048, %v3042
    %v3139 = vpack.c.b16 %v3055, %v3049
    %v3140 = vpack.c.b16 %v3056, %v3050
    %v3141 = vpack.c.b16 %v3057, %v3051
    %v3142 = vpack.c.b16 %v3058, %v3052
    %v3143 = vpack.c.b16 %v3059, %v3053
    %v3144 = vpack.c.b16 %v3060, %v3054
    %v3145 = vpack.c.b16 %v3067, %v3061
    %v3146 = vpack.c.b16 %v3068, %v3062
    %v3147 = vpack.c.b16 %v3069, %v3063
    %v3148 = vpack.c.b16 %v3070, %v3064
    %v3149 = vpack.c.b16 %v3071, %v3065
    %v3150 = vpack.c.b16 %v3072, %v3066
    %v3151 = vpack.c.b16 %v3079, %v3073
    %v3152 = vpack.c.b16 %v3080, %v3074
    %v3153 = vpack.c.b16 %v3081, %v3075
    %v3154 = vpack.c.b16 %v3082, %v3076
    %v3155 = vpack.c.b16 %v3083, %v3077
    %v3156 = vpack.c.b16 %v3084, %v3078
    %v3157 = vpack.c.b16 %v3091, %v3085
    %v3158 = vpack.c.b16 %v3092, %v3086
    %v3159 = vpack.c.b16 %v3093, %v3087
    %v3160 = vpack.c.b16 %v3094, %v3088
    %v3161 = vpack.c.b16 %v3095, %v3089
    %v3162 = vpack.c.b16 %v3096, %v3090
    %v3163 = vpack.c.b16 %v3103, %v3097
    %v3164 = vpack.c.b16 %v3104, %v3098
    %v3165 = vpack.c.b16 %v3105, %v3099
    %v3166 = vpack.c.b16 %v3106, %v3100
    %v3167 = vpack.c.b16 %v3107, %v3101
    %v3168 = vpack.c.b16 %v3108, %v3102
    %v3169 = vpack.c.b16 %v3115, %v3109
    %v3170 = vpack.c.b16 %v3116, %v3110
    %v3171 = vpack.c.b16 %v3117, %v3111
    %v3172 = vpack.c.b16 %v3118, %v3112
    %v3173 = vpack.c.b16 %v3119, %v3113
    %v3174 = vpack.c.b16 %v3120, %v3114
    %v3175 = vpack.c.b16 %v3127, %v3121
    %v3176 = vpack.c.b16 %v3128, %v3122
    %v3177 = vpack.c.b16 %v3129, %v3123
    %v3178 = vpack.c.b16 %v3130, %v3124
    %v3179 = vpack.c.b16 %v3131, %v3125
    %v3180 = vpack.c.b16 %v3132, %v3126
    %v3517 = vunpack.c.l.b16 %v2669
    %v3518 = vunpack.c.h.b16 %v2669
    %v3519 = vunpack.c.l.b16 %v2670
    %v3520 = vunpack.c.h.b16 %v2670
    %v3521 = vunpack.c.l.b16 %v2671
    %v3522 = vunpack.c.h.b16 %v2671
    %v3523 = vunpack.c.l.b16 %v2672
    %v3524 = vunpack.c.h.b16 %v2672
    %v3525 = vunpack.c.l.b16 %v2673
    %v3526 = vunpack.c.h.b16 %v2673
    %v3527 = vunpack.c.l.b16 %v2674
    %v3528 = vunpack.c.h.b16 %v2674
    %v3529 = vunpack.c.l.b16 %v2675
    %v3530 = vunpack.c.h.b16 %v2675
    %v3531 = vunpack.c.l.b16 %v2676
    %v3532 = vunpack.c.h.b16 %v2676
    %v3533 = vunpack.c.l.b16 %v2677
    %v3534 = vunpack.c.h.b16 %v2677
    %v3535 = vunpack.c.l.b16 %v2678
    %v3536 = vunpack.c.h.b16 %v2678
    %v3537 = vunpack.c.l.b16 %v2679
    %v3538 = vunpack.c.h.b16 %v2679
    %v3539 = vunpack.c.l.b16 %v2680
    %v3540 = vunpack.c.h.b16 %v2680
    %v3541 = vunpack.c.l.b16 %v2681
    %v3542 = vunpack.c.h.b16 %v2681
    %v3543 = vunpack.c.l.b16 %v2682
    %v3544 = vunpack.c.h.b16 %v2682
    %v3545 = vunpack.c.l.b16 %v2683
    %v3546 = vunpack.c.h.b16 %v2683
    %v3547 = vunpack.c.l.b16 %v2684
    %v3548 = vunpack.c.h.b16 %v2684
    %v3549 = vunpack.c.l.b16 %v2685
    %v3550 = vunpack.c.h.b16 %v2685
    %v3551 = vunpack.c.l.b16 %v2686
    %v3552 = vunpack.c.h.b16 %v2686
    %v3553 = vunpack.c.l.b16 %v2687
    %v3554 = vunpack.c.h.b16 %v2687
    %v3555 = vunpack.c.l.b16 %v2688
    %v3556 = vunpack.c.h.b16 %v2688
    %v3557 = vunpack.c.l.b16 %v2689
    %v3558 = vunpack.c.h.b16 %v2689
    %v3559 = vunpack.c.l.b16 %v2690
    %v3560 = vunpack.c.h.b16 %v2690
    %v3561 = vunpack.c.l.b16 %v2691
    %v3562 = vunpack.c.h.b16 %v2691
    %v3563 = vunpack.c.l.b16 %v2692
    %v3564 = vunpack.c.h.b16 %v2692
    %v3565 = vunpack.c.l.b16 %v2693
    %v3566 = vunpack.c.h.b16 %v2693
    %v3567 = vunpack.c.l.b16 %v2694
    %v3568 = vunpack.c.h.b16 %v2694
    %v3569 = vunpack.c.l.b16 %v2695
    %v3570 = vunpack.c.h.b16 %v2695
    %v3571 = vunpack.c.l.b16 %v2696
    %v3572 = vunpack.c.h.b16 %v2696
    %v3573 = vunpack.c.l.b16 %v2697
    %v3574 = vunpack.c.h.b16 %v2697
    %v3575 = vunpack.c.l.b16 %v2698
    %v3576 = vunpack.c.h.b16 %v2698
    %v3577 = vunpack.c.l.b16 %v2699
    %v3578 = vunpack.c.h.b16 %v2699
    %v3579 = vunpack.c.l.b16 %v2700
    %v3580 = vunpack.c.h.b16 %v2700
    %v3581 = vunpack.c.l.b16 %v2701
    %v3582 = vunpack.c.h.b16 %v2701
    %v3583 = vunpack.c.l.b16 %v2702
    %v3584 = vunpack.c.h.b16 %v2702
    %v3585 = vunpack.c.l.b16 %v2703
    %v3586 = vunpack.c.h.b16 %v2703
    %v3587 = vunpack.c.l.b16 %v2704
    %v3588 = vunpack.c.h.b16 %v2704
    %v3589 = vunpack.c.l.b16 %v2705
    %v3590 = vunpack.c.h.b16 %v2705
    %v3591 = vunpack.c.l.b16 %v2706
    %v3592 = vunpack.c.h.b16 %v2706
    %v3593 = vunpack.c.l.b16 %v2707
    %v3594 = vunpack.c.h.b16 %v2707
    %v3595 = vunpack.c.l.b16 %v2708
    %v3596 = vunpack.c.h.b16 %v2708
    %v3597 = vunpack.c.l.b16 %v2709
    %v3598 = vunpack.c.h.b16 %v2709
    %v3599 = vunpack.c.l.b16 %v2710
    %v3600 = vunpack.c.h.b16 %v2710
    %v3601 = vunpack.c.l.b16 %v2711
    %v3602 = vunpack.c.h.b16 %v2711
    %v3603 = vunpack.c.l.b16 %v2712
    %v3604 = vunpack.c.h.b16 %v2712
    %v3605 = vunpack.c.l.b16 %v2713
    %v3606 = vunpack.c.h.b16 %v2713
    %v3607 = vunpack.c.l.b16 %v2714
    %v3608 = vunpack.c.h.b16 %v2714
    %v3609 = vunpack.c.l.b16 %v2715
    %v3610 = vunpack.c.h.b16 %v2715
    %v3611 = vunpack.c.l.b16 %v2716
    %v3612 = vunpack.c.h.b16 %v2716
    %v3613 = vunpack.c.l.b16 %v2717
    %v3614 = vunpack.c.h.b16 %v2717
    %v3615 = vunpack.c.l.b16 %v2718
    %v3616 = vunpack.c.h.b16 %v2718
    %v3617 = vunpack.c.l.b16 %v2719
    %v3618 = vunpack.c.h.b16 %v2719
    %v3619 = vunpack.c.l.b16 %v2720
    %v3620 = vunpack.c.h.b16 %v2720
    %v3621 = vunpack.c.l.b16 %v2721
    %v3622 = vunpack.c.h.b16 %v2721
    %v3623 = vunpack.c.l.b16 %v2722
    %v3624 = vunpack.c.h.b16 %v2722
    %v3625 = vunpack.c.l.b16 %v2723
    %v3626 = vunpack.c.h.b16 %v2723
    %v3627 = vunpack.c.l.b16 %v2724
    %v3628 = vunpack.c.h.b16 %v2724
    %v3629 = vunpack.c.l.b16 %v2725
    %v3630 = vunpack.c.h.b16 %v2725
    %v3631 = vunpack.c.l.b16 %v2726
    %v3632 = vunpack.c.h.b16 %v2726
    %v3633 = vunpack.c.l.b16 %v2727
    %v3634 = vunpack.c.h.b16 %v2727
    %v3635 = vunpack.c.l.b16 %v2728
    %v3636 = vunpack.c.h.b16 %v2728
    %v3637 = vunpack.c.l.b16 %v2729
    %v3638 = vunpack.c.h.b16 %v2729
    %v3639 = vunpack.c.l.b16 %v2730
    %v3640 = vunpack.c.h.b16 %v2730
    %v3641 = vunpack.c.l.b16 %v2731
    %v3642 = vunpack.c.h.b16 %v2731
    %v3643 = vunpack.c.l.b16 %v2732
    %v3644 = vunpack.c.h.b16 %v2732
    %v3645 = vunpack.c.l.b16 %v2733
    %v3646 = vunpack.c.h.b16 %v2733
    %v3647 = vunpack.c.l.b16 %v2734
    %v3648 = vunpack.c.h.b16 %v2734
    %v3649 = vunpack.c.l.b16 %v2735
    %v3650 = vunpack.c.h.b16 %v2735
    %v3651 = vunpack.c.l.b16 %v2736
    %v3652 = vunpack.c.h.b16 %v2736
    %v3653 = vunpack.c.l.b16 %v2737
    %v3654 = vunpack.c.h.b16 %v2737
    %v3655 = vunpack.c.l.b16 %v2738
    %v3656 = vunpack.c.h.b16 %v2738
    %v3657 = vunpack.c.l.b16 %v2739
    %v3658 = vunpack.c.h.b16 %v2739
    %v3659 = vunpack.c.l.b16 %v2740
    %v3660 = vunpack.c.h.b16 %v2740
    %v3661 = vunpack.c.l.b16 %v2741
    %v3662 = vunpack.c.h.b16 %v2741
    %v3663 = vunpack.c.l.b16 %v2742
    %v3664 = vunpack.c.h.b16 %v2742
    %v3665 = vunpack.c.l.b16 %v2743
    %v3666 = vunpack.c.h.b16 %v2743
    %v3667 = vunpack.c.l.b16 %v2744
    %v3668 = vunpack.c.h.b16 %v2744
    %v3669 = vunpack.c.l.b16 %v2745
    %v3670 = vunpack.c.h.b16 %v2745
    %v3671 = vunpack.c.l.b16 %v2746
    %v3672 = vunpack.c.h.b16 %v2746
    %v3673 = vunpack.c.l.b16 %v2747
    %v3674 = vunpack.c.h.b16 %v2747
    %v3675 = vunpack.c.l.b16 %v2748
    %v3676 = vunpack.c.h.b16 %v2748
    %v3677 = vunpack.c.l.b16 %v2749
    %v3678 = vunpack.c.h.b16 %v2749
    %v3679 = vunpack.c.l.b16 %v2750
    %v3680 = vunpack.c.h.b16 %v2750
    %v3681 = vunpack.c.l.b16 %v2751
    %v3682 = vunpack.c.h.b16 %v2751
    %v3683 = vunpack.c.l.b16 %v2752
    %v3684 = vunpack.c.h.b16 %v2752
    %v3685 = vunpack.c.l.b16 %v2753
    %v3686 = vunpack.c.h.b16 %v2753
    %v3687 = vunpack.c.l.b16 %v2754
    %v3688 = vunpack.c.h.b16 %v2754
    %v3689 = vunpack.c.l.b16 %v2755
    %v3690 = vunpack.c.h.b16 %v2755
    %v3691 = vunpack.c.l.b16 %v2756
    %v3692 = vunpack.c.h.b16 %v2756
    %v3693 = vunpack.c.l.b16 %v2757
    %v3694 = vunpack.c.h.b16 %v2757
    %v3695 = vunpack.c.l.b16 %v2758
    %v3696 = vunpack.c.h.b16 %v2758
    %v3697 = vunpack.c.l.b16 %v2759
    %v3698 = vunpack.c.h.b16 %v2759
    %v3699 = vunpack.c.l.b16 %v2760
    %v3700 = vunpack.c.h.b16 %v2760
    %v3701 = vunpack.c.l.b16 %v2761
    %v3702 = vunpack.c.h.b16 %v2761
    %v3703 = vunpack.c.l.b16 %v2762
    %v3704 = vunpack.c.h.b16 %v2762
    %v3705 = vunpack.c.l.b16 %v2763
    %v3706 = vunpack.c.h.b16 %v2763
    %v3707 = vunpack.c.l.b16 %v2764
    %v3708 = vunpack.c.h.b16 %v2764
    %v3709 = vunpack.c.l.b16 %v2765
    %v3710 = vunpack.c.h.b16 %v2765
    %v3711 = vunpack.c.l.b16 %v2766
    %v3712 = vunpack.c.h.b16 %v2766
    %v3713 = vunpack.c.l.b16 %v2767
    %v3714 = vunpack.c.h.b16 %v2767
    %v3715 = vunpack.c.l.b16 %v2768
    %v3716 = vunpack.c.h.b16 %v2768
    %v3717 = vunpack.c.l.b16 %v2769
    %v3718 = vunpack.c.h.b16 %v2769
    %v3719 = vunpack.c.l.b16 %v2770
    %v3720 = vunpack.c.h.b16 %v2770
    %v3721 = vunpack.c.l.b16 %v2771
    %v3722 = vunpack.c.h.b16 %v2771
    %v3723 = vunpack.c.l.b16 %v2772
    %v3724 = vunpack.c.h.b16 %v2772
    %v3725 = vunpack.c.l.b16 %v2773
    %v3726 = vunpack.c.h.b16 %v2773
    %v3727 = vunpack.c.l.b16 %v2774
    %v3728 = vunpack.c.h.b16 %v2774
    %v3729 = vunpack.c.l.b16 %v2775
    %v3730 = vunpack.c.h.b16 %v2775
    %v3731 = vunpack.c.l.b16 %v2776
    %v3732 = vunpack.c.h.b16 %v2776
    %v3733 = vunpack.c.l.b16 %v2777
    %v3734 = vunpack.c.h.b16 %v2777
    %v3735 = vunpack.c.l.b16 %v2778
    %v3736 = vunpack.c.h.b16 %v2778
    %v3737 = vunpack.c.l.b16 %v2779
    %v3738 = vunpack.c.h.b16 %v2779
    %v3739 = vunpack.c.l.b16 %v2780
    %v3740 = vunpack.c.h.b16 %v2780
    %v3741 = vunpack.c.l.b16 %v2781
    %v3742 = vunpack.c.h.b16 %v2781
    %v3743 = vunpack.c.l.b16 %v2782
    %v3744 = vunpack.c.h.b16 %v2782
    %v3745 = vunpack.c.l.b16 %v2783
    %v3746 = vunpack.c.h.b16 %v2783
    %v3747 = vunpack.c.l.b16 %v2784
    %v3748 = vunpack.c.h.b16 %v2784
    %v3749 = vunpack.c.l.b16 %v2785
    %v3750 = vunpack.c.h.b16 %v2785
    %v3751 = vunpack.c.l.b16 %v2786
    %v3752 = vunpack.c.h.b16 %v2786
    %v3753 = vunpack.c.l.b16 %v2787
    %v3754 = vunpack.c.h.b16 %v2787
    %v3755 = vunpack.c.l.b16 %v2788
    %v3756 = vunpack.c.h.b16 %v2788
    %v3757 = vunpack.c.l.b16 %v2789
    %v3758 = vunpack.c.h.b16 %v2789
    %v3759 = vunpack.c.l.b16 %v2790
    %v3760 = vunpack.c.h.b16 %v2790
    %v3761 = vunpack.c.l.b16 %v2791
    %v3762 = vunpack.c.h.b16 %v2791
    %v3763 = vunpack.c.l.b16 %v2792
    %v3764 = vunpack.c.h.b16 %v2792
    %v3765 = vunpack.c.l.b16 %v2793
    %v3766 = vunpack.c.h.b16 %v2793
    %v3767 = vunpack.c.l.b16 %v2794
    %v3768 = vunpack.c.h.b16 %v2794
    %v3769 = vunpack.c.l.b16 %v2795
    %v3770 = vunpack.c.h.b16 %v2795
    %v3771 = vunpack.c.l.b16 %v2796
    %v3772 = vunpack.c.h.b16 %v2796
    %v3773 = vunpack.c.l.b16 %v2797
    %v3774 = vunpack.c.h.b16 %v2797
    %v3775 = vunpack.c.l.b16 %v2798
    %v3776 = vunpack.c.h.b16 %v2798
    %v3777 = vunpack.c.l.b16 %v2799
    %v3778 = vunpack.c.h.b16 %v2799
    %v3779 = vunpack.c.l.b16 %v2800
    %v3780 = vunpack.c.h.b16 %v2800
    %v3781 = vunpack.c.l.b16 %v2801
    %v3782 = vunpack.c.h.b16 %v2801
    %v3783 = vunpack.c.l.b16 %v2802
    %v3784 = vunpack.c.h.b16 %v2802
    %v3785 = vunpack.c.l.b16 %v2803
    %v3786 = vunpack.c.h.b16 %v2803
    %v3787 = vunpack.c.l.b16 %v2804
    %v3788 = vunpack.c.h.b16 %v2804
    %v3789 = vunpack.c.l.b16 %v2805
    %v3790 = vunpack.c.h.b16 %v2805
    %v3791 = vunpack.c.l.b16 %v2806
    %v3792 = vunpack.c.h.b16 %v2806
    %v3793 = vunpack.c.l.b16 %v2807
    %v3794 = vunpack.c.h.b16 %v2807
    %v3795 = vunpack.c.l.b16 %v2808
    %v3796 = vunpack.c.h.b16 %v2808
    %v3797 = vunpack.c.l.b16 %v2809
    %v3798 = vunpack.c.h.b16 %v2809
    %v3799 = vunpack.c.l.b16 %v2810
    %v3800 = vunpack.c.h.b16 %v2810
    %v3801 = vunpack.c.l.b16 %v2811
    %v3802 = vunpack.c.h.b16 %v2811
    %v3803 = vunpack.c.l.b16 %v2812
    %v3804 = vunpack.c.h.b16 %v2812
    %v3805 = vunpack.c.l.b16 %v2813
    %v3806 = vunpack.c.h.b16 %v2813
    %v3807 = vunpack.c.l.b16 %v2814
    %v3808 = vunpack.c.h.b16 %v2814
    %v3809 = vunpack.c.l.b16 %v2815
    %v3810 = vunpack.c.h.b16 %v2815
    %v3811 = vunpack.c.l.b16 %v2816
    %v3812 = vunpack.c.h.b16 %v2816
    %v3813 = vunpack.c.l.b16 %v2817
    %v3814 = vunpack.c.h.b16 %v2817
    %v3815 = vunpack.c.l.b16 %v2818
    %v3816 = vunpack.c.h.b16 %v2818
    %v3817 = vunpack.c.l.b16 %v2819
    %v3818 = vunpack.c.h.b16 %v2819
    %v3819 = vunpack.c.l.b16 %v2820
    %v3820 = vunpack.c.h.b16 %v2820
    %v3821 = vunpack.c.l.b16 %v2821
    %v3822 = vunpack.c.h.b16 %v2821
    %v3823 = vunpack.c.l.b16 %v2822
    %v3824 = vunpack.c.h.b16 %v2822
    %v3825 = vunpack.c.l.b16 %v2823
    %v3826 = vunpack.c.h.b16 %v2823
    %v3827 = vunpack.c.l.b16 %v2824
    %v3828 = vunpack.c.h.b16 %v2824
    %v3829 = vunpack.c.l.b16 %v2825
    %v3830 = vunpack.c.h.b16 %v2825
    %v3831 = vunpack.c.l.b16 %v2826
    %v3832 = vunpack.c.h.b16 %v2826
    %v3833 = vunpack.c.l.b16 %v2827
    %v3834 = vunpack.c.h.b16 %v2827
    %v3835 = vunpack.c.l.b16 %v2828
    %v3836 = vunpack.c.h.b16 %v2828
    %v3837 = vunpack.c.l.b16 %v2829
    %v3838 = vunpack.c.h.b16 %v2829
    %v3839 = vunpack.c.l.b16 %v2830
    %v3840 = vunpack.c.h.b16 %v2830
    %v3841 = vunpack.c.l.b16 %v2831
    %v3842 = vunpack.c.h.b16 %v2831
    %v3843 = vunpack.c.l.b16 %v2832
    %v3844 = vunpack.c.h.b16 %v2832
    %v3845 = vunpack.c.l.b16 %v2833
    %v3846 = vunpack.c.h.b16 %v2833
    %v3847 = vunpack.c.l.b16 %v2834
    %v3848 = vunpack.c.h.b16 %v2834
    %v3849 = vunpack.c.l.b16 %v2835
    %v3850 = vunpack.c.h.b16 %v2835
    %v3851 = vunpack.c.l.b16 %v2836
    %v3852 = vunpack.c.h.b16 %v2836
    %v3853 = vunpack.c.l.b16 %v2837
    %v3854 = vunpack.c.h.b16 %v2837
    %v3855 = vunpack.c.l.b16 %v2838
    %v3856 = vunpack.c.h.b16 %v2838
    %v3857 = vunpack.c.l.b16 %v2839
    %v3858 = vunpack.c.h.b16 %v2839
    %v3859 = vunpack.c.l.b16 %v2840
    %v3860 = vunpack.c.h.b16 %v2840
    %v3861 = vunpack.c.l.b16 %v2841
    %v3862 = vunpack.c.h.b16 %v2841
    %v3863 = vunpack.c.l.b16 %v2842
    %v3864 = vunpack.c.h.b16 %v2842
    %v3865 = vunpack.c.l.b16 %v2843
    %v3866 = vunpack.c.h.b16 %v2843
    %v3867 = vunpack.c.l.b16 %v2844
    %v3868 = vunpack.c.h.b16 %v2844
    %v3869 = vunpack.c.l.b16 %v2845
    %v3870 = vunpack.c.h.b16 %v2845
    %v3871 = vunpack.c.l.b16 %v2846
    %v3872 = vunpack.c.h.b16 %v2846
    %v3873 = vunpack.c.l.b16 %v2847
    %v3874 = vunpack.c.h.b16 %v2847
    %v3875 = vunpack.c.l.b16 %v2848
    %v3876 = vunpack.c.h.b16 %v2848
    %v3877 = vunpack.c.l.b16 %v2849
    %v3878 = vunpack.c.h.b16 %v2849
    %v3879 = vunpack.c.l.b16 %v2850
    %v3880 = vunpack.c.h.b16 %v2850
    %v3881 = vunpack.c.l.b16 %v2851
    %v3882 = vunpack.c.h.b16 %v2851
    %v3883 = vunpack.c.l.b16 %v2852
    %v3884 = vunpack.c.h.b16 %v2852
    %v3885 = vunpack.c.l.b16 %v2853
    %v3886 = vunpack.c.h.b16 %v2853
    %v3887 = vunpack.c.l.b16 %v2854
    %v3888 = vunpack.c.h.b16 %v2854
    %v3889 = vunpack.c.l.b16 %v2855
    %v3890 = vunpack.c.h.b16 %v2855
    %v3891 = vunpack.c.l.b16 %v2856
    %v3892 = vunpack.c.h.b16 %v2856
    %v3893 = vunpack.c.l.b16 %v2857
    %v3894 = vunpack.c.h.b16 %v2857
    %v3895 = vunpack.c.l.b16 %v2858
    %v3896 = vunpack.c.h.b16 %v2858
    %v3897 = vunpack.c.l.b16 %v2859
    %v3898 = vunpack.c.h.b16 %v2859
    %v3899 = vunpack.c.l.b16 %v2860
    %v3900 = vunpack.c.h.b16 %v2860
    %v3901 = vunpack.c.l.b16 %v2861
    %v3902 = vunpack.c.h.b16 %v2861
    %v3903 = vunpack.c.l.b16 %v2862
    %v3904 = vunpack.c.h.b16 %v2862
    %v3905 = vunpack.c.l.b16 %v2863
    %v3906 = vunpack.c.h.b16 %v2863
    %v3907 = vunpack.c.l.b16 %v2864
    %v3908 = vunpack.c.h.b16 %v2864
    %v3909 = vunpack.c.l.b16 %v2865
    %v3910 = vunpack.c.h.b16 %v2865
    %v3911 = vunpack.c.l.b16 %v2866
    %v3912 = vunpack.c.h.b16 %v2866
    %v3913 = vunpack.c.l.b16 %v2867
    %v3914 = vunpack.c.h.b16 %v2867
    %v3915 = vunpack.c.l.b16 %v2868
    %v3916 = vunpack.c.h.b16 %v2868
    %v3917 = vunpack.c.l.b16 %v2869
    %v3918 = vunpack.c.h.b16 %v2869
    %v3919 = vunpack.c.l.b16 %v2870
    %v3920 = vunpack.c.h.b16 %v2870
    %v3921 = vunpack.c.l.b16 %v2871
    %v3922 = vunpack.c.h.b16 %v2871
    %v3923 = vunpack.c.l.b16 %v2872
    %v3924 = vunpack.c.h.b16 %v2872
    %v3925 = vunpack.c.l.b16 %v2873
    %v3926 = vunpack.c.h.b16 %v2873
    %v3927 = vunpack.c.l.b16 %v2874
    %v3928 = vunpack.c.h.b16 %v2874
    %v3929 = vunpack.c.l.b16 %v2875
    %v3930 = vunpack.c.h.b16 %v2875
    %v3931 = vunpack.c.l.b16 %v2876
    %v3932 = vunpack.c.h.b16 %v2876
    %v3933 = vunpack.c.l.b16 %v2877
    %v3934 = vunpack.c.h.b16 %v2877
    %v3935 = vunpack.c.l.b16 %v2878
    %v3936 = vunpack.c.h.b16 %v2878
    %v3937 = vunpack.c.l.b16 %v2879
    %v3938 = vunpack.c.h.b16 %v2879
    %v3939 = vunpack.c.l.b16 %v2880
    %v3940 = vunpack.c.h.b16 %v2880
    %v3941 = vunpack.c.l.b16 %v2881
    %v3942 = vunpack.c.h.b16 %v2881
    %v3943 = vunpack.c.l.b16 %v2882
    %v3944 = vunpack.c.h.b16 %v2882
    %v3945 = vunpack.c.l.b16 %v2883
    %v3946 = vunpack.c.h.b16 %v2883
    %v3947 = vunpack.c.l.b16 %v2884
    %v3948 = vunpack.c.h.b16 %v2884
    %v3949 = vunpack.c.l.b16 %v2885
    %v3950 = vunpack.c.h.b16 %v2885
    %v3951 = vunpack.c.l.b16 %v2886
    %v3952 = vunpack.c.h.b16 %v2886
    %v3953 = vunpack.c.l.b16 %v2887
    %v3954 = vunpack.c.h.b16 %v2887
    %v3955 = vunpack.c.l.b16 %v2888
    %v3956 = vunpack.c.h.b16 %v2888
    %v3957 = vunpack.c.l.b16 %v2889
    %v3958 = vunpack.c.h.b16 %v2889
    %v3959 = vunpack.c.l.b16 %v2890
    %v3960 = vunpack.c.h.b16 %v2890
    %v3961 = vunpack.c.l.b16 %v2891
    %v3962 = vunpack.c.h.b16 %v2891
    %v3963 = vunpack.c.l.b16 %v2892
    %v3964 = vunpack.c.h.b16 %v2892
    %v3965 = vunpack.c.l.b16 %v2893
    %v3966 = vunpack.c.h.b16 %v2893
    %v3967 = vunpack.c.l.b16 %v2894
    %v3968 = vunpack.c.h.b16 %v2894
    %v3969 = vunpack.c.l.b16 %v2895
    %v3970 = vunpack.c.h.b16 %v2895
    %v3971 = vunpack.c.l.b16 %v2896
    %v3972 = vunpack.c.h.b16 %v2896
    %v3973 = vunpack.c.l.b16 %v2897
    %v3974 = vunpack.c.h.b16 %v2897
    %v3975 = vunpack.c.l.b16 %v2898
    %v3976 = vunpack.c.h.b16 %v2898
    %v3977 = vunpack.c.l.b16 %v2899
    %v3978 = vunpack.c.h.b16 %v2899
    %v3979 = vunpack.c.l.b16 %v2900
    %v3980 = vunpack.c.h.b16 %v2900
    %v3981 = vunpack.c.l.b16 %v2901
    %v3982 = vunpack.c.h.b16 %v2901
    %v3983 = vunpack.c.l.b16 %v2902
    %v3984 = vunpack.c.h.b16 %v2902
    %v3985 = vunpack.c.l.b16 %v2903
    %v3986 = vunpack.c.h.b16 %v2903
    %v3987 = vunpack.c.l.b16 %v2904
    %v3988 = vunpack.c.h.b16 %v2904
    %v3989 = vunpack.c.l.b16 %v2905
    %v3990 = vunpack.c.h.b16 %v2905
    %v3991 = vunpack.c.l.b16 %v2906
    %v3992 = vunpack.c.h.b16 %v2906
    %v3993 = vunpack.c.l.b16 %v2907
    %v3994 = vunpack.c.h.b16 %v2907
    %v3995 = vunpack.c.l.b16 %v2908
    %v3996 = vunpack.c.h.b16 %v2908
    %v3997 = vunpack.c.l.b16 %v2909
    %v3998 = vunpack.c.h.b16 %v2909
    %v3999 = vunpack.c.l.b16 %v2910
    %v4000 = vunpack.c.h.b16 %v2910
    %v4001 = vunpack.c.l.b16 %v2911
    %v4002 = vunpack.c.h.b16 %v2911
    %v4003 = vunpack.c.l.b16 %v2912
    %v4004 = vunpack.c.h.b16 %v2912
    %v4005 = vunpack.c.l.b16 %v2913
    %v4006 = vunpack.c.h.b16 %v2913
    %v4007 = vunpack.c.l.b16 %v2914
    %v4008 = vunpack.c.h.b16 %v2914
    %v4009 = vunpack.c.l.b16 %v2915
    %v4010 = vunpack.c.h.b16 %v2915
    %v4011 = vunpack.c.l.b16 %v2916
    %v4012 = vunpack.c.h.b16 %v2916
    %v4013 = vunpack.c.l.b16 %v2917
    %v4014 = vunpack.c.h.b16 %v2917
    %v4015 = vunpack.c.l.b16 %v2918
    %v4016 = vunpack.c.h.b16 %v2918
    %v4017 = vunpack.c.l.b16 %v2919
    %v4018 = vunpack.c.h.b16 %v2919
    %v4019 = vunpack.c.l.b16 %v2920
    %v4020 = vunpack.c.h.b16 %v2920
    %v4021 = vunpack.c.l.b16 %v2921
    %v4022 = vunpack.c.h.b16 %v2921
    %v4023 = vunpack.c.l.b16 %v2922
    %v4024 = vunpack.c.h.b16 %v2922
    %v4025 = vunpack.c.l.b16 %v2923
    %v4026 = vunpack.c.h.b16 %v2923
    %v4027 = vunpack.c.l.b16 %v2924
    %v4028 = vunpack.c.h.b16 %v2924
    %v4029 = vunpack.c.l.b16 %v2925
    %v4030 = vunpack.c.h.b16 %v2925
    %v4031 = vunpack.c.l.b16 %v2926
    %v4032 = vunpack.c.h.b16 %v2926
    %v4033 = vunpack.c.l.b16 %v2927
    %v4034 = vunpack.c.h.b16 %v2927
    %v4035 = vunpack.c.l.b16 %v2928
    %v4036 = vunpack.c.h.b16 %v2928
    %v4037 = vunpack.c.l.b16 %v2929
    %v4038 = vunpack.c.h.b16 %v2929
    %v4039 = vunpack.c.l.b16 %v2930
    %v4040 = vunpack.c.h.b16 %v2930
    %v4041 = vunpack.c.l.b16 %v2931
    %v4042 = vunpack.c.h.b16 %v2931
    %v4043 = vunpack.c.l.b16 %v2932
    %v4044 = vunpack.c.h.b16 %v2932
    %v4045 = vunpack.c.l.b16 %v2933
    %v4046 = vunpack.c.h.b16 %v2933
    %v4047 = vunpack.c.l.b16 %v2934
    %v4048 = vunpack.c.h.b16 %v2934
    %v4049 = vunpack.c.l.b16 %v2935
    %v4050 = vunpack.c.h.b16 %v2935
    %v4051 = vunpack.c.l.b16 %v2936
    %v4052 = vunpack.c.h.b16 %v2936
    %v4053 = vunpack.c.l.b16 %v2937
    %v4054 = vunpack.c.h.b16 %v2937
    %v4055 = vunpack.c.l.b16 %v2938
    %v4056 = vunpack.c.h.b16 %v2938
    %v4057 = vunpack.c.l.b16 %v2939
    %v4058 = vunpack.c.h.b16 %v2939
    %v4059 = vunpack.c.l.b16 %v2940
    %v4060 = vunpack.c.h.b16 %v2940
    %v4061 = vunpack.c.l.b16 %v2941
    %v4062 = vunpack.c.h.b16 %v2941
    %v4063 = vunpack.c.l.b16 %v2942
    %v4064 = vunpack.c.h.b16 %v2942
    %v4065 = vunpack.c.l.b16 %v2943
    %v4066 = vunpack.c.h.b16 %v2943
    %v4067 = vunpack.c.l.b16 %v2944
    %v4068 = vunpack.c.h.b16 %v2944
    %v4069 = vunpack.c.l.b16 %v2945
    %v4070 = vunpack.c.h.b16 %v2945
    %v4071 = vunpack.c.l.b16 %v2946
    %v4072 = vunpack.c.h.b16 %v2946
    %v4073 = vunpack.c.l.b16 %v2947
    %v4074 = vunpack.c.h.b16 %v2947
    %v4075 = vunpack.c.l.b16 %v2948
    %v4076 = vunpack.c.h.b16 %v2948
    %v4077 = vunpack.c.l.b16 %v2949
    %v4078 = vunpack.c.h.b16 %v2949
    %v4079 = vunpack.c.l.b16 %v2950
    %v4080 = vunpack.c.h.b16 %v2950
    %v4081 = vunpack.c.l.b16 %v2951
    %v4082 = vunpack.c.h.b16 %v2951
    %v4083 = vunpack.c.l.b16 %v2952
    %v4084 = vunpack.c.h.b16 %v2952
    %v4085 = vunpack.c.l.b16 %v2953
    %v4086 = vunpack.c.h.b16 %v2953
    %v4087 = vunpack.c.l.b16 %v2954
    %v4088 = vunpack.c.h.b16 %v2954
    %v4089 = vunpack.c.l.b16 %v2955
    %v4090 = vunpack.c.h.b16 %v2955
    %v4091 = vunpack.c.l.b16 %v2956
    %v4092 = vunpack.c.h.b16 %v2956
    %v4093 = vpack.c.b16 %v3523, %v3517
    %v4094 = vpack.c.b16 %v3524, %v3518
    %v4095 = vpack.c.b16 %v3525, %v3519
    %v4096 = vpack.c.b16 %v3526, %v3520
    %v4097 = vpack.c.b16 %v3527, %v3521
    %v4098 = vpack.c.b16 %v3528, %v3522
    %v4099 = vpack.c.b16 %v3535, %v3529
    %v4100 = vpack.c.b16 %v3536, %v3530
    %v4101 = vpack.c.b16 %v3537, %v3531
    %v4102 = vpack.c.b16 %v3538, %v3532
    %v4103 = vpack.c.b16 %v3539, %v3533
    %v4104 = vpack.c.b16 %v3540, %v3534
    %v4105 = vpack.c.b16 %v3547, %v3541
    %v4106 = vpack.c.b16 %v3548, %v3542
    %v4107 = vpack.c.b16 %v3549, %v3543
    %v4108 = vpack.c.b16 %v3550, %v3544
    %v4109 = vpack.c.b16 %v3551, %v3545
    %v4110 = vpack.c.b16 %v3552, %v3546
    %v4111 = vpack.c.b16 %v3559, %v3553
    %v4112 = vpack.c.b16 %v3560, %v3554
    %v4113 = vpack.c.b16 %v3561, %v3555
    %v4114 = vpack.c.b16 %v3562, %v3556
    %v4115 = vpack.c.b16 %v3563, %v3557
    %v4116 = vpack.c.b16 %v3564, %v3558
    %v4117 = vpack.c.b16 %v3571, %v3565
    %v4118 = vpack.c.b16 %v3572, %v3566
    %v4119 = vpack.c.b16 %v3573, %v3567
    %v4120 = vpack.c.b16 %v3574, %v3568
    %v4121 = vpack.c.b16 %v3575, %v3569
    %v4122 = vpack.c.b16 %v3576, %v3570
    %v4123 = vpack.c.b16 %v3583, %v3577
    %v4124 = vpack.c.b16 %v3584, %v3578
    %v4125 = vpack.c.b16 %v3585, %v3579
    %v4126 = vpack.c.b16 %v3586, %v3580
    %v4127 = vpack.c.b16 %v3587, %v3581
    %v4128 = vpack.c.b16 %v3588, %v3582
    %v4129 = vpack.c.b16 %v3595, %v3589
    %v4130 = vpack.c.b16 %v3596, %v3590
    %v4131 = vpack.c.b16 %v3597, %v3591
    %v4132 = vpack.c.b16 %v3598, %v3592
    %v4133 = vpack.c.b16 %v3599, %v3593
    %v4134 = vpack.c.b16 %v3600, %v3594
    %v4135 = vpack.c.b16 %v3607, %v3601
    %v4136 = vpack.c.b16 %v3608, %v3602
    %v4137 = vpack.c.b16 %v3609, %v3603
    %v4138 = vpack.c.b16 %v3610, %v3604
    %v4139 = vpack.c.b16 %v3611, %v3605
    %v4140 = vpack.c.b16 %v3612, %v3606
    %v4141 = vpack.c.b16 %v3619, %v3613
    %v4142 = vpack.c.b16 %v3620, %v3614
    %v4143 = vpack.c.b16 %v3621, %v3615
    %v4144 = vpack.c.b16 %v3622, %v3616
    %v4145 = vpack.c.b16 %v3623, %v3617
    %v4146 = vpack.c.b16 %v3624, %v3618
    %v4147 = vpack.c.b16 %v3631, %v3625
    %v4148 = vpack.c.b16 %v3632, %v3626
    %v4149 = vpack.c.b16 %v3633, %v3627
    %v4150 = vpack.c.b16 %v3634, %v3628
    %v4151 = vpack.c.b16 %v3635, %v3629
    %v4152 = vpack.c.b16 %v3636, %v3630
    %v4153 = vpack.c.b16 %v3643, %v3637
    %v4154 = vpack.c.b16 %v3644, %v3638
    %v4155 = vpack.c.b16 %v3645, %v3639
    %v4156 = vpack.c.b16 %v3646, %v3640
    %v4157 = vpack.c.b16 %v3647, %v3641
    %v4158 = vpack.c.b16 %v3648, %v3642
    %v4159 = vpack.c.b16 %v3655, %v3649
    %v4160 = vpack.c.b16 %v3656, %v3650
    %v4161 = vpack.c.b16 %v3657, %v3651
    %v4162 = vpack.c.b16 %v3658, %v3652
    %v4163 = vpack.c.b16 %v3659, %v3653
    %v4164 = vpack.c.b16 %v3660, %v3654
    %v4165 = vpack.c.b16 %v3667, %v3661
    %v4166 = vpack.c.b16 %v3668, %v3662
    %v4167 = vpack.c.b16 %v3669, %v3663
    %v4168 = vpack.c.b16 %v3670, %v3664
    %v4169 = vpack.c.b16 %v3671, %v3665
    %v4170 = vpack.c.b16 %v3672, %v3666
    %v4171 = vpack.c.b16 %v3679, %v3673
    %v4172 = vpack.c.b16 %v3680, %v3674
    %v4173 = vpack.c.b16 %v3681, %v3675
    %v4174 = vpack.c.b16 %v3682, %v3676
    %v4175 = vpack.c.b16 %v3683, %v3677
    %v4176 = vpack.c.b16 %v3684, %v3678
    %v4177 = vpack.c.b16 %v3691, %v3685
    %v4178 = vpack.c.b16 %v3692, %v3686
    %v4179 = vpack.c.b16 %v3693, %v3687
    %v4180 = vpack.c.b16 %v3694, %v3688
    %v4181 = vpack.c.b16 %v3695, %v3689
    %v4182 = vpack.c.b16 %v3696, %v3690
    %v4183 = vpack.c.b16 %v3703, %v3697
    %v4184 = vpack.c.b16 %v3704, %v3698
    %v4185 = vpack.c.b16 %v3705, %v3699
    %v4186 = vpack.c.b16 %v3706, %v3700
    %v4187 = vpack.c.b16 %v3707, %v3701
    %v4188 = vpack.c.b16 %v3708, %v3702
    %v4189 = vpack.c.b16 %v3715, %v3709
    %v4190 = vpack.c.b16 %v3716, %v3710
    %v4191 = vpack.c.b16 %v3717, %v3711
    %v4192 = vpack.c.b16 %v3718, %v3712
    %v4193 = vpack.c.b16 %v3719, %v3713
    %v4194 = vpack.c.b16 %v3720, %v3714
    %v4195 = vpack.c.b16 %v3727, %v3721
    %v4196 = vpack.c.b16 %v3728, %v3722
    %v4197 = vpack.c.b16 %v3729, %v3723
    %v4198 = vpack.c.b16 %v3730, %v3724
    %v4199 = vpack.c.b16 %v3731, %v3725
    %v4200 = vpack.c.b16 %v3732, %v3726
    %v4201 = vpack.c.b16 %v3739, %v3733
    %v4202 = vpack.c.b16 %v3740, %v3734
    %v4203 = vpack.c.b16 %v3741, %v3735
    %v4204 = vpack.c.b16 %v3742, %v3736
    %v4205 = vpack.c.b16 %v3743, %v3737
    %v4206 = vpack.c.b16 %v3744, %v3738
    %v4207 = vpack.c.b16 %v3751, %v3745
    %v4208 = vpack.c.b16 %v3752, %v3746
    %v4209 = vpack.c.b16 %v3753, %v3747
    %v4210 = vpack.c.b16 %v3754, %v3748
    %v4211 = vpack.c.b16 %v3755, %v3749
    %v4212 = vpack.c.b16 %v3756, %v3750
    %v4213 = vpack.c.b16 %v3763, %v3757
    %v4214 = vpack.c.b16 %v3764, %v3758
    %v4215 = vpack.c.b16 %v3765, %v3759
    %v4216 = vpack.c.b16 %v3766, %v3760
    %v4217 = vpack.c.b16 %v3767, %v3761
    %v4218 = vpack.c.b16 %v3768, %v3762
    %v4219 = vpack.c.b16 %v3775, %v3769
    %v4220 = vpack.c.b16 %v3776, %v3770
    %v4221 = vpack.c.b16 %v3777, %v3771
    %v4222 = vpack.c.b16 %v3778, %v3772
    %v4223 = vpack.c.b16 %v3779, %v3773
    %v4224 = vpack.c.b16 %v3780, %v3774
    %v4225 = vpack.c.b16 %v3787, %v3781
    %v4226 = vpack.c.b16 %v3788, %v3782
    %v4227 = vpack.c.b16 %v3789, %v3783
    %v4228 = vpack.c.b16 %v3790, %v3784
    %v4229 = vpack.c.b16 %v3791, %v3785
    %v4230 = vpack.c.b16 %v3792, %v3786
    %v4231 = vpack.c.b16 %v3799, %v3793
    %v4232 = vpack.c.b16 %v3800, %v3794
    %v4233 = vpack.c.b16 %v3801, %v3795
    %v4234 = vpack.c.b16 %v3802, %v3796
    %v4235 = vpack.c.b16 %v3803, %v3797
    %v4236 = vpack.c.b16 %v3804, %v3798
    %v4237 = vpack.c.b16 %v3811, %v3805
    %v4238 = vpack.c.b16 %v3812, %v3806
    %v4239 = vpack.c.b16 %v3813, %v3807
    %v4240 = vpack.c.b16 %v3814, %v3808
    %v4241 = vpack.c.b16 %v3815, %v3809
    %v4242 = vpack.c.b16 %v3816, %v3810
    %v4243 = vpack.c.b16 %v3823, %v3817
    %v4244 = vpack.c.b16 %v3824, %v3818
    %v4245 = vpack.c.b16 %v3825, %v3819
    %v4246 = vpack.c.b16 %v3826, %v3820
    %v4247 = vpack.c.b16 %v3827, %v3821
    %v4248 = vpack.c.b16 %v3828, %v3822
    %v4249 = vpack.c.b16 %v3835, %v3829
    %v4250 = vpack.c.b16 %v3836, %v3830
    %v4251 = vpack.c.b16 %v3837, %v3831
    %v4252 = vpack.c.b16 %v3838, %v3832
    %v4253 = vpack.c.b16 %v3839, %v3833
    %v4254 = vpack.c.b16 %v3840, %v3834
    %v4255 = vpack.c.b16 %v3847, %v3841
    %v4256 = vpack.c.b16 %v3848, %v3842
    %v4257 = vpack.c.b16 %v3849, %v3843
    %v4258 = vpack.c.b16 %v3850, %v3844
    %v4259 = vpack.c.b16 %v3851, %v3845
    %v4260 = vpack.c.b16 %v3852, %v3846
    %v4261 = vpack.c.b16 %v3859, %v3853
    %v4262 = vpack.c.b16 %v3860, %v3854
    %v4263 = vpack.c.b16 %v3861, %v3855
    %v4264 = vpack.c.b16 %v3862, %v3856
    %v4265 = vpack.c.b16 %v3863, %v3857
    %v4266 = vpack.c.b16 %v3864, %v3858
    %v4267 = vpack.c.b16 %v3871, %v3865
    %v4268 = vpack.c.b16 %v3872, %v3866
    %v4269 = vpack.c.b16 %v3873, %v3867
    %v4270 = vpack.c.b16 %v3874, %v3868
    %v4271 = vpack.c.b16 %v3875, %v3869
    %v4272 = vpack.c.b16 %v3876, %v3870
    %v4273 = vpack.c.b16 %v3883, %v3877
    %v4274 = vpack.c.b16 %v3884, %v3878
    %v4275 = vpack.c.b16 %v3885, %v3879
    %v4276 = vpack.c.b16 %v3886, %v3880
    %v4277 = vpack.c.b16 %v3887, %v3881
    %v4278 = vpack.c.b16 %v3888, %v3882
    %v4279 = vpack.c.b16 %v3895, %v3889
    %v4280 = vpack.c.b16 %v3896, %v3890
    %v4281 = vpack.c.b16 %v3897, %v3891
    %v4282 = vpack.c.b16 %v3898, %v3892
    %v4283 = vpack.c.b16 %v3899, %v3893
    %v4284 = vpack.c.b16 %v3900, %v3894
    %v4285 = vpack.c.b16 %v3907, %v3901
    %v4286 = vpack.c.b16 %v3908, %v3902
    %v4287 = vpack.c.b16 %v3909, %v3903
    %v4288 = vpack.c.b16 %v3910, %v3904
    %v4289 = vpack.c.b16 %v3911, %v3905
    %v4290 = vpack.c.b16 %v3912, %v3906
    %v4291 = vpack.c.b16 %v3919, %v3913
    %v4292 = vpack.c.b16 %v3920, %v3914
    %v4293 = vpack.c.b16 %v3921, %v3915
    %v4294 = vpack.c.b16 %v3922, %v3916
    %v4295 = vpack.c.b16 %v3923, %v3917
    %v4296 = vpack.c.b16 %v3924, %v3918
    %v4297 = vpack.c.b16 %v3931, %v3925
    %v4298 = vpack.c.b16 %v3932, %v3926
    %v4299 = vpack.c.b16 %v3933, %v3927
    %v4300 = vpack.c.b16 %v3934, %v3928
    %v4301 = vpack.c.b16 %v3935, %v3929
    %v4302 = vpack.c.b16 %v3936, %v3930
    %v4303 = vpack.c.b16 %v3943, %v3937
    %v4304 = vpack.c.b16 %v3944, %v3938
    %v4305 = vpack.c.b16 %v3945, %v3939
    %v4306 = vpack.c.b16 %v3946, %v3940
    %v4307 = vpack.c.b16 %v3947, %v3941
    %v4308 = vpack.c.b16 %v3948, %v3942
    %v4309 = vpack.c.b16 %v3955, %v3949
    %v4310 = vpack.c.b16 %v3956, %v3950
    %v4311 = vpack.c.b16 %v3957, %v3951
    %v4312 = vpack.c.b16 %v3958, %v3952
    %v4313 = vpack.c.b16 %v3959, %v3953
    %v4314 = vpack.c.b16 %v3960, %v3954
    %v4315 = vpack.c.b16 %v3967, %v3961
    %v4316 = vpack.c.b16 %v3968, %v3962
    %v4317 = vpack.c.b16 %v3969, %v3963
    %v4318 = vpack.c.b16 %v3970, %v3964
    %v4319 = vpack.c.b16 %v3971, %v3965
    %v4320 = vpack.c.b16 %v3972, %v3966
    %v4321 = vpack.c.b16 %v3979, %v3973
    %v4322 = vpack.c.b16 %v3980, %v3974
    %v4323 = vpack.c.b16 %v3981, %v3975
    %v4324 = vpack.c.b16 %v3982, %v3976
    %v4325 = vpack.c.b16 %v3983, %v3977
    %v4326 = vpack.c.b16 %v3984, %v3978
    %v4327 = vpack.c.b16 %v3991, %v3985
    %v4328 = vpack.c.b16 %v3992, %v3986
    %v4329 = vpack.c.b16 %v3993, %v3987
    %v4330 = vpack.c.b16 %v3994, %v3988
    %v4331 = vpack.c.b16 %v3995, %v3989
    %v4332 = vpack.c.b16 %v3996, %v3990
    %v4333 = vpack.c.b16 %v4003, %v3997
    %v4334 = vpack.c.b16 %v4004, %v3998
    %v4335 = vpack.c.b16 %v4005, %v3999
    %v4336 = vpack.c.b16 %v4006, %v4000
    %v4337 = vpack.c.b16 %v4007, %v4001
    %v4338 = vpack.c.b16 %v4008, %v4002
    %v4339 = vpack.c.b16 %v4015, %v4009
    %v4340 = vpack.c.b16 %v4016, %v4010
    %v4341 = vpack.c.b16 %v4017, %v4011
    %v4342 = vpack.c.b16 %v4018, %v4012
    %v4343 = vpack.c.b16 %v4019, %v4013
    %v4344 = vpack.c.b16 %v4020, %v4014
    %v4345 = vpack.c.b16 %v4027, %v4021
    %v4346 = vpack.c.b16 %v4028, %v4022
    %v4347 = vpack.c.b16 %v4029, %v4023
    %v4348 = vpack.c.b16 %v4030, %v4024
    %v4349 = vpack.c.b16 %v4031, %v4025
    %v4350 = vpack.c.b16 %v4032, %v4026
    %v4351 = vpack.c.b16 %v4039, %v4033
    %v4352 = vpack.c.b16 %v4040, %v4034
    %v4353 = vpack.c.b16 %v4041, %v4035
    %v4354 = vpack.c.b16 %v4042, %v4036
    %v4355 = vpack.c.b16 %v4043, %v4037
    %v4356 = vpack.c.b16 %v4044, %v4038
    %v4357 = vpack.c.b16 %v4051, %v4045
    %v4358 = vpack.c.b16 %v4052, %v4046
    %v4359 = vpack.c.b16 %v4053, %v4047
    %v4360 = vpack.c.b16 %v4054, %v4048
    %v4361 = vpack.c.b16 %v4055, %v4049
    %v4362 = vpack.c.b16 %v4056, %v4050
    %v4363 = vpack.c.b16 %v4063, %v4057
    %v4364 = vpack.c.b16 %v4064, %v4058
    %v4365 = vpack.c.b16 %v4065, %v4059
    %v4366 = vpack.c.b16 %v4066, %v4060
    %v4367 = vpack.c.b16 %v4067, %v4061
    %v4368 = vpack.c.b16 %v4068, %v4062
    %v4369 = vpack.c.b16 %v4075, %v4069
    %v4370 = vpack.c.b16 %v4076, %v4070
    %v4371 = vpack.c.b16 %v4077, %v4071
    %v4372 = vpack.c.b16 %v4078, %v4072
    %v4373 = vpack.c.b16 %v4079, %v4073
    %v4374 = vpack.c.b16 %v4080, %v4074
    %v4375 = vpack.c.b16 %v4087, %v4081
    %v4376 = vpack.c.b16 %v4088, %v4082
    %v4377 = vpack.c.b16 %v4089, %v4083
    %v4378 = vpack.c.b16 %v4090, %v4084
    %v4379 = vpack.c.b16 %v4091, %v4085
    %v4380 = vpack.c.b16 %v4092, %v4086
    %4669 = vmatprep.subr.bf16.mxu0 %v4136
    %4670 = vmatpush1.bf16.msra.mxu0 %v4135
    %4671 = vmatprep.subr.bf16.mxu0 %v4130
    %4672 = vmatpush1.bf16.msra.mxu0 %v4129
    %4673 = vmatprep.subr.bf16.mxu0 %v4124
    %4674 = vmatpush1.bf16.msra.mxu0 %v4123
    %4675 = vmatprep.subr.bf16.mxu0 %v4118
    %4676 = vmatpush1.bf16.msra.mxu0 %v4117
    %4677 = vmatprep.subr.bf16.mxu0 %v4112
    %4678 = vmatpush1.bf16.msra.mxu0 %v4111
    %4679 = vmatprep.subr.bf16.mxu0 %v4106
    %4680 = vmatpush1.bf16.msra.mxu0 %v4105
    %4681 = vmatprep.subr.bf16.mxu0 %v4100
    %4682 = vmatpush1.bf16.msra.mxu0 %v4099
    %4683 = vmatprep.subr.bf16.mxu0 %v4094
    %4684 = vmatpush1.bf16.msra.mxu0 %v4093
    %4685 = vmatprep.subr.bf16.mxu0 %v4184
    %4686 = vmatpush2.bf16.msra.mxu0 %v4183
    %4687 = vmatprep.subr.bf16.mxu0 %v4178
    %4688 = vmatpush2.bf16.msra.mxu0 %v4177
    %4689 = vmatprep.subr.bf16.mxu0 %v4172
    %4690 = vmatpush2.bf16.msra.mxu0 %v4171
    %4691 = vmatprep.subr.bf16.mxu0 %v4166
    %4692 = vmatpush2.bf16.msra.mxu0 %v4165
    %4693 = vmatprep.subr.bf16.mxu0 %v4160
    %4694 = vmatpush2.bf16.msra.mxu0 %v4159
    %4695 = vmatprep.subr.bf16.mxu0 %v4154
    %4696 = vmatpush2.bf16.msra.mxu0 %v4153
    %4697 = vmatprep.subr.bf16.mxu0 %v4148
    %4698 = vmatpush2.bf16.msra.mxu0 %v4147
    %4699 = vmatprep.subr.bf16.mxu0 %v4142
    %4700 = vmatpush2.bf16.msra.mxu0 %v4141
    %4701 = vmatprep.mubr.bf16.mxu0 %v3134
    %4702 = vmatmul.mubr.bf16.gmra.mxu0 %v3133
    %v4703 = vpop.f32.mrf.mxu0
    %v4704 = vadd.f32 %v2962, %v4703
    %v4705 = vpop.f32.mrf.mxu0
    %v4706 = vadd.f32 %v2966, %v4705
    %v4707 = vpop.f32.mrf.mxu0
    %v4708 = vadd.f32 %v2962, %v4707
    %v4709 = vpop.f32.mrf.mxu0
    %v4710 = vadd.f32 %v2966, %v4709
    %4711 = vmatprep.mubr.bf16.mxu0 %v3140
    %4712 = vmatmul.mubr.bf16.gmra.mxu0 %v3139
    %v4713 = vpop.f32.mrf.mxu0
    %v4714 = vadd.f32 %v2962, %v4713
    %v4715 = vpop.f32.mrf.mxu0
    %v4716 = vadd.f32 %v2966, %v4715
    %v4717 = vpop.f32.mrf.mxu0
    %v4718 = vadd.f32 %v2962, %v4717
    %v4719 = vpop.f32.mrf.mxu0
    %v4720 = vadd.f32 %v2966, %v4719
    %4721 = vmatprep.mubr.bf16.mxu0 %v3146
    %4722 = vmatmul.mubr.bf16.gmra.mxu0 %v3145
    %v4723 = vpop.f32.mrf.mxu0
    %v4724 = vadd.f32 %v2962, %v4723
    %v4725 = vpop.f32.mrf.mxu0
    %v4726 = vadd.f32 %v2966, %v4725
    %v4727 = vpop.f32.mrf.mxu0
    %v4728 = vadd.f32 %v2962, %v4727
    %v4729 = vpop.f32.mrf.mxu0
    %v4730 = vadd.f32 %v2966, %v4729
    %4731 = vmatprep.mubr.bf16.mxu0 %v3152
    %4732 = vmatmul.mubr.bf16.gmra.mxu0 %v3151
    %v4733 = vpop.f32.mrf.mxu0
    %v4734 = vadd.f32 %v2962, %v4733
    %v4735 = vpop.f32.mrf.mxu0
    %v4736 = vadd.f32 %v2966, %v4735
    %v4737 = vpop.f32.mrf.mxu0
    %v4738 = vadd.f32 %v2962, %v4737
    %v4739 = vpop.f32.mrf.mxu0
    %v4740 = vadd.f32 %v2966, %v4739
    %4741 = vmatprep.mubr.bf16.mxu0 %v3158
    %4742 = vmatmul.mubr.bf16.gmra.mxu0 %v3157
    %v4743 = vpop.f32.mrf.mxu0
    %v4744 = vadd.f32 %v2962, %v4743
    %v4745 = vpop.f32.mrf.mxu0
    %v4746 = vadd.f32 %v2966, %v4745
    %v4747 = vpop.f32.mrf.mxu0
    %v4748 = vadd.f32 %v2962, %v4747
    %v4749 = vpop.f32.mrf.mxu0
    %v4750 = vadd.f32 %v2966, %v4749
    %4751 = vmatprep.mubr.bf16.mxu0 %v3164
    %4752 = vmatmul.mubr.bf16.gmra.mxu0 %v3163
    %v4753 = vpop.f32.mrf.mxu0
    %v4754 = vadd.f32 %v2962, %v4753
    %v4755 = vpop.f32.mrf.mxu0
    %v4756 = vadd.f32 %v2966, %v4755
    %v4757 = vpop.f32.mrf.mxu0
    %v4758 = vadd.f32 %v2962, %v4757
    %v4759 = vpop.f32.mrf.mxu0
    %v4760 = vadd.f32 %v2966, %v4759
    %4761 = vmatprep.mubr.bf16.mxu0 %v3170
    %4762 = vmatmul.mubr.bf16.gmra.mxu0 %v3169
    %v4763 = vpop.f32.mrf.mxu0
    %v4764 = vadd.f32 %v2962, %v4763
    %v4765 = vpop.f32.mrf.mxu0
    %v4766 = vadd.f32 %v2966, %v4765
    %v4767 = vpop.f32.mrf.mxu0
    %v4768 = vadd.f32 %v2962, %v4767
    %v4769 = vpop.f32.mrf.mxu0
    %v4770 = vadd.f32 %v2966, %v4769
    %4771 = vmatprep.mubr.bf16.mxu0 %v3176
    %4772 = vmatmul.mubr.bf16.gmra.mxu0 %v3175
    %v4773 = vpop.f32.mrf.mxu0
    %v4774 = vadd.f32 %v2962, %v4773
    %v4775 = vpop.f32.mrf.mxu0
    %v4776 = vadd.f32 %v2966, %v4775
    %v4777 = vpop.f32.mrf.mxu0
    %v4778 = vadd.f32 %v2962, %v4777
    %v4779 = vpop.f32.mrf.mxu0
    %v4780 = vadd.f32 %v2966, %v4779
    %4781 = vdwg.mxu0
    %4782 = vmatprep.subr.bf16.mxu0 %v4232
    %4783 = vmatpush1.bf16.msra.mxu0 %v4231
    %4784 = vmatprep.subr.bf16.mxu0 %v4226
    %4785 = vmatpush1.bf16.msra.mxu0 %v4225
    %4786 = vmatprep.subr.bf16.mxu0 %v4220
    %4787 = vmatpush1.bf16.msra.mxu0 %v4219
    %4788 = vmatprep.subr.bf16.mxu0 %v4214
    %4789 = vmatpush1.bf16.msra.mxu0 %v4213
    %4790 = vmatprep.subr.bf16.mxu0 %v4208
    %4791 = vmatpush1.bf16.msra.mxu0 %v4207
    %4792 = vmatprep.subr.bf16.mxu0 %v4202
    %4793 = vmatpush1.bf16.msra.mxu0 %v4201
    %4794 = vmatprep.subr.bf16.mxu0 %v4196
    %4795 = vmatpush1.bf16.msra.mxu0 %v4195
    %4796 = vmatprep.subr.bf16.mxu0 %v4190
    %4797 = vmatpush1.bf16.msra.mxu0 %v4189
    %4798 = vmatprep.subr.bf16.mxu0 %v4280
    %4799 = vmatpush2.bf16.msra.mxu0 %v4279
    %4800 = vmatprep.subr.bf16.mxu0 %v4274
    %4801 = vmatpush2.bf16.msra.mxu0 %v4273
    %4802 = vmatprep.subr.bf16.mxu0 %v4268
    %4803 = vmatpush2.bf16.msra.mxu0 %v4267
    %4804 = vmatprep.subr.bf16.mxu0 %v4262
    %4805 = vmatpush2.bf16.msra.mxu0 %v4261
    %4806 = vmatprep.subr.bf16.mxu0 %v4256
    %4807 = vmatpush2.bf16.msra.mxu0 %v4255
    %4808 = vmatprep.subr.bf16.mxu0 %v4250
    %4809 = vmatpush2.bf16.msra.mxu0 %v4249
    %4810 = vmatprep.subr.bf16.mxu0 %v4244
    %4811 = vmatpush2.bf16.msra.mxu0 %v4243
    %4812 = vmatprep.subr.bf16.mxu0 %v4238
    %4813 = vmatpush2.bf16.msra.mxu0 %v4237
    %4814 = vmatprep.mubr.bf16.mxu0 %v3136
    %4815 = vmatmul.mubr.bf16.gmra.mxu0 %v3135
    %v4816 = vpop.f32.mrf.mxu0
    %v4817 = vadd.f32 %v4704, %v4816
    %v4818 = vpop.f32.mrf.mxu0
    %v4819 = vadd.f32 %v4706, %v4818
    %v4820 = vpop.f32.mrf.mxu0
    %v4821 = vadd.f32 %v4708, %v4820
    %v4822 = vpop.f32.mrf.mxu0
    %v4823 = vadd.f32 %v4710, %v4822
    %4824 = vmatprep.mubr.bf16.mxu0 %v3142
    %4825 = vmatmul.mubr.bf16.gmra.mxu0 %v3141
    %v4826 = vpop.f32.mrf.mxu0
    %v4827 = vadd.f32 %v4714, %v4826
    %v4828 = vpop.f32.mrf.mxu0
    %v4829 = vadd.f32 %v4716, %v4828
    %v4830 = vpop.f32.mrf.mxu0
    %v4831 = vadd.f32 %v4718, %v4830
    %v4832 = vpop.f32.mrf.mxu0
    %v4833 = vadd.f32 %v4720, %v4832
    %4834 = vmatprep.mubr.bf16.mxu0 %v3148
    %4835 = vmatmul.mubr.bf16.gmra.mxu0 %v3147
    %v4836 = vpop.f32.mrf.mxu0
    %v4837 = vadd.f32 %v4724, %v4836
    %v4838 = vpop.f32.mrf.mxu0
    %v4839 = vadd.f32 %v4726, %v4838
    %v4840 = vpop.f32.mrf.mxu0
    %v4841 = vadd.f32 %v4728, %v4840
    %v4842 = vpop.f32.mrf.mxu0
    %v4843 = vadd.f32 %v4730, %v4842
    %4844 = vmatprep.mubr.bf16.mxu0 %v3154
    %4845 = vmatmul.mubr.bf16.gmra.mxu0 %v3153
    %v4846 = vpop.f32.mrf.mxu0
    %v4847 = vadd.f32 %v4734, %v4846
    %v4848 = vpop.f32.mrf.mxu0
    %v4849 = vadd.f32 %v4736, %v4848
    %v4850 = vpop.f32.mrf.mxu0
    %v4851 = vadd.f32 %v4738, %v4850
    %v4852 = vpop.f32.mrf.mxu0
    %v4853 = vadd.f32 %v4740, %v4852
    %4854 = vmatprep.mubr.bf16.mxu0 %v3160
    %4855 = vmatmul.mubr.bf16.gmra.mxu0 %v3159
    %v4856 = vpop.f32.mrf.mxu0
    %v4857 = vadd.f32 %v4744, %v4856
    %v4858 = vpop.f32.mrf.mxu0
    %v4859 = vadd.f32 %v4746, %v4858
    %v4860 = vpop.f32.mrf.mxu0
    %v4861 = vadd.f32 %v4748, %v4860
    %v4862 = vpop.f32.mrf.mxu0
    %v4863 = vadd.f32 %v4750, %v4862
    %4864 = vmatprep.mubr.bf16.mxu0 %v3166
    %4865 = vmatmul.mubr.bf16.gmra.mxu0 %v3165
    %v4866 = vpop.f32.mrf.mxu0
    %v4867 = vadd.f32 %v4754, %v4866
    %v4868 = vpop.f32.mrf.mxu0
    %v4869 = vadd.f32 %v4756, %v4868
    %v4870 = vpop.f32.mrf.mxu0
    %v4871 = vadd.f32 %v4758, %v4870
    %v4872 = vpop.f32.mrf.mxu0
    %v4873 = vadd.f32 %v4760, %v4872
    %4874 = vmatprep.mubr.bf16.mxu0 %v3172
    %4875 = vmatmul.mubr.bf16.gmra.mxu0 %v3171
    %v4876 = vpop.f32.mrf.mxu0
    %v4877 = vadd.f32 %v4764, %v4876
    %v4878 = vpop.f32.mrf.mxu0
    %v4879 = vadd.f32 %v4766, %v4878
    %v4880 = vpop.f32.mrf.mxu0
    %v4881 = vadd.f32 %v4768, %v4880
    %v4882 = vpop.f32.mrf.mxu0
    %v4883 = vadd.f32 %v4770, %v4882
    %4884 = vmatprep.mubr.bf16.mxu0 %v3178
    %4885 = vmatmul.mubr.bf16.gmra.mxu0 %v3177
    %v4886 = vpop.f32.mrf.mxu0
    %v4887 = vadd.f32 %v4774, %v4886
    %v4888 = vpop.f32.mrf.mxu0
    %v4889 = vadd.f32 %v4776, %v4888
    %v4890 = vpop.f32.mrf.mxu0
    %v4891 = vadd.f32 %v4778, %v4890
    %v4892 = vpop.f32.mrf.mxu0
    %v4893 = vadd.f32 %v4780, %v4892
    %4894 = vdwg.mxu0
    %4895 = vmatprep.subr.bf16.mxu0 %v4328
    %4896 = vmatpush1.bf16.msra.mxu0 %v4327
    %4897 = vmatprep.subr.bf16.mxu0 %v4322
    %4898 = vmatpush1.bf16.msra.mxu0 %v4321
    %4899 = vmatprep.subr.bf16.mxu0 %v4316
    %4900 = vmatpush1.bf16.msra.mxu0 %v4315
    %4901 = vmatprep.subr.bf16.mxu0 %v4310
    %4902 = vmatpush1.bf16.msra.mxu0 %v4309
    %4903 = vmatprep.subr.bf16.mxu0 %v4304
    %4904 = vmatpush1.bf16.msra.mxu0 %v4303
    %4905 = vmatprep.subr.bf16.mxu0 %v4298
    %4906 = vmatpush1.bf16.msra.mxu0 %v4297
    %4907 = vmatprep.subr.bf16.mxu0 %v4292
    %4908 = vmatpush1.bf16.msra.mxu0 %v4291
    %4909 = vmatprep.subr.bf16.mxu0 %v4286
    %4910 = vmatpush1.bf16.msra.mxu0 %v4285
    %4911 = vmatprep.subr.bf16.mxu0 %v4376
    %4912 = vmatpush2.bf16.msra.mxu0 %v4375
    %4913 = vmatprep.subr.bf16.mxu0 %v4370
    %4914 = vmatpush2.bf16.msra.mxu0 %v4369
    %4915 = vmatprep.subr.bf16.mxu0 %v4364
    %4916 = vmatpush2.bf16.msra.mxu0 %v4363
    %4917 = vmatprep.subr.bf16.mxu0 %v4358
    %4918 = vmatpush2.bf16.msra.mxu0 %v4357
    %4919 = vmatprep.subr.bf16.mxu0 %v4352
    %4920 = vmatpush2.bf16.msra.mxu0 %v4351
    %4921 = vmatprep.subr.bf16.mxu0 %v4346
    %4922 = vmatpush2.bf16.msra.mxu0 %v4345
    %4923 = vmatprep.subr.bf16.mxu0 %v4340
    %4924 = vmatpush2.bf16.msra.mxu0 %v4339
    %4925 = vmatprep.subr.bf16.mxu0 %v4334
    %4926 = vmatpush2.bf16.msra.mxu0 %v4333
    %4927 = vmatprep.mubr.bf16.mxu0 %v3138
    %4928 = vmatmul.mubr.bf16.gmra.mxu0 %v3137
    %v4929 = vpop.f32.mrf.mxu0
    %v4930 = vadd.f32 %v4817, %v4929
    %v4931 = vpop.f32.mrf.mxu0
    %v4932 = vadd.f32 %v4819, %v4931
    %v4933 = vpop.f32.mrf.mxu0
    %v4934 = vadd.f32 %v4821, %v4933
    %v4935 = vpop.f32.mrf.mxu0
    %v4936 = vadd.f32 %v4823, %v4935
    %4937 = vmatprep.mubr.bf16.mxu0 %v3144
    %4938 = vmatmul.mubr.bf16.gmra.mxu0 %v3143
    %v4939 = vpop.f32.mrf.mxu0
    %v4940 = vadd.f32 %v4827, %v4939
    %v4941 = vpop.f32.mrf.mxu0
    %v4942 = vadd.f32 %v4829, %v4941
    %v4943 = vpop.f32.mrf.mxu0
    %v4944 = vadd.f32 %v4831, %v4943
    %v4945 = vpop.f32.mrf.mxu0
    %v4946 = vadd.f32 %v4833, %v4945
    %4947 = vmatprep.mubr.bf16.mxu0 %v3150
    %4948 = vmatmul.mubr.bf16.gmra.mxu0 %v3149
    %v4949 = vpop.f32.mrf.mxu0
    %v4950 = vadd.f32 %v4837, %v4949
    %v4951 = vpop.f32.mrf.mxu0
    %v4952 = vadd.f32 %v4839, %v4951
    %v4953 = vpop.f32.mrf.mxu0
    %v4954 = vadd.f32 %v4841, %v4953
    %v4955 = vpop.f32.mrf.mxu0
    %v4956 = vadd.f32 %v4843, %v4955
    %4957 = vmatprep.mubr.bf16.mxu0 %v3156
    %4958 = vmatmul.mubr.bf16.gmra.mxu0 %v3155
    %v4959 = vpop.f32.mrf.mxu0
    %v4960 = vadd.f32 %v4847, %v4959
    %v4961 = vpop.f32.mrf.mxu0
    %v4962 = vadd.f32 %v4849, %v4961
    %v4963 = vpop.f32.mrf.mxu0
    %v4964 = vadd.f32 %v4851, %v4963
    %v4965 = vpop.f32.mrf.mxu0
    %v4966 = vadd.f32 %v4853, %v4965
    %4967 = vmatprep.mubr.bf16.mxu0 %v3162
    %4968 = vmatmul.mubr.bf16.gmra.mxu0 %v3161
    %v4969 = vpop.f32.mrf.mxu0
    %v4970 = vadd.f32 %v4857, %v4969
    %v4971 = vpop.f32.mrf.mxu0
    %v4972 = vadd.f32 %v4859, %v4971
    %v4973 = vpop.f32.mrf.mxu0
    %v4974 = vadd.f32 %v4861, %v4973
    %v4975 = vpop.f32.mrf.mxu0
    %v4976 = vadd.f32 %v4863, %v4975
    %4977 = vmatprep.mubr.bf16.mxu0 %v3168
    %4978 = vmatmul.mubr.bf16.gmra.mxu0 %v3167
    %v4979 = vpop.f32.mrf.mxu0
    %v4980 = vadd.f32 %v4867, %v4979
    %v4981 = vpop.f32.mrf.mxu0
    %v4982 = vadd.f32 %v4869, %v4981
    %v4983 = vpop.f32.mrf.mxu0
    %v4984 = vadd.f32 %v4871, %v4983
    %v4985 = vpop.f32.mrf.mxu0
    %v4986 = vadd.f32 %v4873, %v4985
    %4987 = vmatprep.mubr.bf16.mxu0 %v3174
    %4988 = vmatmul.mubr.bf16.gmra.mxu0 %v3173
    %v4989 = vpop.f32.mrf.mxu0
    %v4990 = vadd.f32 %v4877, %v4989
    %v4991 = vpop.f32.mrf.mxu0
    %v4992 = vadd.f32 %v4879, %v4991
    %v4993 = vpop.f32.mrf.mxu0
    %v4994 = vadd.f32 %v4881, %v4993
    %v4995 = vpop.f32.mrf.mxu0
    %v4996 = vadd.f32 %v4883, %v4995
    %4997 = vmatprep.mubr.bf16.mxu0 %v3180
    %4998 = vmatmul.mubr.bf16.gmra.mxu0 %v3179
    %v4999 = vpop.f32.mrf.mxu0
    %v5000 = vadd.f32 %v4887, %v4999
    %v5001 = vpop.f32.mrf.mxu0
    %v5002 = vadd.f32 %v4889, %v5001
    %v5003 = vpop.f32.mrf.mxu0
    %v5004 = vadd.f32 %v4891, %v5003
    %v5005 = vpop.f32.mrf.mxu0
    %v5006 = vadd.f32 %v4893, %v5005
    %5007 = vdwg.mxu0
    %5008 = vmatprep.subr.bf16.mxu0 %v4138
    %5009 = vmatpush1.bf16.msra.mxu0 %v4137
    %5010 = vmatprep.subr.bf16.mxu0 %v4132
    %5011 = vmatpush1.bf16.msra.mxu0 %v4131
    %5012 = vmatprep.subr.bf16.mxu0 %v4126
    %5013 = vmatpush1.bf16.msra.mxu0 %v4125
    %5014 = vmatprep.subr.bf16.mxu0 %v4120
    %5015 = vmatpush1.bf16.msra.mxu0 %v4119
    %5016 = vmatprep.subr.bf16.mxu0 %v4114
    %5017 = vmatpush1.bf16.msra.mxu0 %v4113
    %5018 = vmatprep.subr.bf16.mxu0 %v4108
    %5019 = vmatpush1.bf16.msra.mxu0 %v4107
    %5020 = vmatprep.subr.bf16.mxu0 %v4102
    %5021 = vmatpush1.bf16.msra.mxu0 %v4101
    %5022 = vmatprep.subr.bf16.mxu0 %v4096
    %5023 = vmatpush1.bf16.msra.mxu0 %v4095
    %5024 = vmatprep.subr.bf16.mxu0 %v4186
    %5025 = vmatpush2.bf16.msra.mxu0 %v4185
    %5026 = vmatprep.subr.bf16.mxu0 %v4180
    %5027 = vmatpush2.bf16.msra.mxu0 %v4179
    %5028 = vmatprep.subr.bf16.mxu0 %v4174
    %5029 = vmatpush2.bf16.msra.mxu0 %v4173
    %5030 = vmatprep.subr.bf16.mxu0 %v4168
    %5031 = vmatpush2.bf16.msra.mxu0 %v4167
    %5032 = vmatprep.subr.bf16.mxu0 %v4162
    %5033 = vmatpush2.bf16.msra.mxu0 %v4161
    %5034 = vmatprep.subr.bf16.mxu0 %v4156
    %5035 = vmatpush2.bf16.msra.mxu0 %v4155
    %5036 = vmatprep.subr.bf16.mxu0 %v4150
    %5037 = vmatpush2.bf16.msra.mxu0 %v4149
    %5038 = vmatprep.subr.bf16.mxu0 %v4144
    %5039 = vmatpush2.bf16.msra.mxu0 %v4143
    %5040 = vmatprep.mubr.bf16.mxu0 %v3134
    %5041 = vmatmul.mubr.bf16.gmra.mxu0 %v3133
    %v5042 = vpop.f32.mrf.mxu0
    %v5043 = vadd.f32 %v2970, %v5042
    %v5044 = vpop.f32.mrf.mxu0
    %v5045 = vadd.f32 %v2974, %v5044
    %v5046 = vpop.f32.mrf.mxu0
    %v5047 = vadd.f32 %v2970, %v5046
    %v5048 = vpop.f32.mrf.mxu0
    %v5049 = vadd.f32 %v2974, %v5048
    %5050 = vmatprep.mubr.bf16.mxu0 %v3140
    %5051 = vmatmul.mubr.bf16.gmra.mxu0 %v3139
    %v5052 = vpop.f32.mrf.mxu0
    %v5053 = vadd.f32 %v2970, %v5052
    %v5054 = vpop.f32.mrf.mxu0
    %v5055 = vadd.f32 %v2974, %v5054
    %v5056 = vpop.f32.mrf.mxu0
    %v5057 = vadd.f32 %v2970, %v5056
    %v5058 = vpop.f32.mrf.mxu0
    %v5059 = vadd.f32 %v2974, %v5058
    %5060 = vmatprep.mubr.bf16.mxu0 %v3146
    %5061 = vmatmul.mubr.bf16.gmra.mxu0 %v3145
    %v5062 = vpop.f32.mrf.mxu0
    %v5063 = vadd.f32 %v2970, %v5062
    %v5064 = vpop.f32.mrf.mxu0
    %v5065 = vadd.f32 %v2974, %v5064
    %v5066 = vpop.f32.mrf.mxu0
    %v5067 = vadd.f32 %v2970, %v5066
    %v5068 = vpop.f32.mrf.mxu0
    %v5069 = vadd.f32 %v2974, %v5068
    %5070 = vmatprep.mubr.bf16.mxu0 %v3152
    %5071 = vmatmul.mubr.bf16.gmra.mxu0 %v3151
    %v5072 = vpop.f32.mrf.mxu0
    %v5073 = vadd.f32 %v2970, %v5072
    %v5074 = vpop.f32.mrf.mxu0
    %v5075 = vadd.f32 %v2974, %v5074
    %v5076 = vpop.f32.mrf.mxu0
    %v5077 = vadd.f32 %v2970, %v5076
    %v5078 = vpop.f32.mrf.mxu0
    %v5079 = vadd.f32 %v2974, %v5078
    %5080 = vmatprep.mubr.bf16.mxu0 %v3158
    %5081 = vmatmul.mubr.bf16.gmra.mxu0 %v3157
    %v5082 = vpop.f32.mrf.mxu0
    %v5083 = vadd.f32 %v2970, %v5082
    %v5084 = vpop.f32.mrf.mxu0
    %v5085 = vadd.f32 %v2974, %v5084
    %v5086 = vpop.f32.mrf.mxu0
    %v5087 = vadd.f32 %v2970, %v5086
    %v5088 = vpop.f32.mrf.mxu0
    %v5089 = vadd.f32 %v2974, %v5088
    %5090 = vmatprep.mubr.bf16.mxu0 %v3164
    %5091 = vmatmul.mubr.bf16.gmra.mxu0 %v3163
    %v5092 = vpop.f32.mrf.mxu0
    %v5093 = vadd.f32 %v2970, %v5092
    %v5094 = vpop.f32.mrf.mxu0
    %v5095 = vadd.f32 %v2974, %v5094
    %v5096 = vpop.f32.mrf.mxu0
    %v5097 = vadd.f32 %v2970, %v5096
    %v5098 = vpop.f32.mrf.mxu0
    %v5099 = vadd.f32 %v2974, %v5098
    %5100 = vmatprep.mubr.bf16.mxu0 %v3170
    %5101 = vmatmul.mubr.bf16.gmra.mxu0 %v3169
    %v5102 = vpop.f32.mrf.mxu0
    %v5103 = vadd.f32 %v2970, %v5102
    %v5104 = vpop.f32.mrf.mxu0
    %v5105 = vadd.f32 %v2974, %v5104
    %v5106 = vpop.f32.mrf.mxu0
    %v5107 = vadd.f32 %v2970, %v5106
    %v5108 = vpop.f32.mrf.mxu0
    %v5109 = vadd.f32 %v2974, %v5108
    %5110 = vmatprep.mubr.bf16.mxu0 %v3176
    %5111 = vmatmul.mubr.bf16.gmra.mxu0 %v3175
    %v5112 = vpop.f32.mrf.mxu0
    %v5113 = vadd.f32 %v2970, %v5112
    %v5114 = vpop.f32.mrf.mxu0
    %v5115 = vadd.f32 %v2974, %v5114
    %v5116 = vpop.f32.mrf.mxu0
    %v5117 = vadd.f32 %v2970, %v5116
    %v5118 = vpop.f32.mrf.mxu0
    %v5119 = vadd.f32 %v2974, %v5118
    %5120 = vdwg.mxu0
    %5121 = vmatprep.subr.bf16.mxu0 %v4234
    %5122 = vmatpush1.bf16.msra.mxu0 %v4233
    %5123 = vmatprep.subr.bf16.mxu0 %v4228
    %5124 = vmatpush1.bf16.msra.mxu0 %v4227
    %5125 = vmatprep.subr.bf16.mxu0 %v4222
    %5126 = vmatpush1.bf16.msra.mxu0 %v4221
    %5127 = vmatprep.subr.bf16.mxu0 %v4216
    %5128 = vmatpush1.bf16.msra.mxu0 %v4215
    %5129 = vmatprep.subr.bf16.mxu0 %v4210
    %5130 = vmatpush1.bf16.msra.mxu0 %v4209
    %5131 = vmatprep.subr.bf16.mxu0 %v4204
    %5132 = vmatpush1.bf16.msra.mxu0 %v4203
    %5133 = vmatprep.subr.bf16.mxu0 %v4198
    %5134 = vmatpush1.bf16.msra.mxu0 %v4197
    %5135 = vmatprep.subr.bf16.mxu0 %v4192
    %5136 = vmatpush1.bf16.msra.mxu0 %v4191
    %5137 = vmatprep.subr.bf16.mxu0 %v4282
    %5138 = vmatpush2.bf16.msra.mxu0 %v4281
    %5139 = vmatprep.subr.bf16.mxu0 %v4276
    %5140 = vmatpush2.bf16.msra.mxu0 %v4275
    %5141 = vmatprep.subr.bf16.mxu0 %v4270
    %5142 = vmatpush2.bf16.msra.mxu0 %v4269
    %5143 = vmatprep.subr.bf16.mxu0 %v4264
    %5144 = vmatpush2.bf16.msra.mxu0 %v4263
    %5145 = vmatprep.subr.bf16.mxu0 %v4258
    %5146 = vmatpush2.bf16.msra.mxu0 %v4257
    %5147 = vmatprep.subr.bf16.mxu0 %v4252
    %5148 = vmatpush2.bf16.msra.mxu0 %v4251
    %5149 = vmatprep.subr.bf16.mxu0 %v4246
    %5150 = vmatpush2.bf16.msra.mxu0 %v4245
    %5151 = vmatprep.subr.bf16.mxu0 %v4240
    %5152 = vmatpush2.bf16.msra.mxu0 %v4239
    %5153 = vmatprep.mubr.bf16.mxu0 %v3136
    %5154 = vmatmul.mubr.bf16.gmra.mxu0 %v3135
    %v5155 = vpop.f32.mrf.mxu0
    %v5156 = vadd.f32 %v5043, %v5155
    %v5157 = vpop.f32.mrf.mxu0
    %v5158 = vadd.f32 %v5045, %v5157
    %v5159 = vpop.f32.mrf.mxu0
    %v5160 = vadd.f32 %v5047, %v5159
    %v5161 = vpop.f32.mrf.mxu0
    %v5162 = vadd.f32 %v5049, %v5161
    %5163 = vmatprep.mubr.bf16.mxu0 %v3142
    %5164 = vmatmul.mubr.bf16.gmra.mxu0 %v3141
    %v5165 = vpop.f32.mrf.mxu0
    %v5166 = vadd.f32 %v5053, %v5165
    %v5167 = vpop.f32.mrf.mxu0
    %v5168 = vadd.f32 %v5055, %v5167
    %v5169 = vpop.f32.mrf.mxu0
    %v5170 = vadd.f32 %v5057, %v5169
    %v5171 = vpop.f32.mrf.mxu0
    %v5172 = vadd.f32 %v5059, %v5171
    %5173 = vmatprep.mubr.bf16.mxu0 %v3148
    %5174 = vmatmul.mubr.bf16.gmra.mxu0 %v3147
    %v5175 = vpop.f32.mrf.mxu0
    %v5176 = vadd.f32 %v5063, %v5175
    %v5177 = vpop.f32.mrf.mxu0
    %v5178 = vadd.f32 %v5065, %v5177
    %v5179 = vpop.f32.mrf.mxu0
    %v5180 = vadd.f32 %v5067, %v5179
    %v5181 = vpop.f32.mrf.mxu0
    %v5182 = vadd.f32 %v5069, %v5181
    %5183 = vmatprep.mubr.bf16.mxu0 %v3154
    %5184 = vmatmul.mubr.bf16.gmra.mxu0 %v3153
    %v5185 = vpop.f32.mrf.mxu0
    %v5186 = vadd.f32 %v5073, %v5185
    %v5187 = vpop.f32.mrf.mxu0
    %v5188 = vadd.f32 %v5075, %v5187
    %v5189 = vpop.f32.mrf.mxu0
    %v5190 = vadd.f32 %v5077, %v5189
    %v5191 = vpop.f32.mrf.mxu0
    %v5192 = vadd.f32 %v5079, %v5191
    %5193 = vmatprep.mubr.bf16.mxu0 %v3160
    %5194 = vmatmul.mubr.bf16.gmra.mxu0 %v3159
    %v5195 = vpop.f32.mrf.mxu0
    %v5196 = vadd.f32 %v5083, %v5195
    %v5197 = vpop.f32.mrf.mxu0
    %v5198 = vadd.f32 %v5085, %v5197
    %v5199 = vpop.f32.mrf.mxu0
    %v5200 = vadd.f32 %v5087, %v5199
    %v5201 = vpop.f32.mrf.mxu0
    %v5202 = vadd.f32 %v5089, %v5201
    %5203 = vmatprep.mubr.bf16.mxu0 %v3166
    %5204 = vmatmul.mubr.bf16.gmra.mxu0 %v3165
    %v5205 = vpop.f32.mrf.mxu0
    %v5206 = vadd.f32 %v5093, %v5205
    %v5207 = vpop.f32.mrf.mxu0
    %v5208 = vadd.f32 %v5095, %v5207
    %v5209 = vpop.f32.mrf.mxu0
    %v5210 = vadd.f32 %v5097, %v5209
    %v5211 = vpop.f32.mrf.mxu0
    %v5212 = vadd.f32 %v5099, %v5211
    %5213 = vmatprep.mubr.bf16.mxu0 %v3172
    %5214 = vmatmul.mubr.bf16.gmra.mxu0 %v3171
    %v5215 = vpop.f32.mrf.mxu0
    %v5216 = vadd.f32 %v5103, %v5215
    %v5217 = vpop.f32.mrf.mxu0
    %v5218 = vadd.f32 %v5105, %v5217
    %v5219 = vpop.f32.mrf.mxu0
    %v5220 = vadd.f32 %v5107, %v5219
    %v5221 = vpop.f32.mrf.mxu0
    %v5222 = vadd.f32 %v5109, %v5221
    %5223 = vmatprep.mubr.bf16.mxu0 %v3178
    %5224 = vmatmul.mubr.bf16.gmra.mxu0 %v3177
    %v5225 = vpop.f32.mrf.mxu0
    %v5226 = vadd.f32 %v5113, %v5225
    %v5227 = vpop.f32.mrf.mxu0
    %v5228 = vadd.f32 %v5115, %v5227
    %v5229 = vpop.f32.mrf.mxu0
    %v5230 = vadd.f32 %v5117, %v5229
    %v5231 = vpop.f32.mrf.mxu0
    %v5232 = vadd.f32 %v5119, %v5231
    %5233 = vdwg.mxu0
    %5234 = vmatprep.subr.bf16.mxu0 %v4330
    %5235 = vmatpush1.bf16.msra.mxu0 %v4329
    %5236 = vmatprep.subr.bf16.mxu0 %v4324
    %5237 = vmatpush1.bf16.msra.mxu0 %v4323
    %5238 = vmatprep.subr.bf16.mxu0 %v4318
    %5239 = vmatpush1.bf16.msra.mxu0 %v4317
    %5240 = vmatprep.subr.bf16.mxu0 %v4312
    %5241 = vmatpush1.bf16.msra.mxu0 %v4311
    %5242 = vmatprep.subr.bf16.mxu0 %v4306
    %5243 = vmatpush1.bf16.msra.mxu0 %v4305
    %5244 = vmatprep.subr.bf16.mxu0 %v4300
    %5245 = vmatpush1.bf16.msra.mxu0 %v4299
    %5246 = vmatprep.subr.bf16.mxu0 %v4294
    %5247 = vmatpush1.bf16.msra.mxu0 %v4293
    %5248 = vmatprep.subr.bf16.mxu0 %v4288
    %5249 = vmatpush1.bf16.msra.mxu0 %v4287
    %5250 = vmatprep.subr.bf16.mxu0 %v4378
    %5251 = vmatpush2.bf16.msra.mxu0 %v4377
    %5252 = vmatprep.subr.bf16.mxu0 %v4372
    %5253 = vmatpush2.bf16.msra.mxu0 %v4371
    %5254 = vmatprep.subr.bf16.mxu0 %v4366
    %5255 = vmatpush2.bf16.msra.mxu0 %v4365
    %5256 = vmatprep.subr.bf16.mxu0 %v4360
    %5257 = vmatpush2.bf16.msra.mxu0 %v4359
    %5258 = vmatprep.subr.bf16.mxu0 %v4354
    %5259 = vmatpush2.bf16.msra.mxu0 %v4353
    %5260 = vmatprep.subr.bf16.mxu0 %v4348
    %5261 = vmatpush2.bf16.msra.mxu0 %v4347
    %5262 = vmatprep.subr.bf16.mxu0 %v4342
    %5263 = vmatpush2.bf16.msra.mxu0 %v4341
    %5264 = vmatprep.subr.bf16.mxu0 %v4336
    %5265 = vmatpush2.bf16.msra.mxu0 %v4335
    %5266 = vmatprep.mubr.bf16.mxu0 %v3138
    %5267 = vmatmul.mubr.bf16.gmra.mxu0 %v3137
    %v5268 = vpop.f32.mrf.mxu0
    %v5269 = vadd.f32 %v5156, %v5268
    %v5270 = vpop.f32.mrf.mxu0
    %v5271 = vadd.f32 %v5158, %v5270
    %v5272 = vpop.f32.mrf.mxu0
    %v5273 = vadd.f32 %v5160, %v5272
    %v5274 = vpop.f32.mrf.mxu0
    %v5275 = vadd.f32 %v5162, %v5274
    %5276 = vmatprep.mubr.bf16.mxu0 %v3144
    %5277 = vmatmul.mubr.bf16.gmra.mxu0 %v3143
    %v5278 = vpop.f32.mrf.mxu0
    %v5279 = vadd.f32 %v5166, %v5278
    %v5280 = vpop.f32.mrf.mxu0
    %v5281 = vadd.f32 %v5168, %v5280
    %v5282 = vpop.f32.mrf.mxu0
    %v5283 = vadd.f32 %v5170, %v5282
    %v5284 = vpop.f32.mrf.mxu0
    %v5285 = vadd.f32 %v5172, %v5284
    %5286 = vmatprep.mubr.bf16.mxu0 %v3150
    %5287 = vmatmul.mubr.bf16.gmra.mxu0 %v3149
    %v5288 = vpop.f32.mrf.mxu0
    %v5289 = vadd.f32 %v5176, %v5288
    %v5290 = vpop.f32.mrf.mxu0
    %v5291 = vadd.f32 %v5178, %v5290
    %v5292 = vpop.f32.mrf.mxu0
    %v5293 = vadd.f32 %v5180, %v5292
    %v5294 = vpop.f32.mrf.mxu0
    %v5295 = vadd.f32 %v5182, %v5294
    %5296 = vmatprep.mubr.bf16.mxu0 %v3156
    %5297 = vmatmul.mubr.bf16.gmra.mxu0 %v3155
    %v5298 = vpop.f32.mrf.mxu0
    %v5299 = vadd.f32 %v5186, %v5298
    %v5300 = vpop.f32.mrf.mxu0
    %v5301 = vadd.f32 %v5188, %v5300
    %v5302 = vpop.f32.mrf.mxu0
    %v5303 = vadd.f32 %v5190, %v5302
    %v5304 = vpop.f32.mrf.mxu0
    %v5305 = vadd.f32 %v5192, %v5304
    %5306 = vmatprep.mubr.bf16.mxu0 %v3162
    %5307 = vmatmul.mubr.bf16.gmra.mxu0 %v3161
    %v5308 = vpop.f32.mrf.mxu0
    %v5309 = vadd.f32 %v5196, %v5308
    %v5310 = vpop.f32.mrf.mxu0
    %v5311 = vadd.f32 %v5198, %v5310
    %v5312 = vpop.f32.mrf.mxu0
    %v5313 = vadd.f32 %v5200, %v5312
    %v5314 = vpop.f32.mrf.mxu0
    %v5315 = vadd.f32 %v5202, %v5314
    %5316 = vmatprep.mubr.bf16.mxu0 %v3168
    %5317 = vmatmul.mubr.bf16.gmra.mxu0 %v3167
    %v5318 = vpop.f32.mrf.mxu0
    %v5319 = vadd.f32 %v5206, %v5318
    %v5320 = vpop.f32.mrf.mxu0
    %v5321 = vadd.f32 %v5208, %v5320
    %v5322 = vpop.f32.mrf.mxu0
    %v5323 = vadd.f32 %v5210, %v5322
    %v5324 = vpop.f32.mrf.mxu0
    %v5325 = vadd.f32 %v5212, %v5324
    %5326 = vmatprep.mubr.bf16.mxu0 %v3174
    %5327 = vmatmul.mubr.bf16.gmra.mxu0 %v3173
    %v5328 = vpop.f32.mrf.mxu0
    %v5329 = vadd.f32 %v5216, %v5328
    %v5330 = vpop.f32.mrf.mxu0
    %v5331 = vadd.f32 %v5218, %v5330
    %v5332 = vpop.f32.mrf.mxu0
    %v5333 = vadd.f32 %v5220, %v5332
    %v5334 = vpop.f32.mrf.mxu0
    %v5335 = vadd.f32 %v5222, %v5334
    %5336 = vmatprep.mubr.bf16.mxu0 %v3180
    %5337 = vmatmul.mubr.bf16.gmra.mxu0 %v3179
    %v5338 = vpop.f32.mrf.mxu0
    %v5339 = vadd.f32 %v5226, %v5338
    %v5340 = vpop.f32.mrf.mxu0
    %v5341 = vadd.f32 %v5228, %v5340
    %v5342 = vpop.f32.mrf.mxu0
    %v5343 = vadd.f32 %v5230, %v5342
    %v5344 = vpop.f32.mrf.mxu0
    %v5345 = vadd.f32 %v5232, %v5344
    %5346 = vdwg.mxu0
    %5347 = vmatprep.subr.bf16.mxu0 %v4140
    %5348 = vmatpush1.bf16.msra.mxu0 %v4139
    %5349 = vmatprep.subr.bf16.mxu0 %v4134
    %5350 = vmatpush1.bf16.msra.mxu0 %v4133
    %5351 = vmatprep.subr.bf16.mxu0 %v4128
    %5352 = vmatpush1.bf16.msra.mxu0 %v4127
    %5353 = vmatprep.subr.bf16.mxu0 %v4122
    %5354 = vmatpush1.bf16.msra.mxu0 %v4121
    %5355 = vmatprep.subr.bf16.mxu0 %v4116
    %5356 = vmatpush1.bf16.msra.mxu0 %v4115
    %5357 = vmatprep.subr.bf16.mxu0 %v4110
    %5358 = vmatpush1.bf16.msra.mxu0 %v4109
    %5359 = vmatprep.subr.bf16.mxu0 %v4104
    %5360 = vmatpush1.bf16.msra.mxu0 %v4103
    %5361 = vmatprep.subr.bf16.mxu0 %v4098
    %5362 = vmatpush1.bf16.msra.mxu0 %v4097
    %5363 = vmatprep.subr.bf16.mxu0 %v4188
    %5364 = vmatpush2.bf16.msra.mxu0 %v4187
    %5365 = vmatprep.subr.bf16.mxu0 %v4182
    %5366 = vmatpush2.bf16.msra.mxu0 %v4181
    %5367 = vmatprep.subr.bf16.mxu0 %v4176
    %5368 = vmatpush2.bf16.msra.mxu0 %v4175
    %5369 = vmatprep.subr.bf16.mxu0 %v4170
    %5370 = vmatpush2.bf16.msra.mxu0 %v4169
    %5371 = vmatprep.subr.bf16.mxu0 %v4164
    %5372 = vmatpush2.bf16.msra.mxu0 %v4163
    %5373 = vmatprep.subr.bf16.mxu0 %v4158
    %5374 = vmatpush2.bf16.msra.mxu0 %v4157
    %5375 = vmatprep.subr.bf16.mxu0 %v4152
    %5376 = vmatpush2.bf16.msra.mxu0 %v4151
    %5377 = vmatprep.subr.bf16.mxu0 %v4146
    %5378 = vmatpush2.bf16.msra.mxu0 %v4145
    %5379 = vmatprep.mubr.bf16.mxu0 %v3134
    %5380 = vmatmul.mubr.bf16.gmra.mxu0 %v3133
    %v5381 = vpop.f32.mrf.mxu0
    %v5382 = vadd.f32 %v2978, %v5381
    %v5383 = vpop.f32.mrf.mxu0
    %v5384 = vadd.f32 %v2982, %v5383
    %v5385 = vpop.f32.mrf.mxu0
    %v5386 = vadd.f32 %v2978, %v5385
    %v5387 = vpop.f32.mrf.mxu0
    %v5388 = vadd.f32 %v2982, %v5387
    %5389 = vmatprep.mubr.bf16.mxu0 %v3140
    %5390 = vmatmul.mubr.bf16.gmra.mxu0 %v3139
    %v5391 = vpop.f32.mrf.mxu0
    %v5392 = vadd.f32 %v2978, %v5391
    %v5393 = vpop.f32.mrf.mxu0
    %v5394 = vadd.f32 %v2982, %v5393
    %v5395 = vpop.f32.mrf.mxu0
    %v5396 = vadd.f32 %v2978, %v5395
    %v5397 = vpop.f32.mrf.mxu0
    %v5398 = vadd.f32 %v2982, %v5397
    %5399 = vmatprep.mubr.bf16.mxu0 %v3146
    %5400 = vmatmul.mubr.bf16.gmra.mxu0 %v3145
    %v5401 = vpop.f32.mrf.mxu0
    %v5402 = vadd.f32 %v2978, %v5401
    %v5403 = vpop.f32.mrf.mxu0
    %v5404 = vadd.f32 %v2982, %v5403
    %v5405 = vpop.f32.mrf.mxu0
    %v5406 = vadd.f32 %v2978, %v5405
    %v5407 = vpop.f32.mrf.mxu0
    %v5408 = vadd.f32 %v2982, %v5407
    %5409 = vmatprep.mubr.bf16.mxu0 %v3152
    %5410 = vmatmul.mubr.bf16.gmra.mxu0 %v3151
    %v5411 = vpop.f32.mrf.mxu0
    %v5412 = vadd.f32 %v2978, %v5411
    %v5413 = vpop.f32.mrf.mxu0
    %v5414 = vadd.f32 %v2982, %v5413
    %v5415 = vpop.f32.mrf.mxu0
    %v5416 = vadd.f32 %v2978, %v5415
    %v5417 = vpop.f32.mrf.mxu0
    %v5418 = vadd.f32 %v2982, %v5417
    %5419 = vmatprep.mubr.bf16.mxu0 %v3158
    %5420 = vmatmul.mubr.bf16.gmra.mxu0 %v3157
    %v5421 = vpop.f32.mrf.mxu0
    %v5422 = vadd.f32 %v2978, %v5421
    %v5423 = vpop.f32.mrf.mxu0
    %v5424 = vadd.f32 %v2982, %v5423
    %v5425 = vpop.f32.mrf.mxu0
    %v5426 = vadd.f32 %v2978, %v5425
    %v5427 = vpop.f32.mrf.mxu0
    %v5428 = vadd.f32 %v2982, %v5427
    %5429 = vmatprep.mubr.bf16.mxu0 %v3164
    %5430 = vmatmul.mubr.bf16.gmra.mxu0 %v3163
    %v5431 = vpop.f32.mrf.mxu0
    %v5432 = vadd.f32 %v2978, %v5431
    %v5433 = vpop.f32.mrf.mxu0
    %v5434 = vadd.f32 %v2982, %v5433
    %v5435 = vpop.f32.mrf.mxu0
    %v5436 = vadd.f32 %v2978, %v5435
    %v5437 = vpop.f32.mrf.mxu0
    %v5438 = vadd.f32 %v2982, %v5437
    %5439 = vmatprep.mubr.bf16.mxu0 %v3170
    %5440 = vmatmul.mubr.bf16.gmra.mxu0 %v3169
    %v5441 = vpop.f32.mrf.mxu0
    %v5442 = vadd.f32 %v2978, %v5441
    %v5443 = vpop.f32.mrf.mxu0
    %v5444 = vadd.f32 %v2982, %v5443
    %v5445 = vpop.f32.mrf.mxu0
    %v5446 = vadd.f32 %v2978, %v5445
    %v5447 = vpop.f32.mrf.mxu0
    %v5448 = vadd.f32 %v2982, %v5447
    %5449 = vmatprep.mubr.bf16.mxu0 %v3176
    %5450 = vmatmul.mubr.bf16.gmra.mxu0 %v3175
    %v5451 = vpop.f32.mrf.mxu0
    %v5452 = vadd.f32 %v2978, %v5451
    %v5453 = vpop.f32.mrf.mxu0
    %v5454 = vadd.f32 %v2982, %v5453
    %v5455 = vpop.f32.mrf.mxu0
    %v5456 = vadd.f32 %v2978, %v5455
    %v5457 = vpop.f32.mrf.mxu0
    %v5458 = vadd.f32 %v2982, %v5457
    %5459 = vdwg.mxu0
    %5460 = vmatprep.subr.bf16.mxu0 %v4236
    %5461 = vmatpush1.bf16.msra.mxu0 %v4235
    %5462 = vmatprep.subr.bf16.mxu0 %v4230
    %5463 = vmatpush1.bf16.msra.mxu0 %v4229
    %5464 = vmatprep.subr.bf16.mxu0 %v4224
    %5465 = vmatpush1.bf16.msra.mxu0 %v4223
    %5466 = vmatprep.subr.bf16.mxu0 %v4218
    %5467 = vmatpush1.bf16.msra.mxu0 %v4217
    %5468 = vmatprep.subr.bf16.mxu0 %v4212
    %5469 = vmatpush1.bf16.msra.mxu0 %v4211
    %5470 = vmatprep.subr.bf16.mxu0 %v4206
    %5471 = vmatpush1.bf16.msra.mxu0 %v4205
    %5472 = vmatprep.subr.bf16.mxu0 %v4200
    %5473 = vmatpush1.bf16.msra.mxu0 %v4199
    %5474 = vmatprep.subr.bf16.mxu0 %v4194
    %5475 = vmatpush1.bf16.msra.mxu0 %v4193
    %5476 = vmatprep.subr.bf16.mxu0 %v4284
    %5477 = vmatpush2.bf16.msra.mxu0 %v4283
    %5478 = vmatprep.subr.bf16.mxu0 %v4278
    %5479 = vmatpush2.bf16.msra.mxu0 %v4277
    %5480 = vmatprep.subr.bf16.mxu0 %v4272
    %5481 = vmatpush2.bf16.msra.mxu0 %v4271
    %5482 = vmatprep.subr.bf16.mxu0 %v4266
    %5483 = vmatpush2.bf16.msra.mxu0 %v4265
    %5484 = vmatprep.subr.bf16.mxu0 %v4260
    %5485 = vmatpush2.bf16.msra.mxu0 %v4259
    %5486 = vmatprep.subr.bf16.mxu0 %v4254
    %5487 = vmatpush2.bf16.msra.mxu0 %v4253
    %5488 = vmatprep.subr.bf16.mxu0 %v4248
    %5489 = vmatpush2.bf16.msra.mxu0 %v4247
    %5490 = vmatprep.subr.bf16.mxu0 %v4242
    %5491 = vmatpush2.bf16.msra.mxu0 %v4241
    %5492 = vmatprep.mubr.bf16.mxu0 %v3136
    %5493 = vmatmul.mubr.bf16.gmra.mxu0 %v3135
    %v5494 = vpop.f32.mrf.mxu0
    %v5495 = vadd.f32 %v5382, %v5494
    %v5496 = vpop.f32.mrf.mxu0
    %v5497 = vadd.f32 %v5384, %v5496
    %v5498 = vpop.f32.mrf.mxu0
    %v5499 = vadd.f32 %v5386, %v5498
    %v5500 = vpop.f32.mrf.mxu0
    %v5501 = vadd.f32 %v5388, %v5500
    %5502 = vmatprep.mubr.bf16.mxu0 %v3142
    %5503 = vmatmul.mubr.bf16.gmra.mxu0 %v3141
    %v5504 = vpop.f32.mrf.mxu0
    %v5505 = vadd.f32 %v5392, %v5504
    %v5506 = vpop.f32.mrf.mxu0
    %v5507 = vadd.f32 %v5394, %v5506
    %v5508 = vpop.f32.mrf.mxu0
    %v5509 = vadd.f32 %v5396, %v5508
    %v5510 = vpop.f32.mrf.mxu0
    %v5511 = vadd.f32 %v5398, %v5510
    %5512 = vmatprep.mubr.bf16.mxu0 %v3148
    %5513 = vmatmul.mubr.bf16.gmra.mxu0 %v3147
    %v5514 = vpop.f32.mrf.mxu0
    %v5515 = vadd.f32 %v5402, %v5514
    %v5516 = vpop.f32.mrf.mxu0
    %v5517 = vadd.f32 %v5404, %v5516
    %v5518 = vpop.f32.mrf.mxu0
    %v5519 = vadd.f32 %v5406, %v5518
    %v5520 = vpop.f32.mrf.mxu0
    %v5521 = vadd.f32 %v5408, %v5520
    %5522 = vmatprep.mubr.bf16.mxu0 %v3154
    %5523 = vmatmul.mubr.bf16.gmra.mxu0 %v3153
    %v5524 = vpop.f32.mrf.mxu0
    %v5525 = vadd.f32 %v5412, %v5524
    %v5526 = vpop.f32.mrf.mxu0
    %v5527 = vadd.f32 %v5414, %v5526
    %v5528 = vpop.f32.mrf.mxu0
    %v5529 = vadd.f32 %v5416, %v5528
    %v5530 = vpop.f32.mrf.mxu0
    %v5531 = vadd.f32 %v5418, %v5530
    %5532 = vmatprep.mubr.bf16.mxu0 %v3160
    %5533 = vmatmul.mubr.bf16.gmra.mxu0 %v3159
    %v5534 = vpop.f32.mrf.mxu0
    %v5535 = vadd.f32 %v5422, %v5534
    %v5536 = vpop.f32.mrf.mxu0
    %v5537 = vadd.f32 %v5424, %v5536
    %v5538 = vpop.f32.mrf.mxu0
    %v5539 = vadd.f32 %v5426, %v5538
    %v5540 = vpop.f32.mrf.mxu0
    %v5541 = vadd.f32 %v5428, %v5540
    %5542 = vmatprep.mubr.bf16.mxu0 %v3166
    %5543 = vmatmul.mubr.bf16.gmra.mxu0 %v3165
    %v5544 = vpop.f32.mrf.mxu0
    %v5545 = vadd.f32 %v5432, %v5544
    %v5546 = vpop.f32.mrf.mxu0
    %v5547 = vadd.f32 %v5434, %v5546
    %v5548 = vpop.f32.mrf.mxu0
    %v5549 = vadd.f32 %v5436, %v5548
    %v5550 = vpop.f32.mrf.mxu0
    %v5551 = vadd.f32 %v5438, %v5550
    %5552 = vmatprep.mubr.bf16.mxu0 %v3172
    %5553 = vmatmul.mubr.bf16.gmra.mxu0 %v3171
    %v5554 = vpop.f32.mrf.mxu0
    %v5555 = vadd.f32 %v5442, %v5554
    %v5556 = vpop.f32.mrf.mxu0
    %v5557 = vadd.f32 %v5444, %v5556
    %v5558 = vpop.f32.mrf.mxu0
    %v5559 = vadd.f32 %v5446, %v5558
    %v5560 = vpop.f32.mrf.mxu0
    %v5561 = vadd.f32 %v5448, %v5560
    %5562 = vmatprep.mubr.bf16.mxu0 %v3178
    %5563 = vmatmul.mubr.bf16.gmra.mxu0 %v3177
    %v5564 = vpop.f32.mrf.mxu0
    %v5565 = vadd.f32 %v5452, %v5564
    %v5566 = vpop.f32.mrf.mxu0
    %v5567 = vadd.f32 %v5454, %v5566
    %v5568 = vpop.f32.mrf.mxu0
    %v5569 = vadd.f32 %v5456, %v5568
    %v5570 = vpop.f32.mrf.mxu0
    %v5571 = vadd.f32 %v5458, %v5570
    %5572 = vdwg.mxu0
    %5573 = vmatprep.subr.bf16.mxu0 %v4332
    %5574 = vmatpush1.bf16.msra.mxu0 %v4331
    %5575 = vmatprep.subr.bf16.mxu0 %v4326
    %5576 = vmatpush1.bf16.msra.mxu0 %v4325
    %5577 = vmatprep.subr.bf16.mxu0 %v4320
    %5578 = vmatpush1.bf16.msra.mxu0 %v4319
    %5579 = vmatprep.subr.bf16.mxu0 %v4314
    %5580 = vmatpush1.bf16.msra.mxu0 %v4313
    %5581 = vmatprep.subr.bf16.mxu0 %v4308
    %5582 = vmatpush1.bf16.msra.mxu0 %v4307
    %5583 = vmatprep.subr.bf16.mxu0 %v4302
    %5584 = vmatpush1.bf16.msra.mxu0 %v4301
    %5585 = vmatprep.subr.bf16.mxu0 %v4296
    %5586 = vmatpush1.bf16.msra.mxu0 %v4295
    %5587 = vmatprep.subr.bf16.mxu0 %v4290
    %5588 = vmatpush1.bf16.msra.mxu0 %v4289
    %5589 = vmatprep.subr.bf16.mxu0 %v4380
    %5590 = vmatpush2.bf16.msra.mxu0 %v4379
    %5591 = vmatprep.subr.bf16.mxu0 %v4374
    %5592 = vmatpush2.bf16.msra.mxu0 %v4373
    %5593 = vmatprep.subr.bf16.mxu0 %v4368
    %5594 = vmatpush2.bf16.msra.mxu0 %v4367
    %5595 = vmatprep.subr.bf16.mxu0 %v4362
    %5596 = vmatpush2.bf16.msra.mxu0 %v4361
    %5597 = vmatprep.subr.bf16.mxu0 %v4356
    %5598 = vmatpush2.bf16.msra.mxu0 %v4355
    %5599 = vmatprep.subr.bf16.mxu0 %v4350
    %5600 = vmatpush2.bf16.msra.mxu0 %v4349
    %5601 = vmatprep.subr.bf16.mxu0 %v4344
    %5602 = vmatpush2.bf16.msra.mxu0 %v4343
    %5603 = vmatprep.subr.bf16.mxu0 %v4338
    %5604 = vmatpush2.bf16.msra.mxu0 %v4337
    %5605 = vmatprep.mubr.bf16.mxu0 %v3138
    %5606 = vmatmul.mubr.bf16.gmra.mxu0 %v3137
    %v5607 = vpop.f32.mrf.mxu0
    %v5608 = vadd.f32 %v5495, %v5607
    %v5609 = vpop.f32.mrf.mxu0
    %v5610 = vadd.f32 %v5497, %v5609
    %v5611 = vpop.f32.mrf.mxu0
    %v5612 = vadd.f32 %v5499, %v5611
    %v5613 = vpop.f32.mrf.mxu0
    %v5614 = vadd.f32 %v5501, %v5613
    %5615 = vmatprep.mubr.bf16.mxu0 %v3144
    %5616 = vmatmul.mubr.bf16.gmra.mxu0 %v3143
    %v5617 = vpop.f32.mrf.mxu0
    %v5618 = vadd.f32 %v5505, %v5617
    %v5619 = vpop.f32.mrf.mxu0
    %v5620 = vadd.f32 %v5507, %v5619
    %v5621 = vpop.f32.mrf.mxu0
    %v5622 = vadd.f32 %v5509, %v5621
    %v5623 = vpop.f32.mrf.mxu0
    %v5624 = vadd.f32 %v5511, %v5623
    %5625 = vmatprep.mubr.bf16.mxu0 %v3150
    %5626 = vmatmul.mubr.bf16.gmra.mxu0 %v3149
    %v5627 = vpop.f32.mrf.mxu0
    %v5628 = vadd.f32 %v5515, %v5627
    %v5629 = vpop.f32.mrf.mxu0
    %v5630 = vadd.f32 %v5517, %v5629
    %v5631 = vpop.f32.mrf.mxu0
    %v5632 = vadd.f32 %v5519, %v5631
    %v5633 = vpop.f32.mrf.mxu0
    %v5634 = vadd.f32 %v5521, %v5633
    %5635 = vmatprep.mubr.bf16.mxu0 %v3156
    %5636 = vmatmul.mubr.bf16.gmra.mxu0 %v3155
    %v5637 = vpop.f32.mrf.mxu0
    %v5638 = vadd.f32 %v5525, %v5637
    %v5639 = vpop.f32.mrf.mxu0
    %v5640 = vadd.f32 %v5527, %v5639
    %v5641 = vpop.f32.mrf.mxu0
    %v5642 = vadd.f32 %v5529, %v5641
    %v5643 = vpop.f32.mrf.mxu0
    %v5644 = vadd.f32 %v5531, %v5643
    %5645 = vmatprep.mubr.bf16.mxu0 %v3162
    %5646 = vmatmul.mubr.bf16.gmra.mxu0 %v3161
    %v5647 = vpop.f32.mrf.mxu0
    %v5648 = vadd.f32 %v5535, %v5647
    %v5649 = vpop.f32.mrf.mxu0
    %v5650 = vadd.f32 %v5537, %v5649
    %v5651 = vpop.f32.mrf.mxu0
    %v5652 = vadd.f32 %v5539, %v5651
    %v5653 = vpop.f32.mrf.mxu0
    %v5654 = vadd.f32 %v5541, %v5653
    %5655 = vmatprep.mubr.bf16.mxu0 %v3168
    %5656 = vmatmul.mubr.bf16.gmra.mxu0 %v3167
    %v5657 = vpop.f32.mrf.mxu0
    %v5658 = vadd.f32 %v5545, %v5657
    %v5659 = vpop.f32.mrf.mxu0
    %v5660 = vadd.f32 %v5547, %v5659
    %v5661 = vpop.f32.mrf.mxu0
    %v5662 = vadd.f32 %v5549, %v5661
    %v5663 = vpop.f32.mrf.mxu0
    %v5664 = vadd.f32 %v5551, %v5663
    %5665 = vmatprep.mubr.bf16.mxu0 %v3174
    %5666 = vmatmul.mubr.bf16.gmra.mxu0 %v3173
    %v5667 = vpop.f32.mrf.mxu0
    %v5668 = vadd.f32 %v5555, %v5667
    %v5669 = vpop.f32.mrf.mxu0
    %v5670 = vadd.f32 %v5557, %v5669
    %v5671 = vpop.f32.mrf.mxu0
    %v5672 = vadd.f32 %v5559, %v5671
    %v5673 = vpop.f32.mrf.mxu0
    %v5674 = vadd.f32 %v5561, %v5673
    %5675 = vmatprep.mubr.bf16.mxu0 %v3180
    %5676 = vmatmul.mubr.bf16.gmra.mxu0 %v3179
    %v5677 = vpop.f32.mrf.mxu0
    %v5678 = vadd.f32 %v5565, %v5677
    %v5679 = vpop.f32.mrf.mxu0
    %v5680 = vadd.f32 %v5567, %v5679
    %v5681 = vpop.f32.mrf.mxu0
    %v5682 = vadd.f32 %v5569, %v5681
    %v5683 = vpop.f32.mrf.mxu0
    %v5684 = vadd.f32 %v5571, %v5683
    %5685 = vdwg.mxu0
    %vm5686 = vcmp.ge.f32.partialorder %v4930, 0.0
    %vm5687 = vcmp.ge.f32.partialorder %v4932, 0.0
    %vm5688 = vcmp.ge.f32.partialorder %v5269, 0.0
    %vm5689 = vcmp.ge.f32.partialorder %v5271, 0.0
    %vm5690 = vcmp.ge.f32.partialorder %v5608, 0.0
    %vm5691 = vcmp.ge.f32.partialorder %v5610, 0.0
    %vm5692 = vcmp.ge.f32.partialorder %v4934, 0.0
    %vm5693 = vcmp.ge.f32.partialorder %v4936, 0.0
    %vm5694 = vcmp.ge.f32.partialorder %v5273, 0.0
    %vm5695 = vcmp.ge.f32.partialorder %v5275, 0.0
    %vm5696 = vcmp.ge.f32.partialorder %v5612, 0.0
    %vm5697 = vcmp.ge.f32.partialorder %v5614, 0.0
    %vm5698 = vcmp.ge.f32.partialorder %v4940, 0.0
    %vm5699 = vcmp.ge.f32.partialorder %v4942, 0.0
    %vm5700 = vcmp.ge.f32.partialorder %v5279, 0.0
    %vm5701 = vcmp.ge.f32.partialorder %v5281, 0.0
    %vm5702 = vcmp.ge.f32.partialorder %v5618, 0.0
    %vm5703 = vcmp.ge.f32.partialorder %v5620, 0.0
    %vm5704 = vcmp.ge.f32.partialorder %v4944, 0.0
    %vm5705 = vcmp.ge.f32.partialorder %v4946, 0.0
    %vm5706 = vcmp.ge.f32.partialorder %v5283, 0.0
    %vm5707 = vcmp.ge.f32.partialorder %v5285, 0.0
    %vm5708 = vcmp.ge.f32.partialorder %v5622, 0.0
    %vm5709 = vcmp.ge.f32.partialorder %v5624, 0.0
    %vm5710 = vcmp.ge.f32.partialorder %v4950, 0.0
    %vm5711 = vcmp.ge.f32.partialorder %v4952, 0.0
    %vm5712 = vcmp.ge.f32.partialorder %v5289, 0.0
    %vm5713 = vcmp.ge.f32.partialorder %v5291, 0.0
    %vm5714 = vcmp.ge.f32.partialorder %v5628, 0.0
    %vm5715 = vcmp.ge.f32.partialorder %v5630, 0.0
    %vm5716 = vcmp.ge.f32.partialorder %v4954, 0.0
    %vm5717 = vcmp.ge.f32.partialorder %v4956, 0.0
    %vm5718 = vcmp.ge.f32.partialorder %v5293, 0.0
    %vm5719 = vcmp.ge.f32.partialorder %v5295, 0.0
    %vm5720 = vcmp.ge.f32.partialorder %v5632, 0.0
    %vm5721 = vcmp.ge.f32.partialorder %v5634, 0.0
    %vm5722 = vcmp.ge.f32.partialorder %v4960, 0.0
    %vm5723 = vcmp.ge.f32.partialorder %v4962, 0.0
    %vm5724 = vcmp.ge.f32.partialorder %v5299, 0.0
    %vm5725 = vcmp.ge.f32.partialorder %v5301, 0.0
    %vm5726 = vcmp.ge.f32.partialorder %v5638, 0.0
    %vm5727 = vcmp.ge.f32.partialorder %v5640, 0.0
    %vm5728 = vcmp.ge.f32.partialorder %v4964, 0.0
    %vm5729 = vcmp.ge.f32.partialorder %v4966, 0.0
    %vm5730 = vcmp.ge.f32.partialorder %v5303, 0.0
    %vm5731 = vcmp.ge.f32.partialorder %v5305, 0.0
    %vm5732 = vcmp.ge.f32.partialorder %v5642, 0.0
    %vm5733 = vcmp.ge.f32.partialorder %v5644, 0.0
    %vm5734 = vcmp.ge.f32.partialorder %v4970, 0.0
    %vm5735 = vcmp.ge.f32.partialorder %v4972, 0.0
    %vm5736 = vcmp.ge.f32.partialorder %v5309, 0.0
    %vm5737 = vcmp.ge.f32.partialorder %v5311, 0.0
    %vm5738 = vcmp.ge.f32.partialorder %v5648, 0.0
    %vm5739 = vcmp.ge.f32.partialorder %v5650, 0.0
    %vm5740 = vcmp.ge.f32.partialorder %v4974, 0.0
    %vm5741 = vcmp.ge.f32.partialorder %v4976, 0.0
    %vm5742 = vcmp.ge.f32.partialorder %v5313, 0.0
    %vm5743 = vcmp.ge.f32.partialorder %v5315, 0.0
    %vm5744 = vcmp.ge.f32.partialorder %v5652, 0.0
    %vm5745 = vcmp.ge.f32.partialorder %v5654, 0.0
    %vm5746 = vcmp.ge.f32.partialorder %v4980, 0.0
    %vm5747 = vcmp.ge.f32.partialorder %v4982, 0.0
    %vm5748 = vcmp.ge.f32.partialorder %v5319, 0.0
    %vm5749 = vcmp.ge.f32.partialorder %v5321, 0.0
    %vm5750 = vcmp.ge.f32.partialorder %v5658, 0.0
    %vm5751 = vcmp.ge.f32.partialorder %v5660, 0.0
    %vm5752 = vcmp.ge.f32.partialorder %v4984, 0.0
    %vm5753 = vcmp.ge.f32.partialorder %v4986, 0.0
    %vm5754 = vcmp.ge.f32.partialorder %v5323, 0.0
    %vm5755 = vcmp.ge.f32.partialorder %v5325, 0.0
    %vm5756 = vcmp.ge.f32.partialorder %v5662, 0.0
    %vm5757 = vcmp.ge.f32.partialorder %v5664, 0.0
    %vm5758 = vcmp.ge.f32.partialorder %v4990, 0.0
    %vm5759 = vcmp.ge.f32.partialorder %v4992, 0.0
    %vm5760 = vcmp.ge.f32.partialorder %v5329, 0.0
    %vm5761 = vcmp.ge.f32.partialorder %v5331, 0.0
    %vm5762 = vcmp.ge.f32.partialorder %v5668, 0.0
    %vm5763 = vcmp.ge.f32.partialorder %v5670, 0.0
    %vm5764 = vcmp.ge.f32.partialorder %v4994, 0.0
    %vm5765 = vcmp.ge.f32.partialorder %v4996, 0.0
    %vm5766 = vcmp.ge.f32.partialorder %v5333, 0.0
    %vm5767 = vcmp.ge.f32.partialorder %v5335, 0.0
    %vm5768 = vcmp.ge.f32.partialorder %v5672, 0.0
    %vm5769 = vcmp.ge.f32.partialorder %v5674, 0.0
    %vm5770 = vcmp.ge.f32.partialorder %v5000, 0.0
    %vm5771 = vcmp.ge.f32.partialorder %v5002, 0.0
    %vm5772 = vcmp.ge.f32.partialorder %v5339, 0.0
    %vm5773 = vcmp.ge.f32.partialorder %v5341, 0.0
    %vm5774 = vcmp.ge.f32.partialorder %v5678, 0.0
    %vm5775 = vcmp.ge.f32.partialorder %v5680, 0.0
    %vm5776 = vcmp.ge.f32.partialorder %v5004, 0.0
    %vm5777 = vcmp.ge.f32.partialorder %v5006, 0.0
    %vm5778 = vcmp.ge.f32.partialorder %v5343, 0.0
    %vm5779 = vcmp.ge.f32.partialorder %v5345, 0.0
    %vm5780 = vcmp.ge.f32.partialorder %v5682, 0.0
    %vm5781 = vcmp.ge.f32.partialorder %v5684, 0.0
    %v5782 = vmul.f32 %v4930, 0.01
    %v5783 = vmul.f32 %v4932, 0.01
    %v5784 = vmul.f32 %v5269, 0.01
    %v5785 = vmul.f32 %v5271, 0.01
    %v5786 = vmul.f32 %v5608, 0.01
    %v5787 = vmul.f32 %v5610, 0.01
    %v5788 = vmul.f32 %v4934, 0.01
    %v5789 = vmul.f32 %v4936, 0.01
    %v5790 = vmul.f32 %v5273, 0.01
    %v5791 = vmul.f32 %v5275, 0.01
    %v5792 = vmul.f32 %v5612, 0.01
    %v5793 = vmul.f32 %v5614, 0.01
    %v5794 = vmul.f32 %v4940, 0.01
    %v5795 = vmul.f32 %v4942, 0.01
    %v5796 = vmul.f32 %v5279, 0.01
    %v5797 = vmul.f32 %v5281, 0.01
    %v5798 = vmul.f32 %v5618, 0.01
    %v5799 = vmul.f32 %v5620, 0.01
    %v5800 = vmul.f32 %v4944, 0.01
    %v5801 = vmul.f32 %v4946, 0.01
    %v5802 = vmul.f32 %v5283, 0.01
    %v5803 = vmul.f32 %v5285, 0.01
    %v5804 = vmul.f32 %v5622, 0.01
    %v5805 = vmul.f32 %v5624, 0.01
    %v5806 = vmul.f32 %v4950, 0.01
    %v5807 = vmul.f32 %v4952, 0.01
    %v5808 = vmul.f32 %v5289, 0.01
    %v5809 = vmul.f32 %v5291, 0.01
    %v5810 = vmul.f32 %v5628, 0.01
    %v5811 = vmul.f32 %v5630, 0.01
    %v5812 = vmul.f32 %v4954, 0.01
    %v5813 = vmul.f32 %v4956, 0.01
    %v5814 = vmul.f32 %v5293, 0.01
    %v5815 = vmul.f32 %v5295, 0.01
    %v5816 = vmul.f32 %v5632, 0.01
    %v5817 = vmul.f32 %v5634, 0.01
    %v5818 = vmul.f32 %v4960, 0.01
    %v5819 = vmul.f32 %v4962, 0.01
    %v5820 = vmul.f32 %v5299, 0.01
    %v5821 = vmul.f32 %v5301, 0.01
    %v5822 = vmul.f32 %v5638, 0.01
    %v5823 = vmul.f32 %v5640, 0.01
    %v5824 = vmul.f32 %v4964, 0.01
    %v5825 = vmul.f32 %v4966, 0.01
    %v5826 = vmul.f32 %v5303, 0.01
    %v5827 = vmul.f32 %v5305, 0.01
    %v5828 = vmul.f32 %v5642, 0.01
    %v5829 = vmul.f32 %v5644, 0.01
    %v5830 = vmul.f32 %v4970, 0.01
    %v5831 = vmul.f32 %v4972, 0.01
    %v5832 = vmul.f32 %v5309, 0.01
    %v5833 = vmul.f32 %v5311, 0.01
    %v5834 = vmul.f32 %v5648, 0.01
    %v5835 = vmul.f32 %v5650, 0.01
    %v5836 = vmul.f32 %v4974, 0.01
    %v5837 = vmul.f32 %v4976, 0.01
    %v5838 = vmul.f32 %v5313, 0.01
    %v5839 = vmul.f32 %v5315, 0.01
    %v5840 = vmul.f32 %v5652, 0.01
    %v5841 = vmul.f32 %v5654, 0.01
    %v5842 = vmul.f32 %v4980, 0.01
    %v5843 = vmul.f32 %v4982, 0.01
    %v5844 = vmul.f32 %v5319, 0.01
    %v5845 = vmul.f32 %v5321, 0.01
    %v5846 = vmul.f32 %v5658, 0.01
    %v5847 = vmul.f32 %v5660, 0.01
    %v5848 = vmul.f32 %v4984, 0.01
    %v5849 = vmul.f32 %v4986, 0.01
    %v5850 = vmul.f32 %v5323, 0.01
    %v5851 = vmul.f32 %v5325, 0.01
    %v5852 = vmul.f32 %v5662, 0.01
    %v5853 = vmul.f32 %v5664, 0.01
    %v5854 = vmul.f32 %v4990, 0.01
    %v5855 = vmul.f32 %v4992, 0.01
    %v5856 = vmul.f32 %v5329, 0.01
    %v5857 = vmul.f32 %v5331, 0.01
    %v5858 = vmul.f32 %v5668, 0.01
    %v5859 = vmul.f32 %v5670, 0.01
    %v5860 = vmul.f32 %v4994, 0.01
    %v5861 = vmul.f32 %v4996, 0.01
    %v5862 = vmul.f32 %v5333, 0.01
    %v5863 = vmul.f32 %v5335, 0.01
    %v5864 = vmul.f32 %v5672, 0.01
    %v5865 = vmul.f32 %v5674, 0.01
    %v5866 = vmul.f32 %v5000, 0.01
    %v5867 = vmul.f32 %v5002, 0.01
    %v5868 = vmul.f32 %v5339, 0.01
    %v5869 = vmul.f32 %v5341, 0.01
    %v5870 = vmul.f32 %v5678, 0.01
    %v5871 = vmul.f32 %v5680, 0.01
    %v5872 = vmul.f32 %v5004, 0.01
    %v5873 = vmul.f32 %v5006, 0.01
    %v5874 = vmul.f32 %v5343, 0.01
    %v5875 = vmul.f32 %v5345, 0.01
    %v5876 = vmul.f32 %v5682, 0.01
    %v5877 = vmul.f32 %v5684, 0.01
    %v5878 = vsel %vm5686, %v4930, %v5782
    %v5879 = vsel %vm5687, %v4932, %v5783
    %v5880 = vsel %vm5688, %v5269, %v5784
    %v5881 = vsel %vm5689, %v5271, %v5785
    %v5882 = vsel %vm5690, %v5608, %v5786
    %v5883 = vsel %vm5691, %v5610, %v5787
    %v5884 = vsel %vm5692, %v4934, %v5788
    %v5885 = vsel %vm5693, %v4936, %v5789
    %v5886 = vsel %vm5694, %v5273, %v5790
    %v5887 = vsel %vm5695, %v5275, %v5791
    %v5888 = vsel %vm5696, %v5612, %v5792
    %v5889 = vsel %vm5697, %v5614, %v5793
    %v5890 = vsel %vm5698, %v4940, %v5794
    %v5891 = vsel %vm5699, %v4942, %v5795
    %v5892 = vsel %vm5700, %v5279, %v5796
    %v5893 = vsel %vm5701, %v5281, %v5797
    %v5894 = vsel %vm5702, %v5618, %v5798
    %v5895 = vsel %vm5703, %v5620, %v5799
    %v5896 = vsel %vm5704, %v4944, %v5800
    %v5897 = vsel %vm5705, %v4946, %v5801
    %v5898 = vsel %vm5706, %v5283, %v5802
    %v5899 = vsel %vm5707, %v5285, %v5803
    %v5900 = vsel %vm5708, %v5622, %v5804
    %v5901 = vsel %vm5709, %v5624, %v5805
    %v5902 = vsel %vm5710, %v4950, %v5806
    %v5903 = vsel %vm5711, %v4952, %v5807
    %v5904 = vsel %vm5712, %v5289, %v5808
    %v5905 = vsel %vm5713, %v5291, %v5809
    %v5906 = vsel %vm5714, %v5628, %v5810
    %v5907 = vsel %vm5715, %v5630, %v5811
    %v5908 = vsel %vm5716, %v4954, %v5812
    %v5909 = vsel %vm5717, %v4956, %v5813
    %v5910 = vsel %vm5718, %v5293, %v5814
    %v5911 = vsel %vm5719, %v5295, %v5815
    %v5912 = vsel %vm5720, %v5632, %v5816
    %v5913 = vsel %vm5721, %v5634, %v5817
    %v5914 = vsel %vm5722, %v4960, %v5818
    %v5915 = vsel %vm5723, %v4962, %v5819
    %v5916 = vsel %vm5724, %v5299, %v5820
    %v5917 = vsel %vm5725, %v5301, %v5821
    %v5918 = vsel %vm5726, %v5638, %v5822
    %v5919 = vsel %vm5727, %v5640, %v5823
    %v5920 = vsel %vm5728, %v4964, %v5824
    %v5921 = vsel %vm5729, %v4966, %v5825
    %v5922 = vsel %vm5730, %v5303, %v5826
    %v5923 = vsel %vm5731, %v5305, %v5827
    %v5924 = vsel %vm5732, %v5642, %v5828
    %v5925 = vsel %vm5733, %v5644, %v5829
    %v5926 = vsel %vm5734, %v4970, %v5830
    %v5927 = vsel %vm5735, %v4972, %v5831
    %v5928 = vsel %vm5736, %v5309, %v5832
    %v5929 = vsel %vm5737, %v5311, %v5833
    %v5930 = vsel %vm5738, %v5648, %v5834
    %v5931 = vsel %vm5739, %v5650, %v5835
    %v5932 = vsel %vm5740, %v4974, %v5836
    %v5933 = vsel %vm5741, %v4976, %v5837
    %v5934 = vsel %vm5742, %v5313, %v5838
    %v5935 = vsel %vm5743, %v5315, %v5839
    %v5936 = vsel %vm5744, %v5652, %v5840
    %v5937 = vsel %vm5745, %v5654, %v5841
    %v5938 = vsel %vm5746, %v4980, %v5842
    %v5939 = vsel %vm5747, %v4982, %v5843
    %v5940 = vsel %vm5748, %v5319, %v5844
    %v5941 = vsel %vm5749, %v5321, %v5845
    %v5942 = vsel %vm5750, %v5658, %v5846
    %v5943 = vsel %vm5751, %v5660, %v5847
    %v5944 = vsel %vm5752, %v4984, %v5848
    %v5945 = vsel %vm5753, %v4986, %v5849
    %v5946 = vsel %vm5754, %v5323, %v5850
    %v5947 = vsel %vm5755, %v5325, %v5851
    %v5948 = vsel %vm5756, %v5662, %v5852
    %v5949 = vsel %vm5757, %v5664, %v5853
    %v5950 = vsel %vm5758, %v4990, %v5854
    %v5951 = vsel %vm5759, %v4992, %v5855
    %v5952 = vsel %vm5760, %v5329, %v5856
    %v5953 = vsel %vm5761, %v5331, %v5857
    %v5954 = vsel %vm5762, %v5668, %v5858
    %v5955 = vsel %vm5763, %v5670, %v5859
    %v5956 = vsel %vm5764, %v4994, %v5860
    %v5957 = vsel %vm5765, %v4996, %v5861
    %v5958 = vsel %vm5766, %v5333, %v5862
    %v5959 = vsel %vm5767, %v5335, %v5863
    %v5960 = vsel %vm5768, %v5672, %v5864
    %v5961 = vsel %vm5769, %v5674, %v5865
    %v5962 = vsel %vm5770, %v5000, %v5866
    %v5963 = vsel %vm5771, %v5002, %v5867
    %v5964 = vsel %vm5772, %v5339, %v5868
    %v5965 = vsel %vm5773, %v5341, %v5869
    %v5966 = vsel %vm5774, %v5678, %v5870
    %v5967 = vsel %vm5775, %v5680, %v5871
    %v5968 = vsel %vm5776, %v5004, %v5872
    %v5969 = vsel %vm5777, %v5006, %v5873
    %v5970 = vsel %vm5778, %v5343, %v5874
    %v5971 = vsel %vm5779, %v5345, %v5875
    %v5972 = vsel %vm5780, %v5682, %v5876
    %v5973 = vsel %vm5781, %v5684, %v5877
    %v5974 = vsel %vm1526, %v5878, -1e+30
    %v5975 = vsel %vm1526, %v5879, -1e+30
    %v5976 = vsel %vm1526, %v5880, -1e+30
    %v5977 = vsel %vm1526, %v5881, -1e+30
    %v5978 = vsel %vm1526, %v5882, -1e+30
    %v5979 = vsel %vm1526, %v5883, -1e+30
    %v5980 = vsel %vm1527, %v5884, -1e+30
    %v5981 = vsel %vm1527, %v5885, -1e+30
    %v5982 = vsel %vm1527, %v5886, -1e+30
    %v5983 = vsel %vm1527, %v5887, -1e+30
    %v5984 = vsel %vm1527, %v5888, -1e+30
    %v5985 = vsel %vm1527, %v5889, -1e+30
    %v5986 = vsel %vm1528, %v5890, -1e+30
    %v5987 = vsel %vm1528, %v5891, -1e+30
    %v5988 = vsel %vm1528, %v5892, -1e+30
    %v5989 = vsel %vm1528, %v5893, -1e+30
    %v5990 = vsel %vm1528, %v5894, -1e+30
    %v5991 = vsel %vm1528, %v5895, -1e+30
    %v5992 = vsel %vm1529, %v5896, -1e+30
    %v5993 = vsel %vm1529, %v5897, -1e+30
    %v5994 = vsel %vm1529, %v5898, -1e+30
    %v5995 = vsel %vm1529, %v5899, -1e+30
    %v5996 = vsel %vm1529, %v5900, -1e+30
    %v5997 = vsel %vm1529, %v5901, -1e+30
    %v5998 = vsel %vm1530, %v5902, -1e+30
    %v5999 = vsel %vm1530, %v5903, -1e+30
    %v6000 = vsel %vm1530, %v5904, -1e+30
    %v6001 = vsel %vm1530, %v5905, -1e+30
    %v6002 = vsel %vm1530, %v5906, -1e+30
    %v6003 = vsel %vm1530, %v5907, -1e+30
    %v6004 = vsel %vm1531, %v5908, -1e+30
    %v6005 = vsel %vm1531, %v5909, -1e+30
    %v6006 = vsel %vm1531, %v5910, -1e+30
    %v6007 = vsel %vm1531, %v5911, -1e+30
    %v6008 = vsel %vm1531, %v5912, -1e+30
    %v6009 = vsel %vm1531, %v5913, -1e+30
    %v6010 = vsel %vm1532, %v5914, -1e+30
    %v6011 = vsel %vm1532, %v5915, -1e+30
    %v6012 = vsel %vm1532, %v5916, -1e+30
    %v6013 = vsel %vm1532, %v5917, -1e+30
    %v6014 = vsel %vm1532, %v5918, -1e+30
    %v6015 = vsel %vm1532, %v5919, -1e+30
    %v6016 = vsel %vm1533, %v5920, -1e+30
    %v6017 = vsel %vm1533, %v5921, -1e+30
    %v6018 = vsel %vm1533, %v5922, -1e+30
    %v6019 = vsel %vm1533, %v5923, -1e+30
    %v6020 = vsel %vm1533, %v5924, -1e+30
    %v6021 = vsel %vm1533, %v5925, -1e+30
    %v6022 = vsel %vm1534, %v5926, -1e+30
    %v6023 = vsel %vm1534, %v5927, -1e+30
    %v6024 = vsel %vm1534, %v5928, -1e+30
    %v6025 = vsel %vm1534, %v5929, -1e+30
    %v6026 = vsel %vm1534, %v5930, -1e+30
    %v6027 = vsel %vm1534, %v5931, -1e+30
    %v6028 = vsel %vm1535, %v5932, -1e+30
    %v6029 = vsel %vm1535, %v5933, -1e+30
    %v6030 = vsel %vm1535, %v5934, -1e+30
    %v6031 = vsel %vm1535, %v5935, -1e+30
    %v6032 = vsel %vm1535, %v5936, -1e+30
    %v6033 = vsel %vm1535, %v5937, -1e+30
    %v6034 = vsel %vm1536, %v5938, -1e+30
    %v6035 = vsel %vm1536, %v5939, -1e+30
    %v6036 = vsel %vm1536, %v5940, -1e+30
    %v6037 = vsel %vm1536, %v5941, -1e+30
    %v6038 = vsel %vm1536, %v5942, -1e+30
    %v6039 = vsel %vm1536, %v5943, -1e+30
    %v6040 = vsel %vm1537, %v5944, -1e+30
    %v6041 = vsel %vm1537, %v5945, -1e+30
    %v6042 = vsel %vm1537, %v5946, -1e+30
    %v6043 = vsel %vm1537, %v5947, -1e+30
    %v6044 = vsel %vm1537, %v5948, -1e+30
    %v6045 = vsel %vm1537, %v5949, -1e+30
    %v6046 = vsel %vm1538, %v5950, -1e+30
    %v6047 = vsel %vm1538, %v5951, -1e+30
    %v6048 = vsel %vm1538, %v5952, -1e+30
    %v6049 = vsel %vm1538, %v5953, -1e+30
    %v6050 = vsel %vm1538, %v5954, -1e+30
    %v6051 = vsel %vm1538, %v5955, -1e+30
    %v6052 = vsel %vm1539, %v5956, -1e+30
    %v6053 = vsel %vm1539, %v5957, -1e+30
    %v6054 = vsel %vm1539, %v5958, -1e+30
    %v6055 = vsel %vm1539, %v5959, -1e+30
    %v6056 = vsel %vm1539, %v5960, -1e+30
    %v6057 = vsel %vm1539, %v5961, -1e+30
    %v6058 = vsel %vm1540, %v5962, -1e+30
    %v6059 = vsel %vm1540, %v5963, -1e+30
    %v6060 = vsel %vm1540, %v5964, -1e+30
    %v6061 = vsel %vm1540, %v5965, -1e+30
    %v6062 = vsel %vm1540, %v5966, -1e+30
    %v6063 = vsel %vm1540, %v5967, -1e+30
    %v6064 = vsel %vm1541, %v5968, -1e+30
    %v6065 = vsel %vm1541, %v5969, -1e+30
    %v6066 = vsel %vm1541, %v5970, -1e+30
    %v6067 = vsel %vm1541, %v5971, -1e+30
    %v6068 = vsel %vm1541, %v5972, -1e+30
    %v6069 = vsel %vm1541, %v5973, -1e+30
    %v6070 = vmax.f32 %v5974, %v5980
    %v6071 = vrot.slane %v6070, 4
    %v6072 = vmax.f32 %v6070, %v6071
    %v6073 = vrot.slane %v6072, 2
    %v6074 = vmax.f32 %v6072, %v6073
    %v6075 = vrot.slane %v6074, 1
    %v6076 = vmax.f32 %v6074, %v6075
    %v6077 = vmax.f32 %v5975, %v5981
    %v6078 = vrot.slane %v6077, 4
    %v6079 = vmax.f32 %v6077, %v6078
    %v6080 = vrot.slane %v6079, 2
    %v6081 = vmax.f32 %v6079, %v6080
    %v6082 = vrot.slane %v6081, 1
    %v6083 = vmax.f32 %v6081, %v6082
    %v6084 = vmax.f32 %v5976, %v5982
    %v6085 = vrot.slane %v6084, 4
    %v6086 = vmax.f32 %v6084, %v6085
    %v6087 = vrot.slane %v6086, 2
    %v6088 = vmax.f32 %v6086, %v6087
    %v6089 = vrot.slane %v6088, 1
    %v6090 = vmax.f32 %v6088, %v6089
    %v6091 = vmax.f32 %v5977, %v5983
    %v6092 = vrot.slane %v6091, 4
    %v6093 = vmax.f32 %v6091, %v6092
    %v6094 = vrot.slane %v6093, 2
    %v6095 = vmax.f32 %v6093, %v6094
    %v6096 = vrot.slane %v6095, 1
    %v6097 = vmax.f32 %v6095, %v6096
    %v6098 = vmax.f32 %v5978, %v5984
    %v6099 = vrot.slane %v6098, 4
    %v6100 = vmax.f32 %v6098, %v6099
    %v6101 = vrot.slane %v6100, 2
    %v6102 = vmax.f32 %v6100, %v6101
    %v6103 = vrot.slane %v6102, 1
    %v6104 = vmax.f32 %v6102, %v6103
    %v6105 = vmax.f32 %v5979, %v5985
    %v6106 = vrot.slane %v6105, 4
    %v6107 = vmax.f32 %v6105, %v6106
    %v6108 = vrot.slane %v6107, 2
    %v6109 = vmax.f32 %v6107, %v6108
    %v6110 = vrot.slane %v6109, 1
    %v6111 = vmax.f32 %v6109, %v6110
    %v6112 = vmax.f32 %v5986, %v5992
    %v6113 = vrot.slane %v6112, 4
    %v6114 = vmax.f32 %v6112, %v6113
    %v6115 = vrot.slane %v6114, 2
    %v6116 = vmax.f32 %v6114, %v6115
    %v6117 = vrot.slane %v6116, 1
    %v6118 = vmax.f32 %v6116, %v6117
    %v6119 = vmax.f32 %v5987, %v5993
    %v6120 = vrot.slane %v6119, 4
    %v6121 = vmax.f32 %v6119, %v6120
    %v6122 = vrot.slane %v6121, 2
    %v6123 = vmax.f32 %v6121, %v6122
    %v6124 = vrot.slane %v6123, 1
    %v6125 = vmax.f32 %v6123, %v6124
    %v6126 = vmax.f32 %v5988, %v5994
    %v6127 = vrot.slane %v6126, 4
    %v6128 = vmax.f32 %v6126, %v6127
    %v6129 = vrot.slane %v6128, 2
    %v6130 = vmax.f32 %v6128, %v6129
    %v6131 = vrot.slane %v6130, 1
    %v6132 = vmax.f32 %v6130, %v6131
    %v6133 = vmax.f32 %v5989, %v5995
    %v6134 = vrot.slane %v6133, 4
    %v6135 = vmax.f32 %v6133, %v6134
    %v6136 = vrot.slane %v6135, 2
    %v6137 = vmax.f32 %v6135, %v6136
    %v6138 = vrot.slane %v6137, 1
    %v6139 = vmax.f32 %v6137, %v6138
    %v6140 = vmax.f32 %v5990, %v5996
    %v6141 = vrot.slane %v6140, 4
    %v6142 = vmax.f32 %v6140, %v6141
    %v6143 = vrot.slane %v6142, 2
    %v6144 = vmax.f32 %v6142, %v6143
    %v6145 = vrot.slane %v6144, 1
    %v6146 = vmax.f32 %v6144, %v6145
    %v6147 = vmax.f32 %v5991, %v5997
    %v6148 = vrot.slane %v6147, 4
    %v6149 = vmax.f32 %v6147, %v6148
    %v6150 = vrot.slane %v6149, 2
    %v6151 = vmax.f32 %v6149, %v6150
    %v6152 = vrot.slane %v6151, 1
    %v6153 = vmax.f32 %v6151, %v6152
    %v6154 = vmax.f32 %v5998, %v6004
    %v6155 = vrot.slane %v6154, 4
    %v6156 = vmax.f32 %v6154, %v6155
    %v6157 = vrot.slane %v6156, 2
    %v6158 = vmax.f32 %v6156, %v6157
    %v6159 = vrot.slane %v6158, 1
    %v6160 = vmax.f32 %v6158, %v6159
    %v6161 = vmax.f32 %v5999, %v6005
    %v6162 = vrot.slane %v6161, 4
    %v6163 = vmax.f32 %v6161, %v6162
    %v6164 = vrot.slane %v6163, 2
    %v6165 = vmax.f32 %v6163, %v6164
    %v6166 = vrot.slane %v6165, 1
    %v6167 = vmax.f32 %v6165, %v6166
    %v6168 = vmax.f32 %v6000, %v6006
    %v6169 = vrot.slane %v6168, 4
    %v6170 = vmax.f32 %v6168, %v6169
    %v6171 = vrot.slane %v6170, 2
    %v6172 = vmax.f32 %v6170, %v6171
    %v6173 = vrot.slane %v6172, 1
    %v6174 = vmax.f32 %v6172, %v6173
    %v6175 = vmax.f32 %v6001, %v6007
    %v6176 = vrot.slane %v6175, 4
    %v6177 = vmax.f32 %v6175, %v6176
    %v6178 = vrot.slane %v6177, 2
    %v6179 = vmax.f32 %v6177, %v6178
    %v6180 = vrot.slane %v6179, 1
    %v6181 = vmax.f32 %v6179, %v6180
    %v6182 = vmax.f32 %v6002, %v6008
    %v6183 = vrot.slane %v6182, 4
    %v6184 = vmax.f32 %v6182, %v6183
    %v6185 = vrot.slane %v6184, 2
    %v6186 = vmax.f32 %v6184, %v6185
    %v6187 = vrot.slane %v6186, 1
    %v6188 = vmax.f32 %v6186, %v6187
    %v6189 = vmax.f32 %v6003, %v6009
    %v6190 = vrot.slane %v6189, 4
    %v6191 = vmax.f32 %v6189, %v6190
    %v6192 = vrot.slane %v6191, 2
    %v6193 = vmax.f32 %v6191, %v6192
    %v6194 = vrot.slane %v6193, 1
    %v6195 = vmax.f32 %v6193, %v6194
    %v6196 = vmax.f32 %v6010, %v6016
    %v6197 = vrot.slane %v6196, 4
    %v6198 = vmax.f32 %v6196, %v6197
    %v6199 = vrot.slane %v6198, 2
    %v6200 = vmax.f32 %v6198, %v6199
    %v6201 = vrot.slane %v6200, 1
    %v6202 = vmax.f32 %v6200, %v6201
    %v6203 = vmax.f32 %v6011, %v6017
    %v6204 = vrot.slane %v6203, 4
    %v6205 = vmax.f32 %v6203, %v6204
    %v6206 = vrot.slane %v6205, 2
    %v6207 = vmax.f32 %v6205, %v6206
    %v6208 = vrot.slane %v6207, 1
    %v6209 = vmax.f32 %v6207, %v6208
    %v6210 = vmax.f32 %v6012, %v6018
    %v6211 = vrot.slane %v6210, 4
    %v6212 = vmax.f32 %v6210, %v6211
    %v6213 = vrot.slane %v6212, 2
    %v6214 = vmax.f32 %v6212, %v6213
    %v6215 = vrot.slane %v6214, 1
    %v6216 = vmax.f32 %v6214, %v6215
    %v6217 = vmax.f32 %v6013, %v6019
    %v6218 = vrot.slane %v6217, 4
    %v6219 = vmax.f32 %v6217, %v6218
    %v6220 = vrot.slane %v6219, 2
    %v6221 = vmax.f32 %v6219, %v6220
    %v6222 = vrot.slane %v6221, 1
    %v6223 = vmax.f32 %v6221, %v6222
    %v6224 = vmax.f32 %v6014, %v6020
    %v6225 = vrot.slane %v6224, 4
    %v6226 = vmax.f32 %v6224, %v6225
    %v6227 = vrot.slane %v6226, 2
    %v6228 = vmax.f32 %v6226, %v6227
    %v6229 = vrot.slane %v6228, 1
    %v6230 = vmax.f32 %v6228, %v6229
    %v6231 = vmax.f32 %v6015, %v6021
    %v6232 = vrot.slane %v6231, 4
    %v6233 = vmax.f32 %v6231, %v6232
    %v6234 = vrot.slane %v6233, 2
    %v6235 = vmax.f32 %v6233, %v6234
    %v6236 = vrot.slane %v6235, 1
    %v6237 = vmax.f32 %v6235, %v6236
    %v6238 = vmax.f32 %v6022, %v6028
    %v6239 = vrot.slane %v6238, 4
    %v6240 = vmax.f32 %v6238, %v6239
    %v6241 = vrot.slane %v6240, 2
    %v6242 = vmax.f32 %v6240, %v6241
    %v6243 = vrot.slane %v6242, 1
    %v6244 = vmax.f32 %v6242, %v6243
    %v6245 = vmax.f32 %v6023, %v6029
    %v6246 = vrot.slane %v6245, 4
    %v6247 = vmax.f32 %v6245, %v6246
    %v6248 = vrot.slane %v6247, 2
    %v6249 = vmax.f32 %v6247, %v6248
    %v6250 = vrot.slane %v6249, 1
    %v6251 = vmax.f32 %v6249, %v6250
    %v6252 = vmax.f32 %v6024, %v6030
    %v6253 = vrot.slane %v6252, 4
    %v6254 = vmax.f32 %v6252, %v6253
    %v6255 = vrot.slane %v6254, 2
    %v6256 = vmax.f32 %v6254, %v6255
    %v6257 = vrot.slane %v6256, 1
    %v6258 = vmax.f32 %v6256, %v6257
    %v6259 = vmax.f32 %v6025, %v6031
    %v6260 = vrot.slane %v6259, 4
    %v6261 = vmax.f32 %v6259, %v6260
    %v6262 = vrot.slane %v6261, 2
    %v6263 = vmax.f32 %v6261, %v6262
    %v6264 = vrot.slane %v6263, 1
    %v6265 = vmax.f32 %v6263, %v6264
    %v6266 = vmax.f32 %v6026, %v6032
    %v6267 = vrot.slane %v6266, 4
    %v6268 = vmax.f32 %v6266, %v6267
    %v6269 = vrot.slane %v6268, 2
    %v6270 = vmax.f32 %v6268, %v6269
    %v6271 = vrot.slane %v6270, 1
    %v6272 = vmax.f32 %v6270, %v6271
    %v6273 = vmax.f32 %v6027, %v6033
    %v6274 = vrot.slane %v6273, 4
    %v6275 = vmax.f32 %v6273, %v6274
    %v6276 = vrot.slane %v6275, 2
    %v6277 = vmax.f32 %v6275, %v6276
    %v6278 = vrot.slane %v6277, 1
    %v6279 = vmax.f32 %v6277, %v6278
    %v6280 = vmax.f32 %v6034, %v6040
    %v6281 = vrot.slane %v6280, 4
    %v6282 = vmax.f32 %v6280, %v6281
    %v6283 = vrot.slane %v6282, 2
    %v6284 = vmax.f32 %v6282, %v6283
    %v6285 = vrot.slane %v6284, 1
    %v6286 = vmax.f32 %v6284, %v6285
    %v6287 = vmax.f32 %v6035, %v6041
    %v6288 = vrot.slane %v6287, 4
    %v6289 = vmax.f32 %v6287, %v6288
    %v6290 = vrot.slane %v6289, 2
    %v6291 = vmax.f32 %v6289, %v6290
    %v6292 = vrot.slane %v6291, 1
    %v6293 = vmax.f32 %v6291, %v6292
    %v6294 = vmax.f32 %v6036, %v6042
    %v6295 = vrot.slane %v6294, 4
    %v6296 = vmax.f32 %v6294, %v6295
    %v6297 = vrot.slane %v6296, 2
    %v6298 = vmax.f32 %v6296, %v6297
    %v6299 = vrot.slane %v6298, 1
    %v6300 = vmax.f32 %v6298, %v6299
    %v6301 = vmax.f32 %v6037, %v6043
    %v6302 = vrot.slane %v6301, 4
    %v6303 = vmax.f32 %v6301, %v6302
    %v6304 = vrot.slane %v6303, 2
    %v6305 = vmax.f32 %v6303, %v6304
    %v6306 = vrot.slane %v6305, 1
    %v6307 = vmax.f32 %v6305, %v6306
    %v6308 = vmax.f32 %v6038, %v6044
    %v6309 = vrot.slane %v6308, 4
    %v6310 = vmax.f32 %v6308, %v6309
    %v6311 = vrot.slane %v6310, 2
    %v6312 = vmax.f32 %v6310, %v6311
    %v6313 = vrot.slane %v6312, 1
    %v6314 = vmax.f32 %v6312, %v6313
    %v6315 = vmax.f32 %v6039, %v6045
    %v6316 = vrot.slane %v6315, 4
    %v6317 = vmax.f32 %v6315, %v6316
    %v6318 = vrot.slane %v6317, 2
    %v6319 = vmax.f32 %v6317, %v6318
    %v6320 = vrot.slane %v6319, 1
    %v6321 = vmax.f32 %v6319, %v6320
    %v6322 = vmax.f32 %v6046, %v6052
    %v6323 = vrot.slane %v6322, 4
    %v6324 = vmax.f32 %v6322, %v6323
    %v6325 = vrot.slane %v6324, 2
    %v6326 = vmax.f32 %v6324, %v6325
    %v6327 = vrot.slane %v6326, 1
    %v6328 = vmax.f32 %v6326, %v6327
    %v6329 = vmax.f32 %v6047, %v6053
    %v6330 = vrot.slane %v6329, 4
    %v6331 = vmax.f32 %v6329, %v6330
    %v6332 = vrot.slane %v6331, 2
    %v6333 = vmax.f32 %v6331, %v6332
    %v6334 = vrot.slane %v6333, 1
    %v6335 = vmax.f32 %v6333, %v6334
    %v6336 = vmax.f32 %v6048, %v6054
    %v6337 = vrot.slane %v6336, 4
    %v6338 = vmax.f32 %v6336, %v6337
    %v6339 = vrot.slane %v6338, 2
    %v6340 = vmax.f32 %v6338, %v6339
    %v6341 = vrot.slane %v6340, 1
    %v6342 = vmax.f32 %v6340, %v6341
    %v6343 = vmax.f32 %v6049, %v6055
    %v6344 = vrot.slane %v6343, 4
    %v6345 = vmax.f32 %v6343, %v6344
    %v6346 = vrot.slane %v6345, 2
    %v6347 = vmax.f32 %v6345, %v6346
    %v6348 = vrot.slane %v6347, 1
    %v6349 = vmax.f32 %v6347, %v6348
    %v6350 = vmax.f32 %v6050, %v6056
    %v6351 = vrot.slane %v6350, 4
    %v6352 = vmax.f32 %v6350, %v6351
    %v6353 = vrot.slane %v6352, 2
    %v6354 = vmax.f32 %v6352, %v6353
    %v6355 = vrot.slane %v6354, 1
    %v6356 = vmax.f32 %v6354, %v6355
    %v6357 = vmax.f32 %v6051, %v6057
    %v6358 = vrot.slane %v6357, 4
    %v6359 = vmax.f32 %v6357, %v6358
    %v6360 = vrot.slane %v6359, 2
    %v6361 = vmax.f32 %v6359, %v6360
    %v6362 = vrot.slane %v6361, 1
    %v6363 = vmax.f32 %v6361, %v6362
    %v6364 = vmax.f32 %v6058, %v6064
    %v6365 = vrot.slane %v6364, 4
    %v6366 = vmax.f32 %v6364, %v6365
    %v6367 = vrot.slane %v6366, 2
    %v6368 = vmax.f32 %v6366, %v6367
    %v6369 = vrot.slane %v6368, 1
    %v6370 = vmax.f32 %v6368, %v6369
    %v6371 = vmax.f32 %v6059, %v6065
    %v6372 = vrot.slane %v6371, 4
    %v6373 = vmax.f32 %v6371, %v6372
    %v6374 = vrot.slane %v6373, 2
    %v6375 = vmax.f32 %v6373, %v6374
    %v6376 = vrot.slane %v6375, 1
    %v6377 = vmax.f32 %v6375, %v6376
    %v6378 = vmax.f32 %v6060, %v6066
    %v6379 = vrot.slane %v6378, 4
    %v6380 = vmax.f32 %v6378, %v6379
    %v6381 = vrot.slane %v6380, 2
    %v6382 = vmax.f32 %v6380, %v6381
    %v6383 = vrot.slane %v6382, 1
    %v6384 = vmax.f32 %v6382, %v6383
    %v6385 = vmax.f32 %v6061, %v6067
    %v6386 = vrot.slane %v6385, 4
    %v6387 = vmax.f32 %v6385, %v6386
    %v6388 = vrot.slane %v6387, 2
    %v6389 = vmax.f32 %v6387, %v6388
    %v6390 = vrot.slane %v6389, 1
    %v6391 = vmax.f32 %v6389, %v6390
    %v6392 = vmax.f32 %v6062, %v6068
    %v6393 = vrot.slane %v6392, 4
    %v6394 = vmax.f32 %v6392, %v6393
    %v6395 = vrot.slane %v6394, 2
    %v6396 = vmax.f32 %v6394, %v6395
    %v6397 = vrot.slane %v6396, 1
    %v6398 = vmax.f32 %v6396, %v6397
    %v6399 = vmax.f32 %v6063, %v6069
    %v6400 = vrot.slane %v6399, 4
    %v6401 = vmax.f32 %v6399, %v6400
    %v6402 = vrot.slane %v6401, 2
    %v6403 = vmax.f32 %v6401, %v6402
    %v6404 = vrot.slane %v6403, 1
    %v6405 = vmax.f32 %v6403, %v6404
    %v6406 = vpack.c.bf16 %v6076, %v6076
    %v6407 = vpack.c.bf16 %v6083, %v6083
    %v6408 = vpack.c.bf16 %v6090, %v6090
    %v6409 = vpack.c.bf16 %v6097, %v6097
    %v6410 = vpack.c.bf16 %v6104, %v6104
    %v6411 = vpack.c.bf16 %v6111, %v6111
    %v6412 = vpack.c.bf16 %v6118, %v6118
    %v6413 = vpack.c.bf16 %v6125, %v6125
    %v6414 = vpack.c.bf16 %v6132, %v6132
    %v6415 = vpack.c.bf16 %v6139, %v6139
    %v6416 = vpack.c.bf16 %v6146, %v6146
    %v6417 = vpack.c.bf16 %v6153, %v6153
    %v6418 = vpack.c.bf16 %v6160, %v6160
    %v6419 = vpack.c.bf16 %v6167, %v6167
    %v6420 = vpack.c.bf16 %v6174, %v6174
    %v6421 = vpack.c.bf16 %v6181, %v6181
    %v6422 = vpack.c.bf16 %v6188, %v6188
    %v6423 = vpack.c.bf16 %v6195, %v6195
    %v6424 = vpack.c.bf16 %v6202, %v6202
    %v6425 = vpack.c.bf16 %v6209, %v6209
    %v6426 = vpack.c.bf16 %v6216, %v6216
    %v6427 = vpack.c.bf16 %v6223, %v6223
    %v6428 = vpack.c.bf16 %v6230, %v6230
    %v6429 = vpack.c.bf16 %v6237, %v6237
    %v6430 = vpack.c.bf16 %v6244, %v6244
    %v6431 = vpack.c.bf16 %v6251, %v6251
    %v6432 = vpack.c.bf16 %v6258, %v6258
    %v6433 = vpack.c.bf16 %v6265, %v6265
    %v6434 = vpack.c.bf16 %v6272, %v6272
    %v6435 = vpack.c.bf16 %v6279, %v6279
    %v6436 = vpack.c.bf16 %v6286, %v6286
    %v6437 = vpack.c.bf16 %v6293, %v6293
    %v6438 = vpack.c.bf16 %v6300, %v6300
    %v6439 = vpack.c.bf16 %v6307, %v6307
    %v6440 = vpack.c.bf16 %v6314, %v6314
    %v6441 = vpack.c.bf16 %v6321, %v6321
    %v6442 = vpack.c.bf16 %v6328, %v6328
    %v6443 = vpack.c.bf16 %v6335, %v6335
    %v6444 = vpack.c.bf16 %v6342, %v6342
    %v6445 = vpack.c.bf16 %v6349, %v6349
    %v6446 = vpack.c.bf16 %v6356, %v6356
    %v6447 = vpack.c.bf16 %v6363, %v6363
    %v6448 = vpack.c.bf16 %v6370, %v6370
    %v6449 = vpack.c.bf16 %v6377, %v6377
    %v6450 = vpack.c.bf16 %v6384, %v6384
    %v6451 = vpack.c.bf16 %v6391, %v6391
    %v6452 = vpack.c.bf16 %v6398, %v6398
    %v6453 = vpack.c.bf16 %v6405, %v6405
    %v6454 = vld [vmem:[#allocation13] sm:$0xf]
    %v6455 = vld [vmem:[#allocation13 + $0x4] sm:$0xf]
    %v6456 = vld [vmem:[#allocation13 + $0x8] sm:$0xf]
    %v6457 = vld [vmem:[#allocation13 + $0xc] sm:$0xf]
    %v6458 = vld [vmem:[#allocation13 + $0x10] sm:$0xf]
    %v6459 = vld [vmem:[#allocation13 + $0x14] sm:$0xf]
    %v6460 = vld [vmem:[#allocation13 + $0x18] sm:$0xf]
    %v6461 = vld [vmem:[#allocation13 + $0x1c] sm:$0xf]
    %v6462 = vld [vmem:[#allocation13 + $0x20] sm:$0xf]
    %v6463 = vld [vmem:[#allocation13 + $0x24] sm:$0xf]
    %v6464 = vld [vmem:[#allocation13 + $0x28] sm:$0xf]
    %v6465 = vld [vmem:[#allocation13 + $0x2c] sm:$0xf]
    %v6466 = vld [vmem:[#allocation13 + $0x30] sm:$0xf]
    %v6467 = vld [vmem:[#allocation13 + $0x34] sm:$0xf]
    %v6468 = vld [vmem:[#allocation13 + $0x38] sm:$0xf]
    %v6469 = vld [vmem:[#allocation13 + $0x3c] sm:$0xf]
    %v6470 = vld [vmem:[#allocation13 + $0x40] sm:$0xf]
    %v6471 = vld [vmem:[#allocation13 + $0x44] sm:$0xf]
    %v6472 = vld [vmem:[#allocation13 + $0x48] sm:$0xf]
    %v6473 = vld [vmem:[#allocation13 + $0x4c] sm:$0xf]
    %v6474 = vld [vmem:[#allocation13 + $0x50] sm:$0xf]
    %v6475 = vld [vmem:[#allocation13 + $0x54] sm:$0xf]
    %v6476 = vld [vmem:[#allocation13 + $0x58] sm:$0xf]
    %v6477 = vld [vmem:[#allocation13 + $0x5c] sm:$0xf]
    %v6478 = vld [vmem:[#allocation13 + $0x60] sm:$0xf]
    %v6479 = vld [vmem:[#allocation13 + $0x64] sm:$0xf]
    %v6480 = vld [vmem:[#allocation13 + $0x68] sm:$0xf]
    %v6481 = vld [vmem:[#allocation13 + $0x6c] sm:$0xf]
    %v6482 = vld [vmem:[#allocation13 + $0x70] sm:$0xf]
    %v6483 = vld [vmem:[#allocation13 + $0x74] sm:$0xf]
    %v6484 = vld [vmem:[#allocation13 + $0x78] sm:$0xf]
    %v6485 = vld [vmem:[#allocation13 + $0x7c] sm:$0xf]
    %v6486 = vld [vmem:[#allocation13 + $0x80] sm:$0xf]
    %v6487 = vld [vmem:[#allocation13 + $0x84] sm:$0xf]
    %v6488 = vld [vmem:[#allocation13 + $0x88] sm:$0xf]
    %v6489 = vld [vmem:[#allocation13 + $0x8c] sm:$0xf]
    %v6490 = vld [vmem:[#allocation13 + $0x90] sm:$0xf]
    %v6491 = vld [vmem:[#allocation13 + $0x94] sm:$0xf]
    %v6492 = vld [vmem:[#allocation13 + $0x98] sm:$0xf]
    %v6493 = vld [vmem:[#allocation13 + $0x9c] sm:$0xf]
    %v6494 = vld [vmem:[#allocation13 + $0xa0] sm:$0xf]
    %v6495 = vld [vmem:[#allocation13 + $0xa4] sm:$0xf]
    %v6496 = vld [vmem:[#allocation13 + $0xa8] sm:$0xf]
    %v6497 = vld [vmem:[#allocation13 + $0xac] sm:$0xf]
    %v6498 = vld [vmem:[#allocation13 + $0xb0] sm:$0xf]
    %v6499 = vld [vmem:[#allocation13 + $0xb4] sm:$0xf]
    %v6500 = vld [vmem:[#allocation13 + $0xb8] sm:$0xf]
    %v6501 = vld [vmem:[#allocation13 + $0xbc] sm:$0xf]
    %v6502 = vld [vmem:[#allocation13 + $0xc0] sm:$0xf]
    %v6503 = vld [vmem:[#allocation13 + $0xc4] sm:$0xf]
    %v6504 = vld [vmem:[#allocation13 + $0xc8] sm:$0xf]
    %v6505 = vld [vmem:[#allocation13 + $0xcc] sm:$0xf]
    %v6506 = vld [vmem:[#allocation13 + $0xd0] sm:$0xf]
    %v6507 = vld [vmem:[#allocation13 + $0xd4] sm:$0xf]
    %v6508 = vld [vmem:[#allocation13 + $0xd8] sm:$0xf]
    %v6509 = vld [vmem:[#allocation13 + $0xdc] sm:$0xf]
    %v6510 = vld [vmem:[#allocation13 + $0xe0] sm:$0xf]
    %v6511 = vld [vmem:[#allocation13 + $0xe4] sm:$0xf]
    %v6512 = vld [vmem:[#allocation13 + $0xe8] sm:$0xf]
    %v6513 = vld [vmem:[#allocation13 + $0xec] sm:$0xf]
    %v6514 = vld [vmem:[#allocation13 + $0xf0] sm:$0xf]
    %v6515 = vld [vmem:[#allocation13 + $0xf4] sm:$0xf]
    %v6516 = vld [vmem:[#allocation13 + $0xf8] sm:$0xf]
    %v6517 = vld [vmem:[#allocation13 + $0xfc] sm:$0xf]
    %v6518 = vld [vmem:[#allocation13 + $0x100] sm:$0xf]
    %v6519 = vld [vmem:[#allocation13 + $0x104] sm:$0xf]
    %v6520 = vld [vmem:[#allocation13 + $0x108] sm:$0xf]
    %v6521 = vld [vmem:[#allocation13 + $0x10c] sm:$0xf]
    %v6522 = vld [vmem:[#allocation13 + $0x110] sm:$0xf]
    %v6523 = vld [vmem:[#allocation13 + $0x114] sm:$0xf]
    %v6524 = vld [vmem:[#allocation13 + $0x118] sm:$0xf]
    %v6525 = vld [vmem:[#allocation13 + $0x11c] sm:$0xf]
    %v6526 = vld [vmem:[#allocation13 + $0x120] sm:$0xf]
    %v6527 = vld [vmem:[#allocation13 + $0x124] sm:$0xf]
    %v6528 = vld [vmem:[#allocation13 + $0x128] sm:$0xf]
    %v6529 = vld [vmem:[#allocation13 + $0x12c] sm:$0xf]
    %v6530 = vld [vmem:[#allocation13 + $0x130] sm:$0xf]
    %v6531 = vld [vmem:[#allocation13 + $0x134] sm:$0xf]
    %v6532 = vld [vmem:[#allocation13 + $0x138] sm:$0xf]
    %v6533 = vld [vmem:[#allocation13 + $0x13c] sm:$0xf]
    %v6534 = vld [vmem:[#allocation13 + $0x140] sm:$0xf]
    %v6535 = vld [vmem:[#allocation13 + $0x144] sm:$0xf]
    %v6536 = vld [vmem:[#allocation13 + $0x148] sm:$0xf]
    %v6537 = vld [vmem:[#allocation13 + $0x14c] sm:$0xf]
    %v6538 = vld [vmem:[#allocation13 + $0x150] sm:$0xf]
    %v6539 = vld [vmem:[#allocation13 + $0x154] sm:$0xf]
    %v6540 = vld [vmem:[#allocation13 + $0x158] sm:$0xf]
    %v6541 = vld [vmem:[#allocation13 + $0x15c] sm:$0xf]
    %v6542 = vld [vmem:[#allocation13 + $0x160] sm:$0xf]
    %v6543 = vld [vmem:[#allocation13 + $0x164] sm:$0xf]
    %v6544 = vld [vmem:[#allocation13 + $0x168] sm:$0xf]
    %v6545 = vld [vmem:[#allocation13 + $0x16c] sm:$0xf]
    %v6546 = vld [vmem:[#allocation13 + $0x170] sm:$0xf]
    %v6547 = vld [vmem:[#allocation13 + $0x174] sm:$0xf]
    %v6548 = vld [vmem:[#allocation13 + $0x178] sm:$0xf]
    %v6549 = vld [vmem:[#allocation13 + $0x17c] sm:$0xf]
    %v6550 = vld [vmem:[#allocation14] sm:$0x1]
    %v6552 = vlaneseq
    %v6553 = vshrl.u32 %v6552, 7
    %v6554 = vsub.s32 0, %v6553
    %v6555 = vrot.slane %v6550, %v6554
    %v6605 = vunpack.c.l.b16 %v6406
    %v6606 = vunpack.c.l.b16 %v6407
    %v6607 = vunpack.c.l.b16 %v6408
    %v6608 = vunpack.c.l.b16 %v6409
    %v6609 = vunpack.c.l.b16 %v6410
    %v6610 = vunpack.c.l.b16 %v6411
    %v6611 = vunpack.c.l.b16 %v6412
    %v6612 = vunpack.c.l.b16 %v6413
    %v6613 = vunpack.c.l.b16 %v6414
    %v6614 = vunpack.c.l.b16 %v6415
    %v6615 = vunpack.c.l.b16 %v6416
    %v6616 = vunpack.c.l.b16 %v6417
    %v6617 = vunpack.c.l.b16 %v6418
    %v6618 = vunpack.c.l.b16 %v6419
    %v6619 = vunpack.c.l.b16 %v6420
    %v6620 = vunpack.c.l.b16 %v6421
    %v6621 = vunpack.c.l.b16 %v6422
    %v6622 = vunpack.c.l.b16 %v6423
    %v6623 = vunpack.c.l.b16 %v6424
    %v6624 = vunpack.c.l.b16 %v6425
    %v6625 = vunpack.c.l.b16 %v6426
    %v6626 = vunpack.c.l.b16 %v6427
    %v6627 = vunpack.c.l.b16 %v6428
    %v6628 = vunpack.c.l.b16 %v6429
    %v6629 = vunpack.c.l.b16 %v6430
    %v6630 = vunpack.c.l.b16 %v6431
    %v6631 = vunpack.c.l.b16 %v6432
    %v6632 = vunpack.c.l.b16 %v6433
    %v6633 = vunpack.c.l.b16 %v6434
    %v6634 = vunpack.c.l.b16 %v6435
    %v6635 = vunpack.c.l.b16 %v6436
    %v6636 = vunpack.c.l.b16 %v6437
    %v6637 = vunpack.c.l.b16 %v6438
    %v6638 = vunpack.c.l.b16 %v6439
    %v6639 = vunpack.c.l.b16 %v6440
    %v6640 = vunpack.c.l.b16 %v6441
    %v6641 = vunpack.c.l.b16 %v6442
    %v6642 = vunpack.c.l.b16 %v6443
    %v6643 = vunpack.c.l.b16 %v6444
    %v6644 = vunpack.c.l.b16 %v6445
    %v6645 = vunpack.c.l.b16 %v6446
    %v6646 = vunpack.c.l.b16 %v6447
    %v6647 = vunpack.c.l.b16 %v6448
    %v6648 = vunpack.c.l.b16 %v6449
    %v6649 = vunpack.c.l.b16 %v6450
    %v6650 = vunpack.c.l.b16 %v6451
    %v6651 = vunpack.c.l.b16 %v6452
    %v6652 = vunpack.c.l.b16 %v6453
    %vm6653 = vcmask 1041409
    %v6654 = vsel %vm6653, %v6611, %v6605
    %vm6655 = vcmask 1042434
    %v6656 = vsel %vm6655, %v6617, %v6654
    %vm6657 = vcmask 1043459
    %v6658 = vsel %vm6657, %v6623, %v6656
    %vm6659 = vcmask 1044484
    %v6660 = vsel %vm6659, %v6629, %v6658
    %vm6661 = vcmask 1045509
    %v6662 = vsel %vm6661, %v6635, %v6660
    %vm6663 = vcmask 1046534
    %v6664 = vsel %vm6663, %v6641, %v6662
    %vm6665 = vcmask 1047559
    %v6666 = vsel %vm6665, %v6647, %v6664
    %v6667 = vsel %vm6653, %v6612, %v6606
    %v6668 = vsel %vm6655, %v6618, %v6667
    %v6669 = vsel %vm6657, %v6624, %v6668
    %v6670 = vsel %vm6659, %v6630, %v6669
    %v6671 = vsel %vm6661, %v6636, %v6670
    %v6672 = vsel %vm6663, %v6642, %v6671
    %v6673 = vsel %vm6665, %v6648, %v6672
    %v6674 = vsel %vm6653, %v6613, %v6607
    %v6675 = vsel %vm6655, %v6619, %v6674
    %v6676 = vsel %vm6657, %v6625, %v6675
    %v6677 = vsel %vm6659, %v6631, %v6676
    %v6678 = vsel %vm6661, %v6637, %v6677
    %v6679 = vsel %vm6663, %v6643, %v6678
    %v6680 = vsel %vm6665, %v6649, %v6679
    %v6681 = vsel %vm6653, %v6614, %v6608
    %v6682 = vsel %vm6655, %v6620, %v6681
    %v6683 = vsel %vm6657, %v6626, %v6682
    %v6684 = vsel %vm6659, %v6632, %v6683
    %v6685 = vsel %vm6661, %v6638, %v6684
    %v6686 = vsel %vm6663, %v6644, %v6685
    %v6687 = vsel %vm6665, %v6650, %v6686
    %v6688 = vsel %vm6653, %v6615, %v6609
    %v6689 = vsel %vm6655, %v6621, %v6688
    %v6690 = vsel %vm6657, %v6627, %v6689
    %v6691 = vsel %vm6659, %v6633, %v6690
    %v6692 = vsel %vm6661, %v6639, %v6691
    %v6693 = vsel %vm6663, %v6645, %v6692
    %v6694 = vsel %vm6665, %v6651, %v6693
    %v6695 = vsel %vm6653, %v6616, %v6610
    %v6696 = vsel %vm6655, %v6622, %v6695
    %v6697 = vsel %vm6657, %v6628, %v6696
    %v6698 = vsel %vm6659, %v6634, %v6697
    %v6699 = vsel %vm6661, %v6640, %v6698
    %v6700 = vsel %vm6663, %v6646, %v6699
    %v6701 = vsel %vm6665, %v6652, %v6700
    %v6702 = vpack.c.b16 %v6666, %v6666
    %v6703 = vpack.c.b16 %v6673, %v6673
    %v6704 = vpack.c.b16 %v6680, %v6680
    %v6705 = vpack.c.b16 %v6687, %v6687
    %v6706 = vpack.c.b16 %v6694, %v6694
    %v6707 = vpack.c.b16 %v6701, %v6701
    %v6810 = vunpack.c.l.b16 %v6454
    %v6811 = vunpack.c.l.b16 %v6455
    %v6812 = vunpack.c.l.b16 %v6456
    %v6813 = vunpack.c.l.b16 %v6457
    %v6814 = vunpack.c.l.b16 %v6458
    %v6815 = vunpack.c.l.b16 %v6459
    %v6816 = vunpack.c.l.b16 %v6460
    %v6817 = vunpack.c.l.b16 %v6461
    %v6818 = vunpack.c.l.b16 %v6462
    %v6819 = vunpack.c.l.b16 %v6463
    %v6820 = vunpack.c.l.b16 %v6464
    %v6821 = vunpack.c.l.b16 %v6465
    %v6822 = vunpack.c.l.b16 %v6466
    %v6823 = vunpack.c.l.b16 %v6467
    %v6824 = vunpack.c.l.b16 %v6468
    %v6825 = vunpack.c.l.b16 %v6469
    %v6826 = vunpack.c.l.b16 %v6470
    %v6827 = vunpack.c.l.b16 %v6471
    %v6828 = vunpack.c.l.b16 %v6472
    %v6829 = vunpack.c.l.b16 %v6473
    %v6830 = vunpack.c.l.b16 %v6474
    %v6831 = vunpack.c.l.b16 %v6475
    %v6832 = vunpack.c.l.b16 %v6476
    %v6833 = vunpack.c.l.b16 %v6477
    %v6834 = vunpack.c.l.b16 %v6478
    %v6835 = vunpack.c.l.b16 %v6479
    %v6836 = vunpack.c.l.b16 %v6480
    %v6837 = vunpack.c.l.b16 %v6481
    %v6838 = vunpack.c.l.b16 %v6482
    %v6839 = vunpack.c.l.b16 %v6483
    %v6840 = vunpack.c.l.b16 %v6484
    %v6841 = vunpack.c.l.b16 %v6485
    %v6842 = vunpack.c.l.b16 %v6486
    %v6843 = vunpack.c.l.b16 %v6487
    %v6844 = vunpack.c.l.b16 %v6488
    %v6845 = vunpack.c.l.b16 %v6489
    %v6846 = vunpack.c.l.b16 %v6490
    %v6847 = vunpack.c.l.b16 %v6491
    %v6848 = vunpack.c.l.b16 %v6492
    %v6849 = vunpack.c.l.b16 %v6493
    %v6850 = vunpack.c.l.b16 %v6494
    %v6851 = vunpack.c.l.b16 %v6495
    %v6852 = vunpack.c.l.b16 %v6496
    %v6853 = vunpack.c.l.b16 %v6497
    %v6854 = vunpack.c.l.b16 %v6498
    %v6855 = vunpack.c.l.b16 %v6499
    %v6856 = vunpack.c.l.b16 %v6500
    %v6857 = vunpack.c.l.b16 %v6501
    %v6858 = vunpack.c.l.b16 %v6502
    %v6859 = vunpack.c.l.b16 %v6503
    %v6860 = vunpack.c.l.b16 %v6504
    %v6861 = vunpack.c.l.b16 %v6505
    %v6862 = vunpack.c.l.b16 %v6506
    %v6863 = vunpack.c.l.b16 %v6507
    %v6864 = vunpack.c.l.b16 %v6508
    %v6865 = vunpack.c.l.b16 %v6509
    %v6866 = vunpack.c.l.b16 %v6510
    %v6867 = vunpack.c.l.b16 %v6511
    %v6868 = vunpack.c.l.b16 %v6512
    %v6869 = vunpack.c.l.b16 %v6513
    %v6870 = vunpack.c.l.b16 %v6514
    %v6871 = vunpack.c.l.b16 %v6515
    %v6872 = vunpack.c.l.b16 %v6516
    %v6873 = vunpack.c.l.b16 %v6517
    %v6874 = vunpack.c.l.b16 %v6518
    %v6875 = vunpack.c.l.b16 %v6519
    %v6876 = vunpack.c.l.b16 %v6520
    %v6877 = vunpack.c.l.b16 %v6521
    %v6878 = vunpack.c.l.b16 %v6522
    %v6879 = vunpack.c.l.b16 %v6523
    %v6880 = vunpack.c.l.b16 %v6524
    %v6881 = vunpack.c.l.b16 %v6525
    %v6882 = vunpack.c.l.b16 %v6526
    %v6883 = vunpack.c.l.b16 %v6527
    %v6884 = vunpack.c.l.b16 %v6528
    %v6885 = vunpack.c.l.b16 %v6529
    %v6886 = vunpack.c.l.b16 %v6530
    %v6887 = vunpack.c.l.b16 %v6531
    %v6888 = vunpack.c.l.b16 %v6532
    %v6889 = vunpack.c.l.b16 %v6533
    %v6890 = vunpack.c.l.b16 %v6534
    %v6891 = vunpack.c.l.b16 %v6535
    %v6892 = vunpack.c.l.b16 %v6536
    %v6893 = vunpack.c.l.b16 %v6537
    %v6894 = vunpack.c.l.b16 %v6538
    %v6895 = vunpack.c.l.b16 %v6539
    %v6896 = vunpack.c.l.b16 %v6540
    %v6897 = vunpack.c.l.b16 %v6541
    %v6898 = vunpack.c.l.b16 %v6542
    %v6899 = vunpack.c.l.b16 %v6543
    %v6900 = vunpack.c.l.b16 %v6544
    %v6901 = vunpack.c.l.b16 %v6545
    %v6902 = vunpack.c.l.b16 %v6546
    %v6903 = vunpack.c.l.b16 %v6547
    %v6904 = vunpack.c.l.b16 %v6548
    %v6905 = vunpack.c.l.b16 %v6549
    %v6906 = vpack.c.b16 %v6811, %v6810
    %v6907 = vpack.c.b16 %v6813, %v6812
    %v6908 = vpack.c.b16 %v6815, %v6814
    %v6909 = vpack.c.b16 %v6817, %v6816
    %v6910 = vpack.c.b16 %v6819, %v6818
    %v6911 = vpack.c.b16 %v6821, %v6820
    %v6912 = vpack.c.b16 %v6823, %v6822
    %v6913 = vpack.c.b16 %v6825, %v6824
    %v6914 = vpack.c.b16 %v6827, %v6826
    %v6915 = vpack.c.b16 %v6829, %v6828
    %v6916 = vpack.c.b16 %v6831, %v6830
    %v6917 = vpack.c.b16 %v6833, %v6832
    %v6918 = vpack.c.b16 %v6835, %v6834
    %v6919 = vpack.c.b16 %v6837, %v6836
    %v6920 = vpack.c.b16 %v6839, %v6838
    %v6921 = vpack.c.b16 %v6841, %v6840
    %v6922 = vpack.c.b16 %v6843, %v6842
    %v6923 = vpack.c.b16 %v6845, %v6844
    %v6924 = vpack.c.b16 %v6847, %v6846
    %v6925 = vpack.c.b16 %v6849, %v6848
    %v6926 = vpack.c.b16 %v6851, %v6850
    %v6927 = vpack.c.b16 %v6853, %v6852
    %v6928 = vpack.c.b16 %v6855, %v6854
    %v6929 = vpack.c.b16 %v6857, %v6856
    %v6930 = vpack.c.b16 %v6859, %v6858
    %v6931 = vpack.c.b16 %v6861, %v6860
    %v6932 = vpack.c.b16 %v6863, %v6862
    %v6933 = vpack.c.b16 %v6865, %v6864
    %v6934 = vpack.c.b16 %v6867, %v6866
    %v6935 = vpack.c.b16 %v6869, %v6868
    %v6936 = vpack.c.b16 %v6871, %v6870
    %v6937 = vpack.c.b16 %v6873, %v6872
    %v6938 = vpack.c.b16 %v6875, %v6874
    %v6939 = vpack.c.b16 %v6877, %v6876
    %v6940 = vpack.c.b16 %v6879, %v6878
    %v6941 = vpack.c.b16 %v6881, %v6880
    %v6942 = vpack.c.b16 %v6883, %v6882
    %v6943 = vpack.c.b16 %v6885, %v6884
    %v6944 = vpack.c.b16 %v6887, %v6886
    %v6945 = vpack.c.b16 %v6889, %v6888
    %v6946 = vpack.c.b16 %v6891, %v6890
    %v6947 = vpack.c.b16 %v6893, %v6892
    %v6948 = vpack.c.b16 %v6895, %v6894
    %v6949 = vpack.c.b16 %v6897, %v6896
    %v6950 = vpack.c.b16 %v6899, %v6898
    %v6951 = vpack.c.b16 %v6901, %v6900
    %v6952 = vpack.c.b16 %v6903, %v6902
    %v6953 = vpack.c.b16 %v6905, %v6904
    %7002 = vmatprep.subr.bf16.mxu0 0
    %7003 = vmatpush1.bf16.msra.mxu0 %v6913
    %7004 = vmatprep.subr.bf16.mxu0 0
    %7005 = vmatpush1.bf16.msra.mxu0 %v6912
    %7006 = vmatprep.subr.bf16.mxu0 0
    %7007 = vmatpush1.bf16.msra.mxu0 %v6911
    %7008 = vmatprep.subr.bf16.mxu0 0
    %7009 = vmatpush1.bf16.msra.mxu0 %v6910
    %7010 = vmatprep.subr.bf16.mxu0 0
    %7011 = vmatpush1.bf16.msra.mxu0 %v6909
    %7012 = vmatprep.subr.bf16.mxu0 0
    %7013 = vmatpush1.bf16.msra.mxu0 %v6908
    %7014 = vmatprep.subr.bf16.mxu0 0
    %7015 = vmatpush1.bf16.msra.mxu0 %v6907
    %7016 = vmatprep.subr.bf16.mxu0 0
    %7017 = vmatpush1.bf16.msra.mxu0 %v6906
    %7018 = vmatprep.subr.bf16.mxu0 0
    %7019 = vmatpush2.bf16.msra.mxu0 %v6921
    %7020 = vmatprep.subr.bf16.mxu0 0
    %7021 = vmatpush2.bf16.msra.mxu0 %v6920
    %7022 = vmatprep.subr.bf16.mxu0 0
    %7023 = vmatpush2.bf16.msra.mxu0 %v6919
    %7024 = vmatprep.subr.bf16.mxu0 0
    %7025 = vmatpush2.bf16.msra.mxu0 %v6918
    %7026 = vmatprep.subr.bf16.mxu0 0
    %7027 = vmatpush2.bf16.msra.mxu0 %v6917
    %7028 = vmatprep.subr.bf16.mxu0 0
    %7029 = vmatpush2.bf16.msra.mxu0 %v6916
    %7030 = vmatprep.subr.bf16.mxu0 0
    %7031 = vmatpush2.bf16.msra.mxu0 %v6915
    %7032 = vmatprep.subr.bf16.mxu0 0
    %7033 = vmatpush2.bf16.msra.mxu0 %v6914
    %7034 = vmatprep.mubr.bf16.mxu0 %v6703
    %7035 = vmatmul.mubr.bf16.gmra.mxu0 %v6702
    %v7036 = vpop.f32.mrf.mxu0
    %v7037 = vadd.f32 %v6555, %v7036
    %v7038 = vpop.f32.mrf.mxu0
    %v7039 = vpop.f32.mrf.mxu0
    %v7040 = vpop.f32.mrf.mxu0
    %7041 = vdwg.mxu0
    %7042 = vmatprep.subr.bf16.mxu0 0
    %7043 = vmatpush1.bf16.msra.mxu0 %v6929
    %7044 = vmatprep.subr.bf16.mxu0 0
    %7045 = vmatpush1.bf16.msra.mxu0 %v6928
    %7046 = vmatprep.subr.bf16.mxu0 0
    %7047 = vmatpush1.bf16.msra.mxu0 %v6927
    %7048 = vmatprep.subr.bf16.mxu0 0
    %7049 = vmatpush1.bf16.msra.mxu0 %v6926
    %7050 = vmatprep.subr.bf16.mxu0 0
    %7051 = vmatpush1.bf16.msra.mxu0 %v6925
    %7052 = vmatprep.subr.bf16.mxu0 0
    %7053 = vmatpush1.bf16.msra.mxu0 %v6924
    %7054 = vmatprep.subr.bf16.mxu0 0
    %7055 = vmatpush1.bf16.msra.mxu0 %v6923
    %7056 = vmatprep.subr.bf16.mxu0 0
    %7057 = vmatpush1.bf16.msra.mxu0 %v6922
    %7058 = vmatprep.subr.bf16.mxu0 0
    %7059 = vmatpush2.bf16.msra.mxu0 %v6937
    %7060 = vmatprep.subr.bf16.mxu0 0
    %7061 = vmatpush2.bf16.msra.mxu0 %v6936
    %7062 = vmatprep.subr.bf16.mxu0 0
    %7063 = vmatpush2.bf16.msra.mxu0 %v6935
    %7064 = vmatprep.subr.bf16.mxu0 0
    %7065 = vmatpush2.bf16.msra.mxu0 %v6934
    %7066 = vmatprep.subr.bf16.mxu0 0
    %7067 = vmatpush2.bf16.msra.mxu0 %v6933
    %7068 = vmatprep.subr.bf16.mxu0 0
    %7069 = vmatpush2.bf16.msra.mxu0 %v6932
    %7070 = vmatprep.subr.bf16.mxu0 0
    %7071 = vmatpush2.bf16.msra.mxu0 %v6931
    %7072 = vmatprep.subr.bf16.mxu0 0
    %7073 = vmatpush2.bf16.msra.mxu0 %v6930
    %7074 = vmatprep.mubr.bf16.mxu0 %v6705
    %7075 = vmatmul.mubr.bf16.gmra.mxu0 %v6704
    %v7076 = vpop.f32.mrf.mxu0
    %v7077 = vadd.f32 %v7037, %v7076
    %v7078 = vpop.f32.mrf.mxu0
    %v7079 = vpop.f32.mrf.mxu0
    %v7080 = vpop.f32.mrf.mxu0
    %7081 = vdwg.mxu0
    %7082 = vmatprep.subr.bf16.mxu0 0
    %7083 = vmatpush1.bf16.msra.mxu0 %v6945
    %7084 = vmatprep.subr.bf16.mxu0 0
    %7085 = vmatpush1.bf16.msra.mxu0 %v6944
    %7086 = vmatprep.subr.bf16.mxu0 0
    %7087 = vmatpush1.bf16.msra.mxu0 %v6943
    %7088 = vmatprep.subr.bf16.mxu0 0
    %7089 = vmatpush1.bf16.msra.mxu0 %v6942
    %7090 = vmatprep.subr.bf16.mxu0 0
    %7091 = vmatpush1.bf16.msra.mxu0 %v6941
    %7092 = vmatprep.subr.bf16.mxu0 0
    %7093 = vmatpush1.bf16.msra.mxu0 %v6940
    %7094 = vmatprep.subr.bf16.mxu0 0
    %7095 = vmatpush1.bf16.msra.mxu0 %v6939
    %7096 = vmatprep.subr.bf16.mxu0 0
    %7097 = vmatpush1.bf16.msra.mxu0 %v6938
    %7098 = vmatprep.subr.bf16.mxu0 0
    %7099 = vmatpush2.bf16.msra.mxu0 %v6953
    %7100 = vmatprep.subr.bf16.mxu0 0
    %7101 = vmatpush2.bf16.msra.mxu0 %v6952
    %7102 = vmatprep.subr.bf16.mxu0 0
    %7103 = vmatpush2.bf16.msra.mxu0 %v6951
    %7104 = vmatprep.subr.bf16.mxu0 0
    %7105 = vmatpush2.bf16.msra.mxu0 %v6950
    %7106 = vmatprep.subr.bf16.mxu0 0
    %7107 = vmatpush2.bf16.msra.mxu0 %v6949
    %7108 = vmatprep.subr.bf16.mxu0 0
    %7109 = vmatpush2.bf16.msra.mxu0 %v6948
    %7110 = vmatprep.subr.bf16.mxu0 0
    %7111 = vmatpush2.bf16.msra.mxu0 %v6947
    %7112 = vmatprep.subr.bf16.mxu0 0
    %7113 = vmatpush2.bf16.msra.mxu0 %v6946
    %7114 = vmatprep.mubr.bf16.mxu0 %v6707
    %7115 = vmatmul.mubr.bf16.gmra.mxu0 %v6706
    %v7116 = vpop.f32.mrf.mxu0
    %v7117 = vadd.f32 %v7077, %v7116
    %v7118 = vpop.f32.mrf.mxu0
    %v7119 = vpop.f32.mrf.mxu0
    %v7120 = vpop.f32.mrf.mxu0
    %7121 = vdwg.mxu0
    %vm7122 = vcmp.ge.f32.partialorder %v7117, 0.0
    %v7123 = vmul.f32 %v7117, 0.01
    %v7124 = vsel %vm7122, %v7117, %v7123
    %v7125 = vmul.f32 %v7124, %v7124
    %7126 = vadd.xlane.f32.xlu0 %v7125
    %v7127 = vpop.xlane.xlu0 %7126
    %v7128 = vmax.f32 %v7127, 1e-24
    %v7129 = vrsqrt.pop %v7128
    %v7130 = vmul.f32 %v7124, %v7129
    %7131 = vst [vmem:[#allocation16] sm:$0xff] %v7130
    // Predicated region
    $region58: #{tpu_custom_call.1} parent=1 // pred_check
      _
    $region59: #{tpu_custom_call.1} parent=1 // pred_check_branch
      %7133 = sbr.rel (0) target = $region61
    $region60: #{tpu_custom_call.1} parent=1 // pred_region
      %s7135 = ssub.s32 128, 128
      %7136 = vsyncadd [#allocation7], %s7135
      %s7138 = sshll.u32 [#allocation16], 4
      %s7139 = int_to_ptr.vmem [resolvable:$true] %s7138
      %7141 = dma.vmem_to_hbm [thread:$0]  %s7139, 128, %s8, [#allocation7]
    $region61: #{tpu_custom_call.1} parent=1 // pred_fallthru
      _
    // Predicated region
    $region62: #{tpu_custom_call.1} parent=1 // pred_check
      _
    $region63: #{tpu_custom_call.1} parent=1 // pred_check_branch
      %7143 = sbr.rel (0) target = $region65
    $region64: #{tpu_custom_call.1} parent=1 // pred_region
      %7144 = dma.done [#allocation7], 128
    $region65: #{tpu_custom_call.1} parent=1 // pred_fallthru
      _
    %7145 = vsyncpa [#allocation6], 1
    %7146 = vsyncpa [#allocation9], 1
    %7147 = vsyncpa [#allocation12], 1
    %7148 = vsyncpa [#allocation15], 1
    %7149 = vsyncpa [#allocation7], 1

</llo_original>
